<compile_context>
chip_gen: v6e
topology: v6e:2x2x1
jax: 0.10.0
libtpu: 0.0.40
codegen_flags: <defaults>
</compile_context>

<pallas_src>
import jax
import jax.numpy as jnp
from jax import lax
from jax.experimental import pallas as pl
from jax.experimental.pallas import tpu as pltpu

EPS = 1e-5


# --------------------------------------------------------------------------
# VMEM / tiling heuristics (generation-aware)
# --------------------------------------------------------------------------
def _vmem_limit_bytes():
    try:
        cap = int(pltpu.get_tpu_info().vmem_capacity_bytes)
    except Exception:  # noqa: BLE001 - conservative fallback if query unavailable
        cap = 64 * 1024 * 1024
    # ~3/4 of physical, capped at 100 MiB: ~96 MiB on v5e/v6e, ~48 MiB on v7x.
    return max(32 * 1024 * 1024, min(cap * 3 // 4, 100 * 1024 * 1024))


def _conv_vmem_bytes(th, wd, c, co, pad_out):
    """Rough per-grid-step VMEM footprint of the conv + BN-stats stage."""
    wp = wd + 2
    cl, col = max(c, 128), max(co, 128)      # small minor dims pad to 128 lanes
    bf, f32 = 2, 4
    xin = 2 * (th + 2) * wp * cl * bf                     # 2x-buffered input rows
    yout = 2 * (th * max((wp if pad_out else wd) * co, 128) * bf + 2 * col * f32)
    resid = 9 * c * col * bf + 2 * wp * cl * f32           # weights + scale/shift
    scratch = ((th + 2) * wp * cl * bf                     # row slab
               + th * wp * 3 * cl * bf                     # dy-folded LHS
               + th * wp * col * f32                       # one matmul output
               + th * wd * col * f32)                      # f32 accumulator
    return xin + yout + resid + scratch


def _pick_tile_h(h, footprint, budget):
    cands = [t for t in (256, 128, 64, 32, 16, 8) if h % t == 0]
    if not cands:
        return h                                   # odd/tiny H: one full-extent tile
    fits = [t for t in cands if footprint(t) <= budget]
    multi = [t for t in fits if h // t >= 2]       # >=2 row tiles keeps both TCs busy
    if multi:
        return max(multi)
    if fits:
        return max(fits)
    return min(cands)


def _pick_rows(h, wc, budget):
    """Row tile for the elementwise BN2+ReLU stage (no halo, independent of conv)."""
    cands = [t for t in (512, 256, 128, 64, 32, 16, 8) if h % t == 0]
    if not cands:
        return h
    fits = [t for t in cands if 2 * t * wc * (2 + 4) + 2 * wc * 4 <= budget]
    multi = [t for t in fits if h // t >= 2]
    if multi:
        return max(multi)
    if fits:
        return max(fits)
    return min(cands)


def _resident_spec(shape):
    """Constant-index resident param: single-buffered to halve its VMEM cost."""
    idx = lambda *_: (0,) * len(shape)  # noqa: E731
    try:
        return pl.BlockSpec(shape, idx, pipeline_mode=pl.Buffered(1))
    except Exception:  # noqa: BLE001 - fall back to default buffering
        return pl.BlockSpec(shape, idx)


# --------------------------------------------------------------------------
# Kernels
# --------------------------------------------------------------------------
def _conv_body(xt_ref, xm_ref, xb_ref, sc_ref, sh_ref, w_ref, y_ref, st_ref,
               *, th, wd, rt, pre_act, pad_out):
    """One row tile of: [optional fused BN1 affine + ReLU] -> 3x3 conv, plus
    per-tile BN partial statistics of the f32 conv output.

    xt/xm/xb : (1,1,wp,c) / (1,th,wp,c) / (1,1,wp,c)  width-padded halo/body rows (bf16)
    sc/sh    : (1,wp,c)   fused BN1 scale/shift, zero at the pad columns (pre_act only)
    w        : (3, 3*c, co)  per-dx weights, dy folded into K (bf16)
    y        : (1, th, X)    lane-dense folded conv output, bf16 (X = (wp|wd)*co)
    st       : (1, 1, 2, co) per-tile [sum, centred sumsq] over th*wd pixels
    """
    r = pl.program_id(1)
    c = xm_ref.shape[-1]
    co = w_ref.shape[-1]
    wp = wd + 2

    top = xt_ref[0]          # (1,  wp, c)
    mid = xm_ref[0]          # (th, wp, c)
    bot = xb_ref[0]          # (1,  wp, c)

    if pre_act:
        # BN1 affine + ReLU fused into the conv2 input load.  scale/shift are zero
        # in the pad columns so the width zero-padding stays exactly zero.
        sc = sc_ref[...]
        sh = sh_ref[...]
        top = jnp.maximum(top * sc + sh, 0.0)
        mid = jnp.maximum(mid * sc + sh, 0.0).astype(jnp.bfloat16)
        bot = jnp.maximum(bot * sc + sh, 0.0)

    # Halo rows outside the image are the conv's zero padding (the halo index_maps
    # clamp at the edge; a scalar mask on the 1-row halos replaces the old slab mask).
    top = (top * (r > 0).astype(jnp.float32)).astype(jnp.bfloat16)
    bot = (bot * (r < rt - 1).astype(jnp.float32)).astype(jnp.bfloat16)

    slab = jnp.concatenate([top, mid, bot], axis=0)            # (th+2, wp, c) bf16

    # dy folded into K via cheap axis-0 slices; K = 3*c.
    lhs = jnp.concatenate([slab[0:th], slab[1:th + 1], slab[2:th + 2]], axis=-1)
    lhs = lhs.reshape(th * wp, 3 * c)

    # dx handled as 3 accumulating MXU matmuls whose OUTPUT window is shifted by dx.
    acc = None
    for dx in range(3):
        z = jnp.dot(lhs, w_ref[dx], preferred_element_type=jnp.float32)
        z = z.reshape(th, wp, co)[:, dx:dx + wd, :]
        acc = z if acc is None else acc + z                    # (th, wd, co) f32

    # One-pass per-tile BN partials from the f32 accumulator: per-channel sum and
    # tile-mean-centred sum of squares (combined outside with the parallel formula).
    yf = acc.reshape(th * wd, co)
    s = jnp.sum(yf, axis=0, keepdims=True)                     # (1, co)
    d = yf - s * (1.0 / (th * wd))
    q = jnp.sum(d * d, axis=0, keepdims=True)
    st_ref[...] = jnp.concatenate([s, q], axis=0).reshape(1, 1, 2, co)

    # Lane-dense (width*channels folded) bf16 store.  Stage 1 re-emits the width
    # zero-pad columns so the next conv stage needs no in-kernel padding.
    yflat = acc.reshape(th, wd * co)
    if pad_out:
        zc = jnp.zeros((th, co), jnp.float32)
        yflat = jnp.concatenate([zc, yflat, zc], axis=-1)      # (th, wp*co)
    y_ref[...] = yflat.reshape(1, th, yflat.shape[-1]).astype(jnp.bfloat16)


def _make_conv_kernel(*, th, wd, rt, pre_act, pad_out):
    if pre_act:
        def kern(xt, xm, xb, sc, sh, w, y, st):
            _conv_body(xt, xm, xb, sc, sh, w, y, st, th=th, wd=wd, rt=rt,
                       pre_act=True, pad_out=pad_out)
    else:
        def kern(xt, xm, xb, w, y, st):
            _conv_body(xt, xm, xb, None, None, w, y, st, th=th, wd=wd, rt=rt,
                       pre_act=False, pad_out=pad_out)
    return kern


def _bn_relu_kernel(y_ref, sc_ref, sh_ref, o_ref):
    """Lane-dense BN2 affine + ReLU on a (rows, W*C) folded view (bf16 in, f32 out)."""
    o_ref[...] = jnp.maximum(y_ref[...] * sc_ref[...] + sh_ref[...], 0.0)


# --------------------------------------------------------------------------
# Wrapper stages
# --------------------------------------------------------------------------
def _conv_bn_stage(x, wk, scale_w, shift_w, *, pre_act, tile_h, pad_out, vmem_limit):
    n, h, wp, c = x.shape
    wd = wp - 2
    co = wk.shape[-1]
    rt = h // tile_h
    xcols = (wp if pad_out else wd) * co

    kern = _make_conv_kernel(th=tile_h, wd=wd, rt=rt, pre_act=pre_act, pad_out=pad_out)

    top_spec = pl.BlockSpec(
        (1, 1, wp, c), lambda ni, ri: (ni, jnp.maximum(ri * tile_h - 1, 0), 0, 0))
    mid_spec = pl.BlockSpec((1, tile_h, wp, c), lambda ni, ri: (ni, ri, 0, 0))
    bot_spec = pl.BlockSpec(
        (1, 1, wp, c), lambda ni, ri: (ni, jnp.minimum(ri * tile_h + tile_h, h - 1), 0, 0))

    in_specs = [top_spec, mid_spec, bot_spec]
    args = [x, x, x]
    if pre_act:
        in_specs += [_resident_spec((1, wp, c)), _resident_spec((1, wp, c))]
        args += [scale_w, shift_w]
    in_specs += [_resident_spec(tuple(wk.shape))]
    args += [wk]

    flops = 2 * n * h * wd * 9 * c * co
    bytes_accessed = int(x.size * 2 + wk.size * 2 + n * h * xcols * 2
                         + n * rt * 2 * co * 4)

    y, stats = pl.pallas_call(
        kern,
        grid=(n, rt),
        in_specs=in_specs,
        out_specs=(pl.BlockSpec((1, tile_h, xcols), lambda ni, ri: (ni, ri, 0)),
                   pl.BlockSpec((1, 1, 2, co), lambda ni, ri: (ni, ri, 0, 0))),
        out_shape=(jax.ShapeDtypeStruct((n, h, xcols), jnp.bfloat16),
                   jax.ShapeDtypeStruct((n, rt, 2, co), jnp.float32)),
        compiler_params=pltpu.CompilerParams(
            dimension_semantics=("parallel", "parallel"),
            vmem_limit_bytes=vmem_limit),
        cost_estimate=pl.CostEstimate(flops=flops, transcendentals=0,
                                      bytes_accessed=bytes_accessed),
    )(*args)
    return y, stats


def _finalize_bn(stats, tile_count, total_count, gamma, beta):
    """Combine per-tile (sum, centred sumsq) -> fused BN scale/shift (per channel)."""
    s = stats[:, :, 0, :].astype(jnp.float32)          # (n, rt, c)
    q = stats[:, :, 1, :].astype(jnp.float32)
    mean = jnp.sum(s, axis=(0, 1)) / total_count
    tmean = s / tile_count
    m2 = jnp.sum(q, axis=(0, 1)) + tile_count * jnp.sum((tmean - mean) ** 2, axis=(0, 1))
    var = m2 / total_count                             # biased (PyTorch train-mode BN)
    scale = gamma.astype(jnp.float32) * lax.rsqrt(var + EPS)
    shift = beta.astype(jnp.float32) - mean * scale
    return scale, shift


def _bn_relu_stage(y, scale, shift, *, w, c, vmem_limit, budget):
    n, h, wc = y.shape                                 # wc = w * c, lane-dense
    rows = _pick_rows(h, wc, budget)
    rt = h // rows
    scf = jnp.tile(scale.reshape(-1), w).reshape(1, 1, wc).astype(jnp.float32)
    shf = jnp.tile(shift.reshape(-1), w).reshape(1, 1, wc).astype(jnp.float32)

    return pl.pallas_call(
        _bn_relu_kernel,
        grid=(n, rt),
        in_specs=[pl.BlockSpec((1, rows, wc), lambda ni, ri: (ni, ri, 0)),
                  _resident_spec((1, 1, wc)),
                  _resident_spec((1, 1, wc))],
        out_specs=pl.BlockSpec((1, rows, wc), lambda ni, ri: (ni, ri, 0)),
        out_shape=jax.ShapeDtypeStruct((n, h, wc), jnp.float32),
        compiler_params=pltpu.CompilerParams(
            dimension_semantics=("parallel", "parallel"),
            vmem_limit_bytes=vmem_limit),
        cost_estimate=pl.CostEstimate(flops=2 * n * h * wc, transcendentals=0,
                                      bytes_accessed=int(n * h * wc * (2 + 4))),
    )(y, scf, shf)


def vgg_block(x_nchw, params):
    """params = (w1, b1, g1, be1, w2, b2, g2, be2) with PyTorch shapes:
       w*: (Cout, Cin, 3, 3), b*/g*/be*: (C,).  Conv biases are algebraically
       cancelled by training-mode BatchNorm, so the kernels never read b1/b2."""
    w1, _b1, g1, be1, w2, _b2, g2, be2 = params
    n, cin, h, w = x_nchw.shape
    cmid, cout = w1.shape[0], w2.shape[0]
    wp = w + 2

    vmem_limit = _vmem_limit_bytes()
    budget = int(vmem_limit * 0.75)

    # NCHW -> NHWC + conv1's zero width-padding + bf16 cast, fused in XLA.
    # TODO(synk): keep NHWC end-to-end across the UNet so this transpose (and the
    # final NHWC->NCHW one) disappears from the per-block cost.
    x = jnp.transpose(x_nchw, (0, 2, 3, 1))
    x = jnp.pad(x, ((0, 0), (0, 0), (1, 1), (0, 0))).astype(jnp.bfloat16)

    # PyTorch (co, ci, kh, kw) -> (kw(dx), kh(dy)*ci, co): dy folded into K,
    # dx indexes the three accumulating matmuls.  Full Cout kept per matmul.
    wk1 = jnp.transpose(w1, (3, 2, 1, 0)).reshape(3, 3 * cin, cmid).astype(jnp.bfloat16)
    wk2 = jnp.transpose(w2, (3, 2, 1, 0)).reshape(3, 3 * cmid, cout).astype(jnp.bfloat16)

    # Pass 1: conv1, per-tile BN1 partials (output written width-padded + bf16).
    th1 = _pick_tile_h(h, lambda t: _conv_vmem_bytes(t, w, cin, cmid, True), budget)
    y1, st1 = _conv_bn_stage(x, wk1, None, None, pre_act=False, tile_h=th1,
                             pad_out=True, vmem_limit=vmem_limit)
    scale1, shift1 = _finalize_bn(st1, th1 * w, n * h * w, g1, be1)

    # Fused BN1 scale/shift, zeroed at the pad columns so the conv2 kernel's affine
    # keeps the zero padding exactly zero.
    scw = jnp.pad(jnp.broadcast_to(scale1.reshape(1, 1, cmid), (1, w, cmid)),
                  ((0, 0), (1, 1), (0, 0)))
    shw = jnp.pad(jnp.broadcast_to(shift1.reshape(1, 1, cmid), (1, w, cmid)),
                  ((0, 0), (1, 1), (0, 0)))

    # Pass 2: BN1+ReLU fused into the input load, conv2, per-tile BN2 partials.
    y1_4d = y1.reshape(n, h, wp, cmid)          # free view of the lane-folded buffer
    th2 = _pick_tile_h(h, lambda t: _conv_vmem_bytes(t, w, cmid, cout, False), budget)
    y2, st2 = _conv_bn_stage(y1_4d, wk2, scw, shw, pre_act=True, tile_h=th2,
                             pad_out=False, vmem_limit=vmem_limit)
    scale2, shift2 = _finalize_bn(st2, th2 * w, n * h * w, g2, be2)

    # Pass 3: BN2 + ReLU (lane-dense elementwise, own row tiling).
    out = _bn_relu_stage(y2, scale2, shift2, w=w, c=cout,
                         vmem_limit=vmem_limit, budget=budget)
    out = out.reshape(n, h, w, cout)
    return jnp.transpose(out, (0, 3, 1, 2)).astype(jnp.float32)


# --------------------------------------------------------------------------
# Pure-JAX reference (PyTorch training-mode forward; convs use bf16 inputs with
# f32 accumulation to match the MXU; intermediates otherwise f32).
# --------------------------------------------------------------------------
def _ref_forward(x, params):
    w1, b1, g1, be1, w2, b2, g2, be2 = params

    def conv(x, w, b):
        y = lax.conv_general_dilated(
            x.astype(jnp.bfloat16), w.astype(jnp.bfloat16),
            window_strides=(1, 1), padding=((1, 1), (1, 1)),
            dimension_numbers=("NCHW", "OIHW", "NCHW"),
            preferred_element_type=jnp.float32)
        return y + b[None, :, None, None]

    def bn(y, g, be):
        mu = jnp.mean(y, axis=(0, 2, 3), keepdims=True)
        var = jnp.mean((y - mu) ** 2, axis=(0, 2, 3), keepdims=True)
        return ((y - mu) * lax.rsqrt(var + EPS)
                * g[None, :, None, None] + be[None, :, None, None])

    hmid = jnp.maximum(bn(conv(x, w1, b1), g1, be1), 0.0)
    return jnp.maximum(bn(conv(hmid, w2, b2), g2, be2), 0.0)


if __name__ == "__main__":
    N, Cin, Cmid, Cout, H, W = 2, 4, 8, 4, 16, 16

    key = jax.random.PRNGKey(0)
    ks = jax.random.split(key, 9)

    x = jax.random.normal(ks[0], (N, Cin, H, W), jnp.float32)

    # Shapes match nn.Conv2d / nn.BatchNorm2d parameters.
    w1 = 0.1 * jax.random.normal(ks[1], (Cmid, Cin, 3, 3), jnp.float32)
    b1 = 0.1 * jax.random.normal(ks[2], (Cmid,), jnp.float32)
    g1 = 1.0 + 0.1 * jax.random.normal(ks[3], (Cmid,), jnp.float32)
    be1 = 0.1 * jax.random.normal(ks[4], (Cmid,), jnp.float32)
    w2 = 0.1 * jax.random.normal(ks[5], (Cout, Cmid, 3, 3), jnp.float32)
    b2 = 0.1 * jax.random.normal(ks[6], (Cout,), jnp.float32)
    g2 = 1.0 + 0.1 * jax.random.normal(ks[7], (Cout,), jnp.float32)
    be2 = 0.1 * jax.random.normal(ks[8], (Cout,), jnp.float32)

    params = (w1, b1, g1, be1, w2, b2, g2, be2)

    out = jax.block_until_ready(jax.jit(vgg_block)(x, params))
    ref = jax.block_until_ready(_ref_forward(x, params))

    assert out.shape == (N, Cout, H, W), out.shape
    max_err = float(jnp.max(jnp.abs(out - ref)))
    # bf16 activation storage + MXU bf16 inputs vs. the mostly-f32 reference.
    assert jnp.allclose(out, ref, atol=3e-2, rtol=3e-2), f"max_err={max_err}"
    print("KERNEL_OK")
</pallas_src>

<mosaic_0001>
module attributes {stable_mosaic.version = 11 : i64} {
  func.func @kern(%arg0: i32, %arg1: i32, %arg2: memref<1x1x18x4xbf16, #tpu.memory_space<vmem>>, %arg3: memref<1x8x18x4xbf16, #tpu.memory_space<vmem>>, %arg4: memref<1x1x18x4xbf16, #tpu.memory_space<vmem>>, %arg5: memref<3x12x8xbf16, #tpu.memory_space<vmem>>, %arg6: memref<1x8x144xbf16, #tpu.memory_space<vmem>>, %arg7: memref<1x1x2x8xf32, #tpu.memory_space<vmem>>) attributes {dimension_semantics = [#tpu.dimension_semantics<parallel>, #tpu.dimension_semantics<parallel>], iteration_bounds = array<i64: 2, 2>, scalar_prefetch = 0 : i64, scratch_operands = 0 : i64, tpu.core_type = #tpu.core_type<tc>, window_params = [{transform_indices = @transform_0, window_bounds = array<i64: 1, 1, 18, 4>}, {transform_indices = @transform_1, window_bounds = array<i64: 1, 8, 18, 4>}, {transform_indices = @transform_2, window_bounds = array<i64: 1, 1, 18, 4>}, {pipeline_mode = #tpu.pipeline_mode<synchronous>, transform_indices = @transform_3, window_bounds = array<i64: 3, 12, 8>}, {transform_indices = @transform_4, window_bounds = array<i64: 1, 8, 144>}, {transform_indices = @transform_5, window_bounds = array<i64: 1, 1, 2, 8>}]} {
    %c0 = arith.constant 0 : index
    %c0_0 = arith.constant 0 : index
    %c0_1 = arith.constant 0 : index
    %c0_2 = arith.constant 0 : index
    %0 = vector.load %arg2[%c0, %c0_0, %c0_1, %c0_2] : memref<1x1x18x4xbf16, #tpu.memory_space<vmem>>, vector<1x1x18x4xbf16>
    %1 = vector.shape_cast %0 : vector<1x1x18x4xbf16> to vector<1x18x4xbf16>
    %c0_3 = arith.constant 0 : index
    %c0_4 = arith.constant 0 : index
    %c0_5 = arith.constant 0 : index
    %c0_6 = arith.constant 0 : index
    %2 = vector.load %arg3[%c0_3, %c0_4, %c0_5, %c0_6] : memref<1x8x18x4xbf16, #tpu.memory_space<vmem>>, vector<1x8x18x4xbf16>
    %3 = vector.shape_cast %2 : vector<1x8x18x4xbf16> to vector<8x18x4xbf16>
    %c0_7 = arith.constant 0 : index
    %c0_8 = arith.constant 0 : index
    %c0_9 = arith.constant 0 : index
    %c0_10 = arith.constant 0 : index
    %4 = vector.load %arg4[%c0_7, %c0_8, %c0_9, %c0_10] : memref<1x1x18x4xbf16, #tpu.memory_space<vmem>>, vector<1x1x18x4xbf16>
    %5 = vector.shape_cast %4 : vector<1x1x18x4xbf16> to vector<1x18x4xbf16>
    %c0_i32 = arith.constant 0 : i32
    %6 = arith.cmpi sgt, %arg1, %c0_i32 : i32
    %7 = arith.extui %6 : i1 to i32
    %8 = arith.sitofp %7 : i32 to f32
    %9 = arith.extf %1 : vector<1x18x4xbf16> to vector<1x18x4xf32>
    %10 = vector.broadcast %8 : f32 to vector<1x18x4xf32>
    %11 = arith.mulf %9, %10 : vector<1x18x4xf32>
    %12 = arith.truncf %11 : vector<1x18x4xf32> to vector<1x18x4xbf16>
    %c1_i32 = arith.constant 1 : i32
    %13 = arith.cmpi slt, %arg1, %c1_i32 : i32
    %14 = arith.extui %13 : i1 to i32
    %15 = arith.sitofp %14 : i32 to f32
    %16 = arith.extf %5 : vector<1x18x4xbf16> to vector<1x18x4xf32>
    %17 = vector.broadcast %15 : f32 to vector<1x18x4xf32>
    %18 = arith.mulf %16, %17 : vector<1x18x4xf32>
    %19 = arith.truncf %18 : vector<1x18x4xf32> to vector<1x18x4xbf16>
    %20 = tpu.concatenate %12, %3, %19 in 0 : vector<1x18x4xbf16>, vector<8x18x4xbf16>, vector<1x18x4xbf16> -> vector<10x18x4xbf16>
    %21 = vector.extract_strided_slice %20 {offsets = [0, 0, 0], sizes = [8, 18, 4], strides = [1, 1, 1]} : vector<10x18x4xbf16> to vector<8x18x4xbf16>
    %22 = vector.extract_strided_slice %20 {offsets = [1, 0, 0], sizes = [8, 18, 4], strides = [1, 1, 1]} : vector<10x18x4xbf16> to vector<8x18x4xbf16>
    %23 = vector.extract_strided_slice %20 {offsets = [2, 0, 0], sizes = [8, 18, 4], strides = [1, 1, 1]} : vector<10x18x4xbf16> to vector<8x18x4xbf16>
    %24 = tpu.concatenate %21, %22, %23 in 2 : vector<8x18x4xbf16>, vector<8x18x4xbf16>, vector<8x18x4xbf16> -> vector<8x18x12xbf16>
    %25 = vector.shape_cast %24 : vector<8x18x12xbf16> to vector<144x12xbf16>
    %c0_11 = arith.constant 0 : index
    %c0_12 = arith.constant 0 : index
    %c0_13 = arith.constant 0 : index
    %26 = vector.load %arg5[%c0_11, %c0_12, %c0_13] : memref<3x12x8xbf16, #tpu.memory_space<vmem>>, vector<1x12x8xbf16>
    %27 = vector.shape_cast %26 : vector<1x12x8xbf16> to vector<12x8xbf16>
    %cst = arith.constant dense<0.000000e+00> : vector<144x8xf32>
    %28 = tpu.matmul %25, %27, %cst {dimension_numbers = #tpu.dot_dimension_numbers<[1], [0], [0], [1], [0, 0, 1, 1], [], []>} : vector<144x12xbf16>, vector<12x8xbf16>, vector<144x8xf32> -> vector<144x8xf32>
    %29 = vector.shape_cast %28 : vector<144x8xf32> to vector<8x18x8xf32>
    %30 = vector.extract_strided_slice %29 {offsets = [0, 0, 0], sizes = [8, 16, 8], strides = [1, 1, 1]} : vector<8x18x8xf32> to vector<8x16x8xf32>
    %c1 = arith.constant 1 : index
    %c0_14 = arith.constant 0 : index
    %c0_15 = arith.constant 0 : index
    %31 = vector.load %arg5[%c1, %c0_14, %c0_15] : memref<3x12x8xbf16, #tpu.memory_space<vmem>>, vector<1x12x8xbf16>
    %32 = vector.shape_cast %31 : vector<1x12x8xbf16> to vector<12x8xbf16>
    %cst_16 = arith.constant dense<0.000000e+00> : vector<144x8xf32>
    %33 = tpu.matmul %25, %32, %cst_16 {dimension_numbers = #tpu.dot_dimension_numbers<[1], [0], [0], [1], [0, 0, 1, 1], [], []>} : vector<144x12xbf16>, vector<12x8xbf16>, vector<144x8xf32> -> vector<144x8xf32>
    %34 = vector.shape_cast %33 : vector<144x8xf32> to vector<8x18x8xf32>
    %35 = vector.extract_strided_slice %34 {offsets = [0, 1, 0], sizes = [8, 16, 8], strides = [1, 1, 1]} : vector<8x18x8xf32> to vector<8x16x8xf32>
    %36 = arith.addf %30, %35 : vector<8x16x8xf32>
    %c2 = arith.constant 2 : index
    %c0_17 = arith.constant 0 : index
    %c0_18 = arith.constant 0 : index
    %37 = vector.load %arg5[%c2, %c0_17, %c0_18] : memref<3x12x8xbf16, #tpu.memory_space<vmem>>, vector<1x12x8xbf16>
    %38 = vector.shape_cast %37 : vector<1x12x8xbf16> to vector<12x8xbf16>
    %cst_19 = arith.constant dense<0.000000e+00> : vector<144x8xf32>
    %39 = tpu.matmul %25, %38, %cst_19 {dimension_numbers = #tpu.dot_dimension_numbers<[1], [0], [0], [1], [0, 0, 1, 1], [], []>} : vector<144x12xbf16>, vector<12x8xbf16>, vector<144x8xf32> -> vector<144x8xf32>
    %40 = vector.shape_cast %39 : vector<144x8xf32> to vector<8x18x8xf32>
    %41 = vector.extract_strided_slice %40 {offsets = [0, 2, 0], sizes = [8, 16, 8], strides = [1, 1, 1]} : vector<8x18x8xf32> to vector<8x16x8xf32>
    %42 = arith.addf %36, %41 : vector<8x16x8xf32>
    %43 = vector.shape_cast %42 : vector<8x16x8xf32> to vector<128x8xf32>
    %cst_20 = arith.constant dense<0.000000e+00> : vector<8xf32>
    %44 = vector.multi_reduction <add>, %43, %cst_20 [0] : vector<128x8xf32> to vector<8xf32>
    %45 = vector.shape_cast %44 : vector<8xf32> to vector<1x8xf32>
    %cst_21 = arith.constant 7.812500e-03 : f32
    %46 = vector.broadcast %cst_21 : f32 to vector<1x8xf32>
    %47 = arith.mulf %45, %46 : vector<1x8xf32>
    %48 = vector.broadcast %47 : vector<1x8xf32> to vector<128x8xf32>
    %49 = arith.subf %43, %48 : vector<128x8xf32>
    %50 = arith.mulf %49, %49 : vector<128x8xf32>
    %cst_22 = arith.constant dense<0.000000e+00> : vector<8xf32>
    %51 = vector.multi_reduction <add>, %50, %cst_22 [0] : vector<128x8xf32> to vector<8xf32>
    %52 = vector.shape_cast %51 : vector<8xf32> to vector<1x8xf32>
    %53 = tpu.concatenate %45, %52 in 0 : vector<1x8xf32>, vector<1x8xf32> -> vector<2x8xf32>
    %54 = vector.shape_cast %53 : vector<2x8xf32> to vector<1x1x2x8xf32>
    %c0_23 = arith.constant 0 : index
    %c0_24 = arith.constant 0 : index
    %c0_25 = arith.constant 0 : index
    %c0_26 = arith.constant 0 : index
    %55 = vector.load %arg7[%c0_23, %c0_24, %c0_25, %c0_26] : memref<1x1x2x8xf32, #tpu.memory_space<vmem>>, vector<1x1x2x8xf32>
    tpu.vector_store %arg7[%c0_23, %c0_24, %c0_25, %c0_26], %54 {strides = array<i32>} : memref<1x1x2x8xf32, #tpu.memory_space<vmem>>, vector<1x1x2x8xf32>,
    %56 = vector.shape_cast %42 : vector<8x16x8xf32> to vector<8x128xf32>
    %cst_27 = arith.constant 0.000000e+00 : f32
    %57 = vector.broadcast %cst_27 : f32 to vector<8x8xf32>
    %58 = tpu.concatenate %57, %56, %57 in 1 : vector<8x8xf32>, vector<8x128xf32>, vector<8x8xf32> -> vector<8x144xf32>
    %59 = vector.shape_cast %58 : vector<8x144xf32> to vector<1x8x144xf32>
    %60 = arith.truncf %59 : vector<1x8x144xf32> to vector<1x8x144xbf16>
    %c0_28 = arith.constant 0 : index
    %c0_29 = arith.constant 0 : index
    %c0_30 = arith.constant 0 : index
    %61 = vector.load %arg6[%c0_28, %c0_29, %c0_30] : memref<1x8x144xbf16, #tpu.memory_space<vmem>>, vector<1x8x144xbf16>
    tpu.vector_store %arg6[%c0_28, %c0_29, %c0_30], %60 {strides = array<i32>} : memref<1x8x144xbf16, #tpu.memory_space<vmem>>, vector<1x8x144xbf16>,
    return
  }
  func.func @transform_0(%arg0: i32, %arg1: i32) -> (i32, i32, i32, i32) {
    %c8_i32 = arith.constant 8 : i32
    %0 = arith.muli %arg1, %c8_i32 : i32
    %c1_i32 = arith.constant 1 : i32
    %1 = arith.subi %0, %c1_i32 : i32
    %c0_i32 = arith.constant 0 : i32
    %2 = arith.maxsi %1, %c0_i32 : i32
    %c0_i32_0 = arith.constant 0 : i32
    %c0_i32_1 = arith.constant 0 : i32
    %c0_i32_2 = arith.constant 0 : i32
    return %arg0, %2, %c0_i32_0, %c0_i32_1 : i32, i32, i32, i32
  }
  func.func @transform_1(%arg0: i32, %arg1: i32) -> (i32, i32, i32, i32) {
    %c0_i32 = arith.constant 0 : i32
    %c0_i32_0 = arith.constant 0 : i32
    %c0_i32_1 = arith.constant 0 : i32
    return %arg0, %arg1, %c0_i32, %c0_i32_0 : i32, i32, i32, i32
  }
  func.func @transform_2(%arg0: i32, %arg1: i32) -> (i32, i32, i32, i32) {
    %c8_i32 = arith.constant 8 : i32
    %0 = arith.muli %arg1, %c8_i32 : i32
    %c8_i32_0 = arith.constant 8 : i32
    %1 = arith.addi %0, %c8_i32_0 : i32
    %c15_i32 = arith.constant 15 : i32
    %2 = arith.minsi %1, %c15_i32 : i32
    %c0_i32 = arith.constant 0 : i32
    %c0_i32_1 = arith.constant 0 : i32
    %c0_i32_2 = arith.constant 0 : i32
    return %arg0, %2, %c0_i32, %c0_i32_1 : i32, i32, i32, i32
  }
  func.func @transform_3(%arg0: i32, %arg1: i32) -> (i32, i32, i32) {
    %c0_i32 = arith.constant 0 : i32
    %c0_i32_0 = arith.constant 0 : i32
    %c0_i32_1 = arith.constant 0 : i32
    %c0_i32_2 = arith.constant 0 : i32
    return %c0_i32, %c0_i32_0, %c0_i32_1 : i32, i32, i32
  }
  func.func @transform_4(%arg0: i32, %arg1: i32) -> (i32, i32, i32) {
    %c0_i32 = arith.constant 0 : i32
    %c0_i32_0 = arith.constant 0 : i32
    return %arg0, %arg1, %c0_i32 : i32, i32, i32
  }
  func.func @transform_5(%arg0: i32, %arg1: i32) -> (i32, i32, i32, i32) {
    %c0_i32 = arith.constant 0 : i32
    %c0_i32_0 = arith.constant 0 : i32
    %c0_i32_1 = arith.constant 0 : i32
    return %arg0, %arg1, %c0_i32, %c0_i32_0 : i32, i32, i32, i32
  }
}

module attributes {stable_mosaic.version = 11 : i64} {
  func.func @kern(%arg0: i32, %arg1: i32, %arg2: memref<1x1x18x8xbf16, #tpu.memory_space<vmem>>, %arg3: memref<1x8x18x8xbf16, #tpu.memory_space<vmem>>, %arg4: memref<1x1x18x8xbf16, #tpu.memory_space<vmem>>, %arg5: memref<1x18x8xf32, #tpu.memory_space<vmem>>, %arg6: memref<1x18x8xf32, #tpu.memory_space<vmem>>, %arg7: memref<3x24x4xbf16, #tpu.memory_space<vmem>>, %arg8: memref<1x8x64xbf16, #tpu.memory_space<vmem>>, %arg9: memref<1x1x2x4xf32, #tpu.memory_space<vmem>>) attributes {dimension_semantics = [#tpu.dimension_semantics<parallel>, #tpu.dimension_semantics<parallel>], iteration_bounds = array<i64: 2, 2>, scalar_prefetch = 0 : i64, scratch_operands = 0 : i64, tpu.core_type = #tpu.core_type<tc>, window_params = [{transform_indices = @transform_0, window_bounds = array<i64: 1, 1, 18, 8>}, {transform_indices = @transform_1, window_bounds = array<i64: 1, 8, 18, 8>}, {transform_indices = @transform_2, window_bounds = array<i64: 1, 1, 18, 8>}, {pipeline_mode = #tpu.pipeline_mode<synchronous>, transform_indices = @transform_3, window_bounds = array<i64: 1, 18, 8>}, {pipeline_mode = #tpu.pipeline_mode<synchronous>, transform_indices = @transform_4, window_bounds = array<i64: 1, 18, 8>}, {pipeline_mode = #tpu.pipeline_mode<synchronous>, transform_indices = @transform_5, window_bounds = array<i64: 3, 24, 4>}, {transform_indices = @transform_6, window_bounds = array<i64: 1, 8, 64>}, {transform_indices = @transform_7, window_bounds = array<i64: 1, 1, 2, 4>}]} {
    %c0 = arith.constant 0 : index
    %c0_0 = arith.constant 0 : index
    %c0_1 = arith.constant 0 : index
    %c0_2 = arith.constant 0 : index
    %0 = vector.load %arg2[%c0, %c0_0, %c0_1, %c0_2] : memref<1x1x18x8xbf16, #tpu.memory_space<vmem>>, vector<1x1x18x8xbf16>
    %1 = vector.shape_cast %0 : vector<1x1x18x8xbf16> to vector<1x18x8xbf16>
    %c0_3 = arith.constant 0 : index
    %c0_4 = arith.constant 0 : index
    %c0_5 = arith.constant 0 : index
    %c0_6 = arith.constant 0 : index
    %2 = vector.load %arg3[%c0_3, %c0_4, %c0_5, %c0_6] : memref<1x8x18x8xbf16, #tpu.memory_space<vmem>>, vector<1x8x18x8xbf16>
    %3 = vector.shape_cast %2 : vector<1x8x18x8xbf16> to vector<8x18x8xbf16>
    %c0_7 = arith.constant 0 : index
    %c0_8 = arith.constant 0 : index
    %c0_9 = arith.constant 0 : index
    %c0_10 = arith.constant 0 : index
    %4 = vector.load %arg4[%c0_7, %c0_8, %c0_9, %c0_10] : memref<1x1x18x8xbf16, #tpu.memory_space<vmem>>, vector<1x1x18x8xbf16>
    %5 = vector.shape_cast %4 : vector<1x1x18x8xbf16> to vector<1x18x8xbf16>
    %c0_11 = arith.constant 0 : index
    %c0_12 = arith.constant 0 : index
    %c0_13 = arith.constant 0 : index
    %6 = vector.load %arg5[%c0_11, %c0_12, %c0_13] : memref<1x18x8xf32, #tpu.memory_space<vmem>>, vector<1x18x8xf32>
    %c0_14 = arith.constant 0 : index
    %c0_15 = arith.constant 0 : index
    %c0_16 = arith.constant 0 : index
    %7 = vector.load %arg6[%c0_14, %c0_15, %c0_16] : memref<1x18x8xf32, #tpu.memory_space<vmem>>, vector<1x18x8xf32>
    %8 = arith.extf %1 : vector<1x18x8xbf16> to vector<1x18x8xf32>
    %9 = arith.mulf %8, %6 : vector<1x18x8xf32>
    %10 = arith.addf %9, %7 : vector<1x18x8xf32>
    %cst = arith.constant 0.000000e+00 : f32
    %11 = vector.broadcast %cst : f32 to vector<1x18x8xf32>
    %12 = arith.maximumf %10, %11 : vector<1x18x8xf32>
    %13 = arith.extf %3 : vector<8x18x8xbf16> to vector<8x18x8xf32>
    %14 = vector.broadcast %6 : vector<1x18x8xf32> to vector<8x18x8xf32>
    %15 = arith.mulf %13, %14 : vector<8x18x8xf32>
    %16 = vector.broadcast %7 : vector<1x18x8xf32> to vector<8x18x8xf32>
    %17 = arith.addf %15, %16 : vector<8x18x8xf32>
    %cst_17 = arith.constant 0.000000e+00 : f32
    %18 = vector.broadcast %cst_17 : f32 to vector<8x18x8xf32>
    %19 = arith.maximumf %17, %18 : vector<8x18x8xf32>
    %20 = arith.truncf %19 : vector<8x18x8xf32> to vector<8x18x8xbf16>
    %21 = arith.extf %5 : vector<1x18x8xbf16> to vector<1x18x8xf32>
    %22 = arith.mulf %21, %6 : vector<1x18x8xf32>
    %23 = arith.addf %22, %7 : vector<1x18x8xf32>
    %cst_18 = arith.constant 0.000000e+00 : f32
    %24 = vector.broadcast %cst_18 : f32 to vector<1x18x8xf32>
    %25 = arith.maximumf %23, %24 : vector<1x18x8xf32>
    %c0_i32 = arith.constant 0 : i32
    %26 = arith.cmpi sgt, %arg1, %c0_i32 : i32
    %27 = arith.extui %26 : i1 to i32
    %28 = arith.sitofp %27 : i32 to f32
    %29 = vector.broadcast %28 : f32 to vector<1x18x8xf32>
    %30 = arith.mulf %12, %29 : vector<1x18x8xf32>
    %31 = arith.truncf %30 : vector<1x18x8xf32> to vector<1x18x8xbf16>
    %c1_i32 = arith.constant 1 : i32
    %32 = arith.cmpi slt, %arg1, %c1_i32 : i32
    %33 = arith.extui %32 : i1 to i32
    %34 = arith.sitofp %33 : i32 to f32
    %35 = vector.broadcast %34 : f32 to vector<1x18x8xf32>
    %36 = arith.mulf %25, %35 : vector<1x18x8xf32>
    %37 = arith.truncf %36 : vector<1x18x8xf32> to vector<1x18x8xbf16>
    %38 = tpu.concatenate %31, %20, %37 in 0 : vector<1x18x8xbf16>, vector<8x18x8xbf16>, vector<1x18x8xbf16> -> vector<10x18x8xbf16>
    %39 = vector.extract_strided_slice %38 {offsets = [0, 0, 0], sizes = [8, 18, 8], strides = [1, 1, 1]} : vector<10x18x8xbf16> to vector<8x18x8xbf16>
    %40 = vector.extract_strided_slice %38 {offsets = [1, 0, 0], sizes = [8, 18, 8], strides = [1, 1, 1]} : vector<10x18x8xbf16> to vector<8x18x8xbf16>
    %41 = vector.extract_strided_slice %38 {offsets = [2, 0, 0], sizes = [8, 18, 8], strides = [1, 1, 1]} : vector<10x18x8xbf16> to vector<8x18x8xbf16>
    %42 = tpu.concatenate %39, %40, %41 in 2 : vector<8x18x8xbf16>, vector<8x18x8xbf16>, vector<8x18x8xbf16> -> vector<8x18x24xbf16>
    %43 = vector.shape_cast %42 : vector<8x18x24xbf16> to vector<144x24xbf16>
    %c0_19 = arith.constant 0 : index
    %c0_20 = arith.constant 0 : index
    %c0_21 = arith.constant 0 : index
    %44 = vector.load %arg7[%c0_19, %c0_20, %c0_21] : memref<3x24x4xbf16, #tpu.memory_space<vmem>>, vector<1x24x4xbf16>
    %45 = vector.shape_cast %44 : vector<1x24x4xbf16> to vector<24x4xbf16>
    %cst_22 = arith.constant dense<0.000000e+00> : vector<144x4xf32>
    %46 = tpu.matmul %43, %45, %cst_22 {dimension_numbers = #tpu.dot_dimension_numbers<[1], [0], [0], [1], [0, 0, 1, 1], [], []>} : vector<144x24xbf16>, vector<24x4xbf16>, vector<144x4xf32> -> vector<144x4xf32>
    %47 = vector.shape_cast %46 : vector<144x4xf32> to vector<8x18x4xf32>
    %48 = vector.extract_strided_slice %47 {offsets = [0, 0, 0], sizes = [8, 16, 4], strides = [1, 1, 1]} : vector<8x18x4xf32> to vector<8x16x4xf32>
    %c1 = arith.constant 1 : index
    %c0_23 = arith.constant 0 : index
    %c0_24 = arith.constant 0 : index
    %49 = vector.load %arg7[%c1, %c0_23, %c0_24] : memref<3x24x4xbf16, #tpu.memory_space<vmem>>, vector<1x24x4xbf16>
    %50 = vector.shape_cast %49 : vector<1x24x4xbf16> to vector<24x4xbf16>
    %cst_25 = arith.constant dense<0.000000e+00> : vector<144x4xf32>
    %51 = tpu.matmul %43, %50, %cst_25 {dimension_numbers = #tpu.dot_dimension_numbers<[1], [0], [0], [1], [0, 0, 1, 1], [], []>} : vector<144x24xbf16>, vector<24x4xbf16>, vector<144x4xf32> -> vector<144x4xf32>
    %52 = vector.shape_cast %51 : vector<144x4xf32> to vector<8x18x4xf32>
    %53 = vector.extract_strided_slice %52 {offsets = [0, 1, 0], sizes = [8, 16, 4], strides = [1, 1, 1]} : vector<8x18x4xf32> to vector<8x16x4xf32>
    %54 = arith.addf %48, %53 : vector<8x16x4xf32>
    %c2 = arith.constant 2 : index
    %c0_26 = arith.constant 0 : index
    %c0_27 = arith.constant 0 : index
    %55 = vector.load %arg7[%c2, %c0_26, %c0_27] : memref<3x24x4xbf16, #tpu.memory_space<vmem>>, vector<1x24x4xbf16>
    %56 = vector.shape_cast %55 : vector<1x24x4xbf16> to vector<24x4xbf16>
    %cst_28 = arith.constant dense<0.000000e+00> : vector<144x4xf32>
    %57 = tpu.matmul %43, %56, %cst_28 {dimension_numbers = #tpu.dot_dimension_numbers<[1], [0], [0], [1], [0, 0, 1, 1], [], []>} : vector<144x24xbf16>, vector<24x4xbf16>, vector<144x4xf32> -> vector<144x4xf32>
    %58 = vector.shape_cast %57 : vector<144x4xf32> to vector<8x18x4xf32>
    %59 = vector.extract_strided_slice %58 {offsets = [0, 2, 0], sizes = [8, 16, 4], strides = [1, 1, 1]} : vector<8x18x4xf32> to vector<8x16x4xf32>
    %60 = arith.addf %54, %59 : vector<8x16x4xf32>
    %61 = vector.shape_cast %60 : vector<8x16x4xf32> to vector<128x4xf32>
    %cst_29 = arith.constant dense<0.000000e+00> : vector<4xf32>
    %62 = vector.multi_reduction <add>, %61, %cst_29 [0] : vector<128x4xf32> to vector<4xf32>
    %63 = vector.shape_cast %62 : vector<4xf32> to vector<1x4xf32>
    %cst_30 = arith.constant 7.812500e-03 : f32
    %64 = vector.broadcast %cst_30 : f32 to vector<1x4xf32>
    %65 = arith.mulf %63, %64 : vector<1x4xf32>
    %66 = vector.broadcast %65 : vector<1x4xf32> to vector<128x4xf32>
    %67 = arith.subf %61, %66 : vector<128x4xf32>
    %68 = arith.mulf %67, %67 : vector<128x4xf32>
    %cst_31 = arith.constant dense<0.000000e+00> : vector<4xf32>
    %69 = vector.multi_reduction <add>, %68, %cst_31 [0] : vector<128x4xf32> to vector<4xf32>
    %70 = vector.shape_cast %69 : vector<4xf32> to vector<1x4xf32>
    %71 = tpu.concatenate %63, %70 in 0 : vector<1x4xf32>, vector<1x4xf32> -> vector<2x4xf32>
    %72 = vector.shape_cast %71 : vector<2x4xf32> to vector<1x1x2x4xf32>
    %c0_32 = arith.constant 0 : index
    %c0_33 = arith.constant 0 : index
    %c0_34 = arith.constant 0 : index
    %c0_35 = arith.constant 0 : index
    %73 = vector.load %arg9[%c0_32, %c0_33, %c0_34, %c0_35] : memref<1x1x2x4xf32, #tpu.memory_space<vmem>>, vector<1x1x2x4xf32>
    tpu.vector_store %arg9[%c0_32, %c0_33, %c0_34, %c0_35], %72 {strides = array<i32>} : memref<1x1x2x4xf32, #tpu.memory_space<vmem>>, vector<1x1x2x4xf32>,
    %74 = vector.shape_cast %60 : vector<8x16x4xf32> to vector<8x64xf32>
    %75 = vector.shape_cast %74 : vector<8x64xf32> to vector<1x8x64xf32>
    %76 = arith.truncf %75 : vector<1x8x64xf32> to vector<1x8x64xbf16>
    %c0_36 = arith.constant 0 : index
    %c0_37 = arith.constant 0 : index
    %c0_38 = arith.constant 0 : index
    %77 = vector.load %arg8[%c0_36, %c0_37, %c0_38] : memref<1x8x64xbf16, #tpu.memory_space<vmem>>, vector<1x8x64xbf16>
    tpu.vector_store %arg8[%c0_36, %c0_37, %c0_38], %76 {strides = array<i32>} : memref<1x8x64xbf16, #tpu.memory_space<vmem>>, vector<1x8x64xbf16>,
    return
  }
  func.func @transform_0(%arg0: i32, %arg1: i32) -> (i32, i32, i32, i32) {
    %c8_i32 = arith.constant 8 : i32
    %0 = arith.muli %arg1, %c8_i32 : i32
    %c1_i32 = arith.constant 1 : i32
    %1 = arith.subi %0, %c1_i32 : i32
    %c0_i32 = arith.constant 0 : i32
    %2 = arith.maxsi %1, %c0_i32 : i32
    %c0_i32_0 = arith.constant 0 : i32
    %c0_i32_1 = arith.constant 0 : i32
    %c0_i32_2 = arith.constant 0 : i32
    return %arg0, %2, %c0_i32_0, %c0_i32_1 : i32, i32, i32, i32
  }
  func.func @transform_1(%arg0: i32, %arg1: i32) -> (i32, i32, i32, i32) {
    %c0_i32 = arith.constant 0 : i32
    %c0_i32_0 = arith.constant 0 : i32
    %c0_i32_1 = arith.constant 0 : i32
    return %arg0, %arg1, %c0_i32, %c0_i32_0 : i32, i32, i32, i32
  }
  func.func @transform_2(%arg0: i32, %arg1: i32) -> (i32, i32, i32, i32) {
    %c8_i32 = arith.constant 8 : i32
    %0 = arith.muli %arg1, %c8_i32 : i32
    %c8_i32_0 = arith.constant 8 : i32
    %1 = arith.addi %0, %c8_i32_0 : i32
    %c15_i32 = arith.constant 15 : i32
    %2 = arith.minsi %1, %c15_i32 : i32
    %c0_i32 = arith.constant 0 : i32
    %c0_i32_1 = arith.constant 0 : i32
    %c0_i32_2 = arith.constant 0 : i32
    return %arg0, %2, %c0_i32, %c0_i32_1 : i32, i32, i32, i32
  }
  func.func @transform_3(%arg0: i32, %arg1: i32) -> (i32, i32, i32) {
    %c0_i32 = arith.constant 0 : i32
    %c0_i32_0 = arith.constant 0 : i32
    %c0_i32_1 = arith.constant 0 : i32
    %c0_i32_2 = arith.constant 0 : i32
    return %c0_i32, %c0_i32_0, %c0_i32_1 : i32, i32, i32
  }
  func.func @transform_4(%arg0: i32, %arg1: i32) -> (i32, i32, i32) {
    %c0_i32 = arith.constant 0 : i32
    %c0_i32_0 = arith.constant 0 : i32
    %c0_i32_1 = arith.constant 0 : i32
    %c0_i32_2 = arith.constant 0 : i32
    return %c0_i32, %c0_i32_0, %c0_i32_1 : i32, i32, i32
  }
  func.func @transform_5(%arg0: i32, %arg1: i32) -> (i32, i32, i32) {
    %c0_i32 = arith.constant 0 : i32
    %c0_i32_0 = arith.constant 0 : i32
    %c0_i32_1 = arith.constant 0 : i32
    %c0_i32_2 = arith.constant 0 : i32
    return %c0_i32, %c0_i32_0, %c0_i32_1 : i32, i32, i32
  }
  func.func @transform_6(%arg0: i32, %arg1: i32) -> (i32, i32, i32) {
    %c0_i32 = arith.constant 0 : i32
    %c0_i32_0 = arith.constant 0 : i32
    return %arg0, %arg1, %c0_i32 : i32, i32, i32
  }
  func.func @transform_7(%arg0: i32, %arg1: i32) -> (i32, i32, i32, i32) {
    %c0_i32 = arith.constant 0 : i32
    %c0_i32_0 = arith.constant 0 : i32
    %c0_i32_1 = arith.constant 0 : i32
    return %arg0, %arg1, %c0_i32, %c0_i32_0 : i32, i32, i32, i32
  }
}

module attributes {stable_mosaic.version = 11 : i64} {
  func.func @_bn_relu_kernel(%arg0: i32, %arg1: i32, %arg2: memref<1x8x64xbf16, #tpu.memory_space<vmem>>, %arg3: memref<1x1x64xf32, #tpu.memory_space<vmem>>, %arg4: memref<1x1x64xf32, #tpu.memory_space<vmem>>, %arg5: memref<1x8x64xf32, #tpu.memory_space<vmem>>) attributes {dimension_semantics = [#tpu.dimension_semantics<parallel>, #tpu.dimension_semantics<parallel>], iteration_bounds = array<i64: 2, 2>, scalar_prefetch = 0 : i64, scratch_operands = 0 : i64, tpu.core_type = #tpu.core_type<tc>, window_params = [{transform_indices = @transform_0, window_bounds = array<i64: 1, 8, 64>}, {pipeline_mode = #tpu.pipeline_mode<synchronous>, transform_indices = @transform_1, window_bounds = array<i64: 1, 1, 64>}, {pipeline_mode = #tpu.pipeline_mode<synchronous>, transform_indices = @transform_2, window_bounds = array<i64: 1, 1, 64>}, {transform_indices = @transform_3, window_bounds = array<i64: 1, 8, 64>}]} {
    %c0 = arith.constant 0 : index
    %c0_0 = arith.constant 0 : index
    %c0_1 = arith.constant 0 : index
    %0 = vector.load %arg2[%c0, %c0_0, %c0_1] : memref<1x8x64xbf16, #tpu.memory_space<vmem>>, vector<1x8x64xbf16>
    %c0_2 = arith.constant 0 : index
    %c0_3 = arith.constant 0 : index
    %c0_4 = arith.constant 0 : index
    %1 = vector.load %arg3[%c0_2, %c0_3, %c0_4] : memref<1x1x64xf32, #tpu.memory_space<vmem>>, vector<1x1x64xf32>
    %2 = arith.extf %0 : vector<1x8x64xbf16> to vector<1x8x64xf32>
    %3 = vector.broadcast %1 : vector<1x1x64xf32> to vector<1x8x64xf32>
    %4 = arith.mulf %2, %3 : vector<1x8x64xf32>
    %c0_5 = arith.constant 0 : index
    %c0_6 = arith.constant 0 : index
    %c0_7 = arith.constant 0 : index
    %5 = vector.load %arg4[%c0_5, %c0_6, %c0_7] : memref<1x1x64xf32, #tpu.memory_space<vmem>>, vector<1x1x64xf32>
    %6 = vector.broadcast %5 : vector<1x1x64xf32> to vector<1x8x64xf32>
    %7 = arith.addf %4, %6 : vector<1x8x64xf32>
    %cst = arith.constant 0.000000e+00 : f32
    %8 = vector.broadcast %cst : f32 to vector<1x8x64xf32>
    %9 = arith.maximumf %7, %8 : vector<1x8x64xf32>
    %c0_8 = arith.constant 0 : index
    %c0_9 = arith.constant 0 : index
    %c0_10 = arith.constant 0 : index
    %10 = vector.load %arg5[%c0_8, %c0_9, %c0_10] : memref<1x8x64xf32, #tpu.memory_space<vmem>>, vector<1x8x64xf32>
    tpu.vector_store %arg5[%c0_8, %c0_9, %c0_10], %9 {strides = array<i32>} : memref<1x8x64xf32, #tpu.memory_space<vmem>>, vector<1x8x64xf32>,
    return
  }
  func.func @transform_0(%arg0: i32, %arg1: i32) -> (i32, i32, i32) {
    %c0_i32 = arith.constant 0 : i32
    %c0_i32_0 = arith.constant 0 : i32
    return %arg0, %arg1, %c0_i32 : i32, i32, i32
  }
  func.func @transform_1(%arg0: i32, %arg1: i32) -> (i32, i32, i32) {
    %c0_i32 = arith.constant 0 : i32
    %c0_i32_0 = arith.constant 0 : i32
    %c0_i32_1 = arith.constant 0 : i32
    %c0_i32_2 = arith.constant 0 : i32
    return %c0_i32, %c0_i32_0, %c0_i32_1 : i32, i32, i32
  }
  func.func @transform_2(%arg0: i32, %arg1: i32) -> (i32, i32, i32) {
    %c0_i32 = arith.constant 0 : i32
    %c0_i32_0 = arith.constant 0 : i32
    %c0_i32_1 = arith.constant 0 : i32
    %c0_i32_2 = arith.constant 0 : i32
    return %c0_i32, %c0_i32_0, %c0_i32_1 : i32, i32, i32
  }
  func.func @transform_3(%arg0: i32, %arg1: i32) -> (i32, i32, i32) {
    %c0_i32 = arith.constant 0 : i32
    %c0_i32_0 = arith.constant 0 : i32
    return %arg0, %arg1, %c0_i32 : i32, i32, i32
  }
}

</mosaic_0001>

<llo_original>
// kernel: tile.13
$region0: #{tile.13}
  #allocation0 [shape = 's32[1]{0}', space=sflag, size = 0x4, scoped, tag = 'scoped memory for tile.13']
  %s0 = inlined_call_operand.vmem [shape: f32[4], index: 0, kind: input, shape index: {}]
  %s1 = inlined_call_operand.vmem [shape: f32[16,4], index: 1, kind: output, shape index: {}]
  // Predicated region
  $region2: #{tile.13} parent=0 // pred_check
    _
  $region3: #{tile.13} parent=0 // pred_check_branch
    %3 = sbr.rel (0) target = $region5
  $region4: #{tile.13} parent=0 // pred_region
    _
  $region5: #{tile.13} parent=0 // pred_fallthru
    _
  %v4 = vld [vmem:[%s0] ss:$0 sm:$0xff]
  %5 = vst [vmem:[%s1] sm:$0xff] %v4
  %s6 = scalar_lea.vmem %s1, 8
  %7 = vst [vmem:[%s6] sm:$0xff] %v4

// kernel: tile.14
$region0: #{tile.14}
  %s0 = inlined_call_operand.vmem [shape: f32[16,4], index: 0, kind: input, shape index: {}]
  %s1 = inlined_call_operand.vmem [shape: f32[1,1,64], index: 1, kind: output, shape index: {}]
  $region1: #{tile.14} parent=0
    #allocation0 [shape = 'u8[4096]{0}', space=vmem, size = 0x1000, scoped, tag = 'scoped mem for output reshape']
    %v2 = vld [vmem:[%s0] sm:$0x1]
    %vm3 = vcmask 31744
    %4 = vst.msk [vmem:[#allocation0] sm:$0x1] %vm3, %v2
    %s5 = scalar_lea.vmem %s0, 15
    %v6 = vld [vmem:[%s5] sm:$0x1]
    %7 = vrot.lane.b32.xlu0 %v6, 60
    %v8 = vpop.permute.xlu0 %7
    %vm9 = vcmask 523744
    %10 = vst.msk [vmem:[#allocation0] sm:$0x1] %vm9, %v8
    %s11 = scalar_lea.vmem %s0, 14
    %v12 = vld [vmem:[%s11] sm:$0x1]
    %13 = vrot.lane.b32.xlu0 %v12, 56
    %v14 = vpop.permute.xlu0 %13
    %vm15 = vcmask 490944
    %16 = vst.msk [vmem:[#allocation0] sm:$0x1] %vm15, %v14
    %s17 = scalar_lea.vmem %s0, 13
    %v18 = vld [vmem:[%s17] sm:$0x1]
    %19 = vrot.lane.b32.xlu0 %v18, 52
    %v20 = vpop.permute.xlu0 %19
    %vm21 = vcmask 458144
    %22 = vst.msk [vmem:[#allocation0] sm:$0x1] %vm21, %v20
    %s23 = scalar_lea.vmem %s0, 12
    %v24 = vld [vmem:[%s23] sm:$0x1]
    %25 = vrot.lane.b32.xlu0 %v24, 48
    %v26 = vpop.permute.xlu0 %25
    %vm27 = vcmask 425344
    %28 = vst.msk [vmem:[#allocation0] sm:$0x1] %vm27, %v26
    %s29 = scalar_lea.vmem %s0, 11
    %v30 = vld [vmem:[%s29] sm:$0x1]
    %31 = vrot.lane.b32.xlu0 %v30, 44
    %v32 = vpop.permute.xlu0 %31
    %vm33 = vcmask 392544
    %34 = vst.msk [vmem:[#allocation0] sm:$0x1] %vm33, %v32
    %s35 = scalar_lea.vmem %s0, 10
    %v36 = vld [vmem:[%s35] sm:$0x1]
    %37 = vrot.lane.b32.xlu0 %v36, 40
    %v38 = vpop.permute.xlu0 %37
    %vm39 = vcmask 359744
    %40 = vst.msk [vmem:[#allocation0] sm:$0x1] %vm39, %v38
    %s41 = scalar_lea.vmem %s0, 9
    %v42 = vld [vmem:[%s41] sm:$0x1]
    %43 = vrot.lane.b32.xlu0 %v42, 36
    %v44 = vpop.permute.xlu0 %43
    %vm45 = vcmask 326944
    %46 = vst.msk [vmem:[#allocation0] sm:$0x1] %vm45, %v44
    %s47 = scalar_lea.vmem %s0, 8
    %v48 = vld [vmem:[%s47] sm:$0x1]
    %49 = vrot.lane.b32.xlu0 %v48, 32
    %v50 = vpop.permute.xlu0 %49
    %vm51 = vcmask 294144
    %52 = vst.msk [vmem:[#allocation0] sm:$0x1] %vm51, %v50
    %s53 = scalar_lea.vmem %s0, 7
    %v54 = vld [vmem:[%s53] sm:$0x1]
    %55 = vrot.lane.b32.xlu0 %v54, 28
    %v56 = vpop.permute.xlu0 %55
    %vm57 = vcmask 261344
    %58 = vst.msk [vmem:[#allocation0] sm:$0x1] %vm57, %v56
    %s59 = scalar_lea.vmem %s0, 6
    %v60 = vld [vmem:[%s59] sm:$0x1]
    %61 = vrot.lane.b32.xlu0 %v60, 24
    %v62 = vpop.permute.xlu0 %61
    %vm63 = vcmask 228544
    %64 = vst.msk [vmem:[#allocation0] sm:$0x1] %vm63, %v62
    %s65 = scalar_lea.vmem %s0, 5
    %v66 = vld [vmem:[%s65] sm:$0x1]
    %67 = vrot.lane.b32.xlu0 %v66, 20
    %v68 = vpop.permute.xlu0 %67
    %vm69 = vcmask 195744
    %70 = vst.msk [vmem:[#allocation0] sm:$0x1] %vm69, %v68
    %s71 = scalar_lea.vmem %s0, 4
    %v72 = vld [vmem:[%s71] sm:$0x1]
    %73 = vrot.lane.b32.xlu0 %v72, 16
    %v74 = vpop.permute.xlu0 %73
    %vm75 = vcmask 162944
    %76 = vst.msk [vmem:[#allocation0] sm:$0x1] %vm75, %v74
    %s77 = scalar_lea.vmem %s0, 3
    %v78 = vld [vmem:[%s77] sm:$0x1]
    %79 = vrot.lane.b32.xlu0 %v78, 12
    %v80 = vpop.permute.xlu0 %79
    %vm81 = vcmask 130144
    %82 = vst.msk [vmem:[#allocation0] sm:$0x1] %vm81, %v80
    %s83 = scalar_lea.vmem %s0, 2
    %v84 = vld [vmem:[%s83] sm:$0x1]
    %85 = vrot.lane.b32.xlu0 %v84, 8
    %v86 = vpop.permute.xlu0 %85
    %vm87 = vcmask 97344
    %88 = vst.msk [vmem:[#allocation0] sm:$0x1] %vm87, %v86
    %s89 = scalar_lea.vmem %s0, 1
    %v90 = vld [vmem:[%s89] sm:$0x1]
    %91 = vrot.lane.b32.xlu0 %v90, 4
    %v92 = vpop.permute.xlu0 %91
    %vm93 = vcmask 64544
    %94 = vst.msk [vmem:[#allocation0] sm:$0x1] %vm93, %v92
    %s96 = sshll.u32 1, 1
    %s97 = ssub.s32 %s96, 1
    %v99 = vld [vmem:[#allocation0] sm:%s97]
    %s100 = sshll.u32 1, 1
    %s101 = ssub.s32 %s100, 1
    %102 = vst [vmem:[%s1] sm:%s101] %v99

// kernel: vgg_block.5
$region0: #{vgg_block.5}
  #allocation0 [shape = 'u32[]', space=smem, size = 0x4, offset = 0x4, fixed_abs, tag = 'smem constant byte address 0x4 - core index']
  #allocation1 [shape = 'u32[144,128]{1,0:T(1,128)}', space=vmem, size = 0x12000, scoped, tag = 'internal scratch']
  %s0 = inlined_call_operand.vmem [shape: bf16[2,16,64], index: 0, kind: input, shape index: {}]
  %s1 = inlined_call_operand.vmem [shape: f32[1,1,64], index: 1, kind: input, shape index: {}]
  %s2 = inlined_call_operand.vmem [shape: f32[1,1,64], index: 2, kind: input, shape index: {}]
  %s3 = inlined_call_operand.vmem [shape: f32[2,16,64], index: 3, kind: output, shape index: {}]
  %s4 = sld [smem:[#allocation0]]
  $region45: #{vgg_block.5} parent=0
    _
  %s6 = ssub.s32 1, %s4
  %s7 = scalar_select 0, %s6, %s4
  loop: start=0, step=1, limit=6
  $region2: #{vgg_block.5} parent=0 // loop_pre_header
    _
  $region3: #{vgg_block.5} parent=0 // loop_header
    %s9 = sphi 0, %s13
    %p10 = scmp.ge.s32.totalorder %s9, 6
    %s16 = sphi 0, %s28
    %s17 = sphi 0, %s24
    %s18 = sphi 0, %s16
    %s19 = sphi 0, %s17
    %s20 = sphi 0, %s18
    %s21 = sphi 0, %s19
    %s33 = sphi 0, %s35
    %s36 = sphi 0, %s33
    %s37 = sphi 0, %s36
    %s53 = sphi 0, %s37
    %s57 = sphi 0, %s57
    %s59 = sphi 0, %s57
    %s60 = sphi 0, %s59
    %s74 = sphi 0, %s60
    %s78 = sphi 0, %s78
    %s80 = sphi 0, %s78
    %s81 = sphi 0, %s80
    %s95 = sphi 0, %s81
    %s103 = sphi 0, %s105
    %s106 = sphi 0, %s103
    %s107 = sphi 0, %s106
    %s123 = sphi 0, %s107
  $region4: #{vgg_block.5} parent=0 // loop_header_branch
    %12 = sbr.rel (%p10) target = $region8
  $region5: #{vgg_block.5} parent=0 // loop_body
    %s14 = ssub.s32 %s9, 1
    %s15 = ssub.s32 %s9, 2
    %s22 = sadd.s32 1, %s17
    %p23 = scmp.ge.s32.totalorder %s22, 2
    %s24 = scalar_select %p23, 0, %s22
    %s25 = sadd.s32 1, %s16
    %s26 = scalar_select %p23, %s25, %s16
    %p27 = scmp.ge.s32.totalorder %s26, 2
    %s28 = scalar_select %p27, 0, %s26
    %s29 = ssub.s32 %s16, %s28
    %s30 = ssub.s32 %s17, %s24
    %s31 = sor.u32 %s29, %s30
    %p32 = scmp.eq.s32.totalorder %s31, 0
    %s34 = sadd.s32 %s33, 1
    %s35 = scalar_select %p32, %s33, %s34
    %p38 = pneg %p32
    %p39 = scmp.eq.s32.totalorder %s9, 3
    %p40 = por %p38, %p39
    %p41 = scmp.ne.s32.totalorder %s33, %s36
    %p42 = scmp.eq.s32.totalorder %s9, 0
    %p43 = por %p41, %p42
    %p44 = scmp.ne.s32.totalorder %s33, %s36
    %p45 = scmp.eq.s32.totalorder %s14, 3
    %p46 = por %p44, %p45
    %p47 = scmp.ne.s32.totalorder %s36, %s37
    %p48 = scmp.eq.s32.totalorder %s14, 0
    %p49 = por %p47, %p48
    %p50 = scmp.ne.s32.totalorder %s36, %s37
    %p51 = scmp.eq.s32.totalorder %s15, 3
    %p52 = por %p50, %p51
    %p54 = scmp.ne.s32.totalorder %s37, %s53
    %p55 = scmp.eq.s32.totalorder %s15, 0
    %p56 = por %p54, %p55
    %s58 = sadd.s32 %s57, 1
    %p61 = scmp.eq.s32.totalorder %s9, 3
    %p62 = scmp.ne.s32.totalorder %s57, %s59
    %p63 = scmp.eq.s32.totalorder %s9, 0
    %p64 = por %p62, %p63
    %p65 = scmp.ne.s32.totalorder %s57, %s59
    %p66 = scmp.eq.s32.totalorder %s14, 3
    %p67 = por %p65, %p66
    %p68 = scmp.ne.s32.totalorder %s59, %s60
    %p69 = scmp.eq.s32.totalorder %s14, 0
    %p70 = por %p68, %p69
    %p71 = scmp.ne.s32.totalorder %s59, %s60
    %p72 = scmp.eq.s32.totalorder %s15, 3
    %p73 = por %p71, %p72
    %p75 = scmp.ne.s32.totalorder %s60, %s74
    %p76 = scmp.eq.s32.totalorder %s15, 0
    %p77 = por %p75, %p76
    %s79 = sadd.s32 %s78, 1
    %p82 = scmp.eq.s32.totalorder %s9, 3
    %p83 = scmp.ne.s32.totalorder %s78, %s80
    %p84 = scmp.eq.s32.totalorder %s9, 0
    %p85 = por %p83, %p84
    %p86 = scmp.ne.s32.totalorder %s78, %s80
    %p87 = scmp.eq.s32.totalorder %s14, 3
    %p88 = por %p86, %p87
    %p89 = scmp.ne.s32.totalorder %s80, %s81
    %p90 = scmp.eq.s32.totalorder %s14, 0
    %p91 = por %p89, %p90
    %p92 = scmp.ne.s32.totalorder %s80, %s81
    %p93 = scmp.eq.s32.totalorder %s15, 3
    %p94 = por %p92, %p93
    %p96 = scmp.ne.s32.totalorder %s81, %s95
    %p97 = scmp.eq.s32.totalorder %s15, 0
    %p98 = por %p96, %p97
    %s99 = ssub.s32 %s16, %s28
    %s100 = ssub.s32 %s17, %s24
    %s101 = sor.u32 %s99, %s100
    %p102 = scmp.eq.s32.totalorder %s101, 0
    %s104 = sadd.s32 %s103, 1
    %s105 = scalar_select %p102, %s103, %s104
    %p108 = pneg %p102
    %p109 = scmp.eq.s32.totalorder %s9, 3
    %p110 = por %p108, %p109
    %p111 = scmp.ne.s32.totalorder %s103, %s106
    %p112 = scmp.eq.s32.totalorder %s9, 0
    %p113 = por %p111, %p112
    %p114 = scmp.ne.s32.totalorder %s103, %s106
    %p115 = scmp.eq.s32.totalorder %s14, 3
    %p116 = por %p114, %p115
    %p117 = scmp.ne.s32.totalorder %s106, %s107
    %p118 = scmp.eq.s32.totalorder %s14, 0
    %p119 = por %p117, %p118
    %p120 = scmp.ne.s32.totalorder %s106, %s107
    %p121 = scmp.eq.s32.totalorder %s15, 3
    %p122 = por %p120, %p121
    %p124 = scmp.ne.s32.totalorder %s107, %s123
    %p125 = scmp.eq.s32.totalorder %s15, 0
    %p126 = por %p124, %p125
    %p127 = scmp.le.s32.totalorder 1, %s9
    %p128 = scmp.lt.s32.totalorder %s9, 5
    %p129 = pnand %p127, %p128
    %p130 = pneg %p129
    // Predicated region
    $region9: #{vgg_block.5} parent=5 // pred_check
      _
    $region10: #{vgg_block.5} parent=5 // pred_check_branch
      %132 = sbr.rel (%p129) target = $region12
    $region11: #{vgg_block.5} parent=5 // pred_region
      %s133 = ssub.s32 %s9, 1
      // Predicated region
      $region13: #{vgg_block.5} parent=11 // pred_check
        %p134 = pneg %p70
      $region14: #{vgg_block.5} parent=11 // pred_check_branch
        %136 = sbr.rel (%p134) target = $region16
      $region15: #{vgg_block.5} parent=11 // pred_region
        _
      $region16: #{vgg_block.5} parent=11 // pred_fallthru
        _
      // Predicated region
      $region17: #{vgg_block.5} parent=11 // pred_check
        %p137 = pneg %p91
      $region18: #{vgg_block.5} parent=11 // pred_check_branch
        %139 = sbr.rel (%p137) target = $region20
      $region19: #{vgg_block.5} parent=11 // pred_region
        _
      $region20: #{vgg_block.5} parent=11 // pred_fallthru
        _
    $region12: #{vgg_block.5} parent=5 // pred_fallthru
      _
    %p140 = scmp.lt.s32.totalorder %s9, 4
    // Predicated region
    $region21: #{vgg_block.5} parent=5 // pred_check
      %p141 = pneg %p140
    $region22: #{vgg_block.5} parent=5 // pred_check_branch
      %143 = sbr.rel (%p141) target = $region24
    $region23: #{vgg_block.5} parent=5 // pred_region
      // Predicated region
      $region25: #{vgg_block.5} parent=23 // pred_check
        %p144 = pneg %p43
      $region26: #{vgg_block.5} parent=23 // pred_check_branch
        %146 = sbr.rel (%p144) target = $region28
      $region27: #{vgg_block.5} parent=23 // pred_region
        %p147 = scmp.lt.s32.totalorder %s16, 1
        %s148 = scalar_select %p147, %s16, 1
        %p149 = scmp.lt.s32.totalorder %s17, 1
        %s150 = scalar_select %p149, %s17, 1
        %s151 = smul.addr %s148, 2
        %s152 = sadd.s32 %s150, %s151
        %s153 = smul.addr %s152, 4
        %s154 = scalar_lea.vmem %s0, %s153
      $region28: #{vgg_block.5} parent=23 // pred_fallthru
        _
    $region24: #{vgg_block.5} parent=5 // pred_fallthru
      _
    %p155 = scmp.le.s32.totalorder 1, %s9
    %p156 = scmp.lt.s32.totalorder %s9, 5
    %p157 = pnand %p155, %p156
    %p158 = pneg %p157
    // Predicated region
    $region29: #{vgg_block.5} parent=5 // pred_check
      _
    $region30: #{vgg_block.5} parent=5 // pred_check_branch
      %160 = sbr.rel (%p157) target = $region32
    $region31: #{vgg_block.5} parent=5 // pred_region
      %s161 = ssub.s32 %s9, 1
      %p162 = scmp.lt.s32.totalorder %s18, 1
      %s163 = scalar_select %p162, %s18, 1
      %p164 = scmp.lt.s32.totalorder %s19, 1
      %s165 = scalar_select %p164, %s19, 1
      %s166 = smul.addr %s163, 2
      %s167 = sadd.s32 %s165, %s166
      %s168 = smul.addr %s167, 4
      %s169 = scalar_lea.vmem %s0, %s168
      %p170 = pneg %p49
      %p171 = pneg %p46
      %p172 = pneg %p70
      %p173 = pneg %p67
      %p174 = pneg %p91
      %p175 = pneg %p88
      %p176 = pneg %p119
      %p177 = pneg %p116
      %p178 = scmp.lt.s32.totalorder %s18, 1
      %s179 = scalar_select %p178, %s18, 1
      %p180 = scmp.lt.s32.totalorder %s19, 1
      %s181 = scalar_select %p180, %s19, 1
      %s182 = smul.addr %s179, 2
      %s183 = sadd.s32 %s181, %s182
      %s184 = smul.addr %s183, 8
      %s185 = scalar_lea.vmem %s3, %s184
      %p186 = scmp.lt.s32.totalorder %s18, 1
      %s187 = scalar_select %p186, %s18, 1
      %p188 = scmp.lt.s32.totalorder %s19, 1
      %s189 = scalar_select %p188, %s19, 1
      %s190 = smul.addr %s187, 2
      %s191 = sadd.s32 %s189, %s190
      %s192 = smul.addr %s191, 4
      %s193 = scalar_lea.vmem %s0, %s192
      %p194 = scmp.lt.s32.totalorder %s18, 1
      %s195 = scalar_select %p194, %s18, 1
      %p196 = scmp.lt.s32.totalorder %s19, 1
      %s197 = scalar_select %p196, %s19, 1
      %s198 = smul.addr %s195, 2
      %s199 = sadd.s32 %s197, %s198
      %s200 = smul.addr %s199, 8
      %s201 = scalar_lea.vmem %s3, %s200
      %v202 = vld [vmem:[%s193] sm:$0xf]
      %v203 = vld [vmem:[%s1] sm:$0x1]
      %v204 = vunpack.c.l.bf16 %v202
      %v206 = vlaneseq
      %v207 = vshrl.u32 %v206, 7
      %v208 = vsub.s32 0, %v207
      %v209 = vrot.slane %v203, %v208
      %v211 = vmul.f32 %v204, %v209
      %v212 = vld [vmem:[%s2] sm:$0x1]
      %v214 = vlaneseq
      %v215 = vshrl.u32 %v214, 7
      %v216 = vsub.s32 0, %v215
      %v217 = vrot.slane %v212, %v216
      %v219 = vadd.f32 %v211, %v217
      %v220 = vmax.f32 %v219, 0.0
      %vm221 = vcmask 523264
      %222 = vst.msk [vmem:[%s201] sm:$0xff] %vm221, %v220
      %p223 = scmp.lt.s32.totalorder %s18, 1
      %s224 = scalar_select %p223, %s18, 1
      %p225 = scmp.lt.s32.totalorder %s19, 1
      %s226 = scalar_select %p225, %s19, 1
      %s227 = smul.addr %s224, 2
      %s228 = sadd.s32 %s226, %s227
      %s229 = smul.addr %s228, 8
      %s230 = scalar_lea.vmem %s3, %s229
      // Predicated region
      $region33: #{vgg_block.5} parent=31 // pred_check
        %p231 = pneg %p116
      $region34: #{vgg_block.5} parent=31 // pred_check_branch
        %233 = sbr.rel (%p231) target = $region36
      $region35: #{vgg_block.5} parent=31 // pred_region
        _
      $region36: #{vgg_block.5} parent=31 // pred_fallthru
        _
    $region32: #{vgg_block.5} parent=5 // pred_fallthru
      _
    %p234 = scmp.le.s32.totalorder 2, %s9
    // Predicated region
    $region37: #{vgg_block.5} parent=5 // pred_check
      %p235 = pneg %p234
    $region38: #{vgg_block.5} parent=5 // pred_check_branch
      %237 = sbr.rel (%p235) target = $region40
    $region39: #{vgg_block.5} parent=5 // pred_region
      %s238 = ssub.s32 %s9, 2
      // Predicated region
      $region41: #{vgg_block.5} parent=39 // pred_check
        %p239 = pneg %p122
      $region42: #{vgg_block.5} parent=39 // pred_check_branch
        %241 = sbr.rel (%p239) target = $region44
      $region43: #{vgg_block.5} parent=39 // pred_region
        %p242 = scmp.lt.s32.totalorder %s20, 1
        %s243 = scalar_select %p242, %s20, 1
        %p244 = scmp.lt.s32.totalorder %s21, 1
        %s245 = scalar_select %p244, %s21, 1
        %s246 = smul.addr %s243, 2
        %s247 = sadd.s32 %s245, %s246
        %s248 = smul.addr %s247, 8
        %s249 = scalar_lea.vmem %s3, %s248
      $region44: #{vgg_block.5} parent=39 // pred_fallthru
        _
    $region40: #{vgg_block.5} parent=5 // pred_fallthru
      _
  $region6: #{vgg_block.5} parent=0 // loop_footer
    %s13 = sadd.s32 1, %s9
  $region7: #{vgg_block.5} parent=0 // loop_footer_branch
    %8 = sbr.rel target = $region3
  $region8: #{vgg_block.5} parent=0 // loop_exit
    _

// kernel: vgg_block.3
$region0: #{vgg_block.3}
  #allocation0 [shape = 'u32[]', space=smem, size = 0x4, offset = 0x4, fixed_abs, tag = 'smem constant byte address 0x4 - core index']
  #allocation1 [shape = 'u32[144,128]{1,0:T(1,128)}', space=vmem, size = 0x12000, scoped, tag = 'internal scratch']
  %s0 = inlined_call_operand.vmem [shape: bf16[2,16,18,4], index: 0, kind: input, shape index: {}, may-alias: {0,1,2}]
  %s1 = inlined_call_operand.vmem [shape: bf16[2,16,18,4], index: 1, kind: input, shape index: {}, may-alias: {0,1,2}]
  %s2 = inlined_call_operand.vmem [shape: bf16[2,16,18,4], index: 2, kind: input, shape index: {}, may-alias: {0,1,2}]
  %s3 = inlined_call_operand.vmem [shape: bf16[3,12,8], index: 3, kind: input, shape index: {}]
  %s4 = inlined_call_operand.vmem [shape: bf16[2,16,144], index: 4, kind: output, shape index: {0}]
  %s5 = inlined_call_operand.vmem [shape: f32[2,2,2,8], index: 5, kind: output, shape index: {1}]
  %6 = xla_tuple %s4, %s5
  %s7 = sld [smem:[#allocation0]]
  $region57: #{vgg_block.3} parent=0
    _
  %s9 = ssub.s32 1, %s7
  %s10 = scalar_select 0, %s9, %s7
  loop: start=0, step=1, limit=6
  $region2: #{vgg_block.3} parent=0 // loop_pre_header
    _
  $region3: #{vgg_block.3} parent=0 // loop_header
    %s12 = sphi 0, %s16
    %p13 = scmp.ge.s32.totalorder %s12, 6
    %s19 = sphi 0, %s31
    %s20 = sphi 0, %s27
    %s21 = sphi 0, %s19
    %s22 = sphi 0, %s20
    %s23 = sphi 0, %s21
    %s24 = sphi 0, %s22
    %s44 = sphi 0, %s46
    %s47 = sphi 0, %s44
    %s48 = sphi 0, %s47
    %s64 = sphi 0, %s48
    %s72 = sphi 0, %s74
    %s75 = sphi 0, %s72
    %s76 = sphi 0, %s75
    %s92 = sphi 0, %s76
    %s108 = sphi 0, %s110
    %s111 = sphi 0, %s108
    %s112 = sphi 0, %s111
    %s128 = sphi 0, %s112
    %s132 = sphi 0, %s132
    %s134 = sphi 0, %s132
    %s135 = sphi 0, %s134
    %s149 = sphi 0, %s135
    %s157 = sphi 0, %s159
    %s160 = sphi 0, %s157
    %s161 = sphi 0, %s160
    %s177 = sphi 0, %s161
    %s185 = sphi 0, %s187
    %s188 = sphi 0, %s185
    %s189 = sphi 0, %s188
    %s205 = sphi 0, %s189
  $region4: #{vgg_block.3} parent=0 // loop_header_branch
    %15 = sbr.rel (%p13) target = $region8
  $region5: #{vgg_block.3} parent=0 // loop_body
    %s17 = ssub.s32 %s12, 1
    %s18 = ssub.s32 %s12, 2
    %s25 = sadd.s32 1, %s20
    %p26 = scmp.ge.s32.totalorder %s25, 2
    %s27 = scalar_select %p26, 0, %s25
    %s28 = sadd.s32 1, %s19
    %s29 = scalar_select %p26, %s28, %s19
    %p30 = scmp.ge.s32.totalorder %s29, 2
    %s31 = scalar_select %p30, 0, %s29
    %s32 = smul.u32 %s20, 8
    %s33 = ssub.s32 %s32, 1
    %p34 = scmp.gt.s32.totalorder %s33, 0
    %s35 = scalar_select %p34, %s33, 0
    %s36 = smul.u32 %s27, 8
    %s37 = ssub.s32 %s36, 1
    %p38 = scmp.gt.s32.totalorder %s37, 0
    %s39 = scalar_select %p38, %s37, 0
    %s40 = ssub.s32 %s19, %s31
    %s41 = ssub.s32 %s35, %s39
    %s42 = sor.u32 %s40, %s41
    %p43 = scmp.eq.s32.totalorder %s42, 0
    %s45 = sadd.s32 %s44, 1
    %s46 = scalar_select %p43, %s44, %s45
    %p49 = pneg %p43
    %p50 = scmp.eq.s32.totalorder %s12, 3
    %p51 = por %p49, %p50
    %p52 = scmp.ne.s32.totalorder %s44, %s47
    %p53 = scmp.eq.s32.totalorder %s12, 0
    %p54 = por %p52, %p53
    %p55 = scmp.ne.s32.totalorder %s44, %s47
    %p56 = scmp.eq.s32.totalorder %s17, 3
    %p57 = por %p55, %p56
    %p58 = scmp.ne.s32.totalorder %s47, %s48
    %p59 = scmp.eq.s32.totalorder %s17, 0
    %p60 = por %p58, %p59
    %p61 = scmp.ne.s32.totalorder %s47, %s48
    %p62 = scmp.eq.s32.totalorder %s18, 3
    %p63 = por %p61, %p62
    %p65 = scmp.ne.s32.totalorder %s48, %s64
    %p66 = scmp.eq.s32.totalorder %s18, 0
    %p67 = por %p65, %p66
    %s68 = ssub.s32 %s19, %s31
    %s69 = ssub.s32 %s20, %s27
    %s70 = sor.u32 %s68, %s69
    %p71 = scmp.eq.s32.totalorder %s70, 0
    %s73 = sadd.s32 %s72, 1
    %s74 = scalar_select %p71, %s72, %s73
    %p77 = pneg %p71
    %p78 = scmp.eq.s32.totalorder %s12, 3
    %p79 = por %p77, %p78
    %p80 = scmp.ne.s32.totalorder %s72, %s75
    %p81 = scmp.eq.s32.totalorder %s12, 0
    %p82 = por %p80, %p81
    %p83 = scmp.ne.s32.totalorder %s72, %s75
    %p84 = scmp.eq.s32.totalorder %s17, 3
    %p85 = por %p83, %p84
    %p86 = scmp.ne.s32.totalorder %s75, %s76
    %p87 = scmp.eq.s32.totalorder %s17, 0
    %p88 = por %p86, %p87
    %p89 = scmp.ne.s32.totalorder %s75, %s76
    %p90 = scmp.eq.s32.totalorder %s18, 3
    %p91 = por %p89, %p90
    %p93 = scmp.ne.s32.totalorder %s76, %s92
    %p94 = scmp.eq.s32.totalorder %s18, 0
    %p95 = por %p93, %p94
    %s96 = smul.u32 %s20, 8
    %s97 = sadd.s32 %s96, 8
    %p98 = scmp.lt.s32.totalorder %s97, 15
    %s99 = scalar_select %p98, %s97, 15
    %s100 = smul.u32 %s27, 8
    %s101 = sadd.s32 %s100, 8
    %p102 = scmp.lt.s32.totalorder %s101, 15
    %s103 = scalar_select %p102, %s101, 15
    %s104 = ssub.s32 %s19, %s31
    %s105 = ssub.s32 %s99, %s103
    %s106 = sor.u32 %s104, %s105
    %p107 = scmp.eq.s32.totalorder %s106, 0
    %s109 = sadd.s32 %s108, 1
    %s110 = scalar_select %p107, %s108, %s109
    %p113 = pneg %p107
    %p114 = scmp.eq.s32.totalorder %s12, 3
    %p115 = por %p113, %p114
    %p116 = scmp.ne.s32.totalorder %s108, %s111
    %p117 = scmp.eq.s32.totalorder %s12, 0
    %p118 = por %p116, %p117
    %p119 = scmp.ne.s32.totalorder %s108, %s111
    %p120 = scmp.eq.s32.totalorder %s17, 3
    %p121 = por %p119, %p120
    %p122 = scmp.ne.s32.totalorder %s111, %s112
    %p123 = scmp.eq.s32.totalorder %s17, 0
    %p124 = por %p122, %p123
    %p125 = scmp.ne.s32.totalorder %s111, %s112
    %p126 = scmp.eq.s32.totalorder %s18, 3
    %p127 = por %p125, %p126
    %p129 = scmp.ne.s32.totalorder %s112, %s128
    %p130 = scmp.eq.s32.totalorder %s18, 0
    %p131 = por %p129, %p130
    %s133 = sadd.s32 %s132, 1
    %p136 = scmp.eq.s32.totalorder %s12, 3
    %p137 = scmp.ne.s32.totalorder %s132, %s134
    %p138 = scmp.eq.s32.totalorder %s12, 0
    %p139 = por %p137, %p138
    %p140 = scmp.ne.s32.totalorder %s132, %s134
    %p141 = scmp.eq.s32.totalorder %s17, 3
    %p142 = por %p140, %p141
    %p143 = scmp.ne.s32.totalorder %s134, %s135
    %p144 = scmp.eq.s32.totalorder %s17, 0
    %p145 = por %p143, %p144
    %p146 = scmp.ne.s32.totalorder %s134, %s135
    %p147 = scmp.eq.s32.totalorder %s18, 3
    %p148 = por %p146, %p147
    %p150 = scmp.ne.s32.totalorder %s135, %s149
    %p151 = scmp.eq.s32.totalorder %s18, 0
    %p152 = por %p150, %p151
    %s153 = ssub.s32 %s19, %s31
    %s154 = ssub.s32 %s20, %s27
    %s155 = sor.u32 %s153, %s154
    %p156 = scmp.eq.s32.totalorder %s155, 0
    %s158 = sadd.s32 %s157, 1
    %s159 = scalar_select %p156, %s157, %s158
    %p162 = pneg %p156
    %p163 = scmp.eq.s32.totalorder %s12, 3
    %p164 = por %p162, %p163
    %p165 = scmp.ne.s32.totalorder %s157, %s160
    %p166 = scmp.eq.s32.totalorder %s12, 0
    %p167 = por %p165, %p166
    %p168 = scmp.ne.s32.totalorder %s157, %s160
    %p169 = scmp.eq.s32.totalorder %s17, 3
    %p170 = por %p168, %p169
    %p171 = scmp.ne.s32.totalorder %s160, %s161
    %p172 = scmp.eq.s32.totalorder %s17, 0
    %p173 = por %p171, %p172
    %p174 = scmp.ne.s32.totalorder %s160, %s161
    %p175 = scmp.eq.s32.totalorder %s18, 3
    %p176 = por %p174, %p175
    %p178 = scmp.ne.s32.totalorder %s161, %s177
    %p179 = scmp.eq.s32.totalorder %s18, 0
    %p180 = por %p178, %p179
    %s181 = ssub.s32 %s19, %s31
    %s182 = ssub.s32 %s20, %s27
    %s183 = sor.u32 %s181, %s182
    %p184 = scmp.eq.s32.totalorder %s183, 0
    %s186 = sadd.s32 %s185, 1
    %s187 = scalar_select %p184, %s185, %s186
    %p190 = pneg %p184
    %p191 = scmp.eq.s32.totalorder %s12, 3
    %p192 = por %p190, %p191
    %p193 = scmp.ne.s32.totalorder %s185, %s188
    %p194 = scmp.eq.s32.totalorder %s12, 0
    %p195 = por %p193, %p194
    %p196 = scmp.ne.s32.totalorder %s185, %s188
    %p197 = scmp.eq.s32.totalorder %s17, 3
    %p198 = por %p196, %p197
    %p199 = scmp.ne.s32.totalorder %s188, %s189
    %p200 = scmp.eq.s32.totalorder %s17, 0
    %p201 = por %p199, %p200
    %p202 = scmp.ne.s32.totalorder %s188, %s189
    %p203 = scmp.eq.s32.totalorder %s18, 3
    %p204 = por %p202, %p203
    %p206 = scmp.ne.s32.totalorder %s189, %s205
    %p207 = scmp.eq.s32.totalorder %s18, 0
    %p208 = por %p206, %p207
    %p209 = scmp.le.s32.totalorder 1, %s12
    %p210 = scmp.lt.s32.totalorder %s12, 5
    %p211 = pnand %p209, %p210
    %p212 = pneg %p211
    // Predicated region
    $region9: #{vgg_block.3} parent=5 // pred_check
      _
    $region10: #{vgg_block.3} parent=5 // pred_check_branch
      %214 = sbr.rel (%p211) target = $region12
    $region11: #{vgg_block.3} parent=5 // pred_region
      %s215 = ssub.s32 %s12, 1
      // Predicated region
      $region13: #{vgg_block.3} parent=11 // pred_check
        %p216 = pneg %p145
      $region14: #{vgg_block.3} parent=11 // pred_check_branch
        %218 = sbr.rel (%p216) target = $region16
      $region15: #{vgg_block.3} parent=11 // pred_region
        _
      $region16: #{vgg_block.3} parent=11 // pred_fallthru
        _
    $region12: #{vgg_block.3} parent=5 // pred_fallthru
      _
    %p219 = scmp.lt.s32.totalorder %s12, 4
    // Predicated region
    $region17: #{vgg_block.3} parent=5 // pred_check
      %p220 = pneg %p219
    $region18: #{vgg_block.3} parent=5 // pred_check_branch
      %222 = sbr.rel (%p220) target = $region20
    $region19: #{vgg_block.3} parent=5 // pred_region
      // Predicated region
      $region21: #{vgg_block.3} parent=19 // pred_check
        %p223 = pneg %p54
      $region22: #{vgg_block.3} parent=19 // pred_check_branch
        %225 = sbr.rel (%p223) target = $region24
      $region23: #{vgg_block.3} parent=19 // pred_region
        %s226 = smul.u32 %s20, 8
        %s227 = ssub.s32 %s226, 1
        %p228 = scmp.gt.s32.totalorder %s227, 0
        %s229 = scalar_select %p228, %s227, 0
        %p230 = scmp.lt.s32.totalorder %s19, 1
        %s231 = scalar_select %p230, %s19, 1
        %p232 = scmp.lt.s32.totalorder %s229, 15
        %s233 = scalar_select %p232, %s229, 15
        %s234 = smul.addr %s233, 3
        %s235 = smul.addr %s231, 48
        %s236 = sadd.s32 %s234, %s235
        %s237 = smul.addr %s236, 4
        %s238 = scalar_lea.vmem %s0, %s237
        %s239 = smul.u32 %s20, 8
        %s240 = ssub.s32 %s239, 1
        %p241 = scmp.gt.s32.totalorder %s240, 0
        %s242 = scalar_select %p241, %s240, 0
      $region24: #{vgg_block.3} parent=19 // pred_fallthru
        _
      // Predicated region
      $region25: #{vgg_block.3} parent=19 // pred_check
        %p243 = pneg %p82
      $region26: #{vgg_block.3} parent=19 // pred_check_branch
        %245 = sbr.rel (%p243) target = $region28
      $region27: #{vgg_block.3} parent=19 // pred_region
        %s246 = smul.u32 8, %s20
        %p247 = scmp.lt.s32.totalorder %s19, 1
        %s248 = scalar_select %p247, %s19, 1
        %p249 = scmp.lt.s32.totalorder %s246, 15
        %s250 = scalar_select %p249, %s246, 15
        %s251 = smul.addr %s250, 3
        %s252 = smul.addr %s248, 48
        %s253 = sadd.s32 %s251, %s252
        %s254 = smul.addr %s253, 4
        %s255 = scalar_lea.vmem %s1, %s254
        %s256 = smul.u32 8, %s20
      $region28: #{vgg_block.3} parent=19 // pred_fallthru
        _
      // Predicated region
      $region29: #{vgg_block.3} parent=19 // pred_check
        %p257 = pneg %p118
      $region30: #{vgg_block.3} parent=19 // pred_check_branch
        %259 = sbr.rel (%p257) target = $region32
      $region31: #{vgg_block.3} parent=19 // pred_region
        %s260 = smul.u32 %s20, 8
        %s261 = sadd.s32 %s260, 8
        %p262 = scmp.lt.s32.totalorder %s261, 15
        %s263 = scalar_select %p262, %s261, 15
        %p264 = scmp.lt.s32.totalorder %s19, 1
        %s265 = scalar_select %p264, %s19, 1
        %p266 = scmp.lt.s32.totalorder %s263, 15
        %s267 = scalar_select %p266, %s263, 15
        %s268 = smul.addr %s267, 3
        %s269 = smul.addr %s265, 48
        %s270 = sadd.s32 %s268, %s269
        %s271 = smul.addr %s270, 4
        %s272 = scalar_lea.vmem %s2, %s271
        %s273 = smul.u32 %s20, 8
        %s274 = sadd.s32 %s273, 8
        %p275 = scmp.lt.s32.totalorder %s274, 15
        %s276 = scalar_select %p275, %s274, 15
      $region32: #{vgg_block.3} parent=19 // pred_fallthru
        _
    $region20: #{vgg_block.3} parent=5 // pred_fallthru
      _
    %p277 = scmp.le.s32.totalorder 1, %s12
    %p278 = scmp.lt.s32.totalorder %s12, 5
    %p279 = pnand %p277, %p278
    %p280 = pneg %p279
    // Predicated region
    $region33: #{vgg_block.3} parent=5 // pred_check
      _
    $region34: #{vgg_block.3} parent=5 // pred_check_branch
      %282 = sbr.rel (%p279) target = $region36
    $region35: #{vgg_block.3} parent=5 // pred_region
      %s283 = ssub.s32 %s12, 1
      %s284 = smul.u32 %s22, 8
      %s285 = ssub.s32 %s284, 1
      %p286 = scmp.gt.s32.totalorder %s285, 0
      %s287 = scalar_select %p286, %s285, 0
      %p288 = scmp.lt.s32.totalorder %s21, 1
      %s289 = scalar_select %p288, %s21, 1
      %p290 = scmp.lt.s32.totalorder %s287, 15
      %s291 = scalar_select %p290, %s287, 15
      %s292 = smul.addr %s291, 3
      %s293 = smul.addr %s289, 48
      %s294 = sadd.s32 %s292, %s293
      %s295 = smul.addr %s294, 4
      %s296 = scalar_lea.vmem %s0, %s295
      %p297 = pneg %p60
      %p298 = pneg %p57
      %s299 = smul.u32 8, %s22
      %p300 = scmp.lt.s32.totalorder %s21, 1
      %s301 = scalar_select %p300, %s21, 1
      %p302 = scmp.lt.s32.totalorder %s299, 15
      %s303 = scalar_select %p302, %s299, 15
      %s304 = smul.addr %s303, 3
      %s305 = smul.addr %s301, 48
      %s306 = sadd.s32 %s304, %s305
      %s307 = smul.addr %s306, 4
      %s308 = scalar_lea.vmem %s1, %s307
      %p309 = pneg %p88
      %p310 = pneg %p85
      %s311 = smul.u32 %s22, 8
      %s312 = sadd.s32 %s311, 8
      %p313 = scmp.lt.s32.totalorder %s312, 15
      %s314 = scalar_select %p313, %s312, 15
      %p315 = scmp.lt.s32.totalorder %s21, 1
      %s316 = scalar_select %p315, %s21, 1
      %p317 = scmp.lt.s32.totalorder %s314, 15
      %s318 = scalar_select %p317, %s314, 15
      %s319 = smul.addr %s318, 3
      %s320 = smul.addr %s316, 48
      %s321 = sadd.s32 %s319, %s320
      %s322 = smul.addr %s321, 4
      %s323 = scalar_lea.vmem %s2, %s322
      %p324 = pneg %p124
      %p325 = pneg %p121
      %p326 = pneg %p145
      %p327 = pneg %p142
      %p328 = pneg %p173
      %p329 = pneg %p170
      %p330 = scmp.lt.s32.totalorder %s21, 1
      %s331 = scalar_select %p330, %s21, 1
      %p332 = scmp.lt.s32.totalorder %s22, 1
      %s333 = scalar_select %p332, %s22, 1
      %s334 = smul.addr %s333, 2
      %s335 = smul.addr %s331, 4
      %s336 = sadd.s32 %s334, %s335
      %s337 = smul.addr %s336, 4
      %s338 = scalar_lea.vmem %s4, %s337
      %p339 = pneg %p201
      %p340 = pneg %p198
      %p341 = scmp.lt.s32.totalorder %s21, 1
      %s342 = scalar_select %p341, %s21, 1
      %p343 = scmp.lt.s32.totalorder %s22, 1
      %s344 = scalar_select %p343, %s22, 1
      %s345 = smul.addr %s342, 2
      %s346 = sadd.s32 %s344, %s345
      %s347 = smul.addr %s346, 2
      %s348 = scalar_lea.vmem %s5, %s347
      %s349 = smul.u32 %s22, 8
      %s350 = ssub.s32 %s349, 1
      %p351 = scmp.gt.s32.totalorder %s350, 0
      %s352 = scalar_select %p351, %s350, 0
      %p353 = scmp.lt.s32.totalorder %s21, 1
      %s354 = scalar_select %p353, %s21, 1
      %p355 = scmp.lt.s32.totalorder %s352, 15
      %s356 = scalar_select %p355, %s352, 15
      %s357 = smul.addr %s356, 3
      %s358 = smul.addr %s354, 48
      %s359 = sadd.s32 %s357, %s358
      %s360 = smul.addr %s359, 4
      %s361 = scalar_lea.vmem %s0, %s360
      %s362 = smul.u32 %s22, 8
      %s363 = ssub.s32 %s362, 1
      %p364 = scmp.gt.s32.totalorder %s363, 0
      %s365 = scalar_select %p364, %s363, 0
      %s366 = smul.u32 8, %s22
      %p367 = scmp.lt.s32.totalorder %s21, 1
      %s368 = scalar_select %p367, %s21, 1
      %p369 = scmp.lt.s32.totalorder %s366, 15
      %s370 = scalar_select %p369, %s366, 15
      %s371 = smul.addr %s370, 3
      %s372 = smul.addr %s368, 48
      %s373 = sadd.s32 %s371, %s372
      %s374 = smul.addr %s373, 4
      %s375 = scalar_lea.vmem %s1, %s374
      %s376 = smul.u32 8, %s22
      %s377 = smul.u32 %s22, 8
      %s378 = sadd.s32 %s377, 8
      %p379 = scmp.lt.s32.totalorder %s378, 15
      %s380 = scalar_select %p379, %s378, 15
      %p381 = scmp.lt.s32.totalorder %s21, 1
      %s382 = scalar_select %p381, %s21, 1
      %p383 = scmp.lt.s32.totalorder %s380, 15
      %s384 = scalar_select %p383, %s380, 15
      %s385 = smul.addr %s384, 3
      %s386 = smul.addr %s382, 48
      %s387 = sadd.s32 %s385, %s386
      %s388 = smul.addr %s387, 4
      %s389 = scalar_lea.vmem %s2, %s388
      %s390 = smul.u32 %s22, 8
      %s391 = sadd.s32 %s390, 8
      %p392 = scmp.lt.s32.totalorder %s391, 15
      %s393 = scalar_select %p392, %s391, 15
      %p394 = scmp.lt.s32.totalorder %s21, 1
      %s395 = scalar_select %p394, %s21, 1
      %p396 = scmp.lt.s32.totalorder %s22, 1
      %s397 = scalar_select %p396, %s22, 1
      %s398 = smul.addr %s397, 2
      %s399 = smul.addr %s395, 4
      %s400 = sadd.s32 %s398, %s399
      %s401 = smul.addr %s400, 4
      %s402 = scalar_lea.vmem %s4, %s401
      %p403 = scmp.lt.s32.totalorder %s21, 1
      %s404 = scalar_select %p403, %s21, 1
      %p405 = scmp.lt.s32.totalorder %s22, 1
      %s406 = scalar_select %p405, %s22, 1
      %s407 = smul.addr %s404, 2
      %s408 = sadd.s32 %s406, %s407
      %s409 = smul.addr %s408, 2
      %s410 = scalar_lea.vmem %s5, %s409
      %v412 = vld [vmem:[%s361] sm:$0xf]
      %v413 = vld [vmem:[%s361 + $0x4] sm:$0xf]
      %v414 = vld [vmem:[%s361 + $0x8] sm:$0x1]
      %v415 = vld [vmem:[%s375] sm:$0xf]
      %v416 = vld [vmem:[%s375 + $0x4] sm:$0xf]
      %v417 = vld [vmem:[%s375 + $0x8] sm:$0x1]
      %v418 = vld [vmem:[%s375 + $0xc] sm:$0xf]
      %v419 = vld [vmem:[%s375 + $0x10] sm:$0xf]
      %v420 = vld [vmem:[%s375 + $0x14] sm:$0x1]
      %v421 = vld [vmem:[%s375 + $0x18] sm:$0xf]
      %v422 = vld [vmem:[%s375 + $0x1c] sm:$0xf]
      %v423 = vld [vmem:[%s375 + $0x20] sm:$0x1]
      %v424 = vld [vmem:[%s375 + $0x24] sm:$0xf]
      %v425 = vld [vmem:[%s375 + $0x28] sm:$0xf]
      %v426 = vld [vmem:[%s375 + $0x2c] sm:$0x1]
      %v427 = vld [vmem:[%s375 + $0x30] sm:$0xf]
      %v428 = vld [vmem:[%s375 + $0x34] sm:$0xf]
      %v429 = vld [vmem:[%s375 + $0x38] sm:$0x1]
      %v430 = vld [vmem:[%s375 + $0x3c] sm:$0xf]
      %v431 = vld [vmem:[%s375 + $0x40] sm:$0xf]
      %v432 = vld [vmem:[%s375 + $0x44] sm:$0x1]
      %v433 = vld [vmem:[%s375 + $0x48] sm:$0xf]
      %v434 = vld [vmem:[%s375 + $0x4c] sm:$0xf]
      %v435 = vld [vmem:[%s375 + $0x50] sm:$0x1]
      %v436 = vld [vmem:[%s375 + $0x54] sm:$0xf]
      %v437 = vld [vmem:[%s375 + $0x58] sm:$0xf]
      %v438 = vld [vmem:[%s375 + $0x5c] sm:$0x1]
      %v439 = vld [vmem:[%s389] sm:$0xf]
      %v440 = vld [vmem:[%s389 + $0x4] sm:$0xf]
      %v441 = vld [vmem:[%s389 + $0x8] sm:$0x1]
      %p442 = scmp.gt.s32.totalorder %s22, 0
      %s443 = scalar_select %p442, 1, 0
      %s444 = scvt.s32.f32 %s443
      %v445 = vunpack.c.l.bf16 %v412
      %v446 = vunpack.c.l.bf16 %v413
      %v447 = vunpack.c.l.bf16 %v414
      %v448 = vstv %s444
      %v449 = vmul.f32 %v445, %v448
      %v450 = vmul.f32 %v446, %v448
      %v451 = vmul.f32 %v447, %v448
      %v452 = vpack.c.bf16 %v450, %v449
      %v453 = vpack.c.bf16 %v451, %v451
      %p454 = scmp.lt.s32.totalorder %s22, 1
      %s455 = scalar_select %p454, 1, 0
      %s456 = scvt.s32.f32 %s455
      %v457 = vunpack.c.l.bf16 %v439
      %v458 = vunpack.c.l.bf16 %v440
      %v459 = vunpack.c.l.bf16 %v441
      %v460 = vstv %s456
      %v461 = vmul.f32 %v457, %v460
      %v462 = vmul.f32 %v458, %v460
      %v463 = vmul.f32 %v459, %v460
      %v464 = vpack.c.bf16 %v462, %v461
      %v465 = vpack.c.bf16 %v463, %v463
      %v490 = vunpack.c.l.b16 %v415
      %v491 = vunpack.c.l.b16 %v416
      %v492 = vunpack.c.l.b16 %v417
      %v493 = vunpack.c.l.b16 %v418
      %v494 = vunpack.c.l.b16 %v419
      %v495 = vunpack.c.l.b16 %v420
      %v496 = vunpack.c.l.b16 %v421
      %v497 = vunpack.c.l.b16 %v422
      %v498 = vunpack.c.l.b16 %v423
      %v499 = vunpack.c.l.b16 %v424
      %v500 = vunpack.c.l.b16 %v425
      %v501 = vunpack.c.l.b16 %v426
      %v502 = vunpack.c.l.b16 %v427
      %v503 = vunpack.c.l.b16 %v428
      %v504 = vunpack.c.l.b16 %v429
      %v505 = vunpack.c.l.b16 %v430
      %v506 = vunpack.c.l.b16 %v431
      %v507 = vunpack.c.l.b16 %v432
      %v508 = vunpack.c.l.b16 %v433
      %v509 = vunpack.c.l.b16 %v434
      %v510 = vunpack.c.l.b16 %v435
      %v511 = vunpack.c.l.b16 %v436
      %v512 = vunpack.c.l.b16 %v437
      %v513 = vunpack.c.l.b16 %v438
      %v514 = vpack.c.b16 %v491, %v490
      %v515 = vpack.c.b16 %v492, %v492
      %v516 = vpack.c.b16 %v494, %v493
      %v517 = vpack.c.b16 %v495, %v495
      %v518 = vpack.c.b16 %v497, %v496
      %v519 = vpack.c.b16 %v498, %v498
      %v520 = vpack.c.b16 %v500, %v499
      %v521 = vpack.c.b16 %v501, %v501
      %v522 = vpack.c.b16 %v503, %v502
      %v523 = vpack.c.b16 %v504, %v504
      %v524 = vpack.c.b16 %v506, %v505
      %v525 = vpack.c.b16 %v507, %v507
      %v526 = vpack.c.b16 %v509, %v508
      %v527 = vpack.c.b16 %v510, %v510
      %v528 = vpack.c.b16 %v512, %v511
      %v529 = vpack.c.b16 %v513, %v513
      %530 = vrot.lane.b32.xlu0 %v514, 4
      %v531 = vpop.permute.xlu0 %530
      %532 = vrot.lane.b32.xlu0 %v515, 4
      %v533 = vpop.permute.xlu0 %532
      %534 = vrot.lane.b32.xlu0 %v516, 4
      %v535 = vpop.permute.xlu0 %534
      %536 = vrot.lane.b32.xlu0 %v517, 4
      %v537 = vpop.permute.xlu0 %536
      %538 = vrot.lane.b32.xlu0 %v518, 4
      %v539 = vpop.permute.xlu0 %538
      %540 = vrot.lane.b32.xlu0 %v519, 4
      %v541 = vpop.permute.xlu0 %540
      %542 = vrot.lane.b32.xlu0 %v520, 4
      %v543 = vpop.permute.xlu0 %542
      %544 = vrot.lane.b32.xlu0 %v521, 4
      %v545 = vpop.permute.xlu0 %544
      %546 = vrot.lane.b32.xlu0 %v522, 4
      %v547 = vpop.permute.xlu0 %546
      %548 = vrot.lane.b32.xlu0 %v523, 4
      %v549 = vpop.permute.xlu0 %548
      %550 = vrot.lane.b32.xlu0 %v524, 4
      %v551 = vpop.permute.xlu0 %550
      %552 = vrot.lane.b32.xlu0 %v525, 4
      %v553 = vpop.permute.xlu0 %552
      %554 = vrot.lane.b32.xlu0 %v526, 4
      %v555 = vpop.permute.xlu0 %554
      %556 = vrot.lane.b32.xlu0 %v527, 4
      %v557 = vpop.permute.xlu0 %556
      %558 = vrot.lane.b32.xlu0 %v528, 4
      %v559 = vpop.permute.xlu0 %558
      %560 = vrot.lane.b32.xlu0 %v529, 4
      %v561 = vpop.permute.xlu0 %560
      %564 = vrot.lane.b32.xlu0 %v516, 8
      %v565 = vpop.permute.xlu0 %564
      %566 = vrot.lane.b32.xlu0 %v517, 8
      %v567 = vpop.permute.xlu0 %566
      %568 = vrot.lane.b32.xlu0 %v518, 8
      %v569 = vpop.permute.xlu0 %568
      %570 = vrot.lane.b32.xlu0 %v519, 8
      %v571 = vpop.permute.xlu0 %570
      %572 = vrot.lane.b32.xlu0 %v520, 8
      %v573 = vpop.permute.xlu0 %572
      %574 = vrot.lane.b32.xlu0 %v521, 8
      %v575 = vpop.permute.xlu0 %574
      %576 = vrot.lane.b32.xlu0 %v522, 8
      %v577 = vpop.permute.xlu0 %576
      %578 = vrot.lane.b32.xlu0 %v523, 8
      %v579 = vpop.permute.xlu0 %578
      %580 = vrot.lane.b32.xlu0 %v524, 8
      %v581 = vpop.permute.xlu0 %580
      %582 = vrot.lane.b32.xlu0 %v525, 8
      %v583 = vpop.permute.xlu0 %582
      %584 = vrot.lane.b32.xlu0 %v526, 8
      %v585 = vpop.permute.xlu0 %584
      %586 = vrot.lane.b32.xlu0 %v527, 8
      %v587 = vpop.permute.xlu0 %586
      %588 = vrot.lane.b32.xlu0 %v528, 8
      %v589 = vpop.permute.xlu0 %588
      %590 = vrot.lane.b32.xlu0 %v529, 8
      %v591 = vpop.permute.xlu0 %590
      %592 = vrot.lane.b32.xlu0 %v464, 8
      %v593 = vpop.permute.xlu0 %592
      %594 = vrot.lane.b32.xlu0 %v465, 8
      %v595 = vpop.permute.xlu0 %594
      %vm596 = vcmask 31744
      %v599 = vsel %vm596, %v452, %v531
      %v602 = vsel %vm596, %v453, %v533
      %v605 = vsel %vm596, %v514, %v535
      %v608 = vsel %vm596, %v515, %v537
      %v611 = vsel %vm596, %v516, %v539
      %v614 = vsel %vm596, %v517, %v541
      %v617 = vsel %vm596, %v518, %v543
      %v620 = vsel %vm596, %v519, %v545
      %v623 = vsel %vm596, %v520, %v547
      %v626 = vsel %vm596, %v521, %v549
      %v629 = vsel %vm596, %v522, %v551
      %v632 = vsel %vm596, %v523, %v553
      %v635 = vsel %vm596, %v524, %v555
      %v638 = vsel %vm596, %v525, %v557
      %v641 = vsel %vm596, %v526, %v559
      %v644 = vsel %vm596, %v527, %v561
      %vm645 = vcmask 64512
      %v647 = vsel %vm645, %v599, %v565
      %v649 = vsel %vm645, %v602, %v567
      %v651 = vsel %vm645, %v605, %v569
      %v653 = vsel %vm645, %v608, %v571
      %v655 = vsel %vm645, %v611, %v573
      %v657 = vsel %vm645, %v614, %v575
      %v659 = vsel %vm645, %v617, %v577
      %v661 = vsel %vm645, %v620, %v579
      %v663 = vsel %vm645, %v623, %v581
      %v665 = vsel %vm645, %v626, %v583
      %v667 = vsel %vm645, %v629, %v585
      %v669 = vsel %vm645, %v632, %v587
      %v671 = vsel %vm645, %v635, %v589
      %v673 = vsel %vm645, %v638, %v591
      %v675 = vsel %vm645, %v641, %v593
      %v677 = vsel %vm645, %v644, %v595
      %v694 = vcombine.high %v647, %v647
      %v696 = vunpack.c.l.s4 1966171168
      %v697 = vunpack.c.0.s8 %v696
      %v698 = vlaneseq
      %v699 = vshrl.u32 %v698, 7
      %v700 = vsub.s32 %v697, %v699
      %v701 = vrot.slane %v647, %v700
      %v703 = vunpack.c.l.s4 1966171168
      %v704 = vunpack.c.0.s8 %v703
      %v705 = vlaneseq
      %v706 = vshrl.u32 %v705, 7
      %v707 = vsub.s32 %v704, %v706
      %v708 = vrot.slane %v694, %v707
      %v709 = vcombine.high %v701, %v701
      %v710 = vcombine.high %v708, %v708
      %v712 = vunpack.c.l.s4 1966171168
      %v713 = vunpack.c.0.s8 %v712
      %v714 = vlaneseq
      %v715 = vshrl.u32 %v714, 7
      %v716 = vsub.s32 %v713, %v715
      %v717 = vrot.slane %v701, %v716
      %v719 = vunpack.c.l.s4 1966171168
      %v720 = vunpack.c.0.s8 %v719
      %v721 = vlaneseq
      %v722 = vshrl.u32 %v721, 7
      %v723 = vsub.s32 %v720, %v722
      %v724 = vrot.slane %v708, %v723
      %v726 = vunpack.c.l.s4 1966171168
      %v727 = vunpack.c.0.s8 %v726
      %v728 = vlaneseq
      %v729 = vshrl.u32 %v728, 7
      %v730 = vsub.s32 %v727, %v729
      %v731 = vrot.slane %v709, %v730
      %v733 = vunpack.c.l.s4 1966171168
      %v734 = vunpack.c.0.s8 %v733
      %v735 = vlaneseq
      %v736 = vshrl.u32 %v735, 7
      %v737 = vsub.s32 %v734, %v736
      %v738 = vrot.slane %v710, %v737
      %v739 = vcombine.high %v717, %v717
      %v740 = vcombine.high %v724, %v724
      %v741 = vcombine.high %v731, %v731
      %v742 = vcombine.high %v738, %v738
      %v744 = vunpack.c.l.s4 1966171168
      %v745 = vunpack.c.0.s8 %v744
      %v746 = vlaneseq
      %v747 = vshrl.u32 %v746, 7
      %v748 = vsub.s32 %v745, %v747
      %v749 = vrot.slane %v649, %v748
      %v751 = vunpack.c.l.s4 1966171168
      %v752 = vunpack.c.0.s8 %v751
      %v753 = vlaneseq
      %v754 = vshrl.u32 %v753, 7
      %v755 = vsub.s32 %v752, %v754
      %v756 = vrot.slane %v749, %v755
      %v757 = vcombine.high %v651, %v651
      %v759 = vunpack.c.l.s4 1966171168
      %v760 = vunpack.c.0.s8 %v759
      %v761 = vlaneseq
      %v762 = vshrl.u32 %v761, 7
      %v763 = vsub.s32 %v760, %v762
      %v764 = vrot.slane %v651, %v763
      %v766 = vunpack.c.l.s4 1966171168
      %v767 = vunpack.c.0.s8 %v766
      %v768 = vlaneseq
      %v769 = vshrl.u32 %v768, 7
      %v770 = vsub.s32 %v767, %v769
      %v771 = vrot.slane %v757, %v770
      %v772 = vcombine.high %v764, %v764
      %v773 = vcombine.high %v771, %v771
      %v775 = vunpack.c.l.s4 1966171168
      %v776 = vunpack.c.0.s8 %v775
      %v777 = vlaneseq
      %v778 = vshrl.u32 %v777, 7
      %v779 = vsub.s32 %v776, %v778
      %v780 = vrot.slane %v764, %v779
      %v782 = vunpack.c.l.s4 1966171168
      %v783 = vunpack.c.0.s8 %v782
      %v784 = vlaneseq
      %v785 = vshrl.u32 %v784, 7
      %v786 = vsub.s32 %v783, %v785
      %v787 = vrot.slane %v771, %v786
      %v789 = vunpack.c.l.s4 1966171168
      %v790 = vunpack.c.0.s8 %v789
      %v791 = vlaneseq
      %v792 = vshrl.u32 %v791, 7
      %v793 = vsub.s32 %v790, %v792
      %v794 = vrot.slane %v772, %v793
      %v796 = vunpack.c.l.s4 1966171168
      %v797 = vunpack.c.0.s8 %v796
      %v798 = vlaneseq
      %v799 = vshrl.u32 %v798, 7
      %v800 = vsub.s32 %v797, %v799
      %v801 = vrot.slane %v773, %v800
      %v802 = vcombine.high %v780, %v780
      %v803 = vcombine.high %v787, %v787
      %v804 = vcombine.high %v794, %v794
      %v805 = vcombine.high %v801, %v801
      %v807 = vunpack.c.l.s4 1966171168
      %v808 = vunpack.c.0.s8 %v807
      %v809 = vlaneseq
      %v810 = vshrl.u32 %v809, 7
      %v811 = vsub.s32 %v808, %v810
      %v812 = vrot.slane %v653, %v811
      %v814 = vunpack.c.l.s4 1966171168
      %v815 = vunpack.c.0.s8 %v814
      %v816 = vlaneseq
      %v817 = vshrl.u32 %v816, 7
      %v818 = vsub.s32 %v815, %v817
      %v819 = vrot.slane %v812, %v818
      %v820 = vcombine.high %v655, %v655
      %v822 = vunpack.c.l.s4 1966171168
      %v823 = vunpack.c.0.s8 %v822
      %v824 = vlaneseq
      %v825 = vshrl.u32 %v824, 7
      %v826 = vsub.s32 %v823, %v825
      %v827 = vrot.slane %v655, %v826
      %v829 = vunpack.c.l.s4 1966171168
      %v830 = vunpack.c.0.s8 %v829
      %v831 = vlaneseq
      %v832 = vshrl.u32 %v831, 7
      %v833 = vsub.s32 %v830, %v832
      %v834 = vrot.slane %v820, %v833
      %v835 = vcombine.high %v827, %v827
      %v836 = vcombine.high %v834, %v834
      %v838 = vunpack.c.l.s4 1966171168
      %v839 = vunpack.c.0.s8 %v838
      %v840 = vlaneseq
      %v841 = vshrl.u32 %v840, 7
      %v842 = vsub.s32 %v839, %v841
      %v843 = vrot.slane %v827, %v842
      %v845 = vunpack.c.l.s4 1966171168
      %v846 = vunpack.c.0.s8 %v845
      %v847 = vlaneseq
      %v848 = vshrl.u32 %v847, 7
      %v849 = vsub.s32 %v846, %v848
      %v850 = vrot.slane %v834, %v849
      %v852 = vunpack.c.l.s4 1966171168
      %v853 = vunpack.c.0.s8 %v852
      %v854 = vlaneseq
      %v855 = vshrl.u32 %v854, 7
      %v856 = vsub.s32 %v853, %v855
      %v857 = vrot.slane %v835, %v856
      %v859 = vunpack.c.l.s4 1966171168
      %v860 = vunpack.c.0.s8 %v859
      %v861 = vlaneseq
      %v862 = vshrl.u32 %v861, 7
      %v863 = vsub.s32 %v860, %v862
      %v864 = vrot.slane %v836, %v863
      %v865 = vcombine.high %v843, %v843
      %v866 = vcombine.high %v850, %v850
      %v867 = vcombine.high %v857, %v857
      %v868 = vcombine.high %v864, %v864
      %v870 = vunpack.c.l.s4 1966171168
      %v871 = vunpack.c.0.s8 %v870
      %v872 = vlaneseq
      %v873 = vshrl.u32 %v872, 7
      %v874 = vsub.s32 %v871, %v873
      %v875 = vrot.slane %v657, %v874
      %v877 = vunpack.c.l.s4 1966171168
      %v878 = vunpack.c.0.s8 %v877
      %v879 = vlaneseq
      %v880 = vshrl.u32 %v879, 7
      %v881 = vsub.s32 %v878, %v880
      %v882 = vrot.slane %v875, %v881
      %v883 = vcombine.high %v659, %v659
      %v885 = vunpack.c.l.s4 1966171168
      %v886 = vunpack.c.0.s8 %v885
      %v887 = vlaneseq
      %v888 = vshrl.u32 %v887, 7
      %v889 = vsub.s32 %v886, %v888
      %v890 = vrot.slane %v659, %v889
      %v892 = vunpack.c.l.s4 1966171168
      %v893 = vunpack.c.0.s8 %v892
      %v894 = vlaneseq
      %v895 = vshrl.u32 %v894, 7
      %v896 = vsub.s32 %v893, %v895
      %v897 = vrot.slane %v883, %v896
      %v898 = vcombine.high %v890, %v890
      %v899 = vcombine.high %v897, %v897
      %v901 = vunpack.c.l.s4 1966171168
      %v902 = vunpack.c.0.s8 %v901
      %v903 = vlaneseq
      %v904 = vshrl.u32 %v903, 7
      %v905 = vsub.s32 %v902, %v904
      %v906 = vrot.slane %v890, %v905
      %v908 = vunpack.c.l.s4 1966171168
      %v909 = vunpack.c.0.s8 %v908
      %v910 = vlaneseq
      %v911 = vshrl.u32 %v910, 7
      %v912 = vsub.s32 %v909, %v911
      %v913 = vrot.slane %v897, %v912
      %v915 = vunpack.c.l.s4 1966171168
      %v916 = vunpack.c.0.s8 %v915
      %v917 = vlaneseq
      %v918 = vshrl.u32 %v917, 7
      %v919 = vsub.s32 %v916, %v918
      %v920 = vrot.slane %v898, %v919
      %v922 = vunpack.c.l.s4 1966171168
      %v923 = vunpack.c.0.s8 %v922
      %v924 = vlaneseq
      %v925 = vshrl.u32 %v924, 7
      %v926 = vsub.s32 %v923, %v925
      %v927 = vrot.slane %v899, %v926
      %v928 = vcombine.high %v906, %v906
      %v929 = vcombine.high %v913, %v913
      %v930 = vcombine.high %v920, %v920
      %v931 = vcombine.high %v927, %v927
      %v933 = vunpack.c.l.s4 1966171168
      %v934 = vunpack.c.0.s8 %v933
      %v935 = vlaneseq
      %v936 = vshrl.u32 %v935, 7
      %v937 = vsub.s32 %v934, %v936
      %v938 = vrot.slane %v661, %v937
      %v940 = vunpack.c.l.s4 1966171168
      %v941 = vunpack.c.0.s8 %v940
      %v942 = vlaneseq
      %v943 = vshrl.u32 %v942, 7
      %v944 = vsub.s32 %v941, %v943
      %v945 = vrot.slane %v938, %v944
      %v946 = vcombine.high %v663, %v663
      %v948 = vunpack.c.l.s4 1966171168
      %v949 = vunpack.c.0.s8 %v948
      %v950 = vlaneseq
      %v951 = vshrl.u32 %v950, 7
      %v952 = vsub.s32 %v949, %v951
      %v953 = vrot.slane %v663, %v952
      %v955 = vunpack.c.l.s4 1966171168
      %v956 = vunpack.c.0.s8 %v955
      %v957 = vlaneseq
      %v958 = vshrl.u32 %v957, 7
      %v959 = vsub.s32 %v956, %v958
      %v960 = vrot.slane %v946, %v959
      %v961 = vcombine.high %v953, %v953
      %v962 = vcombine.high %v960, %v960
      %v964 = vunpack.c.l.s4 1966171168
      %v965 = vunpack.c.0.s8 %v964
      %v966 = vlaneseq
      %v967 = vshrl.u32 %v966, 7
      %v968 = vsub.s32 %v965, %v967
      %v969 = vrot.slane %v953, %v968
      %v971 = vunpack.c.l.s4 1966171168
      %v972 = vunpack.c.0.s8 %v971
      %v973 = vlaneseq
      %v974 = vshrl.u32 %v973, 7
      %v975 = vsub.s32 %v972, %v974
      %v976 = vrot.slane %v960, %v975
      %v978 = vunpack.c.l.s4 1966171168
      %v979 = vunpack.c.0.s8 %v978
      %v980 = vlaneseq
      %v981 = vshrl.u32 %v980, 7
      %v982 = vsub.s32 %v979, %v981
      %v983 = vrot.slane %v961, %v982
      %v985 = vunpack.c.l.s4 1966171168
      %v986 = vunpack.c.0.s8 %v985
      %v987 = vlaneseq
      %v988 = vshrl.u32 %v987, 7
      %v989 = vsub.s32 %v986, %v988
      %v990 = vrot.slane %v962, %v989
      %v991 = vcombine.high %v969, %v969
      %v992 = vcombine.high %v976, %v976
      %v993 = vcombine.high %v983, %v983
      %v994 = vcombine.high %v990, %v990
      %v996 = vunpack.c.l.s4 1966171168
      %v997 = vunpack.c.0.s8 %v996
      %v998 = vlaneseq
      %v999 = vshrl.u32 %v998, 7
      %v1000 = vsub.s32 %v997, %v999
      %v1001 = vrot.slane %v665, %v1000
      %v1003 = vunpack.c.l.s4 1966171168
      %v1004 = vunpack.c.0.s8 %v1003
      %v1005 = vlaneseq
      %v1006 = vshrl.u32 %v1005, 7
      %v1007 = vsub.s32 %v1004, %v1006
      %v1008 = vrot.slane %v1001, %v1007
      %v1009 = vcombine.high %v667, %v667
      %v1011 = vunpack.c.l.s4 1966171168
      %v1012 = vunpack.c.0.s8 %v1011
      %v1013 = vlaneseq
      %v1014 = vshrl.u32 %v1013, 7
      %v1015 = vsub.s32 %v1012, %v1014
      %v1016 = vrot.slane %v667, %v1015
      %v1018 = vunpack.c.l.s4 1966171168
      %v1019 = vunpack.c.0.s8 %v1018
      %v1020 = vlaneseq
      %v1021 = vshrl.u32 %v1020, 7
      %v1022 = vsub.s32 %v1019, %v1021
      %v1023 = vrot.slane %v1009, %v1022
      %v1024 = vcombine.high %v1016, %v1016
      %v1025 = vcombine.high %v1023, %v1023
      %v1027 = vunpack.c.l.s4 1966171168
      %v1028 = vunpack.c.0.s8 %v1027
      %v1029 = vlaneseq
      %v1030 = vshrl.u32 %v1029, 7
      %v1031 = vsub.s32 %v1028, %v1030
      %v1032 = vrot.slane %v1016, %v1031
      %v1034 = vunpack.c.l.s4 1966171168
      %v1035 = vunpack.c.0.s8 %v1034
      %v1036 = vlaneseq
      %v1037 = vshrl.u32 %v1036, 7
      %v1038 = vsub.s32 %v1035, %v1037
      %v1039 = vrot.slane %v1023, %v1038
      %v1041 = vunpack.c.l.s4 1966171168
      %v1042 = vunpack.c.0.s8 %v1041
      %v1043 = vlaneseq
      %v1044 = vshrl.u32 %v1043, 7
      %v1045 = vsub.s32 %v1042, %v1044
      %v1046 = vrot.slane %v1024, %v1045
      %v1048 = vunpack.c.l.s4 1966171168
      %v1049 = vunpack.c.0.s8 %v1048
      %v1050 = vlaneseq
      %v1051 = vshrl.u32 %v1050, 7
      %v1052 = vsub.s32 %v1049, %v1051
      %v1053 = vrot.slane %v1025, %v1052
      %v1054 = vcombine.high %v1032, %v1032
      %v1055 = vcombine.high %v1039, %v1039
      %v1056 = vcombine.high %v1046, %v1046
      %v1057 = vcombine.high %v1053, %v1053
      %v1059 = vunpack.c.l.s4 1966171168
      %v1060 = vunpack.c.0.s8 %v1059
      %v1061 = vlaneseq
      %v1062 = vshrl.u32 %v1061, 7
      %v1063 = vsub.s32 %v1060, %v1062
      %v1064 = vrot.slane %v669, %v1063
      %v1066 = vunpack.c.l.s4 1966171168
      %v1067 = vunpack.c.0.s8 %v1066
      %v1068 = vlaneseq
      %v1069 = vshrl.u32 %v1068, 7
      %v1070 = vsub.s32 %v1067, %v1069
      %v1071 = vrot.slane %v1064, %v1070
      %v1072 = vcombine.high %v671, %v671
      %v1074 = vunpack.c.l.s4 1966171168
      %v1075 = vunpack.c.0.s8 %v1074
      %v1076 = vlaneseq
      %v1077 = vshrl.u32 %v1076, 7
      %v1078 = vsub.s32 %v1075, %v1077
      %v1079 = vrot.slane %v671, %v1078
      %v1081 = vunpack.c.l.s4 1966171168
      %v1082 = vunpack.c.0.s8 %v1081
      %v1083 = vlaneseq
      %v1084 = vshrl.u32 %v1083, 7
      %v1085 = vsub.s32 %v1082, %v1084
      %v1086 = vrot.slane %v1072, %v1085
      %v1087 = vcombine.high %v1079, %v1079
      %v1088 = vcombine.high %v1086, %v1086
      %v1090 = vunpack.c.l.s4 1966171168
      %v1091 = vunpack.c.0.s8 %v1090
      %v1092 = vlaneseq
      %v1093 = vshrl.u32 %v1092, 7
      %v1094 = vsub.s32 %v1091, %v1093
      %v1095 = vrot.slane %v1079, %v1094
      %v1097 = vunpack.c.l.s4 1966171168
      %v1098 = vunpack.c.0.s8 %v1097
      %v1099 = vlaneseq
      %v1100 = vshrl.u32 %v1099, 7
      %v1101 = vsub.s32 %v1098, %v1100
      %v1102 = vrot.slane %v1086, %v1101
      %v1104 = vunpack.c.l.s4 1966171168
      %v1105 = vunpack.c.0.s8 %v1104
      %v1106 = vlaneseq
      %v1107 = vshrl.u32 %v1106, 7
      %v1108 = vsub.s32 %v1105, %v1107
      %v1109 = vrot.slane %v1087, %v1108
      %v1111 = vunpack.c.l.s4 1966171168
      %v1112 = vunpack.c.0.s8 %v1111
      %v1113 = vlaneseq
      %v1114 = vshrl.u32 %v1113, 7
      %v1115 = vsub.s32 %v1112, %v1114
      %v1116 = vrot.slane %v1088, %v1115
      %v1117 = vcombine.high %v1095, %v1095
      %v1118 = vcombine.high %v1102, %v1102
      %v1119 = vcombine.high %v1109, %v1109
      %v1120 = vcombine.high %v1116, %v1116
      %v1122 = vunpack.c.l.s4 1966171168
      %v1123 = vunpack.c.0.s8 %v1122
      %v1124 = vlaneseq
      %v1125 = vshrl.u32 %v1124, 7
      %v1126 = vsub.s32 %v1123, %v1125
      %v1127 = vrot.slane %v673, %v1126
      %v1129 = vunpack.c.l.s4 1966171168
      %v1130 = vunpack.c.0.s8 %v1129
      %v1131 = vlaneseq
      %v1132 = vshrl.u32 %v1131, 7
      %v1133 = vsub.s32 %v1130, %v1132
      %v1134 = vrot.slane %v1127, %v1133
      %v1135 = vcombine.high %v675, %v675
      %v1137 = vunpack.c.l.s4 1966171168
      %v1138 = vunpack.c.0.s8 %v1137
      %v1139 = vlaneseq
      %v1140 = vshrl.u32 %v1139, 7
      %v1141 = vsub.s32 %v1138, %v1140
      %v1142 = vrot.slane %v675, %v1141
      %v1144 = vunpack.c.l.s4 1966171168
      %v1145 = vunpack.c.0.s8 %v1144
      %v1146 = vlaneseq
      %v1147 = vshrl.u32 %v1146, 7
      %v1148 = vsub.s32 %v1145, %v1147
      %v1149 = vrot.slane %v1135, %v1148
      %v1150 = vcombine.high %v1142, %v1142
      %v1151 = vcombine.high %v1149, %v1149
      %v1153 = vunpack.c.l.s4 1966171168
      %v1154 = vunpack.c.0.s8 %v1153
      %v1155 = vlaneseq
      %v1156 = vshrl.u32 %v1155, 7
      %v1157 = vsub.s32 %v1154, %v1156
      %v1158 = vrot.slane %v1142, %v1157
      %v1160 = vunpack.c.l.s4 1966171168
      %v1161 = vunpack.c.0.s8 %v1160
      %v1162 = vlaneseq
      %v1163 = vshrl.u32 %v1162, 7
      %v1164 = vsub.s32 %v1161, %v1163
      %v1165 = vrot.slane %v1149, %v1164
      %v1167 = vunpack.c.l.s4 1966171168
      %v1168 = vunpack.c.0.s8 %v1167
      %v1169 = vlaneseq
      %v1170 = vshrl.u32 %v1169, 7
      %v1171 = vsub.s32 %v1168, %v1170
      %v1172 = vrot.slane %v1150, %v1171
      %v1174 = vunpack.c.l.s4 1966171168
      %v1175 = vunpack.c.0.s8 %v1174
      %v1176 = vlaneseq
      %v1177 = vshrl.u32 %v1176, 7
      %v1178 = vsub.s32 %v1175, %v1177
      %v1179 = vrot.slane %v1151, %v1178
      %v1180 = vcombine.high %v1158, %v1158
      %v1181 = vcombine.high %v1165, %v1165
      %v1182 = vcombine.high %v1172, %v1172
      %v1183 = vcombine.high %v1179, %v1179
      %v1185 = vunpack.c.l.s4 1966171168
      %v1186 = vunpack.c.0.s8 %v1185
      %v1187 = vlaneseq
      %v1188 = vshrl.u32 %v1187, 7
      %v1189 = vsub.s32 %v1186, %v1188
      %v1190 = vrot.slane %v677, %v1189
      %v1192 = vunpack.c.l.s4 1966171168
      %v1193 = vunpack.c.0.s8 %v1192
      %v1194 = vlaneseq
      %v1195 = vshrl.u32 %v1194, 7
      %v1196 = vsub.s32 %v1193, %v1195
      %v1197 = vrot.slane %v1190, %v1196
      %v1198 = vld [vmem:[%s3] sm:$0xf]
      %v1199 = vld [vmem:[%s3 + $0x4] sm:$0x3]
      %v1200 = vcombine.low %v717, %v731
      %v1201 = vcombine.low %v739, %v741
      %v1202 = vcombine.low %v724, %v738
      %v1203 = vcombine.low %v740, %v742
      %v1205 = vunpack.c.l.s4 1966171168
      %v1206 = vunpack.c.0.s8 %v1205
      %v1207 = vlaneseq
      %v1208 = vshrl.u32 %v1207, 7
      %v1209 = vsub.s32 %v1206, %v1208
      %v1210 = vrot.slane %v1200, %v1209
      %v1212 = vunpack.c.l.s4 1966171168
      %v1213 = vunpack.c.0.s8 %v1212
      %v1214 = vlaneseq
      %v1215 = vshrl.u32 %v1214, 7
      %v1216 = vsub.s32 %v1213, %v1215
      %v1217 = vrot.slane %v1201, %v1216
      %v1219 = vunpack.c.l.s4 1966171168
      %v1220 = vunpack.c.0.s8 %v1219
      %v1221 = vlaneseq
      %v1222 = vshrl.u32 %v1221, 7
      %v1223 = vsub.s32 %v1220, %v1222
      %v1224 = vrot.slane %v1202, %v1223
      %v1226 = vunpack.c.l.s4 1966171168
      %v1227 = vunpack.c.0.s8 %v1226
      %v1228 = vlaneseq
      %v1229 = vshrl.u32 %v1228, 7
      %v1230 = vsub.s32 %v1227, %v1229
      %v1231 = vrot.slane %v1203, %v1230
      %v1232 = vcombine.low %v1210, %v1217
      %v1233 = vcombine.low %v1224, %v1231
      %v1235 = vunpack.c.l.s4 1966171168
      %v1236 = vunpack.c.0.s8 %v1235
      %v1237 = vlaneseq
      %v1238 = vshrl.u32 %v1237, 7
      %v1239 = vsub.s32 %v1236, %v1238
      %v1240 = vrot.slane %v1232, %v1239
      %v1242 = vunpack.c.l.s4 1966171168
      %v1243 = vunpack.c.0.s8 %v1242
      %v1244 = vlaneseq
      %v1245 = vshrl.u32 %v1244, 7
      %v1246 = vsub.s32 %v1243, %v1245
      %v1247 = vrot.slane %v1233, %v1246
      %v1248 = vcombine.low %v1240, %v1247
      %v1249 = vcombine.low %v756, %v780
      %v1250 = vcombine.low %v794, %v802
      %v1251 = vcombine.low %v804, %v787
      %v1252 = vcombine.low %v801, %v803
      %v1254 = vunpack.c.l.s4 1966171168
      %v1255 = vunpack.c.0.s8 %v1254
      %v1256 = vlaneseq
      %v1257 = vshrl.u32 %v1256, 7
      %v1258 = vsub.s32 %v1255, %v1257
      %v1259 = vrot.slane %v1249, %v1258
      %v1261 = vunpack.c.l.s4 1966171168
      %v1262 = vunpack.c.0.s8 %v1261
      %v1263 = vlaneseq
      %v1264 = vshrl.u32 %v1263, 7
      %v1265 = vsub.s32 %v1262, %v1264
      %v1266 = vrot.slane %v1250, %v1265
      %v1268 = vunpack.c.l.s4 1966171168
      %v1269 = vunpack.c.0.s8 %v1268
      %v1270 = vlaneseq
      %v1271 = vshrl.u32 %v1270, 7
      %v1272 = vsub.s32 %v1269, %v1271
      %v1273 = vrot.slane %v1251, %v1272
      %v1275 = vunpack.c.l.s4 1966171168
      %v1276 = vunpack.c.0.s8 %v1275
      %v1277 = vlaneseq
      %v1278 = vshrl.u32 %v1277, 7
      %v1279 = vsub.s32 %v1276, %v1278
      %v1280 = vrot.slane %v1252, %v1279
      %v1281 = vcombine.low %v1259, %v1266
      %v1282 = vcombine.low %v1273, %v1280
      %v1284 = vunpack.c.l.s4 1966171168
      %v1285 = vunpack.c.0.s8 %v1284
      %v1286 = vlaneseq
      %v1287 = vshrl.u32 %v1286, 7
      %v1288 = vsub.s32 %v1285, %v1287
      %v1289 = vrot.slane %v1281, %v1288
      %v1291 = vunpack.c.l.s4 1966171168
      %v1292 = vunpack.c.0.s8 %v1291
      %v1293 = vlaneseq
      %v1294 = vshrl.u32 %v1293, 7
      %v1295 = vsub.s32 %v1292, %v1294
      %v1296 = vrot.slane %v1282, %v1295
      %v1297 = vcombine.low %v1289, %v1296
      %v1298 = vcombine.low %v805, %v819
      %v1299 = vcombine.low %v843, %v857
      %v1300 = vcombine.low %v865, %v867
      %v1301 = vcombine.low %v850, %v864
      %v1303 = vunpack.c.l.s4 1966171168
      %v1304 = vunpack.c.0.s8 %v1303
      %v1305 = vlaneseq
      %v1306 = vshrl.u32 %v1305, 7
      %v1307 = vsub.s32 %v1304, %v1306
      %v1308 = vrot.slane %v1298, %v1307
      %v1310 = vunpack.c.l.s4 1966171168
      %v1311 = vunpack.c.0.s8 %v1310
      %v1312 = vlaneseq
      %v1313 = vshrl.u32 %v1312, 7
      %v1314 = vsub.s32 %v1311, %v1313
      %v1315 = vrot.slane %v1299, %v1314
      %v1317 = vunpack.c.l.s4 1966171168
      %v1318 = vunpack.c.0.s8 %v1317
      %v1319 = vlaneseq
      %v1320 = vshrl.u32 %v1319, 7
      %v1321 = vsub.s32 %v1318, %v1320
      %v1322 = vrot.slane %v1300, %v1321
      %v1324 = vunpack.c.l.s4 1966171168
      %v1325 = vunpack.c.0.s8 %v1324
      %v1326 = vlaneseq
      %v1327 = vshrl.u32 %v1326, 7
      %v1328 = vsub.s32 %v1325, %v1327
      %v1329 = vrot.slane %v1301, %v1328
      %v1330 = vcombine.low %v1308, %v1315
      %v1331 = vcombine.low %v1322, %v1329
      %v1333 = vunpack.c.l.s4 1966171168
      %v1334 = vunpack.c.0.s8 %v1333
      %v1335 = vlaneseq
      %v1336 = vshrl.u32 %v1335, 7
      %v1337 = vsub.s32 %v1334, %v1336
      %v1338 = vrot.slane %v1330, %v1337
      %v1340 = vunpack.c.l.s4 1966171168
      %v1341 = vunpack.c.0.s8 %v1340
      %v1342 = vlaneseq
      %v1343 = vshrl.u32 %v1342, 7
      %v1344 = vsub.s32 %v1341, %v1343
      %v1345 = vrot.slane %v1331, %v1344
      %v1346 = vcombine.low %v1338, %v1345
      %v1347 = vcombine.low %v866, %v868
      %v1348 = vcombine.low %v882, %v906
      %v1349 = vcombine.low %v920, %v928
      %v1350 = vcombine.low %v930, %v913
      %v1352 = vunpack.c.l.s4 1966171168
      %v1353 = vunpack.c.0.s8 %v1352
      %v1354 = vlaneseq
      %v1355 = vshrl.u32 %v1354, 7
      %v1356 = vsub.s32 %v1353, %v1355
      %v1357 = vrot.slane %v1347, %v1356
      %v1359 = vunpack.c.l.s4 1966171168
      %v1360 = vunpack.c.0.s8 %v1359
      %v1361 = vlaneseq
      %v1362 = vshrl.u32 %v1361, 7
      %v1363 = vsub.s32 %v1360, %v1362
      %v1364 = vrot.slane %v1348, %v1363
      %v1366 = vunpack.c.l.s4 1966171168
      %v1367 = vunpack.c.0.s8 %v1366
      %v1368 = vlaneseq
      %v1369 = vshrl.u32 %v1368, 7
      %v1370 = vsub.s32 %v1367, %v1369
      %v1371 = vrot.slane %v1349, %v1370
      %v1373 = vunpack.c.l.s4 1966171168
      %v1374 = vunpack.c.0.s8 %v1373
      %v1375 = vlaneseq
      %v1376 = vshrl.u32 %v1375, 7
      %v1377 = vsub.s32 %v1374, %v1376
      %v1378 = vrot.slane %v1350, %v1377
      %v1379 = vcombine.low %v1357, %v1364
      %v1380 = vcombine.low %v1371, %v1378
      %v1382 = vunpack.c.l.s4 1966171168
      %v1383 = vunpack.c.0.s8 %v1382
      %v1384 = vlaneseq
      %v1385 = vshrl.u32 %v1384, 7
      %v1386 = vsub.s32 %v1383, %v1385
      %v1387 = vrot.slane %v1379, %v1386
      %v1389 = vunpack.c.l.s4 1966171168
      %v1390 = vunpack.c.0.s8 %v1389
      %v1391 = vlaneseq
      %v1392 = vshrl.u32 %v1391, 7
      %v1393 = vsub.s32 %v1390, %v1392
      %v1394 = vrot.slane %v1380, %v1393
      %v1395 = vcombine.low %v1387, %v1394
      %v1396 = vcombine.low %v927, %v929
      %v1397 = vcombine.low %v931, %v945
      %v1398 = vcombine.low %v969, %v983
      %v1399 = vcombine.low %v991, %v993
      %v1401 = vunpack.c.l.s4 1966171168
      %v1402 = vunpack.c.0.s8 %v1401
      %v1403 = vlaneseq
      %v1404 = vshrl.u32 %v1403, 7
      %v1405 = vsub.s32 %v1402, %v1404
      %v1406 = vrot.slane %v1396, %v1405
      %v1408 = vunpack.c.l.s4 1966171168
      %v1409 = vunpack.c.0.s8 %v1408
      %v1410 = vlaneseq
      %v1411 = vshrl.u32 %v1410, 7
      %v1412 = vsub.s32 %v1409, %v1411
      %v1413 = vrot.slane %v1397, %v1412
      %v1415 = vunpack.c.l.s4 1966171168
      %v1416 = vunpack.c.0.s8 %v1415
      %v1417 = vlaneseq
      %v1418 = vshrl.u32 %v1417, 7
      %v1419 = vsub.s32 %v1416, %v1418
      %v1420 = vrot.slane %v1398, %v1419
      %v1422 = vunpack.c.l.s4 1966171168
      %v1423 = vunpack.c.0.s8 %v1422
      %v1424 = vlaneseq
      %v1425 = vshrl.u32 %v1424, 7
      %v1426 = vsub.s32 %v1423, %v1425
      %v1427 = vrot.slane %v1399, %v1426
      %v1428 = vcombine.low %v1406, %v1413
      %v1429 = vcombine.low %v1420, %v1427
      %v1431 = vunpack.c.l.s4 1966171168
      %v1432 = vunpack.c.0.s8 %v1431
      %v1433 = vlaneseq
      %v1434 = vshrl.u32 %v1433, 7
      %v1435 = vsub.s32 %v1432, %v1434
      %v1436 = vrot.slane %v1428, %v1435
      %v1438 = vunpack.c.l.s4 1966171168
      %v1439 = vunpack.c.0.s8 %v1438
      %v1440 = vlaneseq
      %v1441 = vshrl.u32 %v1440, 7
      %v1442 = vsub.s32 %v1439, %v1441
      %v1443 = vrot.slane %v1429, %v1442
      %v1444 = vcombine.low %v1436, %v1443
      %v1445 = vcombine.low %v976, %v990
      %v1446 = vcombine.low %v992, %v994
      %v1447 = vcombine.low %v1008, %v1032
      %v1448 = vcombine.low %v1046, %v1054
      %v1450 = vunpack.c.l.s4 1966171168
      %v1451 = vunpack.c.0.s8 %v1450
      %v1452 = vlaneseq
      %v1453 = vshrl.u32 %v1452, 7
      %v1454 = vsub.s32 %v1451, %v1453
      %v1455 = vrot.slane %v1445, %v1454
      %v1457 = vunpack.c.l.s4 1966171168
      %v1458 = vunpack.c.0.s8 %v1457
      %v1459 = vlaneseq
      %v1460 = vshrl.u32 %v1459, 7
      %v1461 = vsub.s32 %v1458, %v1460
      %v1462 = vrot.slane %v1446, %v1461
      %v1464 = vunpack.c.l.s4 1966171168
      %v1465 = vunpack.c.0.s8 %v1464
      %v1466 = vlaneseq
      %v1467 = vshrl.u32 %v1466, 7
      %v1468 = vsub.s32 %v1465, %v1467
      %v1469 = vrot.slane %v1447, %v1468
      %v1471 = vunpack.c.l.s4 1966171168
      %v1472 = vunpack.c.0.s8 %v1471
      %v1473 = vlaneseq
      %v1474 = vshrl.u32 %v1473, 7
      %v1475 = vsub.s32 %v1472, %v1474
      %v1476 = vrot.slane %v1448, %v1475
      %v1477 = vcombine.low %v1455, %v1462
      %v1478 = vcombine.low %v1469, %v1476
      %v1480 = vunpack.c.l.s4 1966171168
      %v1481 = vunpack.c.0.s8 %v1480
      %v1482 = vlaneseq
      %v1483 = vshrl.u32 %v1482, 7
      %v1484 = vsub.s32 %v1481, %v1483
      %v1485 = vrot.slane %v1477, %v1484
      %v1487 = vunpack.c.l.s4 1966171168
      %v1488 = vunpack.c.0.s8 %v1487
      %v1489 = vlaneseq
      %v1490 = vshrl.u32 %v1489, 7
      %v1491 = vsub.s32 %v1488, %v1490
      %v1492 = vrot.slane %v1478, %v1491
      %v1493 = vcombine.low %v1485, %v1492
      %v1494 = vcombine.low %v1056, %v1039
      %v1495 = vcombine.low %v1053, %v1055
      %v1496 = vcombine.low %v1057, %v1071
      %v1497 = vcombine.low %v1095, %v1109
      %v1499 = vunpack.c.l.s4 1966171168
      %v1500 = vunpack.c.0.s8 %v1499
      %v1501 = vlaneseq
      %v1502 = vshrl.u32 %v1501, 7
      %v1503 = vsub.s32 %v1500, %v1502
      %v1504 = vrot.slane %v1494, %v1503
      %v1506 = vunpack.c.l.s4 1966171168
      %v1507 = vunpack.c.0.s8 %v1506
      %v1508 = vlaneseq
      %v1509 = vshrl.u32 %v1508, 7
      %v1510 = vsub.s32 %v1507, %v1509
      %v1511 = vrot.slane %v1495, %v1510
      %v1513 = vunpack.c.l.s4 1966171168
      %v1514 = vunpack.c.0.s8 %v1513
      %v1515 = vlaneseq
      %v1516 = vshrl.u32 %v1515, 7
      %v1517 = vsub.s32 %v1514, %v1516
      %v1518 = vrot.slane %v1496, %v1517
      %v1520 = vunpack.c.l.s4 1966171168
      %v1521 = vunpack.c.0.s8 %v1520
      %v1522 = vlaneseq
      %v1523 = vshrl.u32 %v1522, 7
      %v1524 = vsub.s32 %v1521, %v1523
      %v1525 = vrot.slane %v1497, %v1524
      %v1526 = vcombine.low %v1504, %v1511
      %v1527 = vcombine.low %v1518, %v1525
      %v1529 = vunpack.c.l.s4 1966171168
      %v1530 = vunpack.c.0.s8 %v1529
      %v1531 = vlaneseq
      %v1532 = vshrl.u32 %v1531, 7
      %v1533 = vsub.s32 %v1530, %v1532
      %v1534 = vrot.slane %v1526, %v1533
      %v1536 = vunpack.c.l.s4 1966171168
      %v1537 = vunpack.c.0.s8 %v1536
      %v1538 = vlaneseq
      %v1539 = vshrl.u32 %v1538, 7
      %v1540 = vsub.s32 %v1537, %v1539
      %v1541 = vrot.slane %v1527, %v1540
      %v1542 = vcombine.low %v1534, %v1541
      %v1543 = vcombine.low %v1117, %v1119
      %v1544 = vcombine.low %v1102, %v1116
      %v1545 = vcombine.low %v1118, %v1120
      %v1546 = vcombine.low %v1134, %v1158
      %v1548 = vunpack.c.l.s4 1966171168
      %v1549 = vunpack.c.0.s8 %v1548
      %v1550 = vlaneseq
      %v1551 = vshrl.u32 %v1550, 7
      %v1552 = vsub.s32 %v1549, %v1551
      %v1553 = vrot.slane %v1543, %v1552
      %v1555 = vunpack.c.l.s4 1966171168
      %v1556 = vunpack.c.0.s8 %v1555
      %v1557 = vlaneseq
      %v1558 = vshrl.u32 %v1557, 7
      %v1559 = vsub.s32 %v1556, %v1558
      %v1560 = vrot.slane %v1544, %v1559
      %v1562 = vunpack.c.l.s4 1966171168
      %v1563 = vunpack.c.0.s8 %v1562
      %v1564 = vlaneseq
      %v1565 = vshrl.u32 %v1564, 7
      %v1566 = vsub.s32 %v1563, %v1565
      %v1567 = vrot.slane %v1545, %v1566
      %v1569 = vunpack.c.l.s4 1966171168
      %v1570 = vunpack.c.0.s8 %v1569
      %v1571 = vlaneseq
      %v1572 = vshrl.u32 %v1571, 7
      %v1573 = vsub.s32 %v1570, %v1572
      %v1574 = vrot.slane %v1546, %v1573
      %v1575 = vcombine.low %v1553, %v1560
      %v1576 = vcombine.low %v1567, %v1574
      %v1578 = vunpack.c.l.s4 1966171168
      %v1579 = vunpack.c.0.s8 %v1578
      %v1580 = vlaneseq
      %v1581 = vshrl.u32 %v1580, 7
      %v1582 = vsub.s32 %v1579, %v1581
      %v1583 = vrot.slane %v1575, %v1582
      %v1585 = vunpack.c.l.s4 1966171168
      %v1586 = vunpack.c.0.s8 %v1585
      %v1587 = vlaneseq
      %v1588 = vshrl.u32 %v1587, 7
      %v1589 = vsub.s32 %v1586, %v1588
      %v1590 = vrot.slane %v1576, %v1589
      %v1591 = vcombine.low %v1583, %v1590
      %v1592 = vcombine.low %v1172, %v1180
      %v1593 = vcombine.low %v1182, %v1165
      %v1594 = vcombine.low %v1179, %v1181
      %v1595 = vcombine.low %v1183, %v1197
      %v1597 = vunpack.c.l.s4 1966171168
      %v1598 = vunpack.c.0.s8 %v1597
      %v1599 = vlaneseq
      %v1600 = vshrl.u32 %v1599, 7
      %v1601 = vsub.s32 %v1598, %v1600
      %v1602 = vrot.slane %v1592, %v1601
      %v1604 = vunpack.c.l.s4 1966171168
      %v1605 = vunpack.c.0.s8 %v1604
      %v1606 = vlaneseq
      %v1607 = vshrl.u32 %v1606, 7
      %v1608 = vsub.s32 %v1605, %v1607
      %v1609 = vrot.slane %v1593, %v1608
      %v1611 = vunpack.c.l.s4 1966171168
      %v1612 = vunpack.c.0.s8 %v1611
      %v1613 = vlaneseq
      %v1614 = vshrl.u32 %v1613, 7
      %v1615 = vsub.s32 %v1612, %v1614
      %v1616 = vrot.slane %v1594, %v1615
      %v1618 = vunpack.c.l.s4 1966171168
      %v1619 = vunpack.c.0.s8 %v1618
      %v1620 = vlaneseq
      %v1621 = vshrl.u32 %v1620, 7
      %v1622 = vsub.s32 %v1619, %v1621
      %v1623 = vrot.slane %v1595, %v1622
      %v1624 = vcombine.low %v1602, %v1609
      %v1625 = vcombine.low %v1616, %v1623
      %v1627 = vunpack.c.l.s4 1966171168
      %v1628 = vunpack.c.0.s8 %v1627
      %v1629 = vlaneseq
      %v1630 = vshrl.u32 %v1629, 7
      %v1631 = vsub.s32 %v1628, %v1630
      %v1632 = vrot.slane %v1624, %v1631
      %v1634 = vunpack.c.l.s4 1966171168
      %v1635 = vunpack.c.0.s8 %v1634
      %v1636 = vlaneseq
      %v1637 = vshrl.u32 %v1636, 7
      %v1638 = vsub.s32 %v1635, %v1637
      %v1639 = vrot.slane %v1625, %v1638
      %v1640 = vcombine.low %v1632, %v1639
      %v1643 = vunpack.c.l.b16 %v1198
      %v1644 = vunpack.c.l.b16 %v1199
      %v1645 = vpack.c.b16 %v1644, %v1643
      %vm1646 = vcmask 97280
      %v1648 = vsel %vm1646, %v1248, 0
      %v1651 = vsel %vm1646, %v1297, 0
      %v1654 = vsel %vm1646, %v1346, 0
      %v1657 = vsel %vm1646, %v1395, 0
      %v1660 = vsel %vm1646, %v1444, 0
      %v1663 = vsel %vm1646, %v1493, 0
      %v1666 = vsel %vm1646, %v1542, 0
      %v1669 = vsel %vm1646, %v1591, 0
      %v1672 = vsel %vm1646, %v1640, 0
      %vm1674 = vcmask 1045504
      %v1676 = vsel %vm1674, %v1645, 0
      %1678 = vmatprep.subr.bf16.mxu0 0
      %1679 = vmatpush1.bf16.msra.mxu0 0
      %1680 = vmatprep.subr.bf16.mxu0 0
      %1681 = vmatpush1.bf16.msra.mxu0 0
      %1682 = vmatprep.subr.bf16.mxu0 0
      %1683 = vmatpush1.bf16.msra.mxu0 0
      %1684 = vmatprep.subr.bf16.mxu0 0
      %1685 = vmatpush1.bf16.msra.mxu0 0
      %1686 = vmatprep.subr.bf16.mxu0 0
      %1687 = vmatpush1.bf16.msra.mxu0 0
      %1688 = vmatprep.subr.bf16.mxu0 0
      %1689 = vmatpush1.bf16.msra.mxu0 0
      %1690 = vmatprep.subr.bf16.mxu0 0
      %1691 = vmatpush1.bf16.msra.mxu0 0
      %1692 = vmatprep.subr.bf16.mxu0 0
      %1693 = vmatpush1.bf16.msra.mxu0 %v1676
      %1694 = vmatprep.subr.bf16.mxu0 0
      %1695 = vmatpush2.bf16.msra.mxu0 0
      %1696 = vmatprep.subr.bf16.mxu0 0
      %1697 = vmatpush2.bf16.msra.mxu0 0
      %1698 = vmatprep.subr.bf16.mxu0 0
      %1699 = vmatpush2.bf16.msra.mxu0 0
      %1700 = vmatprep.subr.bf16.mxu0 0
      %1701 = vmatpush2.bf16.msra.mxu0 0
      %1702 = vmatprep.subr.bf16.mxu0 0
      %1703 = vmatpush2.bf16.msra.mxu0 0
      %1704 = vmatprep.subr.bf16.mxu0 0
      %1705 = vmatpush2.bf16.msra.mxu0 0
      %1706 = vmatprep.subr.bf16.mxu0 0
      %1707 = vmatpush2.bf16.msra.mxu0 0
      %1708 = vmatprep.subr.bf16.mxu0 0
      %1709 = vmatpush2.bf16.msra.mxu0 0
      %1710 = vmatprep.mubr.bf16.mxu0 0
      %1711 = vmatmul.mubr.bf16.gmra.mxu0 %v1648
      %v1712 = vpop.f32.mrf.mxu0
      %v1713 = vadd.f32 0.0, %v1712
      %v1714 = vpop.f32.mrf.mxu0
      %v1715 = vpop.f32.mrf.mxu0
      %v1716 = vadd.f32 0.0, %v1715
      %v1717 = vpop.f32.mrf.mxu0
      %1718 = vmatprep.mubr.bf16.mxu0 0
      %1719 = vmatmul.mubr.bf16.gmra.mxu0 %v1651
      %v1720 = vpop.f32.mrf.mxu0
      %v1721 = vadd.f32 0.0, %v1720
      %v1722 = vpop.f32.mrf.mxu0
      %v1723 = vpop.f32.mrf.mxu0
      %v1724 = vadd.f32 0.0, %v1723
      %v1725 = vpop.f32.mrf.mxu0
      %1726 = vmatprep.mubr.bf16.mxu0 0
      %1727 = vmatmul.mubr.bf16.gmra.mxu0 %v1654
      %v1728 = vpop.f32.mrf.mxu0
      %v1729 = vadd.f32 0.0, %v1728
      %v1730 = vpop.f32.mrf.mxu0
      %v1731 = vpop.f32.mrf.mxu0
      %v1732 = vadd.f32 0.0, %v1731
      %v1733 = vpop.f32.mrf.mxu0
      %1734 = vmatprep.mubr.bf16.mxu0 0
      %1735 = vmatmul.mubr.bf16.gmra.mxu0 %v1657
      %v1736 = vpop.f32.mrf.mxu0
      %v1737 = vadd.f32 0.0, %v1736
      %v1738 = vpop.f32.mrf.mxu0
      %v1739 = vpop.f32.mrf.mxu0
      %v1740 = vadd.f32 0.0, %v1739
      %v1741 = vpop.f32.mrf.mxu0
      %1742 = vmatprep.mubr.bf16.mxu0 0
      %1743 = vmatmul.mubr.bf16.gmra.mxu0 %v1660
      %v1744 = vpop.f32.mrf.mxu0
      %v1745 = vadd.f32 0.0, %v1744
      %v1746 = vpop.f32.mrf.mxu0
      %v1747 = vpop.f32.mrf.mxu0
      %v1748 = vadd.f32 0.0, %v1747
      %v1749 = vpop.f32.mrf.mxu0
      %1750 = vmatprep.mubr.bf16.mxu0 0
      %1751 = vmatmul.mubr.bf16.gmra.mxu0 %v1663
      %v1752 = vpop.f32.mrf.mxu0
      %v1753 = vadd.f32 0.0, %v1752
      %v1754 = vpop.f32.mrf.mxu0
      %v1755 = vpop.f32.mrf.mxu0
      %v1756 = vadd.f32 0.0, %v1755
      %v1757 = vpop.f32.mrf.mxu0
      %1758 = vmatprep.mubr.bf16.mxu0 0
      %1759 = vmatmul.mubr.bf16.gmra.mxu0 %v1666
      %v1760 = vpop.f32.mrf.mxu0
      %v1761 = vadd.f32 0.0, %v1760
      %v1762 = vpop.f32.mrf.mxu0
      %v1763 = vpop.f32.mrf.mxu0
      %v1764 = vadd.f32 0.0, %v1763
      %v1765 = vpop.f32.mrf.mxu0
      %1766 = vmatprep.mubr.bf16.mxu0 0
      %1767 = vmatmul.mubr.bf16.gmra.mxu0 %v1669
      %v1768 = vpop.f32.mrf.mxu0
      %v1769 = vadd.f32 0.0, %v1768
      %v1770 = vpop.f32.mrf.mxu0
      %v1771 = vpop.f32.mrf.mxu0
      %v1772 = vadd.f32 0.0, %v1771
      %v1773 = vpop.f32.mrf.mxu0
      %1774 = vmatprep.mubr.bf16.mxu0 0
      %1775 = vmatmul.mubr.bf16.gmra.mxu0 %v1672
      %v1776 = vpop.f32.mrf.mxu0
      %v1777 = vadd.f32 0.0, %v1776
      %v1778 = vpop.f32.mrf.mxu0
      %v1779 = vpop.f32.mrf.mxu0
      %v1780 = vadd.f32 0.0, %v1779
      %v1781 = vpop.f32.mrf.mxu0
      %1782 = vdwg.mxu0
      %v1801 = vcombine.high %v1713, %v1713
      %v1803 = vunpack.c.l.s4 1983009808
      %v1804 = vunpack.c.0.s8 %v1803
      %v1805 = vlaneseq
      %v1806 = vshrl.u32 %v1805, 7
      %v1807 = vsub.s32 %v1804, %v1806
      %v1808 = vrot.slane %v1713, %v1807
      %v1810 = vunpack.c.l.s4 1983009808
      %v1811 = vunpack.c.0.s8 %v1810
      %v1812 = vlaneseq
      %v1813 = vshrl.u32 %v1812, 7
      %v1814 = vsub.s32 %v1811, %v1813
      %v1815 = vrot.slane %v1801, %v1814
      %v1816 = vcombine.high %v1808, %v1808
      %v1817 = vcombine.high %v1815, %v1815
      %v1818 = vcombine.high %v1716, %v1716
      %v1820 = vunpack.c.l.s4 1983009808
      %v1821 = vunpack.c.0.s8 %v1820
      %v1822 = vlaneseq
      %v1823 = vshrl.u32 %v1822, 7
      %v1824 = vsub.s32 %v1821, %v1823
      %v1825 = vrot.slane %v1716, %v1824
      %v1827 = vunpack.c.l.s4 1983009808
      %v1828 = vunpack.c.0.s8 %v1827
      %v1829 = vlaneseq
      %v1830 = vshrl.u32 %v1829, 7
      %v1831 = vsub.s32 %v1828, %v1830
      %v1832 = vrot.slane %v1818, %v1831
      %v1833 = vcombine.high %v1825, %v1825
      %v1834 = vcombine.high %v1832, %v1832
      %v1835 = vcombine.high %v1721, %v1721
      %v1837 = vunpack.c.l.s4 1983009808
      %v1838 = vunpack.c.0.s8 %v1837
      %v1839 = vlaneseq
      %v1840 = vshrl.u32 %v1839, 7
      %v1841 = vsub.s32 %v1838, %v1840
      %v1842 = vrot.slane %v1721, %v1841
      %v1844 = vunpack.c.l.s4 1983009808
      %v1845 = vunpack.c.0.s8 %v1844
      %v1846 = vlaneseq
      %v1847 = vshrl.u32 %v1846, 7
      %v1848 = vsub.s32 %v1845, %v1847
      %v1849 = vrot.slane %v1835, %v1848
      %v1850 = vcombine.high %v1842, %v1842
      %v1851 = vcombine.high %v1849, %v1849
      %v1852 = vcombine.high %v1724, %v1724
      %v1854 = vunpack.c.l.s4 1983009808
      %v1855 = vunpack.c.0.s8 %v1854
      %v1856 = vlaneseq
      %v1857 = vshrl.u32 %v1856, 7
      %v1858 = vsub.s32 %v1855, %v1857
      %v1859 = vrot.slane %v1724, %v1858
      %v1861 = vunpack.c.l.s4 1983009808
      %v1862 = vunpack.c.0.s8 %v1861
      %v1863 = vlaneseq
      %v1864 = vshrl.u32 %v1863, 7
      %v1865 = vsub.s32 %v1862, %v1864
      %v1866 = vrot.slane %v1852, %v1865
      %v1867 = vcombine.high %v1859, %v1859
      %v1868 = vcombine.high %v1866, %v1866
      %v1869 = vcombine.high %v1729, %v1729
      %v1871 = vunpack.c.l.s4 1983009808
      %v1872 = vunpack.c.0.s8 %v1871
      %v1873 = vlaneseq
      %v1874 = vshrl.u32 %v1873, 7
      %v1875 = vsub.s32 %v1872, %v1874
      %v1876 = vrot.slane %v1729, %v1875
      %v1878 = vunpack.c.l.s4 1983009808
      %v1879 = vunpack.c.0.s8 %v1878
      %v1880 = vlaneseq
      %v1881 = vshrl.u32 %v1880, 7
      %v1882 = vsub.s32 %v1879, %v1881
      %v1883 = vrot.slane %v1869, %v1882
      %v1884 = vcombine.high %v1883, %v1883
      %v1885 = vcombine.high %v1732, %v1732
      %v1887 = vunpack.c.l.s4 1983009808
      %v1888 = vunpack.c.0.s8 %v1887
      %v1889 = vlaneseq
      %v1890 = vshrl.u32 %v1889, 7
      %v1891 = vsub.s32 %v1888, %v1890
      %v1892 = vrot.slane %v1732, %v1891
      %v1894 = vunpack.c.l.s4 1983009808
      %v1895 = vunpack.c.0.s8 %v1894
      %v1896 = vlaneseq
      %v1897 = vshrl.u32 %v1896, 7
      %v1898 = vsub.s32 %v1895, %v1897
      %v1899 = vrot.slane %v1885, %v1898
      %v1900 = vcombine.high %v1892, %v1892
      %v1901 = vcombine.high %v1899, %v1899
      %v1902 = vcombine.high %v1737, %v1737
      %v1904 = vunpack.c.l.s4 1983009808
      %v1905 = vunpack.c.0.s8 %v1904
      %v1906 = vlaneseq
      %v1907 = vshrl.u32 %v1906, 7
      %v1908 = vsub.s32 %v1905, %v1907
      %v1909 = vrot.slane %v1737, %v1908
      %v1911 = vunpack.c.l.s4 1983009808
      %v1912 = vunpack.c.0.s8 %v1911
      %v1913 = vlaneseq
      %v1914 = vshrl.u32 %v1913, 7
      %v1915 = vsub.s32 %v1912, %v1914
      %v1916 = vrot.slane %v1902, %v1915
      %v1917 = vcombine.high %v1909, %v1909
      %v1918 = vcombine.high %v1916, %v1916
      %v1919 = vcombine.high %v1740, %v1740
      %v1921 = vunpack.c.l.s4 1983009808
      %v1922 = vunpack.c.0.s8 %v1921
      %v1923 = vlaneseq
      %v1924 = vshrl.u32 %v1923, 7
      %v1925 = vsub.s32 %v1922, %v1924
      %v1926 = vrot.slane %v1740, %v1925
      %v1928 = vunpack.c.l.s4 1983009808
      %v1929 = vunpack.c.0.s8 %v1928
      %v1930 = vlaneseq
      %v1931 = vshrl.u32 %v1930, 7
      %v1932 = vsub.s32 %v1929, %v1931
      %v1933 = vrot.slane %v1919, %v1932
      %v1934 = vcombine.high %v1926, %v1926
      %v1935 = vcombine.high %v1933, %v1933
      %v1936 = vcombine.high %v1745, %v1745
      %v1938 = vunpack.c.l.s4 1983009808
      %v1939 = vunpack.c.0.s8 %v1938
      %v1940 = vlaneseq
      %v1941 = vshrl.u32 %v1940, 7
      %v1942 = vsub.s32 %v1939, %v1941
      %v1943 = vrot.slane %v1745, %v1942
      %v1945 = vunpack.c.l.s4 1983009808
      %v1946 = vunpack.c.0.s8 %v1945
      %v1947 = vlaneseq
      %v1948 = vshrl.u32 %v1947, 7
      %v1949 = vsub.s32 %v1946, %v1948
      %v1950 = vrot.slane %v1936, %v1949
      %v1951 = vcombine.high %v1943, %v1943
      %v1952 = vcombine.high %v1748, %v1748
      %v1954 = vunpack.c.l.s4 1983009808
      %v1955 = vunpack.c.0.s8 %v1954
      %v1956 = vlaneseq
      %v1957 = vshrl.u32 %v1956, 7
      %v1958 = vsub.s32 %v1955, %v1957
      %v1959 = vrot.slane %v1748, %v1958
      %v1961 = vunpack.c.l.s4 1983009808
      %v1962 = vunpack.c.0.s8 %v1961
      %v1963 = vlaneseq
      %v1964 = vshrl.u32 %v1963, 7
      %v1965 = vsub.s32 %v1962, %v1964
      %v1966 = vrot.slane %v1952, %v1965
      %v1967 = vcombine.high %v1959, %v1959
      %v1968 = vcombine.high %v1966, %v1966
      %v1969 = vcombine.high %v1753, %v1753
      %v1971 = vunpack.c.l.s4 1983009808
      %v1972 = vunpack.c.0.s8 %v1971
      %v1973 = vlaneseq
      %v1974 = vshrl.u32 %v1973, 7
      %v1975 = vsub.s32 %v1972, %v1974
      %v1976 = vrot.slane %v1753, %v1975
      %v1978 = vunpack.c.l.s4 1983009808
      %v1979 = vunpack.c.0.s8 %v1978
      %v1980 = vlaneseq
      %v1981 = vshrl.u32 %v1980, 7
      %v1982 = vsub.s32 %v1979, %v1981
      %v1983 = vrot.slane %v1969, %v1982
      %v1984 = vcombine.high %v1976, %v1976
      %v1985 = vcombine.high %v1983, %v1983
      %v1986 = vcombine.high %v1756, %v1756
      %v1988 = vunpack.c.l.s4 1983009808
      %v1989 = vunpack.c.0.s8 %v1988
      %v1990 = vlaneseq
      %v1991 = vshrl.u32 %v1990, 7
      %v1992 = vsub.s32 %v1989, %v1991
      %v1993 = vrot.slane %v1756, %v1992
      %v1995 = vunpack.c.l.s4 1983009808
      %v1996 = vunpack.c.0.s8 %v1995
      %v1997 = vlaneseq
      %v1998 = vshrl.u32 %v1997, 7
      %v1999 = vsub.s32 %v1996, %v1998
      %v2000 = vrot.slane %v1986, %v1999
      %v2001 = vcombine.high %v1993, %v1993
      %v2002 = vcombine.high %v2000, %v2000
      %v2003 = vcombine.high %v1761, %v1761
      %v2005 = vunpack.c.l.s4 1983009808
      %v2006 = vunpack.c.0.s8 %v2005
      %v2007 = vlaneseq
      %v2008 = vshrl.u32 %v2007, 7
      %v2009 = vsub.s32 %v2006, %v2008
      %v2010 = vrot.slane %v1761, %v2009
      %v2012 = vunpack.c.l.s4 1983009808
      %v2013 = vunpack.c.0.s8 %v2012
      %v2014 = vlaneseq
      %v2015 = vshrl.u32 %v2014, 7
      %v2016 = vsub.s32 %v2013, %v2015
      %v2017 = vrot.slane %v2003, %v2016
      %v2018 = vcombine.high %v2010, %v2010
      %v2019 = vcombine.high %v2017, %v2017
      %v2020 = vcombine.high %v1764, %v1764
      %v2022 = vunpack.c.l.s4 1983009808
      %v2023 = vunpack.c.0.s8 %v2022
      %v2024 = vlaneseq
      %v2025 = vshrl.u32 %v2024, 7
      %v2026 = vsub.s32 %v2023, %v2025
      %v2027 = vrot.slane %v1764, %v2026
      %v2029 = vunpack.c.l.s4 1983009808
      %v2030 = vunpack.c.0.s8 %v2029
      %v2031 = vlaneseq
      %v2032 = vshrl.u32 %v2031, 7
      %v2033 = vsub.s32 %v2030, %v2032
      %v2034 = vrot.slane %v2020, %v2033
      %v2035 = vcombine.high %v2034, %v2034
      %v2036 = vcombine.high %v1769, %v1769
      %v2038 = vunpack.c.l.s4 1983009808
      %v2039 = vunpack.c.0.s8 %v2038
      %v2040 = vlaneseq
      %v2041 = vshrl.u32 %v2040, 7
      %v2042 = vsub.s32 %v2039, %v2041
      %v2043 = vrot.slane %v1769, %v2042
      %v2045 = vunpack.c.l.s4 1983009808
      %v2046 = vunpack.c.0.s8 %v2045
      %v2047 = vlaneseq
      %v2048 = vshrl.u32 %v2047, 7
      %v2049 = vsub.s32 %v2046, %v2048
      %v2050 = vrot.slane %v2036, %v2049
      %v2051 = vcombine.high %v2043, %v2043
      %v2052 = vcombine.high %v2050, %v2050
      %v2053 = vcombine.high %v1772, %v1772
      %v2055 = vunpack.c.l.s4 1983009808
      %v2056 = vunpack.c.0.s8 %v2055
      %v2057 = vlaneseq
      %v2058 = vshrl.u32 %v2057, 7
      %v2059 = vsub.s32 %v2056, %v2058
      %v2060 = vrot.slane %v1772, %v2059
      %v2062 = vunpack.c.l.s4 1983009808
      %v2063 = vunpack.c.0.s8 %v2062
      %v2064 = vlaneseq
      %v2065 = vshrl.u32 %v2064, 7
      %v2066 = vsub.s32 %v2063, %v2065
      %v2067 = vrot.slane %v2053, %v2066
      %v2068 = vcombine.high %v2060, %v2060
      %v2069 = vcombine.high %v2067, %v2067
      %v2070 = vcombine.high %v1777, %v1777
      %v2072 = vunpack.c.l.s4 1983009808
      %v2073 = vunpack.c.0.s8 %v2072
      %v2074 = vlaneseq
      %v2075 = vshrl.u32 %v2074, 7
      %v2076 = vsub.s32 %v2073, %v2075
      %v2077 = vrot.slane %v1777, %v2076
      %v2079 = vunpack.c.l.s4 1983009808
      %v2080 = vunpack.c.0.s8 %v2079
      %v2081 = vlaneseq
      %v2082 = vshrl.u32 %v2081, 7
      %v2083 = vsub.s32 %v2080, %v2082
      %v2084 = vrot.slane %v2070, %v2083
      %v2085 = vcombine.high %v2077, %v2077
      %v2086 = vcombine.high %v2084, %v2084
      %v2087 = vcombine.high %v1780, %v1780
      %v2089 = vunpack.c.l.s4 1983009808
      %v2090 = vunpack.c.0.s8 %v2089
      %v2091 = vlaneseq
      %v2092 = vshrl.u32 %v2091, 7
      %v2093 = vsub.s32 %v2090, %v2092
      %v2094 = vrot.slane %v1780, %v2093
      %v2096 = vunpack.c.l.s4 1983009808
      %v2097 = vunpack.c.0.s8 %v2096
      %v2098 = vlaneseq
      %v2099 = vshrl.u32 %v2098, 7
      %v2100 = vsub.s32 %v2097, %v2099
      %v2101 = vrot.slane %v2087, %v2100
      %v2102 = vcombine.high %v2094, %v2094
      %s2167 = scalar_lea.vmem %s3, 8
      %v2168 = vld [vmem:[%s2167] sm:$0xf]
      %v2169 = vld [vmem:[%s2167 + $0x4] sm:$0x3]
      %v2172 = vunpack.c.l.b16 %v2168
      %v2173 = vunpack.c.l.b16 %v2169
      %v2174 = vpack.c.b16 %v2173, %v2172
      %v2176 = vsel %vm1674, %v2174, 0
      %2178 = vmatprep.subr.bf16.mxu0 0
      %2179 = vmatpush1.bf16.msra.mxu0 0
      %2180 = vmatprep.subr.bf16.mxu0 0
      %2181 = vmatpush1.bf16.msra.mxu0 0
      %2182 = vmatprep.subr.bf16.mxu0 0
      %2183 = vmatpush1.bf16.msra.mxu0 0
      %2184 = vmatprep.subr.bf16.mxu0 0
      %2185 = vmatpush1.bf16.msra.mxu0 0
      %2186 = vmatprep.subr.bf16.mxu0 0
      %2187 = vmatpush1.bf16.msra.mxu0 0
      %2188 = vmatprep.subr.bf16.mxu0 0
      %2189 = vmatpush1.bf16.msra.mxu0 0
      %2190 = vmatprep.subr.bf16.mxu0 0
      %2191 = vmatpush1.bf16.msra.mxu0 0
      %2192 = vmatprep.subr.bf16.mxu0 0
      %2193 = vmatpush1.bf16.msra.mxu0 %v2176
      %2194 = vmatprep.subr.bf16.mxu0 0
      %2195 = vmatpush2.bf16.msra.mxu0 0
      %2196 = vmatprep.subr.bf16.mxu0 0
      %2197 = vmatpush2.bf16.msra.mxu0 0
      %2198 = vmatprep.subr.bf16.mxu0 0
      %2199 = vmatpush2.bf16.msra.mxu0 0
      %2200 = vmatprep.subr.bf16.mxu0 0
      %2201 = vmatpush2.bf16.msra.mxu0 0
      %2202 = vmatprep.subr.bf16.mxu0 0
      %2203 = vmatpush2.bf16.msra.mxu0 0
      %2204 = vmatprep.subr.bf16.mxu0 0
      %2205 = vmatpush2.bf16.msra.mxu0 0
      %2206 = vmatprep.subr.bf16.mxu0 0
      %2207 = vmatpush2.bf16.msra.mxu0 0
      %2208 = vmatprep.subr.bf16.mxu0 0
      %2209 = vmatpush2.bf16.msra.mxu0 0
      %2210 = vmatprep.mubr.bf16.mxu0 0
      %2211 = vmatmul.mubr.bf16.gmra.mxu0 %v1648
      %v2212 = vpop.f32.mrf.mxu0
      %v2213 = vadd.f32 0.0, %v2212
      %v2214 = vpop.f32.mrf.mxu0
      %v2215 = vpop.f32.mrf.mxu0
      %v2216 = vadd.f32 0.0, %v2215
      %v2217 = vpop.f32.mrf.mxu0
      %2218 = vmatprep.mubr.bf16.mxu0 0
      %2219 = vmatmul.mubr.bf16.gmra.mxu0 %v1651
      %v2220 = vpop.f32.mrf.mxu0
      %v2221 = vadd.f32 0.0, %v2220
      %v2222 = vpop.f32.mrf.mxu0
      %v2223 = vpop.f32.mrf.mxu0
      %v2224 = vadd.f32 0.0, %v2223
      %v2225 = vpop.f32.mrf.mxu0
      %2226 = vmatprep.mubr.bf16.mxu0 0
      %2227 = vmatmul.mubr.bf16.gmra.mxu0 %v1654
      %v2228 = vpop.f32.mrf.mxu0
      %v2229 = vadd.f32 0.0, %v2228
      %v2230 = vpop.f32.mrf.mxu0
      %v2231 = vpop.f32.mrf.mxu0
      %v2232 = vadd.f32 0.0, %v2231
      %v2233 = vpop.f32.mrf.mxu0
      %2234 = vmatprep.mubr.bf16.mxu0 0
      %2235 = vmatmul.mubr.bf16.gmra.mxu0 %v1657
      %v2236 = vpop.f32.mrf.mxu0
      %v2237 = vadd.f32 0.0, %v2236
      %v2238 = vpop.f32.mrf.mxu0
      %v2239 = vpop.f32.mrf.mxu0
      %v2240 = vadd.f32 0.0, %v2239
      %v2241 = vpop.f32.mrf.mxu0
      %2242 = vmatprep.mubr.bf16.mxu0 0
      %2243 = vmatmul.mubr.bf16.gmra.mxu0 %v1660
      %v2244 = vpop.f32.mrf.mxu0
      %v2245 = vadd.f32 0.0, %v2244
      %v2246 = vpop.f32.mrf.mxu0
      %v2247 = vpop.f32.mrf.mxu0
      %v2248 = vadd.f32 0.0, %v2247
      %v2249 = vpop.f32.mrf.mxu0
      %2250 = vmatprep.mubr.bf16.mxu0 0
      %2251 = vmatmul.mubr.bf16.gmra.mxu0 %v1663
      %v2252 = vpop.f32.mrf.mxu0
      %v2253 = vadd.f32 0.0, %v2252
      %v2254 = vpop.f32.mrf.mxu0
      %v2255 = vpop.f32.mrf.mxu0
      %v2256 = vadd.f32 0.0, %v2255
      %v2257 = vpop.f32.mrf.mxu0
      %2258 = vmatprep.mubr.bf16.mxu0 0
      %2259 = vmatmul.mubr.bf16.gmra.mxu0 %v1666
      %v2260 = vpop.f32.mrf.mxu0
      %v2261 = vadd.f32 0.0, %v2260
      %v2262 = vpop.f32.mrf.mxu0
      %v2263 = vpop.f32.mrf.mxu0
      %v2264 = vadd.f32 0.0, %v2263
      %v2265 = vpop.f32.mrf.mxu0
      %2266 = vmatprep.mubr.bf16.mxu0 0
      %2267 = vmatmul.mubr.bf16.gmra.mxu0 %v1669
      %v2268 = vpop.f32.mrf.mxu0
      %v2269 = vadd.f32 0.0, %v2268
      %v2270 = vpop.f32.mrf.mxu0
      %v2271 = vpop.f32.mrf.mxu0
      %v2272 = vadd.f32 0.0, %v2271
      %v2273 = vpop.f32.mrf.mxu0
      %2274 = vmatprep.mubr.bf16.mxu0 0
      %2275 = vmatmul.mubr.bf16.gmra.mxu0 %v1672
      %v2276 = vpop.f32.mrf.mxu0
      %v2277 = vadd.f32 0.0, %v2276
      %v2278 = vpop.f32.mrf.mxu0
      %v2279 = vpop.f32.mrf.mxu0
      %v2280 = vadd.f32 0.0, %v2279
      %v2281 = vpop.f32.mrf.mxu0
      %2282 = vdwg.mxu0
      %v2301 = vcombine.high %v2213, %v2213
      %v2303 = vunpack.c.l.s4 1983009808
      %v2304 = vunpack.c.0.s8 %v2303
      %v2305 = vlaneseq
      %v2306 = vshrl.u32 %v2305, 7
      %v2307 = vsub.s32 %v2304, %v2306
      %v2308 = vrot.slane %v2213, %v2307
      %v2310 = vunpack.c.l.s4 1983009808
      %v2311 = vunpack.c.0.s8 %v2310
      %v2312 = vlaneseq
      %v2313 = vshrl.u32 %v2312, 7
      %v2314 = vsub.s32 %v2311, %v2313
      %v2315 = vrot.slane %v2301, %v2314
      %v2316 = vcombine.high %v2308, %v2308
      %v2317 = vcombine.high %v2315, %v2315
      %v2318 = vcombine.high %v2216, %v2216
      %v2320 = vunpack.c.l.s4 1983009808
      %v2321 = vunpack.c.0.s8 %v2320
      %v2322 = vlaneseq
      %v2323 = vshrl.u32 %v2322, 7
      %v2324 = vsub.s32 %v2321, %v2323
      %v2325 = vrot.slane %v2216, %v2324
      %v2327 = vunpack.c.l.s4 1983009808
      %v2328 = vunpack.c.0.s8 %v2327
      %v2329 = vlaneseq
      %v2330 = vshrl.u32 %v2329, 7
      %v2331 = vsub.s32 %v2328, %v2330
      %v2332 = vrot.slane %v2318, %v2331
      %v2333 = vcombine.high %v2325, %v2325
      %v2334 = vcombine.high %v2332, %v2332
      %v2335 = vcombine.high %v2221, %v2221
      %v2337 = vunpack.c.l.s4 1983009808
      %v2338 = vunpack.c.0.s8 %v2337
      %v2339 = vlaneseq
      %v2340 = vshrl.u32 %v2339, 7
      %v2341 = vsub.s32 %v2338, %v2340
      %v2342 = vrot.slane %v2221, %v2341
      %v2344 = vunpack.c.l.s4 1983009808
      %v2345 = vunpack.c.0.s8 %v2344
      %v2346 = vlaneseq
      %v2347 = vshrl.u32 %v2346, 7
      %v2348 = vsub.s32 %v2345, %v2347
      %v2349 = vrot.slane %v2335, %v2348
      %v2350 = vcombine.high %v2342, %v2342
      %v2351 = vcombine.high %v2349, %v2349
      %v2352 = vcombine.high %v2224, %v2224
      %v2354 = vunpack.c.l.s4 1983009808
      %v2355 = vunpack.c.0.s8 %v2354
      %v2356 = vlaneseq
      %v2357 = vshrl.u32 %v2356, 7
      %v2358 = vsub.s32 %v2355, %v2357
      %v2359 = vrot.slane %v2224, %v2358
      %v2361 = vunpack.c.l.s4 1983009808
      %v2362 = vunpack.c.0.s8 %v2361
      %v2363 = vlaneseq
      %v2364 = vshrl.u32 %v2363, 7
      %v2365 = vsub.s32 %v2362, %v2364
      %v2366 = vrot.slane %v2352, %v2365
      %v2367 = vcombine.high %v2359, %v2359
      %v2368 = vcombine.high %v2366, %v2366
      %v2369 = vcombine.high %v2229, %v2229
      %v2371 = vunpack.c.l.s4 1983009808
      %v2372 = vunpack.c.0.s8 %v2371
      %v2373 = vlaneseq
      %v2374 = vshrl.u32 %v2373, 7
      %v2375 = vsub.s32 %v2372, %v2374
      %v2376 = vrot.slane %v2229, %v2375
      %v2378 = vunpack.c.l.s4 1983009808
      %v2379 = vunpack.c.0.s8 %v2378
      %v2380 = vlaneseq
      %v2381 = vshrl.u32 %v2380, 7
      %v2382 = vsub.s32 %v2379, %v2381
      %v2383 = vrot.slane %v2369, %v2382
      %v2384 = vcombine.high %v2376, %v2376
      %v2385 = vcombine.high %v2383, %v2383
      %v2386 = vcombine.high %v2232, %v2232
      %v2388 = vunpack.c.l.s4 1983009808
      %v2389 = vunpack.c.0.s8 %v2388
      %v2390 = vlaneseq
      %v2391 = vshrl.u32 %v2390, 7
      %v2392 = vsub.s32 %v2389, %v2391
      %v2393 = vrot.slane %v2232, %v2392
      %v2395 = vunpack.c.l.s4 1983009808
      %v2396 = vunpack.c.0.s8 %v2395
      %v2397 = vlaneseq
      %v2398 = vshrl.u32 %v2397, 7
      %v2399 = vsub.s32 %v2396, %v2398
      %v2400 = vrot.slane %v2386, %v2399
      %v2401 = vcombine.high %v2393, %v2393
      %v2402 = vcombine.high %v2400, %v2400
      %v2403 = vcombine.high %v2237, %v2237
      %v2405 = vunpack.c.l.s4 1983009808
      %v2406 = vunpack.c.0.s8 %v2405
      %v2407 = vlaneseq
      %v2408 = vshrl.u32 %v2407, 7
      %v2409 = vsub.s32 %v2406, %v2408
      %v2410 = vrot.slane %v2237, %v2409
      %v2412 = vunpack.c.l.s4 1983009808
      %v2413 = vunpack.c.0.s8 %v2412
      %v2414 = vlaneseq
      %v2415 = vshrl.u32 %v2414, 7
      %v2416 = vsub.s32 %v2413, %v2415
      %v2417 = vrot.slane %v2403, %v2416
      %v2418 = vcombine.high %v2410, %v2410
      %v2419 = vcombine.high %v2417, %v2417
      %v2420 = vcombine.high %v2240, %v2240
      %v2422 = vunpack.c.l.s4 1983009808
      %v2423 = vunpack.c.0.s8 %v2422
      %v2424 = vlaneseq
      %v2425 = vshrl.u32 %v2424, 7
      %v2426 = vsub.s32 %v2423, %v2425
      %v2427 = vrot.slane %v2240, %v2426
      %v2429 = vunpack.c.l.s4 1983009808
      %v2430 = vunpack.c.0.s8 %v2429
      %v2431 = vlaneseq
      %v2432 = vshrl.u32 %v2431, 7
      %v2433 = vsub.s32 %v2430, %v2432
      %v2434 = vrot.slane %v2420, %v2433
      %v2435 = vcombine.high %v2427, %v2427
      %v2436 = vcombine.high %v2434, %v2434
      %v2437 = vcombine.high %v2245, %v2245
      %v2439 = vunpack.c.l.s4 1983009808
      %v2440 = vunpack.c.0.s8 %v2439
      %v2441 = vlaneseq
      %v2442 = vshrl.u32 %v2441, 7
      %v2443 = vsub.s32 %v2440, %v2442
      %v2444 = vrot.slane %v2245, %v2443
      %v2446 = vunpack.c.l.s4 1983009808
      %v2447 = vunpack.c.0.s8 %v2446
      %v2448 = vlaneseq
      %v2449 = vshrl.u32 %v2448, 7
      %v2450 = vsub.s32 %v2447, %v2449
      %v2451 = vrot.slane %v2437, %v2450
      %v2452 = vcombine.high %v2444, %v2444
      %v2453 = vcombine.high %v2451, %v2451
      %v2454 = vcombine.high %v2248, %v2248
      %v2456 = vunpack.c.l.s4 1983009808
      %v2457 = vunpack.c.0.s8 %v2456
      %v2458 = vlaneseq
      %v2459 = vshrl.u32 %v2458, 7
      %v2460 = vsub.s32 %v2457, %v2459
      %v2461 = vrot.slane %v2248, %v2460
      %v2463 = vunpack.c.l.s4 1983009808
      %v2464 = vunpack.c.0.s8 %v2463
      %v2465 = vlaneseq
      %v2466 = vshrl.u32 %v2465, 7
      %v2467 = vsub.s32 %v2464, %v2466
      %v2468 = vrot.slane %v2454, %v2467
      %v2469 = vcombine.high %v2461, %v2461
      %v2470 = vcombine.high %v2468, %v2468
      %v2471 = vcombine.high %v2253, %v2253
      %v2473 = vunpack.c.l.s4 1983009808
      %v2474 = vunpack.c.0.s8 %v2473
      %v2475 = vlaneseq
      %v2476 = vshrl.u32 %v2475, 7
      %v2477 = vsub.s32 %v2474, %v2476
      %v2478 = vrot.slane %v2253, %v2477
      %v2480 = vunpack.c.l.s4 1983009808
      %v2481 = vunpack.c.0.s8 %v2480
      %v2482 = vlaneseq
      %v2483 = vshrl.u32 %v2482, 7
      %v2484 = vsub.s32 %v2481, %v2483
      %v2485 = vrot.slane %v2471, %v2484
      %v2486 = vcombine.high %v2478, %v2478
      %v2487 = vcombine.high %v2485, %v2485
      %v2488 = vcombine.high %v2256, %v2256
      %v2490 = vunpack.c.l.s4 1983009808
      %v2491 = vunpack.c.0.s8 %v2490
      %v2492 = vlaneseq
      %v2493 = vshrl.u32 %v2492, 7
      %v2494 = vsub.s32 %v2491, %v2493
      %v2495 = vrot.slane %v2256, %v2494
      %v2497 = vunpack.c.l.s4 1983009808
      %v2498 = vunpack.c.0.s8 %v2497
      %v2499 = vlaneseq
      %v2500 = vshrl.u32 %v2499, 7
      %v2501 = vsub.s32 %v2498, %v2500
      %v2502 = vrot.slane %v2488, %v2501
      %v2503 = vcombine.high %v2495, %v2495
      %v2504 = vcombine.high %v2502, %v2502
      %v2505 = vcombine.high %v2261, %v2261
      %v2507 = vunpack.c.l.s4 1983009808
      %v2508 = vunpack.c.0.s8 %v2507
      %v2509 = vlaneseq
      %v2510 = vshrl.u32 %v2509, 7
      %v2511 = vsub.s32 %v2508, %v2510
      %v2512 = vrot.slane %v2261, %v2511
      %v2514 = vunpack.c.l.s4 1983009808
      %v2515 = vunpack.c.0.s8 %v2514
      %v2516 = vlaneseq
      %v2517 = vshrl.u32 %v2516, 7
      %v2518 = vsub.s32 %v2515, %v2517
      %v2519 = vrot.slane %v2505, %v2518
      %v2520 = vcombine.high %v2512, %v2512
      %v2521 = vcombine.high %v2519, %v2519
      %v2522 = vcombine.high %v2264, %v2264
      %v2524 = vunpack.c.l.s4 1983009808
      %v2525 = vunpack.c.0.s8 %v2524
      %v2526 = vlaneseq
      %v2527 = vshrl.u32 %v2526, 7
      %v2528 = vsub.s32 %v2525, %v2527
      %v2529 = vrot.slane %v2264, %v2528
      %v2531 = vunpack.c.l.s4 1983009808
      %v2532 = vunpack.c.0.s8 %v2531
      %v2533 = vlaneseq
      %v2534 = vshrl.u32 %v2533, 7
      %v2535 = vsub.s32 %v2532, %v2534
      %v2536 = vrot.slane %v2522, %v2535
      %v2537 = vcombine.high %v2529, %v2529
      %v2538 = vcombine.high %v2536, %v2536
      %v2539 = vcombine.high %v2269, %v2269
      %v2541 = vunpack.c.l.s4 1983009808
      %v2542 = vunpack.c.0.s8 %v2541
      %v2543 = vlaneseq
      %v2544 = vshrl.u32 %v2543, 7
      %v2545 = vsub.s32 %v2542, %v2544
      %v2546 = vrot.slane %v2269, %v2545
      %v2548 = vunpack.c.l.s4 1983009808
      %v2549 = vunpack.c.0.s8 %v2548
      %v2550 = vlaneseq
      %v2551 = vshrl.u32 %v2550, 7
      %v2552 = vsub.s32 %v2549, %v2551
      %v2553 = vrot.slane %v2539, %v2552
      %v2554 = vcombine.high %v2546, %v2546
      %v2555 = vcombine.high %v2553, %v2553
      %v2556 = vcombine.high %v2272, %v2272
      %v2558 = vunpack.c.l.s4 1983009808
      %v2559 = vunpack.c.0.s8 %v2558
      %v2560 = vlaneseq
      %v2561 = vshrl.u32 %v2560, 7
      %v2562 = vsub.s32 %v2559, %v2561
      %v2563 = vrot.slane %v2272, %v2562
      %v2565 = vunpack.c.l.s4 1983009808
      %v2566 = vunpack.c.0.s8 %v2565
      %v2567 = vlaneseq
      %v2568 = vshrl.u32 %v2567, 7
      %v2569 = vsub.s32 %v2566, %v2568
      %v2570 = vrot.slane %v2556, %v2569
      %v2571 = vcombine.high %v2563, %v2563
      %v2572 = vcombine.high %v2570, %v2570
      %v2573 = vcombine.high %v2277, %v2277
      %v2575 = vunpack.c.l.s4 1983009808
      %v2576 = vunpack.c.0.s8 %v2575
      %v2577 = vlaneseq
      %v2578 = vshrl.u32 %v2577, 7
      %v2579 = vsub.s32 %v2576, %v2578
      %v2580 = vrot.slane %v2277, %v2579
      %v2582 = vunpack.c.l.s4 1983009808
      %v2583 = vunpack.c.0.s8 %v2582
      %v2584 = vlaneseq
      %v2585 = vshrl.u32 %v2584, 7
      %v2586 = vsub.s32 %v2583, %v2585
      %v2587 = vrot.slane %v2573, %v2586
      %v2588 = vcombine.high %v2580, %v2580
      %v2589 = vcombine.high %v2587, %v2587
      %v2590 = vcombine.high %v2280, %v2280
      %v2592 = vunpack.c.l.s4 1983009808
      %v2593 = vunpack.c.0.s8 %v2592
      %v2594 = vlaneseq
      %v2595 = vshrl.u32 %v2594, 7
      %v2596 = vsub.s32 %v2593, %v2595
      %v2597 = vrot.slane %v2280, %v2596
      %v2599 = vunpack.c.l.s4 1983009808
      %v2600 = vunpack.c.0.s8 %v2599
      %v2601 = vlaneseq
      %v2602 = vshrl.u32 %v2601, 7
      %v2603 = vsub.s32 %v2600, %v2602
      %v2604 = vrot.slane %v2590, %v2603
      %v2605 = vcombine.high %v2597, %v2597
      %v2606 = vcombine.high %v2604, %v2604
      %vm2607 = vcmask 1040384
      %vm2608 = vcmask 1042434
      %vm2609 = vmor %vm2607, %vm2608
      %vm2610 = vcmask 1044484
      %vm2611 = vmor %vm2609, %vm2610
      %vm2612 = vcmask 1046534
      %vm2613 = vmor %vm2611, %vm2612
      %v2614 = vrot.slane %v2308, 7
      %v2615 = vrot.slane %v2614, 2
      %v2616 = vrot.slane %v2316, 7
      %v2617 = vsel %vm2613, %v2615, %v2616
      %v2618 = vrot.slane %v2616, 2
      %v2619 = vrot.slane %v2315, 7
      %v2620 = vsel %vm2613, %v2618, %v2619
      %v2621 = vrot.slane %v2619, 2
      %v2622 = vrot.slane %v2317, 7
      %v2623 = vsel %vm2613, %v2621, %v2622
      %v2624 = vrot.slane %v2622, 2
      %v2625 = vrot.slane %v2325, 7
      %v2626 = vsel %vm2613, %v2624, %v2625
      %v2627 = vrot.slane %v2625, 2
      %v2628 = vrot.slane %v2333, 7
      %v2629 = vsel %vm2613, %v2627, %v2628
      %v2630 = vrot.slane %v2628, 2
      %v2631 = vrot.slane %v2332, 7
      %v2632 = vsel %vm2613, %v2630, %v2631
      %v2633 = vrot.slane %v2631, 2
      %v2634 = vrot.slane %v2334, 7
      %v2635 = vsel %vm2613, %v2633, %v2634
      %v2636 = vrot.slane %v2634, 2
      %v2637 = vrot.slane %v2342, 7
      %v2638 = vsel %vm2613, %v2636, %v2637
      %v2639 = vrot.slane %v2350, 7
      %v2640 = vrot.slane %v2639, 2
      %v2641 = vrot.slane %v2349, 7
      %v2642 = vsel %vm2613, %v2640, %v2641
      %v2643 = vrot.slane %v2641, 2
      %v2644 = vrot.slane %v2351, 7
      %v2645 = vsel %vm2613, %v2643, %v2644
      %v2646 = vrot.slane %v2644, 2
      %v2647 = vrot.slane %v2359, 7
      %v2648 = vsel %vm2613, %v2646, %v2647
      %v2649 = vrot.slane %v2647, 2
      %v2650 = vrot.slane %v2367, 7
      %v2651 = vsel %vm2613, %v2649, %v2650
      %v2652 = vrot.slane %v2650, 2
      %v2653 = vrot.slane %v2366, 7
      %v2654 = vsel %vm2613, %v2652, %v2653
      %v2655 = vrot.slane %v2653, 2
      %v2656 = vrot.slane %v2368, 7
      %v2657 = vsel %vm2613, %v2655, %v2656
      %v2658 = vrot.slane %v2656, 2
      %v2659 = vrot.slane %v2376, 7
      %v2660 = vsel %vm2613, %v2658, %v2659
      %v2661 = vrot.slane %v2659, 2
      %v2662 = vrot.slane %v2384, 7
      %v2663 = vsel %vm2613, %v2661, %v2662
      %v2664 = vrot.slane %v2383, 7
      %v2665 = vrot.slane %v2664, 2
      %v2666 = vrot.slane %v2385, 7
      %v2667 = vsel %vm2613, %v2665, %v2666
      %v2668 = vrot.slane %v2666, 2
      %v2669 = vrot.slane %v2393, 7
      %v2670 = vsel %vm2613, %v2668, %v2669
      %v2671 = vrot.slane %v2669, 2
      %v2672 = vrot.slane %v2401, 7
      %v2673 = vsel %vm2613, %v2671, %v2672
      %v2674 = vrot.slane %v2672, 2
      %v2675 = vrot.slane %v2400, 7
      %v2676 = vsel %vm2613, %v2674, %v2675
      %v2677 = vrot.slane %v2675, 2
      %v2678 = vrot.slane %v2402, 7
      %v2679 = vsel %vm2613, %v2677, %v2678
      %v2680 = vrot.slane %v2678, 2
      %v2681 = vrot.slane %v2410, 7
      %v2682 = vsel %vm2613, %v2680, %v2681
      %v2683 = vrot.slane %v2681, 2
      %v2684 = vrot.slane %v2418, 7
      %v2685 = vsel %vm2613, %v2683, %v2684
      %v2686 = vrot.slane %v2684, 2
      %v2687 = vrot.slane %v2417, 7
      %v2688 = vsel %vm2613, %v2686, %v2687
      %v2689 = vrot.slane %v2419, 7
      %v2690 = vrot.slane %v2689, 2
      %v2691 = vrot.slane %v2427, 7
      %v2692 = vsel %vm2613, %v2690, %v2691
      %v2693 = vrot.slane %v2691, 2
      %v2694 = vrot.slane %v2435, 7
      %v2695 = vsel %vm2613, %v2693, %v2694
      %v2696 = vrot.slane %v2694, 2
      %v2697 = vrot.slane %v2434, 7
      %v2698 = vsel %vm2613, %v2696, %v2697
      %v2699 = vrot.slane %v2697, 2
      %v2700 = vrot.slane %v2436, 7
      %v2701 = vsel %vm2613, %v2699, %v2700
      %v2702 = vrot.slane %v2700, 2
      %v2703 = vrot.slane %v2444, 7
      %v2704 = vsel %vm2613, %v2702, %v2703
      %v2705 = vrot.slane %v2703, 2
      %v2706 = vrot.slane %v2452, 7
      %v2707 = vsel %vm2613, %v2705, %v2706
      %v2708 = vrot.slane %v2706, 2
      %v2709 = vrot.slane %v2451, 7
      %v2710 = vsel %vm2613, %v2708, %v2709
      %v2711 = vrot.slane %v2709, 2
      %v2712 = vrot.slane %v2453, 7
      %v2713 = vsel %vm2613, %v2711, %v2712
      %v2714 = vrot.slane %v2461, 7
      %v2715 = vrot.slane %v2714, 2
      %v2716 = vrot.slane %v2469, 7
      %v2717 = vsel %vm2613, %v2715, %v2716
      %v2718 = vrot.slane %v2716, 2
      %v2719 = vrot.slane %v2468, 7
      %v2720 = vsel %vm2613, %v2718, %v2719
      %v2721 = vrot.slane %v2719, 2
      %v2722 = vrot.slane %v2470, 7
      %v2723 = vsel %vm2613, %v2721, %v2722
      %v2724 = vrot.slane %v2722, 2
      %v2725 = vrot.slane %v2478, 7
      %v2726 = vsel %vm2613, %v2724, %v2725
      %v2727 = vrot.slane %v2725, 2
      %v2728 = vrot.slane %v2486, 7
      %v2729 = vsel %vm2613, %v2727, %v2728
      %v2730 = vrot.slane %v2728, 2
      %v2731 = vrot.slane %v2485, 7
      %v2732 = vsel %vm2613, %v2730, %v2731
      %v2733 = vrot.slane %v2731, 2
      %v2734 = vrot.slane %v2487, 7
      %v2735 = vsel %vm2613, %v2733, %v2734
      %v2736 = vrot.slane %v2734, 2
      %v2737 = vrot.slane %v2495, 7
      %v2738 = vsel %vm2613, %v2736, %v2737
      %v2739 = vrot.slane %v2503, 7
      %v2740 = vrot.slane %v2739, 2
      %v2741 = vrot.slane %v2502, 7
      %v2742 = vsel %vm2613, %v2740, %v2741
      %v2743 = vrot.slane %v2741, 2
      %v2744 = vrot.slane %v2504, 7
      %v2745 = vsel %vm2613, %v2743, %v2744
      %v2746 = vrot.slane %v2744, 2
      %v2747 = vrot.slane %v2512, 7
      %v2748 = vsel %vm2613, %v2746, %v2747
      %v2749 = vrot.slane %v2747, 2
      %v2750 = vrot.slane %v2520, 7
      %v2751 = vsel %vm2613, %v2749, %v2750
      %v2752 = vrot.slane %v2750, 2
      %v2753 = vrot.slane %v2519, 7
      %v2754 = vsel %vm2613, %v2752, %v2753
      %v2755 = vrot.slane %v2753, 2
      %v2756 = vrot.slane %v2521, 7
      %v2757 = vsel %vm2613, %v2755, %v2756
      %v2758 = vrot.slane %v2756, 2
      %v2759 = vrot.slane %v2529, 7
      %v2760 = vsel %vm2613, %v2758, %v2759
      %v2761 = vrot.slane %v2759, 2
      %v2762 = vrot.slane %v2537, 7
      %v2763 = vsel %vm2613, %v2761, %v2762
      %v2764 = vrot.slane %v2536, 7
      %v2765 = vrot.slane %v2764, 2
      %v2766 = vrot.slane %v2538, 7
      %v2767 = vsel %vm2613, %v2765, %v2766
      %v2768 = vrot.slane %v2766, 2
      %v2769 = vrot.slane %v2546, 7
      %v2770 = vsel %vm2613, %v2768, %v2769
      %v2771 = vrot.slane %v2769, 2
      %v2772 = vrot.slane %v2554, 7
      %v2773 = vsel %vm2613, %v2771, %v2772
      %v2774 = vrot.slane %v2772, 2
      %v2775 = vrot.slane %v2553, 7
      %v2776 = vsel %vm2613, %v2774, %v2775
      %v2777 = vrot.slane %v2775, 2
      %v2778 = vrot.slane %v2555, 7
      %v2779 = vsel %vm2613, %v2777, %v2778
      %v2780 = vrot.slane %v2778, 2
      %v2781 = vrot.slane %v2563, 7
      %v2782 = vsel %vm2613, %v2780, %v2781
      %v2783 = vrot.slane %v2781, 2
      %v2784 = vrot.slane %v2571, 7
      %v2785 = vsel %vm2613, %v2783, %v2784
      %v2786 = vrot.slane %v2784, 2
      %v2787 = vrot.slane %v2570, 7
      %v2788 = vsel %vm2613, %v2786, %v2787
      %v2789 = vrot.slane %v2572, 7
      %v2790 = vrot.slane %v2789, 2
      %v2791 = vrot.slane %v2580, 7
      %v2792 = vsel %vm2613, %v2790, %v2791
      %v2793 = vrot.slane %v2791, 2
      %v2794 = vrot.slane %v2588, 7
      %v2795 = vsel %vm2613, %v2793, %v2794
      %v2796 = vrot.slane %v2794, 2
      %v2797 = vrot.slane %v2587, 7
      %v2798 = vsel %vm2613, %v2796, %v2797
      %v2799 = vrot.slane %v2797, 2
      %v2800 = vrot.slane %v2589, 7
      %v2801 = vsel %vm2613, %v2799, %v2800
      %v2802 = vrot.slane %v2800, 2
      %v2803 = vrot.slane %v2597, 7
      %v2804 = vsel %vm2613, %v2802, %v2803
      %v2805 = vrot.slane %v2803, 2
      %v2806 = vrot.slane %v2605, 7
      %v2807 = vsel %vm2613, %v2805, %v2806
      %v2808 = vrot.slane %v2806, 2
      %v2809 = vrot.slane %v2604, 7
      %v2810 = vsel %vm2613, %v2808, %v2809
      %v2811 = vrot.slane %v2809, 2
      %v2812 = vrot.slane %v2606, 7
      %v2813 = vsel %vm2613, %v2811, %v2812
      %v2878 = vadd.f32 %v1808, %v2617
      %v2879 = vadd.f32 %v1816, %v2620
      %v2880 = vadd.f32 %v1815, %v2623
      %v2881 = vadd.f32 %v1817, %v2626
      %v2882 = vadd.f32 %v1825, %v2629
      %v2883 = vadd.f32 %v1833, %v2632
      %v2884 = vadd.f32 %v1832, %v2635
      %v2885 = vadd.f32 %v1834, %v2638
      %v2886 = vadd.f32 %v1850, %v2642
      %v2887 = vadd.f32 %v1849, %v2645
      %v2888 = vadd.f32 %v1851, %v2648
      %v2889 = vadd.f32 %v1859, %v2651
      %v2890 = vadd.f32 %v1867, %v2654
      %v2891 = vadd.f32 %v1866, %v2657
      %v2892 = vadd.f32 %v1868, %v2660
      %v2893 = vadd.f32 %v1876, %v2663
      %v2894 = vadd.f32 %v1883, %v2667
      %v2895 = vadd.f32 %v1884, %v2670
      %v2896 = vadd.f32 %v1892, %v2673
      %v2897 = vadd.f32 %v1900, %v2676
      %v2898 = vadd.f32 %v1899, %v2679
      %v2899 = vadd.f32 %v1901, %v2682
      %v2900 = vadd.f32 %v1909, %v2685
      %v2901 = vadd.f32 %v1917, %v2688
      %v2902 = vadd.f32 %v1918, %v2692
      %v2903 = vadd.f32 %v1926, %v2695
      %v2904 = vadd.f32 %v1934, %v2698
      %v2905 = vadd.f32 %v1933, %v2701
      %v2906 = vadd.f32 %v1935, %v2704
      %v2907 = vadd.f32 %v1943, %v2707
      %v2908 = vadd.f32 %v1951, %v2710
      %v2909 = vadd.f32 %v1950, %v2713
      %v2910 = vadd.f32 %v1959, %v2717
      %v2911 = vadd.f32 %v1967, %v2720
      %v2912 = vadd.f32 %v1966, %v2723
      %v2913 = vadd.f32 %v1968, %v2726
      %v2914 = vadd.f32 %v1976, %v2729
      %v2915 = vadd.f32 %v1984, %v2732
      %v2916 = vadd.f32 %v1983, %v2735
      %v2917 = vadd.f32 %v1985, %v2738
      %v2918 = vadd.f32 %v2001, %v2742
      %v2919 = vadd.f32 %v2000, %v2745
      %v2920 = vadd.f32 %v2002, %v2748
      %v2921 = vadd.f32 %v2010, %v2751
      %v2922 = vadd.f32 %v2018, %v2754
      %v2923 = vadd.f32 %v2017, %v2757
      %v2924 = vadd.f32 %v2019, %v2760
      %v2925 = vadd.f32 %v2027, %v2763
      %v2926 = vadd.f32 %v2034, %v2767
      %v2927 = vadd.f32 %v2035, %v2770
      %v2928 = vadd.f32 %v2043, %v2773
      %v2929 = vadd.f32 %v2051, %v2776
      %v2930 = vadd.f32 %v2050, %v2779
      %v2931 = vadd.f32 %v2052, %v2782
      %v2932 = vadd.f32 %v2060, %v2785
      %v2933 = vadd.f32 %v2068, %v2788
      %v2934 = vadd.f32 %v2069, %v2792
      %v2935 = vadd.f32 %v2077, %v2795
      %v2936 = vadd.f32 %v2085, %v2798
      %v2937 = vadd.f32 %v2084, %v2801
      %v2938 = vadd.f32 %v2086, %v2804
      %v2939 = vadd.f32 %v2094, %v2807
      %v2940 = vadd.f32 %v2102, %v2810
      %v2941 = vadd.f32 %v2101, %v2813
      %s2942 = scalar_lea.vmem %s3, 16
      %v2943 = vld [vmem:[%s2942] sm:$0xf]
      %v2944 = vld [vmem:[%s2942 + $0x4] sm:$0x3]
      %v2947 = vunpack.c.l.b16 %v2943
      %v2948 = vunpack.c.l.b16 %v2944
      %v2949 = vpack.c.b16 %v2948, %v2947
      %v2951 = vsel %vm1674, %v2949, 0
      %2953 = vmatprep.subr.bf16.mxu0 0
      %2954 = vmatpush1.bf16.msra.mxu0 0
      %2955 = vmatprep.subr.bf16.mxu0 0
      %2956 = vmatpush1.bf16.msra.mxu0 0
      %2957 = vmatprep.subr.bf16.mxu0 0
      %2958 = vmatpush1.bf16.msra.mxu0 0
      %2959 = vmatprep.subr.bf16.mxu0 0
      %2960 = vmatpush1.bf16.msra.mxu0 0
      %2961 = vmatprep.subr.bf16.mxu0 0
      %2962 = vmatpush1.bf16.msra.mxu0 0
      %2963 = vmatprep.subr.bf16.mxu0 0
      %2964 = vmatpush1.bf16.msra.mxu0 0
      %2965 = vmatprep.subr.bf16.mxu0 0
      %2966 = vmatpush1.bf16.msra.mxu0 0
      %2967 = vmatprep.subr.bf16.mxu0 0
      %2968 = vmatpush1.bf16.msra.mxu0 %v2951
      %2969 = vmatprep.subr.bf16.mxu0 0
      %2970 = vmatpush2.bf16.msra.mxu0 0
      %2971 = vmatprep.subr.bf16.mxu0 0
      %2972 = vmatpush2.bf16.msra.mxu0 0
      %2973 = vmatprep.subr.bf16.mxu0 0
      %2974 = vmatpush2.bf16.msra.mxu0 0
      %2975 = vmatprep.subr.bf16.mxu0 0
      %2976 = vmatpush2.bf16.msra.mxu0 0
      %2977 = vmatprep.subr.bf16.mxu0 0
      %2978 = vmatpush2.bf16.msra.mxu0 0
      %2979 = vmatprep.subr.bf16.mxu0 0
      %2980 = vmatpush2.bf16.msra.mxu0 0
      %2981 = vmatprep.subr.bf16.mxu0 0
      %2982 = vmatpush2.bf16.msra.mxu0 0
      %2983 = vmatprep.subr.bf16.mxu0 0
      %2984 = vmatpush2.bf16.msra.mxu0 0
      %2985 = vmatprep.mubr.bf16.mxu0 0
      %2986 = vmatmul.mubr.bf16.gmra.mxu0 %v1648
      %v2987 = vpop.f32.mrf.mxu0
      %v2988 = vadd.f32 0.0, %v2987
      %v2989 = vpop.f32.mrf.mxu0
      %v2990 = vpop.f32.mrf.mxu0
      %v2991 = vadd.f32 0.0, %v2990
      %v2992 = vpop.f32.mrf.mxu0
      %2993 = vmatprep.mubr.bf16.mxu0 0
      %2994 = vmatmul.mubr.bf16.gmra.mxu0 %v1651
      %v2995 = vpop.f32.mrf.mxu0
      %v2996 = vadd.f32 0.0, %v2995
      %v2997 = vpop.f32.mrf.mxu0
      %v2998 = vpop.f32.mrf.mxu0
      %v2999 = vadd.f32 0.0, %v2998
      %v3000 = vpop.f32.mrf.mxu0
      %3001 = vmatprep.mubr.bf16.mxu0 0
      %3002 = vmatmul.mubr.bf16.gmra.mxu0 %v1654
      %v3003 = vpop.f32.mrf.mxu0
      %v3004 = vadd.f32 0.0, %v3003
      %v3005 = vpop.f32.mrf.mxu0
      %v3006 = vpop.f32.mrf.mxu0
      %v3007 = vadd.f32 0.0, %v3006
      %v3008 = vpop.f32.mrf.mxu0
      %3009 = vmatprep.mubr.bf16.mxu0 0
      %3010 = vmatmul.mubr.bf16.gmra.mxu0 %v1657
      %v3011 = vpop.f32.mrf.mxu0
      %v3012 = vadd.f32 0.0, %v3011
      %v3013 = vpop.f32.mrf.mxu0
      %v3014 = vpop.f32.mrf.mxu0
      %v3015 = vadd.f32 0.0, %v3014
      %v3016 = vpop.f32.mrf.mxu0
      %3017 = vmatprep.mubr.bf16.mxu0 0
      %3018 = vmatmul.mubr.bf16.gmra.mxu0 %v1660
      %v3019 = vpop.f32.mrf.mxu0
      %v3020 = vadd.f32 0.0, %v3019
      %v3021 = vpop.f32.mrf.mxu0
      %v3022 = vpop.f32.mrf.mxu0
      %v3023 = vadd.f32 0.0, %v3022
      %v3024 = vpop.f32.mrf.mxu0
      %3025 = vmatprep.mubr.bf16.mxu0 0
      %3026 = vmatmul.mubr.bf16.gmra.mxu0 %v1663
      %v3027 = vpop.f32.mrf.mxu0
      %v3028 = vadd.f32 0.0, %v3027
      %v3029 = vpop.f32.mrf.mxu0
      %v3030 = vpop.f32.mrf.mxu0
      %v3031 = vadd.f32 0.0, %v3030
      %v3032 = vpop.f32.mrf.mxu0
      %3033 = vmatprep.mubr.bf16.mxu0 0
      %3034 = vmatmul.mubr.bf16.gmra.mxu0 %v1666
      %v3035 = vpop.f32.mrf.mxu0
      %v3036 = vadd.f32 0.0, %v3035
      %v3037 = vpop.f32.mrf.mxu0
      %v3038 = vpop.f32.mrf.mxu0
      %v3039 = vadd.f32 0.0, %v3038
      %v3040 = vpop.f32.mrf.mxu0
      %3041 = vmatprep.mubr.bf16.mxu0 0
      %3042 = vmatmul.mubr.bf16.gmra.mxu0 %v1669
      %v3043 = vpop.f32.mrf.mxu0
      %v3044 = vadd.f32 0.0, %v3043
      %v3045 = vpop.f32.mrf.mxu0
      %v3046 = vpop.f32.mrf.mxu0
      %v3047 = vadd.f32 0.0, %v3046
      %v3048 = vpop.f32.mrf.mxu0
      %3049 = vmatprep.mubr.bf16.mxu0 0
      %3050 = vmatmul.mubr.bf16.gmra.mxu0 %v1672
      %v3051 = vpop.f32.mrf.mxu0
      %v3052 = vadd.f32 0.0, %v3051
      %v3053 = vpop.f32.mrf.mxu0
      %v3054 = vpop.f32.mrf.mxu0
      %v3055 = vadd.f32 0.0, %v3054
      %v3056 = vpop.f32.mrf.mxu0
      %3057 = vdwg.mxu0
      %v3076 = vcombine.high %v2988, %v2988
      %v3078 = vunpack.c.l.s4 1983009808
      %v3079 = vunpack.c.0.s8 %v3078
      %v3080 = vlaneseq
      %v3081 = vshrl.u32 %v3080, 7
      %v3082 = vsub.s32 %v3079, %v3081
      %v3083 = vrot.slane %v2988, %v3082
      %v3085 = vunpack.c.l.s4 1983009808
      %v3086 = vunpack.c.0.s8 %v3085
      %v3087 = vlaneseq
      %v3088 = vshrl.u32 %v3087, 7
      %v3089 = vsub.s32 %v3086, %v3088
      %v3090 = vrot.slane %v3076, %v3089
      %v3091 = vcombine.high %v3083, %v3083
      %v3092 = vcombine.high %v3090, %v3090
      %v3093 = vcombine.high %v2991, %v2991
      %v3095 = vunpack.c.l.s4 1983009808
      %v3096 = vunpack.c.0.s8 %v3095
      %v3097 = vlaneseq
      %v3098 = vshrl.u32 %v3097, 7
      %v3099 = vsub.s32 %v3096, %v3098
      %v3100 = vrot.slane %v2991, %v3099
      %v3102 = vunpack.c.l.s4 1983009808
      %v3103 = vunpack.c.0.s8 %v3102
      %v3104 = vlaneseq
      %v3105 = vshrl.u32 %v3104, 7
      %v3106 = vsub.s32 %v3103, %v3105
      %v3107 = vrot.slane %v3093, %v3106
      %v3108 = vcombine.high %v3100, %v3100
      %v3109 = vcombine.high %v3107, %v3107
      %v3110 = vcombine.high %v2996, %v2996
      %v3112 = vunpack.c.l.s4 1983009808
      %v3113 = vunpack.c.0.s8 %v3112
      %v3114 = vlaneseq
      %v3115 = vshrl.u32 %v3114, 7
      %v3116 = vsub.s32 %v3113, %v3115
      %v3117 = vrot.slane %v2996, %v3116
      %v3119 = vunpack.c.l.s4 1983009808
      %v3120 = vunpack.c.0.s8 %v3119
      %v3121 = vlaneseq
      %v3122 = vshrl.u32 %v3121, 7
      %v3123 = vsub.s32 %v3120, %v3122
      %v3124 = vrot.slane %v3110, %v3123
      %v3125 = vcombine.high %v3124, %v3124
      %v3126 = vcombine.high %v2999, %v2999
      %v3128 = vunpack.c.l.s4 1983009808
      %v3129 = vunpack.c.0.s8 %v3128
      %v3130 = vlaneseq
      %v3131 = vshrl.u32 %v3130, 7
      %v3132 = vsub.s32 %v3129, %v3131
      %v3133 = vrot.slane %v2999, %v3132
      %v3135 = vunpack.c.l.s4 1983009808
      %v3136 = vunpack.c.0.s8 %v3135
      %v3137 = vlaneseq
      %v3138 = vshrl.u32 %v3137, 7
      %v3139 = vsub.s32 %v3136, %v3138
      %v3140 = vrot.slane %v3126, %v3139
      %v3141 = vcombine.high %v3133, %v3133
      %v3142 = vcombine.high %v3140, %v3140
      %v3143 = vcombine.high %v3004, %v3004
      %v3145 = vunpack.c.l.s4 1983009808
      %v3146 = vunpack.c.0.s8 %v3145
      %v3147 = vlaneseq
      %v3148 = vshrl.u32 %v3147, 7
      %v3149 = vsub.s32 %v3146, %v3148
      %v3150 = vrot.slane %v3004, %v3149
      %v3152 = vunpack.c.l.s4 1983009808
      %v3153 = vunpack.c.0.s8 %v3152
      %v3154 = vlaneseq
      %v3155 = vshrl.u32 %v3154, 7
      %v3156 = vsub.s32 %v3153, %v3155
      %v3157 = vrot.slane %v3143, %v3156
      %v3158 = vcombine.high %v3150, %v3150
      %v3159 = vcombine.high %v3157, %v3157
      %v3160 = vcombine.high %v3007, %v3007
      %v3162 = vunpack.c.l.s4 1983009808
      %v3163 = vunpack.c.0.s8 %v3162
      %v3164 = vlaneseq
      %v3165 = vshrl.u32 %v3164, 7
      %v3166 = vsub.s32 %v3163, %v3165
      %v3167 = vrot.slane %v3007, %v3166
      %v3169 = vunpack.c.l.s4 1983009808
      %v3170 = vunpack.c.0.s8 %v3169
      %v3171 = vlaneseq
      %v3172 = vshrl.u32 %v3171, 7
      %v3173 = vsub.s32 %v3170, %v3172
      %v3174 = vrot.slane %v3160, %v3173
      %v3175 = vcombine.high %v3167, %v3167
      %v3176 = vcombine.high %v3174, %v3174
      %v3177 = vcombine.high %v3012, %v3012
      %v3179 = vunpack.c.l.s4 1983009808
      %v3180 = vunpack.c.0.s8 %v3179
      %v3181 = vlaneseq
      %v3182 = vshrl.u32 %v3181, 7
      %v3183 = vsub.s32 %v3180, %v3182
      %v3184 = vrot.slane %v3012, %v3183
      %v3186 = vunpack.c.l.s4 1983009808
      %v3187 = vunpack.c.0.s8 %v3186
      %v3188 = vlaneseq
      %v3189 = vshrl.u32 %v3188, 7
      %v3190 = vsub.s32 %v3187, %v3189
      %v3191 = vrot.slane %v3177, %v3190
      %v3192 = vcombine.high %v3184, %v3184
      %v3193 = vcombine.high %v3015, %v3015
      %v3195 = vunpack.c.l.s4 1983009808
      %v3196 = vunpack.c.0.s8 %v3195
      %v3197 = vlaneseq
      %v3198 = vshrl.u32 %v3197, 7
      %v3199 = vsub.s32 %v3196, %v3198
      %v3200 = vrot.slane %v3015, %v3199
      %v3202 = vunpack.c.l.s4 1983009808
      %v3203 = vunpack.c.0.s8 %v3202
      %v3204 = vlaneseq
      %v3205 = vshrl.u32 %v3204, 7
      %v3206 = vsub.s32 %v3203, %v3205
      %v3207 = vrot.slane %v3193, %v3206
      %v3208 = vcombine.high %v3200, %v3200
      %v3209 = vcombine.high %v3207, %v3207
      %v3210 = vcombine.high %v3020, %v3020
      %v3212 = vunpack.c.l.s4 1983009808
      %v3213 = vunpack.c.0.s8 %v3212
      %v3214 = vlaneseq
      %v3215 = vshrl.u32 %v3214, 7
      %v3216 = vsub.s32 %v3213, %v3215
      %v3217 = vrot.slane %v3020, %v3216
      %v3219 = vunpack.c.l.s4 1983009808
      %v3220 = vunpack.c.0.s8 %v3219
      %v3221 = vlaneseq
      %v3222 = vshrl.u32 %v3221, 7
      %v3223 = vsub.s32 %v3220, %v3222
      %v3224 = vrot.slane %v3210, %v3223
      %v3225 = vcombine.high %v3217, %v3217
      %v3226 = vcombine.high %v3224, %v3224
      %v3227 = vcombine.high %v3023, %v3023
      %v3229 = vunpack.c.l.s4 1983009808
      %v3230 = vunpack.c.0.s8 %v3229
      %v3231 = vlaneseq
      %v3232 = vshrl.u32 %v3231, 7
      %v3233 = vsub.s32 %v3230, %v3232
      %v3234 = vrot.slane %v3023, %v3233
      %v3236 = vunpack.c.l.s4 1983009808
      %v3237 = vunpack.c.0.s8 %v3236
      %v3238 = vlaneseq
      %v3239 = vshrl.u32 %v3238, 7
      %v3240 = vsub.s32 %v3237, %v3239
      %v3241 = vrot.slane %v3227, %v3240
      %v3242 = vcombine.high %v3234, %v3234
      %v3243 = vcombine.high %v3241, %v3241
      %v3244 = vcombine.high %v3028, %v3028
      %v3246 = vunpack.c.l.s4 1983009808
      %v3247 = vunpack.c.0.s8 %v3246
      %v3248 = vlaneseq
      %v3249 = vshrl.u32 %v3248, 7
      %v3250 = vsub.s32 %v3247, %v3249
      %v3251 = vrot.slane %v3028, %v3250
      %v3253 = vunpack.c.l.s4 1983009808
      %v3254 = vunpack.c.0.s8 %v3253
      %v3255 = vlaneseq
      %v3256 = vshrl.u32 %v3255, 7
      %v3257 = vsub.s32 %v3254, %v3256
      %v3258 = vrot.slane %v3244, %v3257
      %v3259 = vcombine.high %v3251, %v3251
      %v3260 = vcombine.high %v3258, %v3258
      %v3261 = vcombine.high %v3031, %v3031
      %v3263 = vunpack.c.l.s4 1983009808
      %v3264 = vunpack.c.0.s8 %v3263
      %v3265 = vlaneseq
      %v3266 = vshrl.u32 %v3265, 7
      %v3267 = vsub.s32 %v3264, %v3266
      %v3268 = vrot.slane %v3031, %v3267
      %v3270 = vunpack.c.l.s4 1983009808
      %v3271 = vunpack.c.0.s8 %v3270
      %v3272 = vlaneseq
      %v3273 = vshrl.u32 %v3272, 7
      %v3274 = vsub.s32 %v3271, %v3273
      %v3275 = vrot.slane %v3261, %v3274
      %v3276 = vcombine.high %v3275, %v3275
      %v3277 = vcombine.high %v3036, %v3036
      %v3279 = vunpack.c.l.s4 1983009808
      %v3280 = vunpack.c.0.s8 %v3279
      %v3281 = vlaneseq
      %v3282 = vshrl.u32 %v3281, 7
      %v3283 = vsub.s32 %v3280, %v3282
      %v3284 = vrot.slane %v3036, %v3283
      %v3286 = vunpack.c.l.s4 1983009808
      %v3287 = vunpack.c.0.s8 %v3286
      %v3288 = vlaneseq
      %v3289 = vshrl.u32 %v3288, 7
      %v3290 = vsub.s32 %v3287, %v3289
      %v3291 = vrot.slane %v3277, %v3290
      %v3292 = vcombine.high %v3284, %v3284
      %v3293 = vcombine.high %v3291, %v3291
      %v3294 = vcombine.high %v3039, %v3039
      %v3296 = vunpack.c.l.s4 1983009808
      %v3297 = vunpack.c.0.s8 %v3296
      %v3298 = vlaneseq
      %v3299 = vshrl.u32 %v3298, 7
      %v3300 = vsub.s32 %v3297, %v3299
      %v3301 = vrot.slane %v3039, %v3300
      %v3303 = vunpack.c.l.s4 1983009808
      %v3304 = vunpack.c.0.s8 %v3303
      %v3305 = vlaneseq
      %v3306 = vshrl.u32 %v3305, 7
      %v3307 = vsub.s32 %v3304, %v3306
      %v3308 = vrot.slane %v3294, %v3307
      %v3309 = vcombine.high %v3301, %v3301
      %v3310 = vcombine.high %v3308, %v3308
      %v3311 = vcombine.high %v3044, %v3044
      %v3313 = vunpack.c.l.s4 1983009808
      %v3314 = vunpack.c.0.s8 %v3313
      %v3315 = vlaneseq
      %v3316 = vshrl.u32 %v3315, 7
      %v3317 = vsub.s32 %v3314, %v3316
      %v3318 = vrot.slane %v3044, %v3317
      %v3320 = vunpack.c.l.s4 1983009808
      %v3321 = vunpack.c.0.s8 %v3320
      %v3322 = vlaneseq
      %v3323 = vshrl.u32 %v3322, 7
      %v3324 = vsub.s32 %v3321, %v3323
      %v3325 = vrot.slane %v3311, %v3324
      %v3326 = vcombine.high %v3318, %v3318
      %v3327 = vcombine.high %v3325, %v3325
      %v3328 = vcombine.high %v3047, %v3047
      %v3330 = vunpack.c.l.s4 1983009808
      %v3331 = vunpack.c.0.s8 %v3330
      %v3332 = vlaneseq
      %v3333 = vshrl.u32 %v3332, 7
      %v3334 = vsub.s32 %v3331, %v3333
      %v3335 = vrot.slane %v3047, %v3334
      %v3337 = vunpack.c.l.s4 1983009808
      %v3338 = vunpack.c.0.s8 %v3337
      %v3339 = vlaneseq
      %v3340 = vshrl.u32 %v3339, 7
      %v3341 = vsub.s32 %v3338, %v3340
      %v3342 = vrot.slane %v3328, %v3341
      %v3343 = vcombine.high %v3335, %v3335
      %v3344 = vcombine.high %v3052, %v3052
      %v3346 = vunpack.c.l.s4 1983009808
      %v3347 = vunpack.c.0.s8 %v3346
      %v3348 = vlaneseq
      %v3349 = vshrl.u32 %v3348, 7
      %v3350 = vsub.s32 %v3347, %v3349
      %v3351 = vrot.slane %v3052, %v3350
      %v3353 = vunpack.c.l.s4 1983009808
      %v3354 = vunpack.c.0.s8 %v3353
      %v3355 = vlaneseq
      %v3356 = vshrl.u32 %v3355, 7
      %v3357 = vsub.s32 %v3354, %v3356
      %v3358 = vrot.slane %v3344, %v3357
      %v3359 = vcombine.high %v3351, %v3351
      %v3360 = vcombine.high %v3358, %v3358
      %v3361 = vcombine.high %v3055, %v3055
      %v3363 = vunpack.c.l.s4 1983009808
      %v3364 = vunpack.c.0.s8 %v3363
      %v3365 = vlaneseq
      %v3366 = vshrl.u32 %v3365, 7
      %v3367 = vsub.s32 %v3364, %v3366
      %v3368 = vrot.slane %v3055, %v3367
      %v3370 = vunpack.c.l.s4 1983009808
      %v3371 = vunpack.c.0.s8 %v3370
      %v3372 = vlaneseq
      %v3373 = vshrl.u32 %v3372, 7
      %v3374 = vsub.s32 %v3371, %v3373
      %v3375 = vrot.slane %v3361, %v3374
      %v3376 = vcombine.high %v3368, %v3368
      %v3377 = vcombine.high %v3375, %v3375
      %v3442 = vadd.f32 %v2878, %v3091
      %v3443 = vadd.f32 %v2879, %v3090
      %v3444 = vadd.f32 %v2880, %v3092
      %v3445 = vadd.f32 %v2881, %v3100
      %v3446 = vadd.f32 %v2882, %v3108
      %v3447 = vadd.f32 %v2883, %v3107
      %v3448 = vadd.f32 %v2884, %v3109
      %v3449 = vadd.f32 %v2885, %v3117
      %v3450 = vadd.f32 %v2886, %v3124
      %v3451 = vadd.f32 %v2887, %v3125
      %v3452 = vadd.f32 %v2888, %v3133
      %v3453 = vadd.f32 %v2889, %v3141
      %v3454 = vadd.f32 %v2890, %v3140
      %v3455 = vadd.f32 %v2891, %v3142
      %v3456 = vadd.f32 %v2892, %v3150
      %v3457 = vadd.f32 %v2893, %v3158
      %v3458 = vadd.f32 %v2894, %v3159
      %v3459 = vadd.f32 %v2895, %v3167
      %v3460 = vadd.f32 %v2896, %v3175
      %v3461 = vadd.f32 %v2897, %v3174
      %v3462 = vadd.f32 %v2898, %v3176
      %v3463 = vadd.f32 %v2899, %v3184
      %v3464 = vadd.f32 %v2900, %v3192
      %v3465 = vadd.f32 %v2901, %v3191
      %v3466 = vadd.f32 %v2902, %v3200
      %v3467 = vadd.f32 %v2903, %v3208
      %v3468 = vadd.f32 %v2904, %v3207
      %v3469 = vadd.f32 %v2905, %v3209
      %v3470 = vadd.f32 %v2906, %v3217
      %v3471 = vadd.f32 %v2907, %v3225
      %v3472 = vadd.f32 %v2908, %v3224
      %v3473 = vadd.f32 %v2909, %v3226
      %v3474 = vadd.f32 %v2910, %v3242
      %v3475 = vadd.f32 %v2911, %v3241
      %v3476 = vadd.f32 %v2912, %v3243
      %v3477 = vadd.f32 %v2913, %v3251
      %v3478 = vadd.f32 %v2914, %v3259
      %v3479 = vadd.f32 %v2915, %v3258
      %v3480 = vadd.f32 %v2916, %v3260
      %v3481 = vadd.f32 %v2917, %v3268
      %v3482 = vadd.f32 %v2918, %v3275
      %v3483 = vadd.f32 %v2919, %v3276
      %v3484 = vadd.f32 %v2920, %v3284
      %v3485 = vadd.f32 %v2921, %v3292
      %v3486 = vadd.f32 %v2922, %v3291
      %v3487 = vadd.f32 %v2923, %v3293
      %v3488 = vadd.f32 %v2924, %v3301
      %v3489 = vadd.f32 %v2925, %v3309
      %v3490 = vadd.f32 %v2926, %v3310
      %v3491 = vadd.f32 %v2927, %v3318
      %v3492 = vadd.f32 %v2928, %v3326
      %v3493 = vadd.f32 %v2929, %v3325
      %v3494 = vadd.f32 %v2930, %v3327
      %v3495 = vadd.f32 %v2931, %v3335
      %v3496 = vadd.f32 %v2932, %v3343
      %v3497 = vadd.f32 %v2933, %v3342
      %v3498 = vadd.f32 %v2934, %v3351
      %v3499 = vadd.f32 %v2935, %v3359
      %v3500 = vadd.f32 %v2936, %v3358
      %v3501 = vadd.f32 %v2937, %v3360
      %v3502 = vadd.f32 %v2938, %v3368
      %v3503 = vadd.f32 %v2939, %v3376
      %v3504 = vadd.f32 %v2940, %v3375
      %v3505 = vadd.f32 %v2941, %v3377
      %v3570 = vcombine.low %v3442, %v3443
      %v3571 = vcombine.low %v3444, %v3445
      %v3573 = vunpack.c.l.s4 1983009808
      %v3574 = vunpack.c.0.s8 %v3573
      %v3575 = vlaneseq
      %v3576 = vshrl.u32 %v3575, 7
      %v3577 = vsub.s32 %v3574, %v3576
      %v3578 = vrot.slane %v3570, %v3577
      %v3580 = vunpack.c.l.s4 1983009808
      %v3581 = vunpack.c.0.s8 %v3580
      %v3582 = vlaneseq
      %v3583 = vshrl.u32 %v3582, 7
      %v3584 = vsub.s32 %v3581, %v3583
      %v3585 = vrot.slane %v3571, %v3584
      %v3586 = vcombine.low %v3578, %v3585
      %v3587 = vcombine.low %v3446, %v3447
      %v3588 = vcombine.low %v3448, %v3449
      %v3590 = vunpack.c.l.s4 1983009808
      %v3591 = vunpack.c.0.s8 %v3590
      %v3592 = vlaneseq
      %v3593 = vshrl.u32 %v3592, 7
      %v3594 = vsub.s32 %v3591, %v3593
      %v3595 = vrot.slane %v3587, %v3594
      %v3597 = vunpack.c.l.s4 1983009808
      %v3598 = vunpack.c.0.s8 %v3597
      %v3599 = vlaneseq
      %v3600 = vshrl.u32 %v3599, 7
      %v3601 = vsub.s32 %v3598, %v3600
      %v3602 = vrot.slane %v3588, %v3601
      %v3603 = vcombine.low %v3595, %v3602
      %v3604 = vcombine.low %v3450, %v3451
      %v3605 = vcombine.low %v3452, %v3453
      %v3607 = vunpack.c.l.s4 1983009808
      %v3608 = vunpack.c.0.s8 %v3607
      %v3609 = vlaneseq
      %v3610 = vshrl.u32 %v3609, 7
      %v3611 = vsub.s32 %v3608, %v3610
      %v3612 = vrot.slane %v3604, %v3611
      %v3614 = vunpack.c.l.s4 1983009808
      %v3615 = vunpack.c.0.s8 %v3614
      %v3616 = vlaneseq
      %v3617 = vshrl.u32 %v3616, 7
      %v3618 = vsub.s32 %v3615, %v3617
      %v3619 = vrot.slane %v3605, %v3618
      %v3620 = vcombine.low %v3612, %v3619
      %v3621 = vcombine.low %v3454, %v3455
      %v3622 = vcombine.low %v3456, %v3457
      %v3624 = vunpack.c.l.s4 1983009808
      %v3625 = vunpack.c.0.s8 %v3624
      %v3626 = vlaneseq
      %v3627 = vshrl.u32 %v3626, 7
      %v3628 = vsub.s32 %v3625, %v3627
      %v3629 = vrot.slane %v3621, %v3628
      %v3631 = vunpack.c.l.s4 1983009808
      %v3632 = vunpack.c.0.s8 %v3631
      %v3633 = vlaneseq
      %v3634 = vshrl.u32 %v3633, 7
      %v3635 = vsub.s32 %v3632, %v3634
      %v3636 = vrot.slane %v3622, %v3635
      %v3637 = vcombine.low %v3629, %v3636
      %v3638 = vcombine.low %v3458, %v3459
      %v3639 = vcombine.low %v3460, %v3461
      %v3641 = vunpack.c.l.s4 1983009808
      %v3642 = vunpack.c.0.s8 %v3641
      %v3643 = vlaneseq
      %v3644 = vshrl.u32 %v3643, 7
      %v3645 = vsub.s32 %v3642, %v3644
      %v3646 = vrot.slane %v3638, %v3645
      %v3648 = vunpack.c.l.s4 1983009808
      %v3649 = vunpack.c.0.s8 %v3648
      %v3650 = vlaneseq
      %v3651 = vshrl.u32 %v3650, 7
      %v3652 = vsub.s32 %v3649, %v3651
      %v3653 = vrot.slane %v3639, %v3652
      %v3654 = vcombine.low %v3646, %v3653
      %v3655 = vcombine.low %v3462, %v3463
      %v3656 = vcombine.low %v3464, %v3465
      %v3658 = vunpack.c.l.s4 1983009808
      %v3659 = vunpack.c.0.s8 %v3658
      %v3660 = vlaneseq
      %v3661 = vshrl.u32 %v3660, 7
      %v3662 = vsub.s32 %v3659, %v3661
      %v3663 = vrot.slane %v3655, %v3662
      %v3665 = vunpack.c.l.s4 1983009808
      %v3666 = vunpack.c.0.s8 %v3665
      %v3667 = vlaneseq
      %v3668 = vshrl.u32 %v3667, 7
      %v3669 = vsub.s32 %v3666, %v3668
      %v3670 = vrot.slane %v3656, %v3669
      %v3671 = vcombine.low %v3663, %v3670
      %v3672 = vcombine.low %v3466, %v3467
      %v3673 = vcombine.low %v3468, %v3469
      %v3675 = vunpack.c.l.s4 1983009808
      %v3676 = vunpack.c.0.s8 %v3675
      %v3677 = vlaneseq
      %v3678 = vshrl.u32 %v3677, 7
      %v3679 = vsub.s32 %v3676, %v3678
      %v3680 = vrot.slane %v3672, %v3679
      %v3682 = vunpack.c.l.s4 1983009808
      %v3683 = vunpack.c.0.s8 %v3682
      %v3684 = vlaneseq
      %v3685 = vshrl.u32 %v3684, 7
      %v3686 = vsub.s32 %v3683, %v3685
      %v3687 = vrot.slane %v3673, %v3686
      %v3688 = vcombine.low %v3680, %v3687
      %v3689 = vcombine.low %v3470, %v3471
      %v3690 = vcombine.low %v3472, %v3473
      %v3692 = vunpack.c.l.s4 1983009808
      %v3693 = vunpack.c.0.s8 %v3692
      %v3694 = vlaneseq
      %v3695 = vshrl.u32 %v3694, 7
      %v3696 = vsub.s32 %v3693, %v3695
      %v3697 = vrot.slane %v3689, %v3696
      %v3699 = vunpack.c.l.s4 1983009808
      %v3700 = vunpack.c.0.s8 %v3699
      %v3701 = vlaneseq
      %v3702 = vshrl.u32 %v3701, 7
      %v3703 = vsub.s32 %v3700, %v3702
      %v3704 = vrot.slane %v3690, %v3703
      %v3705 = vcombine.low %v3697, %v3704
      %v3706 = vcombine.low %v3474, %v3475
      %v3707 = vcombine.low %v3476, %v3477
      %v3709 = vunpack.c.l.s4 1983009808
      %v3710 = vunpack.c.0.s8 %v3709
      %v3711 = vlaneseq
      %v3712 = vshrl.u32 %v3711, 7
      %v3713 = vsub.s32 %v3710, %v3712
      %v3714 = vrot.slane %v3706, %v3713
      %v3716 = vunpack.c.l.s4 1983009808
      %v3717 = vunpack.c.0.s8 %v3716
      %v3718 = vlaneseq
      %v3719 = vshrl.u32 %v3718, 7
      %v3720 = vsub.s32 %v3717, %v3719
      %v3721 = vrot.slane %v3707, %v3720
      %v3722 = vcombine.low %v3714, %v3721
      %v3723 = vcombine.low %v3478, %v3479
      %v3724 = vcombine.low %v3480, %v3481
      %v3726 = vunpack.c.l.s4 1983009808
      %v3727 = vunpack.c.0.s8 %v3726
      %v3728 = vlaneseq
      %v3729 = vshrl.u32 %v3728, 7
      %v3730 = vsub.s32 %v3727, %v3729
      %v3731 = vrot.slane %v3723, %v3730
      %v3733 = vunpack.c.l.s4 1983009808
      %v3734 = vunpack.c.0.s8 %v3733
      %v3735 = vlaneseq
      %v3736 = vshrl.u32 %v3735, 7
      %v3737 = vsub.s32 %v3734, %v3736
      %v3738 = vrot.slane %v3724, %v3737
      %v3739 = vcombine.low %v3731, %v3738
      %v3740 = vcombine.low %v3482, %v3483
      %v3741 = vcombine.low %v3484, %v3485
      %v3743 = vunpack.c.l.s4 1983009808
      %v3744 = vunpack.c.0.s8 %v3743
      %v3745 = vlaneseq
      %v3746 = vshrl.u32 %v3745, 7
      %v3747 = vsub.s32 %v3744, %v3746
      %v3748 = vrot.slane %v3740, %v3747
      %v3750 = vunpack.c.l.s4 1983009808
      %v3751 = vunpack.c.0.s8 %v3750
      %v3752 = vlaneseq
      %v3753 = vshrl.u32 %v3752, 7
      %v3754 = vsub.s32 %v3751, %v3753
      %v3755 = vrot.slane %v3741, %v3754
      %v3756 = vcombine.low %v3748, %v3755
      %v3757 = vcombine.low %v3486, %v3487
      %v3758 = vcombine.low %v3488, %v3489
      %v3760 = vunpack.c.l.s4 1983009808
      %v3761 = vunpack.c.0.s8 %v3760
      %v3762 = vlaneseq
      %v3763 = vshrl.u32 %v3762, 7
      %v3764 = vsub.s32 %v3761, %v3763
      %v3765 = vrot.slane %v3757, %v3764
      %v3767 = vunpack.c.l.s4 1983009808
      %v3768 = vunpack.c.0.s8 %v3767
      %v3769 = vlaneseq
      %v3770 = vshrl.u32 %v3769, 7
      %v3771 = vsub.s32 %v3768, %v3770
      %v3772 = vrot.slane %v3758, %v3771
      %v3773 = vcombine.low %v3765, %v3772
      %v3774 = vcombine.low %v3490, %v3491
      %v3775 = vcombine.low %v3492, %v3493
      %v3777 = vunpack.c.l.s4 1983009808
      %v3778 = vunpack.c.0.s8 %v3777
      %v3779 = vlaneseq
      %v3780 = vshrl.u32 %v3779, 7
      %v3781 = vsub.s32 %v3778, %v3780
      %v3782 = vrot.slane %v3774, %v3781
      %v3784 = vunpack.c.l.s4 1983009808
      %v3785 = vunpack.c.0.s8 %v3784
      %v3786 = vlaneseq
      %v3787 = vshrl.u32 %v3786, 7
      %v3788 = vsub.s32 %v3785, %v3787
      %v3789 = vrot.slane %v3775, %v3788
      %v3790 = vcombine.low %v3782, %v3789
      %v3791 = vcombine.low %v3494, %v3495
      %v3792 = vcombine.low %v3496, %v3497
      %v3794 = vunpack.c.l.s4 1983009808
      %v3795 = vunpack.c.0.s8 %v3794
      %v3796 = vlaneseq
      %v3797 = vshrl.u32 %v3796, 7
      %v3798 = vsub.s32 %v3795, %v3797
      %v3799 = vrot.slane %v3791, %v3798
      %v3801 = vunpack.c.l.s4 1983009808
      %v3802 = vunpack.c.0.s8 %v3801
      %v3803 = vlaneseq
      %v3804 = vshrl.u32 %v3803, 7
      %v3805 = vsub.s32 %v3802, %v3804
      %v3806 = vrot.slane %v3792, %v3805
      %v3807 = vcombine.low %v3799, %v3806
      %v3808 = vcombine.low %v3498, %v3499
      %v3809 = vcombine.low %v3500, %v3501
      %v3811 = vunpack.c.l.s4 1983009808
      %v3812 = vunpack.c.0.s8 %v3811
      %v3813 = vlaneseq
      %v3814 = vshrl.u32 %v3813, 7
      %v3815 = vsub.s32 %v3812, %v3814
      %v3816 = vrot.slane %v3808, %v3815
      %v3818 = vunpack.c.l.s4 1983009808
      %v3819 = vunpack.c.0.s8 %v3818
      %v3820 = vlaneseq
      %v3821 = vshrl.u32 %v3820, 7
      %v3822 = vsub.s32 %v3819, %v3821
      %v3823 = vrot.slane %v3809, %v3822
      %v3824 = vcombine.low %v3816, %v3823
      %v3825 = vcombine.low %v3502, %v3503
      %v3826 = vcombine.low %v3504, %v3505
      %v3828 = vunpack.c.l.s4 1983009808
      %v3829 = vunpack.c.0.s8 %v3828
      %v3830 = vlaneseq
      %v3831 = vshrl.u32 %v3830, 7
      %v3832 = vsub.s32 %v3829, %v3831
      %v3833 = vrot.slane %v3825, %v3832
      %v3835 = vunpack.c.l.s4 1983009808
      %v3836 = vunpack.c.0.s8 %v3835
      %v3837 = vlaneseq
      %v3838 = vshrl.u32 %v3837, 7
      %v3839 = vsub.s32 %v3836, %v3838
      %v3840 = vrot.slane %v3826, %v3839
      %v3841 = vcombine.low %v3833, %v3840
      %v3858 = vsel %vm645, %v3586, 0.0
      %v3859 = vsel %vm645, %v3603, 0.0
      %v3860 = vadd.f32 %v3858, %v3859
      %v3861 = vsel %vm645, %v3620, 0.0
      %v3862 = vadd.f32 %v3860, %v3861
      %v3863 = vsel %vm645, %v3637, 0.0
      %v3864 = vadd.f32 %v3862, %v3863
      %v3865 = vsel %vm645, %v3654, 0.0
      %v3866 = vadd.f32 %v3864, %v3865
      %v3867 = vsel %vm645, %v3671, 0.0
      %v3868 = vadd.f32 %v3866, %v3867
      %v3869 = vsel %vm645, %v3688, 0.0
      %v3870 = vadd.f32 %v3868, %v3869
      %v3871 = vsel %vm645, %v3705, 0.0
      %v3872 = vadd.f32 %v3870, %v3871
      %v3873 = vsel %vm645, %v3722, 0.0
      %v3874 = vadd.f32 %v3872, %v3873
      %v3875 = vsel %vm645, %v3739, 0.0
      %v3876 = vadd.f32 %v3874, %v3875
      %v3877 = vsel %vm645, %v3756, 0.0
      %v3878 = vadd.f32 %v3876, %v3877
      %v3879 = vsel %vm645, %v3773, 0.0
      %v3880 = vadd.f32 %v3878, %v3879
      %v3881 = vsel %vm645, %v3790, 0.0
      %v3882 = vadd.f32 %v3880, %v3881
      %v3883 = vsel %vm645, %v3807, 0.0
      %v3884 = vadd.f32 %v3882, %v3883
      %v3885 = vsel %vm645, %v3824, 0.0
      %v3886 = vadd.f32 %v3884, %v3885
      %v3887 = vsel %vm645, %v3841, 0.0
      %v3888 = vadd.f32 %v3886, %v3887
      %v3889 = vrot.slane %v3888, 4
      %v3890 = vadd.f32 %v3888, %v3889
      %v3891 = vrot.slane %v3890, 2
      %v3892 = vadd.f32 %v3890, %v3891
      %v3893 = vrot.slane %v3892, 1
      %v3894 = vadd.f32 %v3892, %v3893
      %v3895 = vmul.f32 %v3894, 0.0078125
      %v3897 = vcombine.high %v3895, %v3895
      %v3899 = vunpack.c.l.s4 1983009808
      %v3900 = vunpack.c.0.s8 %v3899
      %v3901 = vlaneseq
      %v3902 = vshrl.u32 %v3901, 7
      %v3903 = vsub.s32 %v3900, %v3902
      %v3904 = vrot.slane %v3895, %v3903
      %v3906 = vunpack.c.l.s4 1983009808
      %v3907 = vunpack.c.0.s8 %v3906
      %v3908 = vlaneseq
      %v3909 = vshrl.u32 %v3908, 7
      %v3910 = vsub.s32 %v3907, %v3909
      %v3911 = vrot.slane %v3897, %v3910
      %v3912 = vcombine.high %v3904, %v3904
      %v3913 = vcombine.high %v3911, %v3911
      %v3918 = vsub.f32 %v3442, %v3904
      %v3919 = vsub.f32 %v3443, %v3912
      %v3920 = vsub.f32 %v3444, %v3911
      %v3921 = vsub.f32 %v3445, %v3913
      %v3922 = vsub.f32 %v3446, %v3904
      %v3923 = vsub.f32 %v3447, %v3912
      %v3924 = vsub.f32 %v3448, %v3911
      %v3925 = vsub.f32 %v3449, %v3913
      %v3926 = vsub.f32 %v3450, %v3904
      %v3927 = vsub.f32 %v3451, %v3912
      %v3928 = vsub.f32 %v3452, %v3911
      %v3929 = vsub.f32 %v3453, %v3913
      %v3930 = vsub.f32 %v3454, %v3904
      %v3931 = vsub.f32 %v3455, %v3912
      %v3932 = vsub.f32 %v3456, %v3911
      %v3933 = vsub.f32 %v3457, %v3913
      %v3934 = vsub.f32 %v3458, %v3904
      %v3935 = vsub.f32 %v3459, %v3912
      %v3936 = vsub.f32 %v3460, %v3911
      %v3937 = vsub.f32 %v3461, %v3913
      %v3938 = vsub.f32 %v3462, %v3904
      %v3939 = vsub.f32 %v3463, %v3912
      %v3940 = vsub.f32 %v3464, %v3911
      %v3941 = vsub.f32 %v3465, %v3913
      %v3942 = vsub.f32 %v3466, %v3904
      %v3943 = vsub.f32 %v3467, %v3912
      %v3944 = vsub.f32 %v3468, %v3911
      %v3945 = vsub.f32 %v3469, %v3913
      %v3946 = vsub.f32 %v3470, %v3904
      %v3947 = vsub.f32 %v3471, %v3912
      %v3948 = vsub.f32 %v3472, %v3911
      %v3949 = vsub.f32 %v3473, %v3913
      %v3950 = vsub.f32 %v3474, %v3904
      %v3951 = vsub.f32 %v3475, %v3912
      %v3952 = vsub.f32 %v3476, %v3911
      %v3953 = vsub.f32 %v3477, %v3913
      %v3954 = vsub.f32 %v3478, %v3904
      %v3955 = vsub.f32 %v3479, %v3912
      %v3956 = vsub.f32 %v3480, %v3911
      %v3957 = vsub.f32 %v3481, %v3913
      %v3958 = vsub.f32 %v3482, %v3904
      %v3959 = vsub.f32 %v3483, %v3912
      %v3960 = vsub.f32 %v3484, %v3911
      %v3961 = vsub.f32 %v3485, %v3913
      %v3962 = vsub.f32 %v3486, %v3904
      %v3963 = vsub.f32 %v3487, %v3912
      %v3964 = vsub.f32 %v3488, %v3911
      %v3965 = vsub.f32 %v3489, %v3913
      %v3966 = vsub.f32 %v3490, %v3904
      %v3967 = vsub.f32 %v3491, %v3912
      %v3968 = vsub.f32 %v3492, %v3911
      %v3969 = vsub.f32 %v3493, %v3913
      %v3970 = vsub.f32 %v3494, %v3904
      %v3971 = vsub.f32 %v3495, %v3912
      %v3972 = vsub.f32 %v3496, %v3911
      %v3973 = vsub.f32 %v3497, %v3913
      %v3974 = vsub.f32 %v3498, %v3904
      %v3975 = vsub.f32 %v3499, %v3912
      %v3976 = vsub.f32 %v3500, %v3911
      %v3977 = vsub.f32 %v3501, %v3913
      %v3978 = vsub.f32 %v3502, %v3904
      %v3979 = vsub.f32 %v3503, %v3912
      %v3980 = vsub.f32 %v3504, %v3911
      %v3981 = vsub.f32 %v3505, %v3913
      %v3982 = vmul.f32 %v3918, %v3918
      %v3983 = vmul.f32 %v3919, %v3919
      %v3984 = vmul.f32 %v3920, %v3920
      %v3985 = vmul.f32 %v3921, %v3921
      %v3986 = vmul.f32 %v3922, %v3922
      %v3987 = vmul.f32 %v3923, %v3923
      %v3988 = vmul.f32 %v3924, %v3924
      %v3989 = vmul.f32 %v3925, %v3925
      %v3990 = vmul.f32 %v3926, %v3926
      %v3991 = vmul.f32 %v3927, %v3927
      %v3992 = vmul.f32 %v3928, %v3928
      %v3993 = vmul.f32 %v3929, %v3929
      %v3994 = vmul.f32 %v3930, %v3930
      %v3995 = vmul.f32 %v3931, %v3931
      %v3996 = vmul.f32 %v3932, %v3932
      %v3997 = vmul.f32 %v3933, %v3933
      %v3998 = vmul.f32 %v3934, %v3934
      %v3999 = vmul.f32 %v3935, %v3935
      %v4000 = vmul.f32 %v3936, %v3936
      %v4001 = vmul.f32 %v3937, %v3937
      %v4002 = vmul.f32 %v3938, %v3938
      %v4003 = vmul.f32 %v3939, %v3939
      %v4004 = vmul.f32 %v3940, %v3940
      %v4005 = vmul.f32 %v3941, %v3941
      %v4006 = vmul.f32 %v3942, %v3942
      %v4007 = vmul.f32 %v3943, %v3943
      %v4008 = vmul.f32 %v3944, %v3944
      %v4009 = vmul.f32 %v3945, %v3945
      %v4010 = vmul.f32 %v3946, %v3946
      %v4011 = vmul.f32 %v3947, %v3947
      %v4012 = vmul.f32 %v3948, %v3948
      %v4013 = vmul.f32 %v3949, %v3949
      %v4014 = vmul.f32 %v3950, %v3950
      %v4015 = vmul.f32 %v3951, %v3951
      %v4016 = vmul.f32 %v3952, %v3952
      %v4017 = vmul.f32 %v3953, %v3953
      %v4018 = vmul.f32 %v3954, %v3954
      %v4019 = vmul.f32 %v3955, %v3955
      %v4020 = vmul.f32 %v3956, %v3956
      %v4021 = vmul.f32 %v3957, %v3957
      %v4022 = vmul.f32 %v3958, %v3958
      %v4023 = vmul.f32 %v3959, %v3959
      %v4024 = vmul.f32 %v3960, %v3960
      %v4025 = vmul.f32 %v3961, %v3961
      %v4026 = vmul.f32 %v3962, %v3962
      %v4027 = vmul.f32 %v3963, %v3963
      %v4028 = vmul.f32 %v3964, %v3964
      %v4029 = vmul.f32 %v3965, %v3965
      %v4030 = vmul.f32 %v3966, %v3966
      %v4031 = vmul.f32 %v3967, %v3967
      %v4032 = vmul.f32 %v3968, %v3968
      %v4033 = vmul.f32 %v3969, %v3969
      %v4034 = vmul.f32 %v3970, %v3970
      %v4035 = vmul.f32 %v3971, %v3971
      %v4036 = vmul.f32 %v3972, %v3972
      %v4037 = vmul.f32 %v3973, %v3973
      %v4038 = vmul.f32 %v3974, %v3974
      %v4039 = vmul.f32 %v3975, %v3975
      %v4040 = vmul.f32 %v3976, %v3976
      %v4041 = vmul.f32 %v3977, %v3977
      %v4042 = vmul.f32 %v3978, %v3978
      %v4043 = vmul.f32 %v3979, %v3979
      %v4044 = vmul.f32 %v3980, %v3980
      %v4045 = vmul.f32 %v3981, %v3981
      %v4110 = vcombine.low %v3982, %v3983
      %v4111 = vcombine.low %v3984, %v3985
      %v4113 = vunpack.c.l.s4 1983009808
      %v4114 = vunpack.c.0.s8 %v4113
      %v4115 = vlaneseq
      %v4116 = vshrl.u32 %v4115, 7
      %v4117 = vsub.s32 %v4114, %v4116
      %v4118 = vrot.slane %v4110, %v4117
      %v4120 = vunpack.c.l.s4 1983009808
      %v4121 = vunpack.c.0.s8 %v4120
      %v4122 = vlaneseq
      %v4123 = vshrl.u32 %v4122, 7
      %v4124 = vsub.s32 %v4121, %v4123
      %v4125 = vrot.slane %v4111, %v4124
      %v4126 = vcombine.low %v4118, %v4125
      %v4127 = vcombine.low %v3986, %v3987
      %v4128 = vcombine.low %v3988, %v3989
      %v4130 = vunpack.c.l.s4 1983009808
      %v4131 = vunpack.c.0.s8 %v4130
      %v4132 = vlaneseq
      %v4133 = vshrl.u32 %v4132, 7
      %v4134 = vsub.s32 %v4131, %v4133
      %v4135 = vrot.slane %v4127, %v4134
      %v4137 = vunpack.c.l.s4 1983009808
      %v4138 = vunpack.c.0.s8 %v4137
      %v4139 = vlaneseq
      %v4140 = vshrl.u32 %v4139, 7
      %v4141 = vsub.s32 %v4138, %v4140
      %v4142 = vrot.slane %v4128, %v4141
      %v4143 = vcombine.low %v4135, %v4142
      %v4144 = vcombine.low %v3990, %v3991
      %v4145 = vcombine.low %v3992, %v3993
      %v4147 = vunpack.c.l.s4 1983009808
      %v4148 = vunpack.c.0.s8 %v4147
      %v4149 = vlaneseq
      %v4150 = vshrl.u32 %v4149, 7
      %v4151 = vsub.s32 %v4148, %v4150
      %v4152 = vrot.slane %v4144, %v4151
      %v4154 = vunpack.c.l.s4 1983009808
      %v4155 = vunpack.c.0.s8 %v4154
      %v4156 = vlaneseq
      %v4157 = vshrl.u32 %v4156, 7
      %v4158 = vsub.s32 %v4155, %v4157
      %v4159 = vrot.slane %v4145, %v4158
      %v4160 = vcombine.low %v4152, %v4159
      %v4161 = vcombine.low %v3994, %v3995
      %v4162 = vcombine.low %v3996, %v3997
      %v4164 = vunpack.c.l.s4 1983009808
      %v4165 = vunpack.c.0.s8 %v4164
      %v4166 = vlaneseq
      %v4167 = vshrl.u32 %v4166, 7
      %v4168 = vsub.s32 %v4165, %v4167
      %v4169 = vrot.slane %v4161, %v4168
      %v4171 = vunpack.c.l.s4 1983009808
      %v4172 = vunpack.c.0.s8 %v4171
      %v4173 = vlaneseq
      %v4174 = vshrl.u32 %v4173, 7
      %v4175 = vsub.s32 %v4172, %v4174
      %v4176 = vrot.slane %v4162, %v4175
      %v4177 = vcombine.low %v4169, %v4176
      %v4178 = vcombine.low %v3998, %v3999
      %v4179 = vcombine.low %v4000, %v4001
      %v4181 = vunpack.c.l.s4 1983009808
      %v4182 = vunpack.c.0.s8 %v4181
      %v4183 = vlaneseq
      %v4184 = vshrl.u32 %v4183, 7
      %v4185 = vsub.s32 %v4182, %v4184
      %v4186 = vrot.slane %v4178, %v4185
      %v4188 = vunpack.c.l.s4 1983009808
      %v4189 = vunpack.c.0.s8 %v4188
      %v4190 = vlaneseq
      %v4191 = vshrl.u32 %v4190, 7
      %v4192 = vsub.s32 %v4189, %v4191
      %v4193 = vrot.slane %v4179, %v4192
      %v4194 = vcombine.low %v4186, %v4193
      %v4195 = vcombine.low %v4002, %v4003
      %v4196 = vcombine.low %v4004, %v4005
      %v4198 = vunpack.c.l.s4 1983009808
      %v4199 = vunpack.c.0.s8 %v4198
      %v4200 = vlaneseq
      %v4201 = vshrl.u32 %v4200, 7
      %v4202 = vsub.s32 %v4199, %v4201
      %v4203 = vrot.slane %v4195, %v4202
      %v4205 = vunpack.c.l.s4 1983009808
      %v4206 = vunpack.c.0.s8 %v4205
      %v4207 = vlaneseq
      %v4208 = vshrl.u32 %v4207, 7
      %v4209 = vsub.s32 %v4206, %v4208
      %v4210 = vrot.slane %v4196, %v4209
      %v4211 = vcombine.low %v4203, %v4210
      %v4212 = vcombine.low %v4006, %v4007
      %v4213 = vcombine.low %v4008, %v4009
      %v4215 = vunpack.c.l.s4 1983009808
      %v4216 = vunpack.c.0.s8 %v4215
      %v4217 = vlaneseq
      %v4218 = vshrl.u32 %v4217, 7
      %v4219 = vsub.s32 %v4216, %v4218
      %v4220 = vrot.slane %v4212, %v4219
      %v4222 = vunpack.c.l.s4 1983009808
      %v4223 = vunpack.c.0.s8 %v4222
      %v4224 = vlaneseq
      %v4225 = vshrl.u32 %v4224, 7
      %v4226 = vsub.s32 %v4223, %v4225
      %v4227 = vrot.slane %v4213, %v4226
      %v4228 = vcombine.low %v4220, %v4227
      %v4229 = vcombine.low %v4010, %v4011
      %v4230 = vcombine.low %v4012, %v4013
      %v4232 = vunpack.c.l.s4 1983009808
      %v4233 = vunpack.c.0.s8 %v4232
      %v4234 = vlaneseq
      %v4235 = vshrl.u32 %v4234, 7
      %v4236 = vsub.s32 %v4233, %v4235
      %v4237 = vrot.slane %v4229, %v4236
      %v4239 = vunpack.c.l.s4 1983009808
      %v4240 = vunpack.c.0.s8 %v4239
      %v4241 = vlaneseq
      %v4242 = vshrl.u32 %v4241, 7
      %v4243 = vsub.s32 %v4240, %v4242
      %v4244 = vrot.slane %v4230, %v4243
      %v4245 = vcombine.low %v4237, %v4244
      %v4246 = vcombine.low %v4014, %v4015
      %v4247 = vcombine.low %v4016, %v4017
      %v4249 = vunpack.c.l.s4 1983009808
      %v4250 = vunpack.c.0.s8 %v4249
      %v4251 = vlaneseq
      %v4252 = vshrl.u32 %v4251, 7
      %v4253 = vsub.s32 %v4250, %v4252
      %v4254 = vrot.slane %v4246, %v4253
      %v4256 = vunpack.c.l.s4 1983009808
      %v4257 = vunpack.c.0.s8 %v4256
      %v4258 = vlaneseq
      %v4259 = vshrl.u32 %v4258, 7
      %v4260 = vsub.s32 %v4257, %v4259
      %v4261 = vrot.slane %v4247, %v4260
      %v4262 = vcombine.low %v4254, %v4261
      %v4263 = vcombine.low %v4018, %v4019
      %v4264 = vcombine.low %v4020, %v4021
      %v4266 = vunpack.c.l.s4 1983009808
      %v4267 = vunpack.c.0.s8 %v4266
      %v4268 = vlaneseq
      %v4269 = vshrl.u32 %v4268, 7
      %v4270 = vsub.s32 %v4267, %v4269
      %v4271 = vrot.slane %v4263, %v4270
      %v4273 = vunpack.c.l.s4 1983009808
      %v4274 = vunpack.c.0.s8 %v4273
      %v4275 = vlaneseq
      %v4276 = vshrl.u32 %v4275, 7
      %v4277 = vsub.s32 %v4274, %v4276
      %v4278 = vrot.slane %v4264, %v4277
      %v4279 = vcombine.low %v4271, %v4278
      %v4280 = vcombine.low %v4022, %v4023
      %v4281 = vcombine.low %v4024, %v4025
      %v4283 = vunpack.c.l.s4 1983009808
      %v4284 = vunpack.c.0.s8 %v4283
      %v4285 = vlaneseq
      %v4286 = vshrl.u32 %v4285, 7
      %v4287 = vsub.s32 %v4284, %v4286
      %v4288 = vrot.slane %v4280, %v4287
      %v4290 = vunpack.c.l.s4 1983009808
      %v4291 = vunpack.c.0.s8 %v4290
      %v4292 = vlaneseq
      %v4293 = vshrl.u32 %v4292, 7
      %v4294 = vsub.s32 %v4291, %v4293
      %v4295 = vrot.slane %v4281, %v4294
      %v4296 = vcombine.low %v4288, %v4295
      %v4297 = vcombine.low %v4026, %v4027
      %v4298 = vcombine.low %v4028, %v4029
      %v4300 = vunpack.c.l.s4 1983009808
      %v4301 = vunpack.c.0.s8 %v4300
      %v4302 = vlaneseq
      %v4303 = vshrl.u32 %v4302, 7
      %v4304 = vsub.s32 %v4301, %v4303
      %v4305 = vrot.slane %v4297, %v4304
      %v4307 = vunpack.c.l.s4 1983009808
      %v4308 = vunpack.c.0.s8 %v4307
      %v4309 = vlaneseq
      %v4310 = vshrl.u32 %v4309, 7
      %v4311 = vsub.s32 %v4308, %v4310
      %v4312 = vrot.slane %v4298, %v4311
      %v4313 = vcombine.low %v4305, %v4312
      %v4314 = vcombine.low %v4030, %v4031
      %v4315 = vcombine.low %v4032, %v4033
      %v4317 = vunpack.c.l.s4 1983009808
      %v4318 = vunpack.c.0.s8 %v4317
      %v4319 = vlaneseq
      %v4320 = vshrl.u32 %v4319, 7
      %v4321 = vsub.s32 %v4318, %v4320
      %v4322 = vrot.slane %v4314, %v4321
      %v4324 = vunpack.c.l.s4 1983009808
      %v4325 = vunpack.c.0.s8 %v4324
      %v4326 = vlaneseq
      %v4327 = vshrl.u32 %v4326, 7
      %v4328 = vsub.s32 %v4325, %v4327
      %v4329 = vrot.slane %v4315, %v4328
      %v4330 = vcombine.low %v4322, %v4329
      %v4331 = vcombine.low %v4034, %v4035
      %v4332 = vcombine.low %v4036, %v4037
      %v4334 = vunpack.c.l.s4 1983009808
      %v4335 = vunpack.c.0.s8 %v4334
      %v4336 = vlaneseq
      %v4337 = vshrl.u32 %v4336, 7
      %v4338 = vsub.s32 %v4335, %v4337
      %v4339 = vrot.slane %v4331, %v4338
      %v4341 = vunpack.c.l.s4 1983009808
      %v4342 = vunpack.c.0.s8 %v4341
      %v4343 = vlaneseq
      %v4344 = vshrl.u32 %v4343, 7
      %v4345 = vsub.s32 %v4342, %v4344
      %v4346 = vrot.slane %v4332, %v4345
      %v4347 = vcombine.low %v4339, %v4346
      %v4348 = vcombine.low %v4038, %v4039
      %v4349 = vcombine.low %v4040, %v4041
      %v4351 = vunpack.c.l.s4 1983009808
      %v4352 = vunpack.c.0.s8 %v4351
      %v4353 = vlaneseq
      %v4354 = vshrl.u32 %v4353, 7
      %v4355 = vsub.s32 %v4352, %v4354
      %v4356 = vrot.slane %v4348, %v4355
      %v4358 = vunpack.c.l.s4 1983009808
      %v4359 = vunpack.c.0.s8 %v4358
      %v4360 = vlaneseq
      %v4361 = vshrl.u32 %v4360, 7
      %v4362 = vsub.s32 %v4359, %v4361
      %v4363 = vrot.slane %v4349, %v4362
      %v4364 = vcombine.low %v4356, %v4363
      %v4365 = vcombine.low %v4042, %v4043
      %v4366 = vcombine.low %v4044, %v4045
      %v4368 = vunpack.c.l.s4 1983009808
      %v4369 = vunpack.c.0.s8 %v4368
      %v4370 = vlaneseq
      %v4371 = vshrl.u32 %v4370, 7
      %v4372 = vsub.s32 %v4369, %v4371
      %v4373 = vrot.slane %v4365, %v4372
      %v4375 = vunpack.c.l.s4 1983009808
      %v4376 = vunpack.c.0.s8 %v4375
      %v4377 = vlaneseq
      %v4378 = vshrl.u32 %v4377, 7
      %v4379 = vsub.s32 %v4376, %v4378
      %v4380 = vrot.slane %v4366, %v4379
      %v4381 = vcombine.low %v4373, %v4380
      %v4398 = vsel %vm645, %v4126, 0.0
      %v4399 = vsel %vm645, %v4143, 0.0
      %v4400 = vadd.f32 %v4398, %v4399
      %v4401 = vsel %vm645, %v4160, 0.0
      %v4402 = vadd.f32 %v4400, %v4401
      %v4403 = vsel %vm645, %v4177, 0.0
      %v4404 = vadd.f32 %v4402, %v4403
      %v4405 = vsel %vm645, %v4194, 0.0
      %v4406 = vadd.f32 %v4404, %v4405
      %v4407 = vsel %vm645, %v4211, 0.0
      %v4408 = vadd.f32 %v4406, %v4407
      %v4409 = vsel %vm645, %v4228, 0.0
      %v4410 = vadd.f32 %v4408, %v4409
      %v4411 = vsel %vm645, %v4245, 0.0
      %v4412 = vadd.f32 %v4410, %v4411
      %v4413 = vsel %vm645, %v4262, 0.0
      %v4414 = vadd.f32 %v4412, %v4413
      %v4415 = vsel %vm645, %v4279, 0.0
      %v4416 = vadd.f32 %v4414, %v4415
      %v4417 = vsel %vm645, %v4296, 0.0
      %v4418 = vadd.f32 %v4416, %v4417
      %v4419 = vsel %vm645, %v4313, 0.0
      %v4420 = vadd.f32 %v4418, %v4419
      %v4421 = vsel %vm645, %v4330, 0.0
      %v4422 = vadd.f32 %v4420, %v4421
      %v4423 = vsel %vm645, %v4347, 0.0
      %v4424 = vadd.f32 %v4422, %v4423
      %v4425 = vsel %vm645, %v4364, 0.0
      %v4426 = vadd.f32 %v4424, %v4425
      %v4427 = vsel %vm645, %v4381, 0.0
      %v4428 = vadd.f32 %v4426, %v4427
      %v4429 = vrot.slane %v4428, 4
      %v4430 = vadd.f32 %v4428, %v4429
      %v4431 = vrot.slane %v4430, 2
      %v4432 = vadd.f32 %v4430, %v4431
      %v4433 = vrot.slane %v4432, 1
      %v4434 = vadd.f32 %v4432, %v4433
      %v4435 = vsel %vm2607, %v3894, %v4434
      %vm4436 = vcmask 58368
      %4437 = vst.msk [vmem:[%s410] sm:$0x3] %vm4436, %v4435
      %v4438 = vcombine.low %v3442, %v3450
      %v4440 = vunpack.c.l.s4 1934713408
      %v4441 = vunpack.c.0.s8 %v4440
      %v4442 = vlaneseq
      %v4443 = vshrl.u32 %v4442, 7
      %v4444 = vsub.s32 %v4441, %v4443
      %v4445 = vrot.slane %v4438, %v4444
      %v4446 = vcombine.high %v4445, 0.0
      %v4447 = vcombine.low %v3458, %v3466
      %v4449 = vunpack.c.l.s4 1934713408
      %v4450 = vunpack.c.0.s8 %v4449
      %v4451 = vlaneseq
      %v4452 = vshrl.u32 %v4451, 7
      %v4453 = vsub.s32 %v4450, %v4452
      %v4454 = vrot.slane %v4447, %v4453
      %v4455 = vcombine.high %v4454, 0.0
      %v4456 = vcombine.low %v3474, %v3482
      %v4458 = vunpack.c.l.s4 1934713408
      %v4459 = vunpack.c.0.s8 %v4458
      %v4460 = vlaneseq
      %v4461 = vshrl.u32 %v4460, 7
      %v4462 = vsub.s32 %v4459, %v4461
      %v4463 = vrot.slane %v4456, %v4462
      %v4464 = vcombine.high %v4463, 0.0
      %v4465 = vcombine.low %v3490, %v3498
      %v4467 = vunpack.c.l.s4 1934713408
      %v4468 = vunpack.c.0.s8 %v4467
      %v4469 = vlaneseq
      %v4470 = vshrl.u32 %v4469, 7
      %v4471 = vsub.s32 %v4468, %v4470
      %v4472 = vrot.slane %v4465, %v4471
      %v4473 = vcombine.high %v4472, 0.0
      %v4474 = vcombine.low %v3443, %v3451
      %v4476 = vunpack.c.l.s4 1934713408
      %v4477 = vunpack.c.0.s8 %v4476
      %v4478 = vlaneseq
      %v4479 = vshrl.u32 %v4478, 7
      %v4480 = vsub.s32 %v4477, %v4479
      %v4481 = vrot.slane %v4474, %v4480
      %v4482 = vcombine.high %v4481, 0.0
      %v4483 = vcombine.low %v3459, %v3467
      %v4485 = vunpack.c.l.s4 1934713408
      %v4486 = vunpack.c.0.s8 %v4485
      %v4487 = vlaneseq
      %v4488 = vshrl.u32 %v4487, 7
      %v4489 = vsub.s32 %v4486, %v4488
      %v4490 = vrot.slane %v4483, %v4489
      %v4491 = vcombine.high %v4490, 0.0
      %v4492 = vcombine.low %v3475, %v3483
      %v4494 = vunpack.c.l.s4 1934713408
      %v4495 = vunpack.c.0.s8 %v4494
      %v4496 = vlaneseq
      %v4497 = vshrl.u32 %v4496, 7
      %v4498 = vsub.s32 %v4495, %v4497
      %v4499 = vrot.slane %v4492, %v4498
      %v4500 = vcombine.high %v4499, 0.0
      %v4501 = vcombine.low %v3491, %v3499
      %v4503 = vunpack.c.l.s4 1934713408
      %v4504 = vunpack.c.0.s8 %v4503
      %v4505 = vlaneseq
      %v4506 = vshrl.u32 %v4505, 7
      %v4507 = vsub.s32 %v4504, %v4506
      %v4508 = vrot.slane %v4501, %v4507
      %v4509 = vcombine.high %v4508, 0.0
      %v4510 = vcombine.low %v3444, %v3452
      %v4512 = vunpack.c.l.s4 1934713408
      %v4513 = vunpack.c.0.s8 %v4512
      %v4514 = vlaneseq
      %v4515 = vshrl.u32 %v4514, 7
      %v4516 = vsub.s32 %v4513, %v4515
      %v4517 = vrot.slane %v4510, %v4516
      %v4518 = vcombine.high %v4517, 0.0
      %v4519 = vcombine.low %v3460, %v3468
      %v4521 = vunpack.c.l.s4 1934713408
      %v4522 = vunpack.c.0.s8 %v4521
      %v4523 = vlaneseq
      %v4524 = vshrl.u32 %v4523, 7
      %v4525 = vsub.s32 %v4522, %v4524
      %v4526 = vrot.slane %v4519, %v4525
      %v4527 = vcombine.high %v4526, 0.0
      %v4528 = vcombine.low %v3476, %v3484
      %v4530 = vunpack.c.l.s4 1934713408
      %v4531 = vunpack.c.0.s8 %v4530
      %v4532 = vlaneseq
      %v4533 = vshrl.u32 %v4532, 7
      %v4534 = vsub.s32 %v4531, %v4533
      %v4535 = vrot.slane %v4528, %v4534
      %v4536 = vcombine.high %v4535, 0.0
      %v4537 = vcombine.low %v3492, %v3500
      %v4539 = vunpack.c.l.s4 1934713408
      %v4540 = vunpack.c.0.s8 %v4539
      %v4541 = vlaneseq
      %v4542 = vshrl.u32 %v4541, 7
      %v4543 = vsub.s32 %v4540, %v4542
      %v4544 = vrot.slane %v4537, %v4543
      %v4545 = vcombine.high %v4544, 0.0
      %v4546 = vcombine.low %v3445, %v3453
      %v4548 = vunpack.c.l.s4 1934713408
      %v4549 = vunpack.c.0.s8 %v4548
      %v4550 = vlaneseq
      %v4551 = vshrl.u32 %v4550, 7
      %v4552 = vsub.s32 %v4549, %v4551
      %v4553 = vrot.slane %v4546, %v4552
      %v4554 = vcombine.high %v4553, 0.0
      %v4555 = vcombine.low %v3461, %v3469
      %v4557 = vunpack.c.l.s4 1934713408
      %v4558 = vunpack.c.0.s8 %v4557
      %v4559 = vlaneseq
      %v4560 = vshrl.u32 %v4559, 7
      %v4561 = vsub.s32 %v4558, %v4560
      %v4562 = vrot.slane %v4555, %v4561
      %v4563 = vcombine.high %v4562, 0.0
      %v4564 = vcombine.low %v3477, %v3485
      %v4566 = vunpack.c.l.s4 1934713408
      %v4567 = vunpack.c.0.s8 %v4566
      %v4568 = vlaneseq
      %v4569 = vshrl.u32 %v4568, 7
      %v4570 = vsub.s32 %v4567, %v4569
      %v4571 = vrot.slane %v4564, %v4570
      %v4572 = vcombine.high %v4571, 0.0
      %v4573 = vcombine.low %v3493, %v3501
      %v4575 = vunpack.c.l.s4 1934713408
      %v4576 = vunpack.c.0.s8 %v4575
      %v4577 = vlaneseq
      %v4578 = vshrl.u32 %v4577, 7
      %v4579 = vsub.s32 %v4576, %v4578
      %v4580 = vrot.slane %v4573, %v4579
      %v4581 = vcombine.high %v4580, 0.0
      %v4582 = vcombine.low %v3446, %v3454
      %v4584 = vunpack.c.l.s4 1934713408
      %v4585 = vunpack.c.0.s8 %v4584
      %v4586 = vlaneseq
      %v4587 = vshrl.u32 %v4586, 7
      %v4588 = vsub.s32 %v4585, %v4587
      %v4589 = vrot.slane %v4582, %v4588
      %v4590 = vcombine.high %v4589, 0.0
      %v4591 = vcombine.low %v3462, %v3470
      %v4593 = vunpack.c.l.s4 1934713408
      %v4594 = vunpack.c.0.s8 %v4593
      %v4595 = vlaneseq
      %v4596 = vshrl.u32 %v4595, 7
      %v4597 = vsub.s32 %v4594, %v4596
      %v4598 = vrot.slane %v4591, %v4597
      %v4599 = vcombine.high %v4598, 0.0
      %v4600 = vcombine.low %v3478, %v3486
      %v4602 = vunpack.c.l.s4 1934713408
      %v4603 = vunpack.c.0.s8 %v4602
      %v4604 = vlaneseq
      %v4605 = vshrl.u32 %v4604, 7
      %v4606 = vsub.s32 %v4603, %v4605
      %v4607 = vrot.slane %v4600, %v4606
      %v4608 = vcombine.high %v4607, 0.0
      %v4609 = vcombine.low %v3494, %v3502
      %v4611 = vunpack.c.l.s4 1934713408
      %v4612 = vunpack.c.0.s8 %v4611
      %v4613 = vlaneseq
      %v4614 = vshrl.u32 %v4613, 7
      %v4615 = vsub.s32 %v4612, %v4614
      %v4616 = vrot.slane %v4609, %v4615
      %v4617 = vcombine.high %v4616, 0.0
      %v4618 = vcombine.low %v3447, %v3455
      %v4620 = vunpack.c.l.s4 1934713408
      %v4621 = vunpack.c.0.s8 %v4620
      %v4622 = vlaneseq
      %v4623 = vshrl.u32 %v4622, 7
      %v4624 = vsub.s32 %v4621, %v4623
      %v4625 = vrot.slane %v4618, %v4624
      %v4626 = vcombine.high %v4625, 0.0
      %v4627 = vcombine.low %v3463, %v3471
      %v4629 = vunpack.c.l.s4 1934713408
      %v4630 = vunpack.c.0.s8 %v4629
      %v4631 = vlaneseq
      %v4632 = vshrl.u32 %v4631, 7
      %v4633 = vsub.s32 %v4630, %v4632
      %v4634 = vrot.slane %v4627, %v4633
      %v4635 = vcombine.high %v4634, 0.0
      %v4636 = vcombine.low %v3479, %v3487
      %v4638 = vunpack.c.l.s4 1934713408
      %v4639 = vunpack.c.0.s8 %v4638
      %v4640 = vlaneseq
      %v4641 = vshrl.u32 %v4640, 7
      %v4642 = vsub.s32 %v4639, %v4641
      %v4643 = vrot.slane %v4636, %v4642
      %v4644 = vcombine.high %v4643, 0.0
      %v4645 = vcombine.low %v3495, %v3503
      %v4647 = vunpack.c.l.s4 1934713408
      %v4648 = vunpack.c.0.s8 %v4647
      %v4649 = vlaneseq
      %v4650 = vshrl.u32 %v4649, 7
      %v4651 = vsub.s32 %v4648, %v4650
      %v4652 = vrot.slane %v4645, %v4651
      %v4653 = vcombine.high %v4652, 0.0
      %v4654 = vcombine.low %v3448, %v3456
      %v4656 = vunpack.c.l.s4 1934713408
      %v4657 = vunpack.c.0.s8 %v4656
      %v4658 = vlaneseq
      %v4659 = vshrl.u32 %v4658, 7
      %v4660 = vsub.s32 %v4657, %v4659
      %v4661 = vrot.slane %v4654, %v4660
      %v4662 = vcombine.high %v4661, 0.0
      %v4663 = vcombine.low %v3464, %v3472
      %v4665 = vunpack.c.l.s4 1934713408
      %v4666 = vunpack.c.0.s8 %v4665
      %v4667 = vlaneseq
      %v4668 = vshrl.u32 %v4667, 7
      %v4669 = vsub.s32 %v4666, %v4668
      %v4670 = vrot.slane %v4663, %v4669
      %v4671 = vcombine.high %v4670, 0.0
      %v4672 = vcombine.low %v3480, %v3488
      %v4674 = vunpack.c.l.s4 1934713408
      %v4675 = vunpack.c.0.s8 %v4674
      %v4676 = vlaneseq
      %v4677 = vshrl.u32 %v4676, 7
      %v4678 = vsub.s32 %v4675, %v4677
      %v4679 = vrot.slane %v4672, %v4678
      %v4680 = vcombine.high %v4679, 0.0
      %v4681 = vcombine.low %v3496, %v3504
      %v4683 = vunpack.c.l.s4 1934713408
      %v4684 = vunpack.c.0.s8 %v4683
      %v4685 = vlaneseq
      %v4686 = vshrl.u32 %v4685, 7
      %v4687 = vsub.s32 %v4684, %v4686
      %v4688 = vrot.slane %v4681, %v4687
      %v4689 = vcombine.high %v4688, 0.0
      %v4690 = vcombine.low %v3449, %v3457
      %v4692 = vunpack.c.l.s4 1934713408
      %v4693 = vunpack.c.0.s8 %v4692
      %v4694 = vlaneseq
      %v4695 = vshrl.u32 %v4694, 7
      %v4696 = vsub.s32 %v4693, %v4695
      %v4697 = vrot.slane %v4690, %v4696
      %v4698 = vcombine.high %v4697, 0.0
      %v4699 = vcombine.low %v3465, %v3473
      %v4701 = vunpack.c.l.s4 1934713408
      %v4702 = vunpack.c.0.s8 %v4701
      %v4703 = vlaneseq
      %v4704 = vshrl.u32 %v4703, 7
      %v4705 = vsub.s32 %v4702, %v4704
      %v4706 = vrot.slane %v4699, %v4705
      %v4707 = vcombine.high %v4706, 0.0
      %v4708 = vcombine.low %v3481, %v3489
      %v4710 = vunpack.c.l.s4 1934713408
      %v4711 = vunpack.c.0.s8 %v4710
      %v4712 = vlaneseq
      %v4713 = vshrl.u32 %v4712, 7
      %v4714 = vsub.s32 %v4711, %v4713
      %v4715 = vrot.slane %v4708, %v4714
      %v4716 = vcombine.high %v4715, 0.0
      %v4717 = vcombine.low %v3497, %v3505
      %v4719 = vunpack.c.l.s4 1934713408
      %v4720 = vunpack.c.0.s8 %v4719
      %v4721 = vlaneseq
      %v4722 = vshrl.u32 %v4721, 7
      %v4723 = vsub.s32 %v4720, %v4722
      %v4724 = vrot.slane %v4717, %v4723
      %v4725 = vcombine.high %v4724, 0.0
      %v4730 = vcombine.low %v4445, %v4454
      %v4731 = vcombine.low %v4463, %v4472
      %v4733 = vunpack.c.l.s4 1983009808
      %v4734 = vunpack.c.0.s8 %v4733
      %v4735 = vlaneseq
      %v4736 = vshrl.u32 %v4735, 7
      %v4737 = vsub.s32 %v4734, %v4736
      %v4738 = vrot.slane %v4730, %v4737
      %v4740 = vunpack.c.l.s4 1983009808
      %v4741 = vunpack.c.0.s8 %v4740
      %v4742 = vlaneseq
      %v4743 = vshrl.u32 %v4742, 7
      %v4744 = vsub.s32 %v4741, %v4743
      %v4745 = vrot.slane %v4731, %v4744
      %v4746 = vcombine.low %v4738, %v4745
      %v4752 = vcombine.low %v4446, %v4455
      %v4753 = vcombine.low %v4464, %v4473
      %v4755 = vunpack.c.l.s4 1983009808
      %v4756 = vunpack.c.0.s8 %v4755
      %v4757 = vlaneseq
      %v4758 = vshrl.u32 %v4757, 7
      %v4759 = vsub.s32 %v4756, %v4758
      %v4760 = vrot.slane %v4752, %v4759
      %v4762 = vunpack.c.l.s4 1983009808
      %v4763 = vunpack.c.0.s8 %v4762
      %v4764 = vlaneseq
      %v4765 = vshrl.u32 %v4764, 7
      %v4766 = vsub.s32 %v4763, %v4765
      %v4767 = vrot.slane %v4753, %v4766
      %v4768 = vcombine.low %v4760, %v4767
      %4769 = vrot.lane.b32.xlu0 %v4768, 8
      %v4770 = vpop.permute.xlu0 %4769
      %v4776 = vcombine.low %v4481, %v4490
      %v4777 = vcombine.low %v4499, %v4508
      %v4779 = vunpack.c.l.s4 1983009808
      %v4780 = vunpack.c.0.s8 %v4779
      %v4781 = vlaneseq
      %v4782 = vshrl.u32 %v4781, 7
      %v4783 = vsub.s32 %v4780, %v4782
      %v4784 = vrot.slane %v4776, %v4783
      %v4786 = vunpack.c.l.s4 1983009808
      %v4787 = vunpack.c.0.s8 %v4786
      %v4788 = vlaneseq
      %v4789 = vshrl.u32 %v4788, 7
      %v4790 = vsub.s32 %v4787, %v4789
      %v4791 = vrot.slane %v4777, %v4790
      %v4792 = vcombine.low %v4784, %v4791
      %4793 = vrot.lane.b32.xlu0 %v4792, 16
      %v4794 = vpop.permute.xlu0 %4793
      %v4800 = vcombine.low %v4482, %v4491
      %v4801 = vcombine.low %v4500, %v4509
      %v4803 = vunpack.c.l.s4 1983009808
      %v4804 = vunpack.c.0.s8 %v4803
      %v4805 = vlaneseq
      %v4806 = vshrl.u32 %v4805, 7
      %v4807 = vsub.s32 %v4804, %v4806
      %v4808 = vrot.slane %v4800, %v4807
      %v4810 = vunpack.c.l.s4 1983009808
      %v4811 = vunpack.c.0.s8 %v4810
      %v4812 = vlaneseq
      %v4813 = vshrl.u32 %v4812, 7
      %v4814 = vsub.s32 %v4811, %v4813
      %v4815 = vrot.slane %v4801, %v4814
      %v4816 = vcombine.low %v4808, %v4815
      %4817 = vrot.lane.b32.xlu0 %v4816, 24
      %v4818 = vpop.permute.xlu0 %4817
      %v4824 = vcombine.low %v4517, %v4526
      %v4825 = vcombine.low %v4535, %v4544
      %v4827 = vunpack.c.l.s4 1983009808
      %v4828 = vunpack.c.0.s8 %v4827
      %v4829 = vlaneseq
      %v4830 = vshrl.u32 %v4829, 7
      %v4831 = vsub.s32 %v4828, %v4830
      %v4832 = vrot.slane %v4824, %v4831
      %v4834 = vunpack.c.l.s4 1983009808
      %v4835 = vunpack.c.0.s8 %v4834
      %v4836 = vlaneseq
      %v4837 = vshrl.u32 %v4836, 7
      %v4838 = vsub.s32 %v4835, %v4837
      %v4839 = vrot.slane %v4825, %v4838
      %v4840 = vcombine.low %v4832, %v4839
      %4841 = vrot.lane.b32.xlu0 %v4840, 32
      %v4842 = vpop.permute.xlu0 %4841
      %v4848 = vcombine.low %v4518, %v4527
      %v4849 = vcombine.low %v4536, %v4545
      %v4851 = vunpack.c.l.s4 1983009808
      %v4852 = vunpack.c.0.s8 %v4851
      %v4853 = vlaneseq
      %v4854 = vshrl.u32 %v4853, 7
      %v4855 = vsub.s32 %v4852, %v4854
      %v4856 = vrot.slane %v4848, %v4855
      %v4858 = vunpack.c.l.s4 1983009808
      %v4859 = vunpack.c.0.s8 %v4858
      %v4860 = vlaneseq
      %v4861 = vshrl.u32 %v4860, 7
      %v4862 = vsub.s32 %v4859, %v4861
      %v4863 = vrot.slane %v4849, %v4862
      %v4864 = vcombine.low %v4856, %v4863
      %4865 = vrot.lane.b32.xlu0 %v4864, 40
      %v4866 = vpop.permute.xlu0 %4865
      %v4872 = vcombine.low %v4553, %v4562
      %v4873 = vcombine.low %v4571, %v4580
      %v4875 = vunpack.c.l.s4 1983009808
      %v4876 = vunpack.c.0.s8 %v4875
      %v4877 = vlaneseq
      %v4878 = vshrl.u32 %v4877, 7
      %v4879 = vsub.s32 %v4876, %v4878
      %v4880 = vrot.slane %v4872, %v4879
      %v4882 = vunpack.c.l.s4 1983009808
      %v4883 = vunpack.c.0.s8 %v4882
      %v4884 = vlaneseq
      %v4885 = vshrl.u32 %v4884, 7
      %v4886 = vsub.s32 %v4883, %v4885
      %v4887 = vrot.slane %v4873, %v4886
      %v4888 = vcombine.low %v4880, %v4887
      %4889 = vrot.lane.b32.xlu0 %v4888, 48
      %v4890 = vpop.permute.xlu0 %4889
      %v4896 = vcombine.low %v4554, %v4563
      %v4897 = vcombine.low %v4572, %v4581
      %v4899 = vunpack.c.l.s4 1983009808
      %v4900 = vunpack.c.0.s8 %v4899
      %v4901 = vlaneseq
      %v4902 = vshrl.u32 %v4901, 7
      %v4903 = vsub.s32 %v4900, %v4902
      %v4904 = vrot.slane %v4896, %v4903
      %v4906 = vunpack.c.l.s4 1983009808
      %v4907 = vunpack.c.0.s8 %v4906
      %v4908 = vlaneseq
      %v4909 = vshrl.u32 %v4908, 7
      %v4910 = vsub.s32 %v4907, %v4909
      %v4911 = vrot.slane %v4897, %v4910
      %v4912 = vcombine.low %v4904, %v4911
      %4913 = vrot.lane.b32.xlu0 %v4912, 56
      %v4914 = vpop.permute.xlu0 %4913
      %v4920 = vcombine.low %v4589, %v4598
      %v4921 = vcombine.low %v4607, %v4616
      %v4923 = vunpack.c.l.s4 1983009808
      %v4924 = vunpack.c.0.s8 %v4923
      %v4925 = vlaneseq
      %v4926 = vshrl.u32 %v4925, 7
      %v4927 = vsub.s32 %v4924, %v4926
      %v4928 = vrot.slane %v4920, %v4927
      %v4930 = vunpack.c.l.s4 1983009808
      %v4931 = vunpack.c.0.s8 %v4930
      %v4932 = vlaneseq
      %v4933 = vshrl.u32 %v4932, 7
      %v4934 = vsub.s32 %v4931, %v4933
      %v4935 = vrot.slane %v4921, %v4934
      %v4936 = vcombine.low %v4928, %v4935
      %4937 = vrot.lane.b32.xlu0 %v4936, 64
      %v4938 = vpop.permute.xlu0 %4937
      %v4944 = vcombine.low %v4590, %v4599
      %v4945 = vcombine.low %v4608, %v4617
      %v4947 = vunpack.c.l.s4 1983009808
      %v4948 = vunpack.c.0.s8 %v4947
      %v4949 = vlaneseq
      %v4950 = vshrl.u32 %v4949, 7
      %v4951 = vsub.s32 %v4948, %v4950
      %v4952 = vrot.slane %v4944, %v4951
      %v4954 = vunpack.c.l.s4 1983009808
      %v4955 = vunpack.c.0.s8 %v4954
      %v4956 = vlaneseq
      %v4957 = vshrl.u32 %v4956, 7
      %v4958 = vsub.s32 %v4955, %v4957
      %v4959 = vrot.slane %v4945, %v4958
      %v4960 = vcombine.low %v4952, %v4959
      %4961 = vrot.lane.b32.xlu0 %v4960, 72
      %v4962 = vpop.permute.xlu0 %4961
      %v4968 = vcombine.low %v4625, %v4634
      %v4969 = vcombine.low %v4643, %v4652
      %v4971 = vunpack.c.l.s4 1983009808
      %v4972 = vunpack.c.0.s8 %v4971
      %v4973 = vlaneseq
      %v4974 = vshrl.u32 %v4973, 7
      %v4975 = vsub.s32 %v4972, %v4974
      %v4976 = vrot.slane %v4968, %v4975
      %v4978 = vunpack.c.l.s4 1983009808
      %v4979 = vunpack.c.0.s8 %v4978
      %v4980 = vlaneseq
      %v4981 = vshrl.u32 %v4980, 7
      %v4982 = vsub.s32 %v4979, %v4981
      %v4983 = vrot.slane %v4969, %v4982
      %v4984 = vcombine.low %v4976, %v4983
      %4985 = vrot.lane.b32.xlu0 %v4984, 80
      %v4986 = vpop.permute.xlu0 %4985
      %v4992 = vcombine.low %v4626, %v4635
      %v4993 = vcombine.low %v4644, %v4653
      %v4995 = vunpack.c.l.s4 1983009808
      %v4996 = vunpack.c.0.s8 %v4995
      %v4997 = vlaneseq
      %v4998 = vshrl.u32 %v4997, 7
      %v4999 = vsub.s32 %v4996, %v4998
      %v5000 = vrot.slane %v4992, %v4999
      %v5002 = vunpack.c.l.s4 1983009808
      %v5003 = vunpack.c.0.s8 %v5002
      %v5004 = vlaneseq
      %v5005 = vshrl.u32 %v5004, 7
      %v5006 = vsub.s32 %v5003, %v5005
      %v5007 = vrot.slane %v4993, %v5006
      %v5008 = vcombine.low %v5000, %v5007
      %5009 = vrot.lane.b32.xlu0 %v5008, 88
      %v5010 = vpop.permute.xlu0 %5009
      %v5016 = vcombine.low %v4661, %v4670
      %v5017 = vcombine.low %v4679, %v4688
      %v5019 = vunpack.c.l.s4 1983009808
      %v5020 = vunpack.c.0.s8 %v5019
      %v5021 = vlaneseq
      %v5022 = vshrl.u32 %v5021, 7
      %v5023 = vsub.s32 %v5020, %v5022
      %v5024 = vrot.slane %v5016, %v5023
      %v5026 = vunpack.c.l.s4 1983009808
      %v5027 = vunpack.c.0.s8 %v5026
      %v5028 = vlaneseq
      %v5029 = vshrl.u32 %v5028, 7
      %v5030 = vsub.s32 %v5027, %v5029
      %v5031 = vrot.slane %v5017, %v5030
      %v5032 = vcombine.low %v5024, %v5031
      %5033 = vrot.lane.b32.xlu0 %v5032, 96
      %v5034 = vpop.permute.xlu0 %5033
      %v5040 = vcombine.low %v4662, %v4671
      %v5041 = vcombine.low %v4680, %v4689
      %v5043 = vunpack.c.l.s4 1983009808
      %v5044 = vunpack.c.0.s8 %v5043
      %v5045 = vlaneseq
      %v5046 = vshrl.u32 %v5045, 7
      %v5047 = vsub.s32 %v5044, %v5046
      %v5048 = vrot.slane %v5040, %v5047
      %v5050 = vunpack.c.l.s4 1983009808
      %v5051 = vunpack.c.0.s8 %v5050
      %v5052 = vlaneseq
      %v5053 = vshrl.u32 %v5052, 7
      %v5054 = vsub.s32 %v5051, %v5053
      %v5055 = vrot.slane %v5041, %v5054
      %v5056 = vcombine.low %v5048, %v5055
      %5057 = vrot.lane.b32.xlu0 %v5056, 104
      %v5058 = vpop.permute.xlu0 %5057
      %v5064 = vcombine.low %v4697, %v4706
      %v5065 = vcombine.low %v4715, %v4724
      %v5067 = vunpack.c.l.s4 1983009808
      %v5068 = vunpack.c.0.s8 %v5067
      %v5069 = vlaneseq
      %v5070 = vshrl.u32 %v5069, 7
      %v5071 = vsub.s32 %v5068, %v5070
      %v5072 = vrot.slane %v5064, %v5071
      %v5074 = vunpack.c.l.s4 1983009808
      %v5075 = vunpack.c.0.s8 %v5074
      %v5076 = vlaneseq
      %v5077 = vshrl.u32 %v5076, 7
      %v5078 = vsub.s32 %v5075, %v5077
      %v5079 = vrot.slane %v5065, %v5078
      %v5080 = vcombine.low %v5072, %v5079
      %5081 = vrot.lane.b32.xlu0 %v5080, 112
      %v5082 = vpop.permute.xlu0 %5081
      %v5088 = vcombine.low %v4698, %v4707
      %v5089 = vcombine.low %v4716, %v4725
      %v5091 = vunpack.c.l.s4 1983009808
      %v5092 = vunpack.c.0.s8 %v5091
      %v5093 = vlaneseq
      %v5094 = vshrl.u32 %v5093, 7
      %v5095 = vsub.s32 %v5092, %v5094
      %v5096 = vrot.slane %v5088, %v5095
      %v5098 = vunpack.c.l.s4 1983009808
      %v5099 = vunpack.c.0.s8 %v5098
      %v5100 = vlaneseq
      %v5101 = vshrl.u32 %v5100, 7
      %v5102 = vsub.s32 %v5099, %v5101
      %v5103 = vrot.slane %v5089, %v5102
      %v5104 = vcombine.low %v5096, %v5103
      %5105 = vrot.lane.b32.xlu0 %v5104, 120
      %v5106 = vpop.permute.xlu0 %5105
      %v5108 = vsel %vm645, %v4746, %v4770
      %vm5109 = vcmask 130048
      %v5110 = vsel %vm5109, %v5108, %v4794
      %vm5111 = vcmask 195584
      %v5112 = vsel %vm5111, %v5110, %v4818
      %vm5113 = vcmask 261120
      %v5114 = vsel %vm5113, %v5112, %v4842
      %vm5115 = vcmask 326656
      %v5116 = vsel %vm5115, %v5114, %v4866
      %vm5117 = vcmask 392192
      %v5118 = vsel %vm5117, %v5116, %v4890
      %vm5119 = vcmask 457728
      %v5120 = vsel %vm5119, %v5118, %v4914
      %vm5121 = vcmask 523264
      %v5122 = vsel %vm5121, %v5120, %v4938
      %vm5123 = vcmask 588800
      %v5124 = vsel %vm5123, %v5122, %v4962
      %vm5125 = vcmask 654336
      %v5126 = vsel %vm5125, %v5124, %v4986
      %vm5127 = vcmask 719872
      %v5128 = vsel %vm5127, %v5126, %v5010
      %vm5129 = vcmask 785408
      %v5130 = vsel %vm5129, %v5128, %v5034
      %vm5131 = vcmask 850944
      %v5132 = vsel %vm5131, %v5130, %v5058
      %vm5133 = vcmask 916480
      %v5134 = vsel %vm5133, %v5132, %v5082
      %vm5135 = vcmask 982016
      %v5136 = vsel %vm5135, %v5134, %v5106
      %5138 = vrot.lane.b32.xlu0 %v5136, 8
      %v5139 = vpop.permute.xlu0 %5138
      %v5141 = vsel %vm645, 0.0, %v5139
      %v5142 = vsel %vm645, %v5139, 0.0
      %v5143 = vpack.c.bf16 %v5141, %v5141
      %v5144 = vpack.c.bf16 %v5142, %v5142
      %v5147 = vunpack.c.l.b16 %v5143
      %v5148 = vunpack.c.l.b16 %v5144
      %v5149 = vpack.c.b16 %v5148, %v5147
      %vm5151 = vcmask 1043456
      %vm5152 = vcmask 130052
      %vm5153 = vmor %vm5152, %vm5151
      %5154 = vst.msk [vmem:[%s402] sm:$0xff] %vm5153, %v5149
      %p5155 = scmp.lt.s32.totalorder %s21, 1
      %s5156 = scalar_select %p5155, %s21, 1
      %p5157 = scmp.lt.s32.totalorder %s22, 1
      %s5158 = scalar_select %p5157, %s22, 1
      %s5159 = smul.addr %s5158, 2
      %s5160 = smul.addr %s5156, 4
      %s5161 = sadd.s32 %s5159, %s5160
      %s5162 = smul.addr %s5161, 4
      %s5163 = scalar_lea.vmem %s4, %s5162
      %p5164 = scmp.lt.s32.totalorder %s21, 1
      %s5165 = scalar_select %p5164, %s21, 1
      %p5166 = scmp.lt.s32.totalorder %s22, 1
      %s5167 = scalar_select %p5166, %s22, 1
      %s5168 = smul.addr %s5165, 2
      %s5169 = sadd.s32 %s5167, %s5168
      %s5170 = smul.addr %s5169, 2
      %s5171 = scalar_lea.vmem %s5, %s5170
      // Predicated region
      $region37: #{vgg_block.3} parent=35 // pred_check
        %p5172 = pneg %p170
      $region38: #{vgg_block.3} parent=35 // pred_check_branch
        %5174 = sbr.rel (%p5172) target = $region40
      $region39: #{vgg_block.3} parent=35 // pred_region
        _
      $region40: #{vgg_block.3} parent=35 // pred_fallthru
        _
      // Predicated region
      $region41: #{vgg_block.3} parent=35 // pred_check
        %p5175 = pneg %p198
      $region42: #{vgg_block.3} parent=35 // pred_check_branch
        %5177 = sbr.rel (%p5175) target = $region44
      $region43: #{vgg_block.3} parent=35 // pred_region
        _
      $region44: #{vgg_block.3} parent=35 // pred_fallthru
        _
    $region36: #{vgg_block.3} parent=5 // pred_fallthru
      _
    %p5178 = scmp.le.s32.totalorder 2, %s12
    // Predicated region
    $region45: #{vgg_block.3} parent=5 // pred_check
      %p5179 = pneg %p5178
    $region46: #{vgg_block.3} parent=5 // pred_check_branch
      %5181 = sbr.rel (%p5179) target = $region48
    $region47: #{vgg_block.3} parent=5 // pred_region
      %s5182 = ssub.s32 %s12, 2
      // Predicated region
      $region49: #{vgg_block.3} parent=47 // pred_check
        %p5183 = pneg %p176
      $region50: #{vgg_block.3} parent=47 // pred_check_branch
        %5185 = sbr.rel (%p5183) target = $region52
      $region51: #{vgg_block.3} parent=47 // pred_region
        %p5186 = scmp.lt.s32.totalorder %s23, 1
        %s5187 = scalar_select %p5186, %s23, 1
        %p5188 = scmp.lt.s32.totalorder %s24, 1
        %s5189 = scalar_select %p5188, %s24, 1
        %s5190 = smul.addr %s5189, 2
        %s5191 = smul.addr %s5187, 4
        %s5192 = sadd.s32 %s5190, %s5191
        %s5193 = smul.addr %s5192, 4
        %s5194 = scalar_lea.vmem %s4, %s5193
      $region52: #{vgg_block.3} parent=47 // pred_fallthru
        _
      // Predicated region
      $region53: #{vgg_block.3} parent=47 // pred_check
        %p5195 = pneg %p204
      $region54: #{vgg_block.3} parent=47 // pred_check_branch
        %5197 = sbr.rel (%p5195) target = $region56
      $region55: #{vgg_block.3} parent=47 // pred_region
        %p5198 = scmp.lt.s32.totalorder %s23, 1
        %s5199 = scalar_select %p5198, %s23, 1
        %p5200 = scmp.lt.s32.totalorder %s24, 1
        %s5201 = scalar_select %p5200, %s24, 1
        %s5202 = smul.addr %s5199, 2
        %s5203 = sadd.s32 %s5201, %s5202
        %s5204 = smul.addr %s5203, 2
        %s5205 = scalar_lea.vmem %s5, %s5204
      $region56: #{vgg_block.3} parent=47 // pred_fallthru
        _
    $region48: #{vgg_block.3} parent=5 // pred_fallthru
      _
  $region6: #{vgg_block.3} parent=0 // loop_footer
    %s16 = sadd.s32 1, %s12
  $region7: #{vgg_block.3} parent=0 // loop_footer_branch
    %11 = sbr.rel target = $region3
  $region8: #{vgg_block.3} parent=0 // loop_exit
    _

// kernel: vgg_block.4
$region0: #{vgg_block.4}
  #allocation0 [shape = 'u32[]', space=smem, size = 0x4, offset = 0x4, fixed_abs, tag = 'smem constant byte address 0x4 - core index']
  #allocation1 [shape = 'u32[144,128]{1,0:T(1,128)}', space=vmem, size = 0x12000, scoped, tag = 'internal scratch']
  %s0 = inlined_call_operand.vmem [shape: bf16[2,16,18,8], index: 0, kind: input, shape index: {}, may-alias: {0,1,2}]
  %s1 = inlined_call_operand.vmem [shape: bf16[2,16,18,8], index: 1, kind: input, shape index: {}, may-alias: {0,1,2}]
  %s2 = inlined_call_operand.vmem [shape: bf16[2,16,18,8], index: 2, kind: input, shape index: {}, may-alias: {0,1,2}]
  %s3 = inlined_call_operand.vmem [shape: f32[1,18,8], index: 3, kind: input, shape index: {}]
  %s4 = inlined_call_operand.vmem [shape: f32[1,18,8], index: 4, kind: input, shape index: {}]
  %s5 = inlined_call_operand.vmem [shape: bf16[3,24,4], index: 5, kind: input, shape index: {}]
  %s6 = inlined_call_operand.vmem [shape: bf16[2,16,64], index: 6, kind: output, shape index: {0}]
  %s7 = inlined_call_operand.vmem [shape: f32[2,2,2,4], index: 7, kind: output, shape index: {1}]
  %8 = xla_tuple %s6, %s7
  %s9 = sld [smem:[#allocation0]]
  $region65: #{vgg_block.4} parent=0
    _
  %s11 = ssub.s32 1, %s9
  %s12 = scalar_select 0, %s11, %s9
  loop: start=0, step=1, limit=6
  $region2: #{vgg_block.4} parent=0 // loop_pre_header
    _
  $region3: #{vgg_block.4} parent=0 // loop_header
    %s14 = sphi 0, %s18
    %p15 = scmp.ge.s32.totalorder %s14, 6
    %s21 = sphi 0, %s33
    %s22 = sphi 0, %s29
    %s23 = sphi 0, %s21
    %s24 = sphi 0, %s22
    %s25 = sphi 0, %s23
    %s26 = sphi 0, %s24
    %s46 = sphi 0, %s48
    %s49 = sphi 0, %s46
    %s50 = sphi 0, %s49
    %s66 = sphi 0, %s50
    %s74 = sphi 0, %s76
    %s77 = sphi 0, %s74
    %s78 = sphi 0, %s77
    %s94 = sphi 0, %s78
    %s110 = sphi 0, %s112
    %s113 = sphi 0, %s110
    %s114 = sphi 0, %s113
    %s130 = sphi 0, %s114
    %s134 = sphi 0, %s134
    %s136 = sphi 0, %s134
    %s137 = sphi 0, %s136
    %s151 = sphi 0, %s137
    %s155 = sphi 0, %s155
    %s157 = sphi 0, %s155
    %s158 = sphi 0, %s157
    %s172 = sphi 0, %s158
    %s176 = sphi 0, %s176
    %s178 = sphi 0, %s176
    %s179 = sphi 0, %s178
    %s193 = sphi 0, %s179
    %s201 = sphi 0, %s203
    %s204 = sphi 0, %s201
    %s205 = sphi 0, %s204
    %s221 = sphi 0, %s205
    %s229 = sphi 0, %s231
    %s232 = sphi 0, %s229
    %s233 = sphi 0, %s232
    %s249 = sphi 0, %s233
  $region4: #{vgg_block.4} parent=0 // loop_header_branch
    %17 = sbr.rel (%p15) target = $region8
  $region5: #{vgg_block.4} parent=0 // loop_body
    %s19 = ssub.s32 %s14, 1
    %s20 = ssub.s32 %s14, 2
    %s27 = sadd.s32 1, %s22
    %p28 = scmp.ge.s32.totalorder %s27, 2
    %s29 = scalar_select %p28, 0, %s27
    %s30 = sadd.s32 1, %s21
    %s31 = scalar_select %p28, %s30, %s21
    %p32 = scmp.ge.s32.totalorder %s31, 2
    %s33 = scalar_select %p32, 0, %s31
    %s34 = smul.u32 %s22, 8
    %s35 = ssub.s32 %s34, 1
    %p36 = scmp.gt.s32.totalorder %s35, 0
    %s37 = scalar_select %p36, %s35, 0
    %s38 = smul.u32 %s29, 8
    %s39 = ssub.s32 %s38, 1
    %p40 = scmp.gt.s32.totalorder %s39, 0
    %s41 = scalar_select %p40, %s39, 0
    %s42 = ssub.s32 %s21, %s33
    %s43 = ssub.s32 %s37, %s41
    %s44 = sor.u32 %s42, %s43
    %p45 = scmp.eq.s32.totalorder %s44, 0
    %s47 = sadd.s32 %s46, 1
    %s48 = scalar_select %p45, %s46, %s47
    %p51 = pneg %p45
    %p52 = scmp.eq.s32.totalorder %s14, 3
    %p53 = por %p51, %p52
    %p54 = scmp.ne.s32.totalorder %s46, %s49
    %p55 = scmp.eq.s32.totalorder %s14, 0
    %p56 = por %p54, %p55
    %p57 = scmp.ne.s32.totalorder %s46, %s49
    %p58 = scmp.eq.s32.totalorder %s19, 3
    %p59 = por %p57, %p58
    %p60 = scmp.ne.s32.totalorder %s49, %s50
    %p61 = scmp.eq.s32.totalorder %s19, 0
    %p62 = por %p60, %p61
    %p63 = scmp.ne.s32.totalorder %s49, %s50
    %p64 = scmp.eq.s32.totalorder %s20, 3
    %p65 = por %p63, %p64
    %p67 = scmp.ne.s32.totalorder %s50, %s66
    %p68 = scmp.eq.s32.totalorder %s20, 0
    %p69 = por %p67, %p68
    %s70 = ssub.s32 %s21, %s33
    %s71 = ssub.s32 %s22, %s29
    %s72 = sor.u32 %s70, %s71
    %p73 = scmp.eq.s32.totalorder %s72, 0
    %s75 = sadd.s32 %s74, 1
    %s76 = scalar_select %p73, %s74, %s75
    %p79 = pneg %p73
    %p80 = scmp.eq.s32.totalorder %s14, 3
    %p81 = por %p79, %p80
    %p82 = scmp.ne.s32.totalorder %s74, %s77
    %p83 = scmp.eq.s32.totalorder %s14, 0
    %p84 = por %p82, %p83
    %p85 = scmp.ne.s32.totalorder %s74, %s77
    %p86 = scmp.eq.s32.totalorder %s19, 3
    %p87 = por %p85, %p86
    %p88 = scmp.ne.s32.totalorder %s77, %s78
    %p89 = scmp.eq.s32.totalorder %s19, 0
    %p90 = por %p88, %p89
    %p91 = scmp.ne.s32.totalorder %s77, %s78
    %p92 = scmp.eq.s32.totalorder %s20, 3
    %p93 = por %p91, %p92
    %p95 = scmp.ne.s32.totalorder %s78, %s94
    %p96 = scmp.eq.s32.totalorder %s20, 0
    %p97 = por %p95, %p96
    %s98 = smul.u32 %s22, 8
    %s99 = sadd.s32 %s98, 8
    %p100 = scmp.lt.s32.totalorder %s99, 15
    %s101 = scalar_select %p100, %s99, 15
    %s102 = smul.u32 %s29, 8
    %s103 = sadd.s32 %s102, 8
    %p104 = scmp.lt.s32.totalorder %s103, 15
    %s105 = scalar_select %p104, %s103, 15
    %s106 = ssub.s32 %s21, %s33
    %s107 = ssub.s32 %s101, %s105
    %s108 = sor.u32 %s106, %s107
    %p109 = scmp.eq.s32.totalorder %s108, 0
    %s111 = sadd.s32 %s110, 1
    %s112 = scalar_select %p109, %s110, %s111
    %p115 = pneg %p109
    %p116 = scmp.eq.s32.totalorder %s14, 3
    %p117 = por %p115, %p116
    %p118 = scmp.ne.s32.totalorder %s110, %s113
    %p119 = scmp.eq.s32.totalorder %s14, 0
    %p120 = por %p118, %p119
    %p121 = scmp.ne.s32.totalorder %s110, %s113
    %p122 = scmp.eq.s32.totalorder %s19, 3
    %p123 = por %p121, %p122
    %p124 = scmp.ne.s32.totalorder %s113, %s114
    %p125 = scmp.eq.s32.totalorder %s19, 0
    %p126 = por %p124, %p125
    %p127 = scmp.ne.s32.totalorder %s113, %s114
    %p128 = scmp.eq.s32.totalorder %s20, 3
    %p129 = por %p127, %p128
    %p131 = scmp.ne.s32.totalorder %s114, %s130
    %p132 = scmp.eq.s32.totalorder %s20, 0
    %p133 = por %p131, %p132
    %s135 = sadd.s32 %s134, 1
    %p138 = scmp.eq.s32.totalorder %s14, 3
    %p139 = scmp.ne.s32.totalorder %s134, %s136
    %p140 = scmp.eq.s32.totalorder %s14, 0
    %p141 = por %p139, %p140
    %p142 = scmp.ne.s32.totalorder %s134, %s136
    %p143 = scmp.eq.s32.totalorder %s19, 3
    %p144 = por %p142, %p143
    %p145 = scmp.ne.s32.totalorder %s136, %s137
    %p146 = scmp.eq.s32.totalorder %s19, 0
    %p147 = por %p145, %p146
    %p148 = scmp.ne.s32.totalorder %s136, %s137
    %p149 = scmp.eq.s32.totalorder %s20, 3
    %p150 = por %p148, %p149
    %p152 = scmp.ne.s32.totalorder %s137, %s151
    %p153 = scmp.eq.s32.totalorder %s20, 0
    %p154 = por %p152, %p153
    %s156 = sadd.s32 %s155, 1
    %p159 = scmp.eq.s32.totalorder %s14, 3
    %p160 = scmp.ne.s32.totalorder %s155, %s157
    %p161 = scmp.eq.s32.totalorder %s14, 0
    %p162 = por %p160, %p161
    %p163 = scmp.ne.s32.totalorder %s155, %s157
    %p164 = scmp.eq.s32.totalorder %s19, 3
    %p165 = por %p163, %p164
    %p166 = scmp.ne.s32.totalorder %s157, %s158
    %p167 = scmp.eq.s32.totalorder %s19, 0
    %p168 = por %p166, %p167
    %p169 = scmp.ne.s32.totalorder %s157, %s158
    %p170 = scmp.eq.s32.totalorder %s20, 3
    %p171 = por %p169, %p170
    %p173 = scmp.ne.s32.totalorder %s158, %s172
    %p174 = scmp.eq.s32.totalorder %s20, 0
    %p175 = por %p173, %p174
    %s177 = sadd.s32 %s176, 1
    %p180 = scmp.eq.s32.totalorder %s14, 3
    %p181 = scmp.ne.s32.totalorder %s176, %s178
    %p182 = scmp.eq.s32.totalorder %s14, 0
    %p183 = por %p181, %p182
    %p184 = scmp.ne.s32.totalorder %s176, %s178
    %p185 = scmp.eq.s32.totalorder %s19, 3
    %p186 = por %p184, %p185
    %p187 = scmp.ne.s32.totalorder %s178, %s179
    %p188 = scmp.eq.s32.totalorder %s19, 0
    %p189 = por %p187, %p188
    %p190 = scmp.ne.s32.totalorder %s178, %s179
    %p191 = scmp.eq.s32.totalorder %s20, 3
    %p192 = por %p190, %p191
    %p194 = scmp.ne.s32.totalorder %s179, %s193
    %p195 = scmp.eq.s32.totalorder %s20, 0
    %p196 = por %p194, %p195
    %s197 = ssub.s32 %s21, %s33
    %s198 = ssub.s32 %s22, %s29
    %s199 = sor.u32 %s197, %s198
    %p200 = scmp.eq.s32.totalorder %s199, 0
    %s202 = sadd.s32 %s201, 1
    %s203 = scalar_select %p200, %s201, %s202
    %p206 = pneg %p200
    %p207 = scmp.eq.s32.totalorder %s14, 3
    %p208 = por %p206, %p207
    %p209 = scmp.ne.s32.totalorder %s201, %s204
    %p210 = scmp.eq.s32.totalorder %s14, 0
    %p211 = por %p209, %p210
    %p212 = scmp.ne.s32.totalorder %s201, %s204
    %p213 = scmp.eq.s32.totalorder %s19, 3
    %p214 = por %p212, %p213
    %p215 = scmp.ne.s32.totalorder %s204, %s205
    %p216 = scmp.eq.s32.totalorder %s19, 0
    %p217 = por %p215, %p216
    %p218 = scmp.ne.s32.totalorder %s204, %s205
    %p219 = scmp.eq.s32.totalorder %s20, 3
    %p220 = por %p218, %p219
    %p222 = scmp.ne.s32.totalorder %s205, %s221
    %p223 = scmp.eq.s32.totalorder %s20, 0
    %p224 = por %p222, %p223
    %s225 = ssub.s32 %s21, %s33
    %s226 = ssub.s32 %s22, %s29
    %s227 = sor.u32 %s225, %s226
    %p228 = scmp.eq.s32.totalorder %s227, 0
    %s230 = sadd.s32 %s229, 1
    %s231 = scalar_select %p228, %s229, %s230
    %p234 = pneg %p228
    %p235 = scmp.eq.s32.totalorder %s14, 3
    %p236 = por %p234, %p235
    %p237 = scmp.ne.s32.totalorder %s229, %s232
    %p238 = scmp.eq.s32.totalorder %s14, 0
    %p239 = por %p237, %p238
    %p240 = scmp.ne.s32.totalorder %s229, %s232
    %p241 = scmp.eq.s32.totalorder %s19, 3
    %p242 = por %p240, %p241
    %p243 = scmp.ne.s32.totalorder %s232, %s233
    %p244 = scmp.eq.s32.totalorder %s19, 0
    %p245 = por %p243, %p244
    %p246 = scmp.ne.s32.totalorder %s232, %s233
    %p247 = scmp.eq.s32.totalorder %s20, 3
    %p248 = por %p246, %p247
    %p250 = scmp.ne.s32.totalorder %s233, %s249
    %p251 = scmp.eq.s32.totalorder %s20, 0
    %p252 = por %p250, %p251
    %p253 = scmp.le.s32.totalorder 1, %s14
    %p254 = scmp.lt.s32.totalorder %s14, 5
    %p255 = pnand %p253, %p254
    %p256 = pneg %p255
    // Predicated region
    $region9: #{vgg_block.4} parent=5 // pred_check
      _
    $region10: #{vgg_block.4} parent=5 // pred_check_branch
      %258 = sbr.rel (%p255) target = $region12
    $region11: #{vgg_block.4} parent=5 // pred_region
      %s259 = ssub.s32 %s14, 1
      // Predicated region
      $region13: #{vgg_block.4} parent=11 // pred_check
        %p260 = pneg %p147
      $region14: #{vgg_block.4} parent=11 // pred_check_branch
        %262 = sbr.rel (%p260) target = $region16
      $region15: #{vgg_block.4} parent=11 // pred_region
        _
      $region16: #{vgg_block.4} parent=11 // pred_fallthru
        _
      // Predicated region
      $region17: #{vgg_block.4} parent=11 // pred_check
        %p263 = pneg %p168
      $region18: #{vgg_block.4} parent=11 // pred_check_branch
        %265 = sbr.rel (%p263) target = $region20
      $region19: #{vgg_block.4} parent=11 // pred_region
        _
      $region20: #{vgg_block.4} parent=11 // pred_fallthru
        _
      // Predicated region
      $region21: #{vgg_block.4} parent=11 // pred_check
        %p266 = pneg %p189
      $region22: #{vgg_block.4} parent=11 // pred_check_branch
        %268 = sbr.rel (%p266) target = $region24
      $region23: #{vgg_block.4} parent=11 // pred_region
        _
      $region24: #{vgg_block.4} parent=11 // pred_fallthru
        _
    $region12: #{vgg_block.4} parent=5 // pred_fallthru
      _
    %p269 = scmp.lt.s32.totalorder %s14, 4
    // Predicated region
    $region25: #{vgg_block.4} parent=5 // pred_check
      %p270 = pneg %p269
    $region26: #{vgg_block.4} parent=5 // pred_check_branch
      %272 = sbr.rel (%p270) target = $region28
    $region27: #{vgg_block.4} parent=5 // pred_region
      // Predicated region
      $region29: #{vgg_block.4} parent=27 // pred_check
        %p273 = pneg %p56
      $region30: #{vgg_block.4} parent=27 // pred_check_branch
        %275 = sbr.rel (%p273) target = $region32
      $region31: #{vgg_block.4} parent=27 // pred_region
        %s276 = smul.u32 %s22, 8
        %s277 = ssub.s32 %s276, 1
        %p278 = scmp.gt.s32.totalorder %s277, 0
        %s279 = scalar_select %p278, %s277, 0
        %p280 = scmp.lt.s32.totalorder %s21, 1
        %s281 = scalar_select %p280, %s21, 1
        %p282 = scmp.lt.s32.totalorder %s279, 15
        %s283 = scalar_select %p282, %s279, 15
        %s284 = smul.addr %s283, 3
        %s285 = smul.addr %s281, 48
        %s286 = sadd.s32 %s284, %s285
        %s287 = smul.addr %s286, 4
        %s288 = scalar_lea.vmem %s0, %s287
        %s289 = smul.u32 %s22, 8
        %s290 = ssub.s32 %s289, 1
        %p291 = scmp.gt.s32.totalorder %s290, 0
        %s292 = scalar_select %p291, %s290, 0
      $region32: #{vgg_block.4} parent=27 // pred_fallthru
        _
      // Predicated region
      $region33: #{vgg_block.4} parent=27 // pred_check
        %p293 = pneg %p84
      $region34: #{vgg_block.4} parent=27 // pred_check_branch
        %295 = sbr.rel (%p293) target = $region36
      $region35: #{vgg_block.4} parent=27 // pred_region
        %s296 = smul.u32 8, %s22
        %p297 = scmp.lt.s32.totalorder %s21, 1
        %s298 = scalar_select %p297, %s21, 1
        %p299 = scmp.lt.s32.totalorder %s296, 15
        %s300 = scalar_select %p299, %s296, 15
        %s301 = smul.addr %s300, 3
        %s302 = smul.addr %s298, 48
        %s303 = sadd.s32 %s301, %s302
        %s304 = smul.addr %s303, 4
        %s305 = scalar_lea.vmem %s1, %s304
        %s306 = smul.u32 8, %s22
      $region36: #{vgg_block.4} parent=27 // pred_fallthru
        _
      // Predicated region
      $region37: #{vgg_block.4} parent=27 // pred_check
        %p307 = pneg %p120
      $region38: #{vgg_block.4} parent=27 // pred_check_branch
        %309 = sbr.rel (%p307) target = $region40
      $region39: #{vgg_block.4} parent=27 // pred_region
        %s310 = smul.u32 %s22, 8
        %s311 = sadd.s32 %s310, 8
        %p312 = scmp.lt.s32.totalorder %s311, 15
        %s313 = scalar_select %p312, %s311, 15
        %p314 = scmp.lt.s32.totalorder %s21, 1
        %s315 = scalar_select %p314, %s21, 1
        %p316 = scmp.lt.s32.totalorder %s313, 15
        %s317 = scalar_select %p316, %s313, 15
        %s318 = smul.addr %s317, 3
        %s319 = smul.addr %s315, 48
        %s320 = sadd.s32 %s318, %s319
        %s321 = smul.addr %s320, 4
        %s322 = scalar_lea.vmem %s2, %s321
        %s323 = smul.u32 %s22, 8
        %s324 = sadd.s32 %s323, 8
        %p325 = scmp.lt.s32.totalorder %s324, 15
        %s326 = scalar_select %p325, %s324, 15
      $region40: #{vgg_block.4} parent=27 // pred_fallthru
        _
    $region28: #{vgg_block.4} parent=5 // pred_fallthru
      _
    %p327 = scmp.le.s32.totalorder 1, %s14
    %p328 = scmp.lt.s32.totalorder %s14, 5
    %p329 = pnand %p327, %p328
    %p330 = pneg %p329
    // Predicated region
    $region41: #{vgg_block.4} parent=5 // pred_check
      _
    $region42: #{vgg_block.4} parent=5 // pred_check_branch
      %332 = sbr.rel (%p329) target = $region44
    $region43: #{vgg_block.4} parent=5 // pred_region
      %s333 = ssub.s32 %s14, 1
      %s334 = smul.u32 %s24, 8
      %s335 = ssub.s32 %s334, 1
      %p336 = scmp.gt.s32.totalorder %s335, 0
      %s337 = scalar_select %p336, %s335, 0
      %p338 = scmp.lt.s32.totalorder %s23, 1
      %s339 = scalar_select %p338, %s23, 1
      %p340 = scmp.lt.s32.totalorder %s337, 15
      %s341 = scalar_select %p340, %s337, 15
      %s342 = smul.addr %s341, 3
      %s343 = smul.addr %s339, 48
      %s344 = sadd.s32 %s342, %s343
      %s345 = smul.addr %s344, 4
      %s346 = scalar_lea.vmem %s0, %s345
      %p347 = pneg %p62
      %p348 = pneg %p59
      %s349 = smul.u32 8, %s24
      %p350 = scmp.lt.s32.totalorder %s23, 1
      %s351 = scalar_select %p350, %s23, 1
      %p352 = scmp.lt.s32.totalorder %s349, 15
      %s353 = scalar_select %p352, %s349, 15
      %s354 = smul.addr %s353, 3
      %s355 = smul.addr %s351, 48
      %s356 = sadd.s32 %s354, %s355
      %s357 = smul.addr %s356, 4
      %s358 = scalar_lea.vmem %s1, %s357
      %p359 = pneg %p90
      %p360 = pneg %p87
      %s361 = smul.u32 %s24, 8
      %s362 = sadd.s32 %s361, 8
      %p363 = scmp.lt.s32.totalorder %s362, 15
      %s364 = scalar_select %p363, %s362, 15
      %p365 = scmp.lt.s32.totalorder %s23, 1
      %s366 = scalar_select %p365, %s23, 1
      %p367 = scmp.lt.s32.totalorder %s364, 15
      %s368 = scalar_select %p367, %s364, 15
      %s369 = smul.addr %s368, 3
      %s370 = smul.addr %s366, 48
      %s371 = sadd.s32 %s369, %s370
      %s372 = smul.addr %s371, 4
      %s373 = scalar_lea.vmem %s2, %s372
      %p374 = pneg %p126
      %p375 = pneg %p123
      %p376 = pneg %p147
      %p377 = pneg %p144
      %p378 = pneg %p168
      %p379 = pneg %p165
      %p380 = pneg %p189
      %p381 = pneg %p186
      %p382 = pneg %p217
      %p383 = pneg %p214
      %p384 = scmp.lt.s32.totalorder %s23, 1
      %s385 = scalar_select %p384, %s23, 1
      %p386 = scmp.lt.s32.totalorder %s24, 1
      %s387 = scalar_select %p386, %s24, 1
      %s388 = smul.addr %s385, 2
      %s389 = sadd.s32 %s387, %s388
      %s390 = smul.addr %s389, 4
      %s391 = scalar_lea.vmem %s6, %s390
      %p392 = pneg %p245
      %p393 = pneg %p242
      %p394 = scmp.lt.s32.totalorder %s23, 1
      %s395 = scalar_select %p394, %s23, 1
      %p396 = scmp.lt.s32.totalorder %s24, 1
      %s397 = scalar_select %p396, %s24, 1
      %s398 = smul.addr %s395, 2
      %s399 = sadd.s32 %s397, %s398
      %s400 = smul.addr %s399, 2
      %s401 = scalar_lea.vmem %s7, %s400
      %s402 = smul.u32 %s24, 8
      %s403 = ssub.s32 %s402, 1
      %p404 = scmp.gt.s32.totalorder %s403, 0
      %s405 = scalar_select %p404, %s403, 0
      %p406 = scmp.lt.s32.totalorder %s23, 1
      %s407 = scalar_select %p406, %s23, 1
      %p408 = scmp.lt.s32.totalorder %s405, 15
      %s409 = scalar_select %p408, %s405, 15
      %s410 = smul.addr %s409, 3
      %s411 = smul.addr %s407, 48
      %s412 = sadd.s32 %s410, %s411
      %s413 = smul.addr %s412, 4
      %s414 = scalar_lea.vmem %s0, %s413
      %s415 = smul.u32 %s24, 8
      %s416 = ssub.s32 %s415, 1
      %p417 = scmp.gt.s32.totalorder %s416, 0
      %s418 = scalar_select %p417, %s416, 0
      %s419 = smul.u32 8, %s24
      %p420 = scmp.lt.s32.totalorder %s23, 1
      %s421 = scalar_select %p420, %s23, 1
      %p422 = scmp.lt.s32.totalorder %s419, 15
      %s423 = scalar_select %p422, %s419, 15
      %s424 = smul.addr %s423, 3
      %s425 = smul.addr %s421, 48
      %s426 = sadd.s32 %s424, %s425
      %s427 = smul.addr %s426, 4
      %s428 = scalar_lea.vmem %s1, %s427
      %s429 = smul.u32 8, %s24
      %s430 = smul.u32 %s24, 8
      %s431 = sadd.s32 %s430, 8
      %p432 = scmp.lt.s32.totalorder %s431, 15
      %s433 = scalar_select %p432, %s431, 15
      %p434 = scmp.lt.s32.totalorder %s23, 1
      %s435 = scalar_select %p434, %s23, 1
      %p436 = scmp.lt.s32.totalorder %s433, 15
      %s437 = scalar_select %p436, %s433, 15
      %s438 = smul.addr %s437, 3
      %s439 = smul.addr %s435, 48
      %s440 = sadd.s32 %s438, %s439
      %s441 = smul.addr %s440, 4
      %s442 = scalar_lea.vmem %s2, %s441
      %s443 = smul.u32 %s24, 8
      %s444 = sadd.s32 %s443, 8
      %p445 = scmp.lt.s32.totalorder %s444, 15
      %s446 = scalar_select %p445, %s444, 15
      %p447 = scmp.lt.s32.totalorder %s23, 1
      %s448 = scalar_select %p447, %s23, 1
      %p449 = scmp.lt.s32.totalorder %s24, 1
      %s450 = scalar_select %p449, %s24, 1
      %s451 = smul.addr %s448, 2
      %s452 = sadd.s32 %s450, %s451
      %s453 = smul.addr %s452, 4
      %s454 = scalar_lea.vmem %s6, %s453
      %p455 = scmp.lt.s32.totalorder %s23, 1
      %s456 = scalar_select %p455, %s23, 1
      %p457 = scmp.lt.s32.totalorder %s24, 1
      %s458 = scalar_select %p457, %s24, 1
      %s459 = smul.addr %s456, 2
      %s460 = sadd.s32 %s458, %s459
      %s461 = smul.addr %s460, 2
      %s462 = scalar_lea.vmem %s7, %s461
      %v464 = vld [vmem:[%s414] sm:$0xf]
      %v465 = vld [vmem:[%s414 + $0x4] sm:$0xf]
      %v466 = vld [vmem:[%s414 + $0x8] sm:$0x1]
      %v467 = vld [vmem:[%s428] sm:$0xf]
      %v468 = vld [vmem:[%s428 + $0x4] sm:$0xf]
      %v469 = vld [vmem:[%s428 + $0x8] sm:$0x1]
      %v470 = vld [vmem:[%s428 + $0xc] sm:$0xf]
      %v471 = vld [vmem:[%s428 + $0x10] sm:$0xf]
      %v472 = vld [vmem:[%s428 + $0x14] sm:$0x1]
      %v473 = vld [vmem:[%s428 + $0x18] sm:$0xf]
      %v474 = vld [vmem:[%s428 + $0x1c] sm:$0xf]
      %v475 = vld [vmem:[%s428 + $0x20] sm:$0x1]
      %v476 = vld [vmem:[%s428 + $0x24] sm:$0xf]
      %v477 = vld [vmem:[%s428 + $0x28] sm:$0xf]
      %v478 = vld [vmem:[%s428 + $0x2c] sm:$0x1]
      %v479 = vld [vmem:[%s428 + $0x30] sm:$0xf]
      %v480 = vld [vmem:[%s428 + $0x34] sm:$0xf]
      %v481 = vld [vmem:[%s428 + $0x38] sm:$0x1]
      %v482 = vld [vmem:[%s428 + $0x3c] sm:$0xf]
      %v483 = vld [vmem:[%s428 + $0x40] sm:$0xf]
      %v484 = vld [vmem:[%s428 + $0x44] sm:$0x1]
      %v485 = vld [vmem:[%s428 + $0x48] sm:$0xf]
      %v486 = vld [vmem:[%s428 + $0x4c] sm:$0xf]
      %v487 = vld [vmem:[%s428 + $0x50] sm:$0x1]
      %v488 = vld [vmem:[%s428 + $0x54] sm:$0xf]
      %v489 = vld [vmem:[%s428 + $0x58] sm:$0xf]
      %v490 = vld [vmem:[%s428 + $0x5c] sm:$0x1]
      %v491 = vld [vmem:[%s442] sm:$0xf]
      %v492 = vld [vmem:[%s442 + $0x4] sm:$0xf]
      %v493 = vld [vmem:[%s442 + $0x8] sm:$0x1]
      %v494 = vld [vmem:[%s3] sm:$0xff]
      %v495 = vld [vmem:[%s3 + $0x8] sm:$0xff]
      %v496 = vld [vmem:[%s3 + $0x10] sm:$0x3]
      %v497 = vld [vmem:[%s4] sm:$0xff]
      %v498 = vld [vmem:[%s4 + $0x8] sm:$0xff]
      %v499 = vld [vmem:[%s4 + $0x10] sm:$0x3]
      %v500 = vunpack.c.l.bf16 %v464
      %v501 = vunpack.c.l.bf16 %v465
      %v502 = vunpack.c.l.bf16 %v466
      %v503 = vmul.f32 %v500, %v494
      %v504 = vmul.f32 %v501, %v495
      %v505 = vmul.f32 %v502, %v496
      %v506 = vadd.f32 %v503, %v497
      %v507 = vadd.f32 %v504, %v498
      %v508 = vadd.f32 %v505, %v499
      %v509 = vmax.f32 %v506, 0.0
      %v510 = vmax.f32 %v507, 0.0
      %v511 = vmax.f32 %v508, 0.0
      %v512 = vunpack.c.l.bf16 %v467
      %v513 = vunpack.c.l.bf16 %v468
      %v514 = vunpack.c.l.bf16 %v469
      %v515 = vunpack.c.l.bf16 %v470
      %v516 = vunpack.c.l.bf16 %v471
      %v517 = vunpack.c.l.bf16 %v472
      %v518 = vunpack.c.l.bf16 %v473
      %v519 = vunpack.c.l.bf16 %v474
      %v520 = vunpack.c.l.bf16 %v475
      %v521 = vunpack.c.l.bf16 %v476
      %v522 = vunpack.c.l.bf16 %v477
      %v523 = vunpack.c.l.bf16 %v478
      %v524 = vunpack.c.l.bf16 %v479
      %v525 = vunpack.c.l.bf16 %v480
      %v526 = vunpack.c.l.bf16 %v481
      %v527 = vunpack.c.l.bf16 %v482
      %v528 = vunpack.c.l.bf16 %v483
      %v529 = vunpack.c.l.bf16 %v484
      %v530 = vunpack.c.l.bf16 %v485
      %v531 = vunpack.c.l.bf16 %v486
      %v532 = vunpack.c.l.bf16 %v487
      %v533 = vunpack.c.l.bf16 %v488
      %v534 = vunpack.c.l.bf16 %v489
      %v535 = vunpack.c.l.bf16 %v490
      %v536 = vmul.f32 %v512, %v494
      %v537 = vmul.f32 %v513, %v495
      %v538 = vmul.f32 %v514, %v496
      %v539 = vmul.f32 %v515, %v494
      %v540 = vmul.f32 %v516, %v495
      %v541 = vmul.f32 %v517, %v496
      %v542 = vmul.f32 %v518, %v494
      %v543 = vmul.f32 %v519, %v495
      %v544 = vmul.f32 %v520, %v496
      %v545 = vmul.f32 %v521, %v494
      %v546 = vmul.f32 %v522, %v495
      %v547 = vmul.f32 %v523, %v496
      %v548 = vmul.f32 %v524, %v494
      %v549 = vmul.f32 %v525, %v495
      %v550 = vmul.f32 %v526, %v496
      %v551 = vmul.f32 %v527, %v494
      %v552 = vmul.f32 %v528, %v495
      %v553 = vmul.f32 %v529, %v496
      %v554 = vmul.f32 %v530, %v494
      %v555 = vmul.f32 %v531, %v495
      %v556 = vmul.f32 %v532, %v496
      %v557 = vmul.f32 %v533, %v494
      %v558 = vmul.f32 %v534, %v495
      %v559 = vmul.f32 %v535, %v496
      %v560 = vadd.f32 %v536, %v497
      %v561 = vadd.f32 %v537, %v498
      %v562 = vadd.f32 %v538, %v499
      %v563 = vadd.f32 %v539, %v497
      %v564 = vadd.f32 %v540, %v498
      %v565 = vadd.f32 %v541, %v499
      %v566 = vadd.f32 %v542, %v497
      %v567 = vadd.f32 %v543, %v498
      %v568 = vadd.f32 %v544, %v499
      %v569 = vadd.f32 %v545, %v497
      %v570 = vadd.f32 %v546, %v498
      %v571 = vadd.f32 %v547, %v499
      %v572 = vadd.f32 %v548, %v497
      %v573 = vadd.f32 %v549, %v498
      %v574 = vadd.f32 %v550, %v499
      %v575 = vadd.f32 %v551, %v497
      %v576 = vadd.f32 %v552, %v498
      %v577 = vadd.f32 %v553, %v499
      %v578 = vadd.f32 %v554, %v497
      %v579 = vadd.f32 %v555, %v498
      %v580 = vadd.f32 %v556, %v499
      %v581 = vadd.f32 %v557, %v497
      %v582 = vadd.f32 %v558, %v498
      %v583 = vadd.f32 %v559, %v499
      %v584 = vmax.f32 %v560, 0.0
      %v585 = vmax.f32 %v561, 0.0
      %v586 = vmax.f32 %v562, 0.0
      %v587 = vmax.f32 %v563, 0.0
      %v588 = vmax.f32 %v564, 0.0
      %v589 = vmax.f32 %v565, 0.0
      %v590 = vmax.f32 %v566, 0.0
      %v591 = vmax.f32 %v567, 0.0
      %v592 = vmax.f32 %v568, 0.0
      %v593 = vmax.f32 %v569, 0.0
      %v594 = vmax.f32 %v570, 0.0
      %v595 = vmax.f32 %v571, 0.0
      %v596 = vmax.f32 %v572, 0.0
      %v597 = vmax.f32 %v573, 0.0
      %v598 = vmax.f32 %v574, 0.0
      %v599 = vmax.f32 %v575, 0.0
      %v600 = vmax.f32 %v576, 0.0
      %v601 = vmax.f32 %v577, 0.0
      %v602 = vmax.f32 %v578, 0.0
      %v603 = vmax.f32 %v579, 0.0
      %v604 = vmax.f32 %v580, 0.0
      %v605 = vmax.f32 %v581, 0.0
      %v606 = vmax.f32 %v582, 0.0
      %v607 = vmax.f32 %v583, 0.0
      %v608 = vpack.c.bf16 %v585, %v584
      %v609 = vpack.c.bf16 %v586, %v586
      %v610 = vpack.c.bf16 %v588, %v587
      %v611 = vpack.c.bf16 %v589, %v589
      %v612 = vpack.c.bf16 %v591, %v590
      %v613 = vpack.c.bf16 %v592, %v592
      %v614 = vpack.c.bf16 %v594, %v593
      %v615 = vpack.c.bf16 %v595, %v595
      %v616 = vpack.c.bf16 %v597, %v596
      %v617 = vpack.c.bf16 %v598, %v598
      %v618 = vpack.c.bf16 %v600, %v599
      %v619 = vpack.c.bf16 %v601, %v601
      %v620 = vpack.c.bf16 %v603, %v602
      %v621 = vpack.c.bf16 %v604, %v604
      %v622 = vpack.c.bf16 %v606, %v605
      %v623 = vpack.c.bf16 %v607, %v607
      %v624 = vunpack.c.l.bf16 %v491
      %v625 = vunpack.c.l.bf16 %v492
      %v626 = vunpack.c.l.bf16 %v493
      %v627 = vmul.f32 %v624, %v494
      %v628 = vmul.f32 %v625, %v495
      %v629 = vmul.f32 %v626, %v496
      %v630 = vadd.f32 %v627, %v497
      %v631 = vadd.f32 %v628, %v498
      %v632 = vadd.f32 %v629, %v499
      %v633 = vmax.f32 %v630, 0.0
      %v634 = vmax.f32 %v631, 0.0
      %v635 = vmax.f32 %v632, 0.0
      %p636 = scmp.gt.s32.totalorder %s24, 0
      %s637 = scalar_select %p636, 1, 0
      %s638 = scvt.s32.f32 %s637
      %v639 = vstv %s638
      %v640 = vmul.f32 %v509, %v639
      %v641 = vmul.f32 %v510, %v639
      %v642 = vmul.f32 %v511, %v639
      %v643 = vpack.c.bf16 %v641, %v640
      %v644 = vpack.c.bf16 %v642, %v642
      %p645 = scmp.lt.s32.totalorder %s24, 1
      %s646 = scalar_select %p645, 1, 0
      %s647 = scvt.s32.f32 %s646
      %v648 = vstv %s647
      %v649 = vmul.f32 %v633, %v648
      %v650 = vmul.f32 %v634, %v648
      %v651 = vmul.f32 %v635, %v648
      %v652 = vpack.c.bf16 %v650, %v649
      %v653 = vpack.c.bf16 %v651, %v651
      %670 = vrot.lane.b32.xlu0 %v608, 8
      %v671 = vpop.permute.xlu0 %670
      %672 = vrot.lane.b32.xlu0 %v609, 8
      %v673 = vpop.permute.xlu0 %672
      %674 = vrot.lane.b32.xlu0 %v610, 8
      %v675 = vpop.permute.xlu0 %674
      %676 = vrot.lane.b32.xlu0 %v611, 8
      %v677 = vpop.permute.xlu0 %676
      %678 = vrot.lane.b32.xlu0 %v612, 8
      %v679 = vpop.permute.xlu0 %678
      %680 = vrot.lane.b32.xlu0 %v613, 8
      %v681 = vpop.permute.xlu0 %680
      %682 = vrot.lane.b32.xlu0 %v614, 8
      %v683 = vpop.permute.xlu0 %682
      %684 = vrot.lane.b32.xlu0 %v615, 8
      %v685 = vpop.permute.xlu0 %684
      %686 = vrot.lane.b32.xlu0 %v616, 8
      %v687 = vpop.permute.xlu0 %686
      %688 = vrot.lane.b32.xlu0 %v617, 8
      %v689 = vpop.permute.xlu0 %688
      %690 = vrot.lane.b32.xlu0 %v618, 8
      %v691 = vpop.permute.xlu0 %690
      %692 = vrot.lane.b32.xlu0 %v619, 8
      %v693 = vpop.permute.xlu0 %692
      %694 = vrot.lane.b32.xlu0 %v620, 8
      %v695 = vpop.permute.xlu0 %694
      %696 = vrot.lane.b32.xlu0 %v621, 8
      %v697 = vpop.permute.xlu0 %696
      %698 = vrot.lane.b32.xlu0 %v622, 8
      %v699 = vpop.permute.xlu0 %698
      %700 = vrot.lane.b32.xlu0 %v623, 8
      %v701 = vpop.permute.xlu0 %700
      %704 = vrot.lane.b32.xlu0 %v610, 16
      %v705 = vpop.permute.xlu0 %704
      %706 = vrot.lane.b32.xlu0 %v611, 16
      %v707 = vpop.permute.xlu0 %706
      %708 = vrot.lane.b32.xlu0 %v612, 16
      %v709 = vpop.permute.xlu0 %708
      %710 = vrot.lane.b32.xlu0 %v613, 16
      %v711 = vpop.permute.xlu0 %710
      %712 = vrot.lane.b32.xlu0 %v614, 16
      %v713 = vpop.permute.xlu0 %712
      %714 = vrot.lane.b32.xlu0 %v615, 16
      %v715 = vpop.permute.xlu0 %714
      %716 = vrot.lane.b32.xlu0 %v616, 16
      %v717 = vpop.permute.xlu0 %716
      %718 = vrot.lane.b32.xlu0 %v617, 16
      %v719 = vpop.permute.xlu0 %718
      %720 = vrot.lane.b32.xlu0 %v618, 16
      %v721 = vpop.permute.xlu0 %720
      %722 = vrot.lane.b32.xlu0 %v619, 16
      %v723 = vpop.permute.xlu0 %722
      %724 = vrot.lane.b32.xlu0 %v620, 16
      %v725 = vpop.permute.xlu0 %724
      %726 = vrot.lane.b32.xlu0 %v621, 16
      %v727 = vpop.permute.xlu0 %726
      %728 = vrot.lane.b32.xlu0 %v622, 16
      %v729 = vpop.permute.xlu0 %728
      %730 = vrot.lane.b32.xlu0 %v623, 16
      %v731 = vpop.permute.xlu0 %730
      %732 = vrot.lane.b32.xlu0 %v652, 16
      %v733 = vpop.permute.xlu0 %732
      %734 = vrot.lane.b32.xlu0 %v653, 16
      %v735 = vpop.permute.xlu0 %734
      %vm736 = vcmask 64512
      %v739 = vsel %vm736, %v643, %v671
      %v742 = vsel %vm736, %v644, %v673
      %v745 = vsel %vm736, %v608, %v675
      %v748 = vsel %vm736, %v609, %v677
      %v751 = vsel %vm736, %v610, %v679
      %v754 = vsel %vm736, %v611, %v681
      %v757 = vsel %vm736, %v612, %v683
      %v760 = vsel %vm736, %v613, %v685
      %v763 = vsel %vm736, %v614, %v687
      %v766 = vsel %vm736, %v615, %v689
      %v769 = vsel %vm736, %v616, %v691
      %v772 = vsel %vm736, %v617, %v693
      %v775 = vsel %vm736, %v618, %v695
      %v778 = vsel %vm736, %v619, %v697
      %v781 = vsel %vm736, %v620, %v699
      %v784 = vsel %vm736, %v621, %v701
      %vm785 = vcmask 130048
      %v787 = vsel %vm785, %v739, %v705
      %v789 = vsel %vm785, %v742, %v707
      %v791 = vsel %vm785, %v745, %v709
      %v793 = vsel %vm785, %v748, %v711
      %v795 = vsel %vm785, %v751, %v713
      %v797 = vsel %vm785, %v754, %v715
      %v799 = vsel %vm785, %v757, %v717
      %v801 = vsel %vm785, %v760, %v719
      %v803 = vsel %vm785, %v763, %v721
      %v805 = vsel %vm785, %v766, %v723
      %v807 = vsel %vm785, %v769, %v725
      %v809 = vsel %vm785, %v772, %v727
      %v811 = vsel %vm785, %v775, %v729
      %v813 = vsel %vm785, %v778, %v731
      %v815 = vsel %vm785, %v781, %v733
      %v817 = vsel %vm785, %v784, %v735
      %v834 = vcombine.high %v787, %v787
      %v836 = vunpack.c.l.s4 1966171168
      %v837 = vunpack.c.0.s8 %v836
      %v838 = vlaneseq
      %v839 = vshrl.u32 %v838, 7
      %v840 = vsub.s32 %v837, %v839
      %v841 = vrot.slane %v787, %v840
      %v843 = vunpack.c.l.s4 1966171168
      %v844 = vunpack.c.0.s8 %v843
      %v845 = vlaneseq
      %v846 = vshrl.u32 %v845, 7
      %v847 = vsub.s32 %v844, %v846
      %v848 = vrot.slane %v834, %v847
      %v849 = vcombine.high %v841, %v841
      %v850 = vcombine.high %v848, %v848
      %v852 = vunpack.c.l.s4 1966171168
      %v853 = vunpack.c.0.s8 %v852
      %v854 = vlaneseq
      %v855 = vshrl.u32 %v854, 7
      %v856 = vsub.s32 %v853, %v855
      %v857 = vrot.slane %v841, %v856
      %v859 = vunpack.c.l.s4 1966171168
      %v860 = vunpack.c.0.s8 %v859
      %v861 = vlaneseq
      %v862 = vshrl.u32 %v861, 7
      %v863 = vsub.s32 %v860, %v862
      %v864 = vrot.slane %v848, %v863
      %v866 = vunpack.c.l.s4 1966171168
      %v867 = vunpack.c.0.s8 %v866
      %v868 = vlaneseq
      %v869 = vshrl.u32 %v868, 7
      %v870 = vsub.s32 %v867, %v869
      %v871 = vrot.slane %v849, %v870
      %v873 = vunpack.c.l.s4 1966171168
      %v874 = vunpack.c.0.s8 %v873
      %v875 = vlaneseq
      %v876 = vshrl.u32 %v875, 7
      %v877 = vsub.s32 %v874, %v876
      %v878 = vrot.slane %v850, %v877
      %v879 = vcombine.high %v857, %v857
      %v880 = vcombine.high %v864, %v864
      %v881 = vcombine.high %v871, %v871
      %v882 = vcombine.high %v878, %v878
      %v884 = vunpack.c.l.s4 1966171168
      %v885 = vunpack.c.0.s8 %v884
      %v886 = vlaneseq
      %v887 = vshrl.u32 %v886, 7
      %v888 = vsub.s32 %v885, %v887
      %v889 = vrot.slane %v789, %v888
      %v891 = vunpack.c.l.s4 1966171168
      %v892 = vunpack.c.0.s8 %v891
      %v893 = vlaneseq
      %v894 = vshrl.u32 %v893, 7
      %v895 = vsub.s32 %v892, %v894
      %v896 = vrot.slane %v889, %v895
      %v897 = vcombine.high %v791, %v791
      %v899 = vunpack.c.l.s4 1966171168
      %v900 = vunpack.c.0.s8 %v899
      %v901 = vlaneseq
      %v902 = vshrl.u32 %v901, 7
      %v903 = vsub.s32 %v900, %v902
      %v904 = vrot.slane %v791, %v903
      %v906 = vunpack.c.l.s4 1966171168
      %v907 = vunpack.c.0.s8 %v906
      %v908 = vlaneseq
      %v909 = vshrl.u32 %v908, 7
      %v910 = vsub.s32 %v907, %v909
      %v911 = vrot.slane %v897, %v910
      %v912 = vcombine.high %v904, %v904
      %v913 = vcombine.high %v911, %v911
      %v915 = vunpack.c.l.s4 1966171168
      %v916 = vunpack.c.0.s8 %v915
      %v917 = vlaneseq
      %v918 = vshrl.u32 %v917, 7
      %v919 = vsub.s32 %v916, %v918
      %v920 = vrot.slane %v904, %v919
      %v922 = vunpack.c.l.s4 1966171168
      %v923 = vunpack.c.0.s8 %v922
      %v924 = vlaneseq
      %v925 = vshrl.u32 %v924, 7
      %v926 = vsub.s32 %v923, %v925
      %v927 = vrot.slane %v911, %v926
      %v929 = vunpack.c.l.s4 1966171168
      %v930 = vunpack.c.0.s8 %v929
      %v931 = vlaneseq
      %v932 = vshrl.u32 %v931, 7
      %v933 = vsub.s32 %v930, %v932
      %v934 = vrot.slane %v912, %v933
      %v936 = vunpack.c.l.s4 1966171168
      %v937 = vunpack.c.0.s8 %v936
      %v938 = vlaneseq
      %v939 = vshrl.u32 %v938, 7
      %v940 = vsub.s32 %v937, %v939
      %v941 = vrot.slane %v913, %v940
      %v942 = vcombine.high %v920, %v920
      %v943 = vcombine.high %v927, %v927
      %v944 = vcombine.high %v934, %v934
      %v945 = vcombine.high %v941, %v941
      %v947 = vunpack.c.l.s4 1966171168
      %v948 = vunpack.c.0.s8 %v947
      %v949 = vlaneseq
      %v950 = vshrl.u32 %v949, 7
      %v951 = vsub.s32 %v948, %v950
      %v952 = vrot.slane %v793, %v951
      %v954 = vunpack.c.l.s4 1966171168
      %v955 = vunpack.c.0.s8 %v954
      %v956 = vlaneseq
      %v957 = vshrl.u32 %v956, 7
      %v958 = vsub.s32 %v955, %v957
      %v959 = vrot.slane %v952, %v958
      %v960 = vcombine.high %v795, %v795
      %v962 = vunpack.c.l.s4 1966171168
      %v963 = vunpack.c.0.s8 %v962
      %v964 = vlaneseq
      %v965 = vshrl.u32 %v964, 7
      %v966 = vsub.s32 %v963, %v965
      %v967 = vrot.slane %v795, %v966
      %v969 = vunpack.c.l.s4 1966171168
      %v970 = vunpack.c.0.s8 %v969
      %v971 = vlaneseq
      %v972 = vshrl.u32 %v971, 7
      %v973 = vsub.s32 %v970, %v972
      %v974 = vrot.slane %v960, %v973
      %v975 = vcombine.high %v967, %v967
      %v976 = vcombine.high %v974, %v974
      %v978 = vunpack.c.l.s4 1966171168
      %v979 = vunpack.c.0.s8 %v978
      %v980 = vlaneseq
      %v981 = vshrl.u32 %v980, 7
      %v982 = vsub.s32 %v979, %v981
      %v983 = vrot.slane %v967, %v982
      %v985 = vunpack.c.l.s4 1966171168
      %v986 = vunpack.c.0.s8 %v985
      %v987 = vlaneseq
      %v988 = vshrl.u32 %v987, 7
      %v989 = vsub.s32 %v986, %v988
      %v990 = vrot.slane %v974, %v989
      %v992 = vunpack.c.l.s4 1966171168
      %v993 = vunpack.c.0.s8 %v992
      %v994 = vlaneseq
      %v995 = vshrl.u32 %v994, 7
      %v996 = vsub.s32 %v993, %v995
      %v997 = vrot.slane %v975, %v996
      %v999 = vunpack.c.l.s4 1966171168
      %v1000 = vunpack.c.0.s8 %v999
      %v1001 = vlaneseq
      %v1002 = vshrl.u32 %v1001, 7
      %v1003 = vsub.s32 %v1000, %v1002
      %v1004 = vrot.slane %v976, %v1003
      %v1005 = vcombine.high %v983, %v983
      %v1006 = vcombine.high %v990, %v990
      %v1007 = vcombine.high %v997, %v997
      %v1008 = vcombine.high %v1004, %v1004
      %v1010 = vunpack.c.l.s4 1966171168
      %v1011 = vunpack.c.0.s8 %v1010
      %v1012 = vlaneseq
      %v1013 = vshrl.u32 %v1012, 7
      %v1014 = vsub.s32 %v1011, %v1013
      %v1015 = vrot.slane %v797, %v1014
      %v1017 = vunpack.c.l.s4 1966171168
      %v1018 = vunpack.c.0.s8 %v1017
      %v1019 = vlaneseq
      %v1020 = vshrl.u32 %v1019, 7
      %v1021 = vsub.s32 %v1018, %v1020
      %v1022 = vrot.slane %v1015, %v1021
      %v1023 = vcombine.high %v799, %v799
      %v1025 = vunpack.c.l.s4 1966171168
      %v1026 = vunpack.c.0.s8 %v1025
      %v1027 = vlaneseq
      %v1028 = vshrl.u32 %v1027, 7
      %v1029 = vsub.s32 %v1026, %v1028
      %v1030 = vrot.slane %v799, %v1029
      %v1032 = vunpack.c.l.s4 1966171168
      %v1033 = vunpack.c.0.s8 %v1032
      %v1034 = vlaneseq
      %v1035 = vshrl.u32 %v1034, 7
      %v1036 = vsub.s32 %v1033, %v1035
      %v1037 = vrot.slane %v1023, %v1036
      %v1038 = vcombine.high %v1030, %v1030
      %v1039 = vcombine.high %v1037, %v1037
      %v1041 = vunpack.c.l.s4 1966171168
      %v1042 = vunpack.c.0.s8 %v1041
      %v1043 = vlaneseq
      %v1044 = vshrl.u32 %v1043, 7
      %v1045 = vsub.s32 %v1042, %v1044
      %v1046 = vrot.slane %v1030, %v1045
      %v1048 = vunpack.c.l.s4 1966171168
      %v1049 = vunpack.c.0.s8 %v1048
      %v1050 = vlaneseq
      %v1051 = vshrl.u32 %v1050, 7
      %v1052 = vsub.s32 %v1049, %v1051
      %v1053 = vrot.slane %v1037, %v1052
      %v1055 = vunpack.c.l.s4 1966171168
      %v1056 = vunpack.c.0.s8 %v1055
      %v1057 = vlaneseq
      %v1058 = vshrl.u32 %v1057, 7
      %v1059 = vsub.s32 %v1056, %v1058
      %v1060 = vrot.slane %v1038, %v1059
      %v1062 = vunpack.c.l.s4 1966171168
      %v1063 = vunpack.c.0.s8 %v1062
      %v1064 = vlaneseq
      %v1065 = vshrl.u32 %v1064, 7
      %v1066 = vsub.s32 %v1063, %v1065
      %v1067 = vrot.slane %v1039, %v1066
      %v1068 = vcombine.high %v1046, %v1046
      %v1069 = vcombine.high %v1053, %v1053
      %v1070 = vcombine.high %v1060, %v1060
      %v1071 = vcombine.high %v1067, %v1067
      %v1073 = vunpack.c.l.s4 1966171168
      %v1074 = vunpack.c.0.s8 %v1073
      %v1075 = vlaneseq
      %v1076 = vshrl.u32 %v1075, 7
      %v1077 = vsub.s32 %v1074, %v1076
      %v1078 = vrot.slane %v801, %v1077
      %v1080 = vunpack.c.l.s4 1966171168
      %v1081 = vunpack.c.0.s8 %v1080
      %v1082 = vlaneseq
      %v1083 = vshrl.u32 %v1082, 7
      %v1084 = vsub.s32 %v1081, %v1083
      %v1085 = vrot.slane %v1078, %v1084
      %v1086 = vcombine.high %v803, %v803
      %v1088 = vunpack.c.l.s4 1966171168
      %v1089 = vunpack.c.0.s8 %v1088
      %v1090 = vlaneseq
      %v1091 = vshrl.u32 %v1090, 7
      %v1092 = vsub.s32 %v1089, %v1091
      %v1093 = vrot.slane %v803, %v1092
      %v1095 = vunpack.c.l.s4 1966171168
      %v1096 = vunpack.c.0.s8 %v1095
      %v1097 = vlaneseq
      %v1098 = vshrl.u32 %v1097, 7
      %v1099 = vsub.s32 %v1096, %v1098
      %v1100 = vrot.slane %v1086, %v1099
      %v1101 = vcombine.high %v1093, %v1093
      %v1102 = vcombine.high %v1100, %v1100
      %v1104 = vunpack.c.l.s4 1966171168
      %v1105 = vunpack.c.0.s8 %v1104
      %v1106 = vlaneseq
      %v1107 = vshrl.u32 %v1106, 7
      %v1108 = vsub.s32 %v1105, %v1107
      %v1109 = vrot.slane %v1093, %v1108
      %v1111 = vunpack.c.l.s4 1966171168
      %v1112 = vunpack.c.0.s8 %v1111
      %v1113 = vlaneseq
      %v1114 = vshrl.u32 %v1113, 7
      %v1115 = vsub.s32 %v1112, %v1114
      %v1116 = vrot.slane %v1100, %v1115
      %v1118 = vunpack.c.l.s4 1966171168
      %v1119 = vunpack.c.0.s8 %v1118
      %v1120 = vlaneseq
      %v1121 = vshrl.u32 %v1120, 7
      %v1122 = vsub.s32 %v1119, %v1121
      %v1123 = vrot.slane %v1101, %v1122
      %v1125 = vunpack.c.l.s4 1966171168
      %v1126 = vunpack.c.0.s8 %v1125
      %v1127 = vlaneseq
      %v1128 = vshrl.u32 %v1127, 7
      %v1129 = vsub.s32 %v1126, %v1128
      %v1130 = vrot.slane %v1102, %v1129
      %v1131 = vcombine.high %v1109, %v1109
      %v1132 = vcombine.high %v1116, %v1116
      %v1133 = vcombine.high %v1123, %v1123
      %v1134 = vcombine.high %v1130, %v1130
      %v1136 = vunpack.c.l.s4 1966171168
      %v1137 = vunpack.c.0.s8 %v1136
      %v1138 = vlaneseq
      %v1139 = vshrl.u32 %v1138, 7
      %v1140 = vsub.s32 %v1137, %v1139
      %v1141 = vrot.slane %v805, %v1140
      %v1143 = vunpack.c.l.s4 1966171168
      %v1144 = vunpack.c.0.s8 %v1143
      %v1145 = vlaneseq
      %v1146 = vshrl.u32 %v1145, 7
      %v1147 = vsub.s32 %v1144, %v1146
      %v1148 = vrot.slane %v1141, %v1147
      %v1149 = vcombine.high %v807, %v807
      %v1151 = vunpack.c.l.s4 1966171168
      %v1152 = vunpack.c.0.s8 %v1151
      %v1153 = vlaneseq
      %v1154 = vshrl.u32 %v1153, 7
      %v1155 = vsub.s32 %v1152, %v1154
      %v1156 = vrot.slane %v807, %v1155
      %v1158 = vunpack.c.l.s4 1966171168
      %v1159 = vunpack.c.0.s8 %v1158
      %v1160 = vlaneseq
      %v1161 = vshrl.u32 %v1160, 7
      %v1162 = vsub.s32 %v1159, %v1161
      %v1163 = vrot.slane %v1149, %v1162
      %v1164 = vcombine.high %v1156, %v1156
      %v1165 = vcombine.high %v1163, %v1163
      %v1167 = vunpack.c.l.s4 1966171168
      %v1168 = vunpack.c.0.s8 %v1167
      %v1169 = vlaneseq
      %v1170 = vshrl.u32 %v1169, 7
      %v1171 = vsub.s32 %v1168, %v1170
      %v1172 = vrot.slane %v1156, %v1171
      %v1174 = vunpack.c.l.s4 1966171168
      %v1175 = vunpack.c.0.s8 %v1174
      %v1176 = vlaneseq
      %v1177 = vshrl.u32 %v1176, 7
      %v1178 = vsub.s32 %v1175, %v1177
      %v1179 = vrot.slane %v1163, %v1178
      %v1181 = vunpack.c.l.s4 1966171168
      %v1182 = vunpack.c.0.s8 %v1181
      %v1183 = vlaneseq
      %v1184 = vshrl.u32 %v1183, 7
      %v1185 = vsub.s32 %v1182, %v1184
      %v1186 = vrot.slane %v1164, %v1185
      %v1188 = vunpack.c.l.s4 1966171168
      %v1189 = vunpack.c.0.s8 %v1188
      %v1190 = vlaneseq
      %v1191 = vshrl.u32 %v1190, 7
      %v1192 = vsub.s32 %v1189, %v1191
      %v1193 = vrot.slane %v1165, %v1192
      %v1194 = vcombine.high %v1172, %v1172
      %v1195 = vcombine.high %v1179, %v1179
      %v1196 = vcombine.high %v1186, %v1186
      %v1197 = vcombine.high %v1193, %v1193
      %v1199 = vunpack.c.l.s4 1966171168
      %v1200 = vunpack.c.0.s8 %v1199
      %v1201 = vlaneseq
      %v1202 = vshrl.u32 %v1201, 7
      %v1203 = vsub.s32 %v1200, %v1202
      %v1204 = vrot.slane %v809, %v1203
      %v1206 = vunpack.c.l.s4 1966171168
      %v1207 = vunpack.c.0.s8 %v1206
      %v1208 = vlaneseq
      %v1209 = vshrl.u32 %v1208, 7
      %v1210 = vsub.s32 %v1207, %v1209
      %v1211 = vrot.slane %v1204, %v1210
      %v1212 = vcombine.high %v811, %v811
      %v1214 = vunpack.c.l.s4 1966171168
      %v1215 = vunpack.c.0.s8 %v1214
      %v1216 = vlaneseq
      %v1217 = vshrl.u32 %v1216, 7
      %v1218 = vsub.s32 %v1215, %v1217
      %v1219 = vrot.slane %v811, %v1218
      %v1221 = vunpack.c.l.s4 1966171168
      %v1222 = vunpack.c.0.s8 %v1221
      %v1223 = vlaneseq
      %v1224 = vshrl.u32 %v1223, 7
      %v1225 = vsub.s32 %v1222, %v1224
      %v1226 = vrot.slane %v1212, %v1225
      %v1227 = vcombine.high %v1219, %v1219
      %v1228 = vcombine.high %v1226, %v1226
      %v1230 = vunpack.c.l.s4 1966171168
      %v1231 = vunpack.c.0.s8 %v1230
      %v1232 = vlaneseq
      %v1233 = vshrl.u32 %v1232, 7
      %v1234 = vsub.s32 %v1231, %v1233
      %v1235 = vrot.slane %v1219, %v1234
      %v1237 = vunpack.c.l.s4 1966171168
      %v1238 = vunpack.c.0.s8 %v1237
      %v1239 = vlaneseq
      %v1240 = vshrl.u32 %v1239, 7
      %v1241 = vsub.s32 %v1238, %v1240
      %v1242 = vrot.slane %v1226, %v1241
      %v1244 = vunpack.c.l.s4 1966171168
      %v1245 = vunpack.c.0.s8 %v1244
      %v1246 = vlaneseq
      %v1247 = vshrl.u32 %v1246, 7
      %v1248 = vsub.s32 %v1245, %v1247
      %v1249 = vrot.slane %v1227, %v1248
      %v1251 = vunpack.c.l.s4 1966171168
      %v1252 = vunpack.c.0.s8 %v1251
      %v1253 = vlaneseq
      %v1254 = vshrl.u32 %v1253, 7
      %v1255 = vsub.s32 %v1252, %v1254
      %v1256 = vrot.slane %v1228, %v1255
      %v1257 = vcombine.high %v1235, %v1235
      %v1258 = vcombine.high %v1242, %v1242
      %v1259 = vcombine.high %v1249, %v1249
      %v1260 = vcombine.high %v1256, %v1256
      %v1262 = vunpack.c.l.s4 1966171168
      %v1263 = vunpack.c.0.s8 %v1262
      %v1264 = vlaneseq
      %v1265 = vshrl.u32 %v1264, 7
      %v1266 = vsub.s32 %v1263, %v1265
      %v1267 = vrot.slane %v813, %v1266
      %v1269 = vunpack.c.l.s4 1966171168
      %v1270 = vunpack.c.0.s8 %v1269
      %v1271 = vlaneseq
      %v1272 = vshrl.u32 %v1271, 7
      %v1273 = vsub.s32 %v1270, %v1272
      %v1274 = vrot.slane %v1267, %v1273
      %v1275 = vcombine.high %v815, %v815
      %v1277 = vunpack.c.l.s4 1966171168
      %v1278 = vunpack.c.0.s8 %v1277
      %v1279 = vlaneseq
      %v1280 = vshrl.u32 %v1279, 7
      %v1281 = vsub.s32 %v1278, %v1280
      %v1282 = vrot.slane %v815, %v1281
      %v1284 = vunpack.c.l.s4 1966171168
      %v1285 = vunpack.c.0.s8 %v1284
      %v1286 = vlaneseq
      %v1287 = vshrl.u32 %v1286, 7
      %v1288 = vsub.s32 %v1285, %v1287
      %v1289 = vrot.slane %v1275, %v1288
      %v1290 = vcombine.high %v1282, %v1282
      %v1291 = vcombine.high %v1289, %v1289
      %v1293 = vunpack.c.l.s4 1966171168
      %v1294 = vunpack.c.0.s8 %v1293
      %v1295 = vlaneseq
      %v1296 = vshrl.u32 %v1295, 7
      %v1297 = vsub.s32 %v1294, %v1296
      %v1298 = vrot.slane %v1282, %v1297
      %v1300 = vunpack.c.l.s4 1966171168
      %v1301 = vunpack.c.0.s8 %v1300
      %v1302 = vlaneseq
      %v1303 = vshrl.u32 %v1302, 7
      %v1304 = vsub.s32 %v1301, %v1303
      %v1305 = vrot.slane %v1289, %v1304
      %v1307 = vunpack.c.l.s4 1966171168
      %v1308 = vunpack.c.0.s8 %v1307
      %v1309 = vlaneseq
      %v1310 = vshrl.u32 %v1309, 7
      %v1311 = vsub.s32 %v1308, %v1310
      %v1312 = vrot.slane %v1290, %v1311
      %v1314 = vunpack.c.l.s4 1966171168
      %v1315 = vunpack.c.0.s8 %v1314
      %v1316 = vlaneseq
      %v1317 = vshrl.u32 %v1316, 7
      %v1318 = vsub.s32 %v1315, %v1317
      %v1319 = vrot.slane %v1291, %v1318
      %v1320 = vcombine.high %v1298, %v1298
      %v1321 = vcombine.high %v1305, %v1305
      %v1322 = vcombine.high %v1312, %v1312
      %v1323 = vcombine.high %v1319, %v1319
      %v1325 = vunpack.c.l.s4 1966171168
      %v1326 = vunpack.c.0.s8 %v1325
      %v1327 = vlaneseq
      %v1328 = vshrl.u32 %v1327, 7
      %v1329 = vsub.s32 %v1326, %v1328
      %v1330 = vrot.slane %v817, %v1329
      %v1332 = vunpack.c.l.s4 1966171168
      %v1333 = vunpack.c.0.s8 %v1332
      %v1334 = vlaneseq
      %v1335 = vshrl.u32 %v1334, 7
      %v1336 = vsub.s32 %v1333, %v1335
      %v1337 = vrot.slane %v1330, %v1336
      %v1338 = vld [vmem:[%s5] sm:$0xf]
      %v1339 = vld [vmem:[%s5 + $0x4] sm:$0xf]
      %v1340 = vld [vmem:[%s5 + $0x8] sm:$0xf]
      %v1341 = vcombine.low %v857, %v871
      %v1342 = vcombine.low %v879, %v881
      %v1343 = vcombine.low %v864, %v878
      %v1344 = vcombine.low %v880, %v882
      %v1346 = vunpack.c.l.s4 1966171168
      %v1347 = vunpack.c.0.s8 %v1346
      %v1348 = vlaneseq
      %v1349 = vshrl.u32 %v1348, 7
      %v1350 = vsub.s32 %v1347, %v1349
      %v1351 = vrot.slane %v1341, %v1350
      %v1353 = vunpack.c.l.s4 1966171168
      %v1354 = vunpack.c.0.s8 %v1353
      %v1355 = vlaneseq
      %v1356 = vshrl.u32 %v1355, 7
      %v1357 = vsub.s32 %v1354, %v1356
      %v1358 = vrot.slane %v1342, %v1357
      %v1360 = vunpack.c.l.s4 1966171168
      %v1361 = vunpack.c.0.s8 %v1360
      %v1362 = vlaneseq
      %v1363 = vshrl.u32 %v1362, 7
      %v1364 = vsub.s32 %v1361, %v1363
      %v1365 = vrot.slane %v1343, %v1364
      %v1367 = vunpack.c.l.s4 1966171168
      %v1368 = vunpack.c.0.s8 %v1367
      %v1369 = vlaneseq
      %v1370 = vshrl.u32 %v1369, 7
      %v1371 = vsub.s32 %v1368, %v1370
      %v1372 = vrot.slane %v1344, %v1371
      %v1373 = vcombine.low %v1351, %v1358
      %v1374 = vcombine.low %v1365, %v1372
      %v1376 = vunpack.c.l.s4 1966171168
      %v1377 = vunpack.c.0.s8 %v1376
      %v1378 = vlaneseq
      %v1379 = vshrl.u32 %v1378, 7
      %v1380 = vsub.s32 %v1377, %v1379
      %v1381 = vrot.slane %v1373, %v1380
      %v1383 = vunpack.c.l.s4 1966171168
      %v1384 = vunpack.c.0.s8 %v1383
      %v1385 = vlaneseq
      %v1386 = vshrl.u32 %v1385, 7
      %v1387 = vsub.s32 %v1384, %v1386
      %v1388 = vrot.slane %v1374, %v1387
      %v1389 = vcombine.low %v1381, %v1388
      %v1390 = vcombine.low %v896, %v920
      %v1391 = vcombine.low %v934, %v942
      %v1392 = vcombine.low %v944, %v927
      %v1393 = vcombine.low %v941, %v943
      %v1395 = vunpack.c.l.s4 1966171168
      %v1396 = vunpack.c.0.s8 %v1395
      %v1397 = vlaneseq
      %v1398 = vshrl.u32 %v1397, 7
      %v1399 = vsub.s32 %v1396, %v1398
      %v1400 = vrot.slane %v1390, %v1399
      %v1402 = vunpack.c.l.s4 1966171168
      %v1403 = vunpack.c.0.s8 %v1402
      %v1404 = vlaneseq
      %v1405 = vshrl.u32 %v1404, 7
      %v1406 = vsub.s32 %v1403, %v1405
      %v1407 = vrot.slane %v1391, %v1406
      %v1409 = vunpack.c.l.s4 1966171168
      %v1410 = vunpack.c.0.s8 %v1409
      %v1411 = vlaneseq
      %v1412 = vshrl.u32 %v1411, 7
      %v1413 = vsub.s32 %v1410, %v1412
      %v1414 = vrot.slane %v1392, %v1413
      %v1416 = vunpack.c.l.s4 1966171168
      %v1417 = vunpack.c.0.s8 %v1416
      %v1418 = vlaneseq
      %v1419 = vshrl.u32 %v1418, 7
      %v1420 = vsub.s32 %v1417, %v1419
      %v1421 = vrot.slane %v1393, %v1420
      %v1422 = vcombine.low %v1400, %v1407
      %v1423 = vcombine.low %v1414, %v1421
      %v1425 = vunpack.c.l.s4 1966171168
      %v1426 = vunpack.c.0.s8 %v1425
      %v1427 = vlaneseq
      %v1428 = vshrl.u32 %v1427, 7
      %v1429 = vsub.s32 %v1426, %v1428
      %v1430 = vrot.slane %v1422, %v1429
      %v1432 = vunpack.c.l.s4 1966171168
      %v1433 = vunpack.c.0.s8 %v1432
      %v1434 = vlaneseq
      %v1435 = vshrl.u32 %v1434, 7
      %v1436 = vsub.s32 %v1433, %v1435
      %v1437 = vrot.slane %v1423, %v1436
      %v1438 = vcombine.low %v1430, %v1437
      %v1439 = vcombine.low %v945, %v959
      %v1440 = vcombine.low %v983, %v997
      %v1441 = vcombine.low %v1005, %v1007
      %v1442 = vcombine.low %v990, %v1004
      %v1444 = vunpack.c.l.s4 1966171168
      %v1445 = vunpack.c.0.s8 %v1444
      %v1446 = vlaneseq
      %v1447 = vshrl.u32 %v1446, 7
      %v1448 = vsub.s32 %v1445, %v1447
      %v1449 = vrot.slane %v1439, %v1448
      %v1451 = vunpack.c.l.s4 1966171168
      %v1452 = vunpack.c.0.s8 %v1451
      %v1453 = vlaneseq
      %v1454 = vshrl.u32 %v1453, 7
      %v1455 = vsub.s32 %v1452, %v1454
      %v1456 = vrot.slane %v1440, %v1455
      %v1458 = vunpack.c.l.s4 1966171168
      %v1459 = vunpack.c.0.s8 %v1458
      %v1460 = vlaneseq
      %v1461 = vshrl.u32 %v1460, 7
      %v1462 = vsub.s32 %v1459, %v1461
      %v1463 = vrot.slane %v1441, %v1462
      %v1465 = vunpack.c.l.s4 1966171168
      %v1466 = vunpack.c.0.s8 %v1465
      %v1467 = vlaneseq
      %v1468 = vshrl.u32 %v1467, 7
      %v1469 = vsub.s32 %v1466, %v1468
      %v1470 = vrot.slane %v1442, %v1469
      %v1471 = vcombine.low %v1449, %v1456
      %v1472 = vcombine.low %v1463, %v1470
      %v1474 = vunpack.c.l.s4 1966171168
      %v1475 = vunpack.c.0.s8 %v1474
      %v1476 = vlaneseq
      %v1477 = vshrl.u32 %v1476, 7
      %v1478 = vsub.s32 %v1475, %v1477
      %v1479 = vrot.slane %v1471, %v1478
      %v1481 = vunpack.c.l.s4 1966171168
      %v1482 = vunpack.c.0.s8 %v1481
      %v1483 = vlaneseq
      %v1484 = vshrl.u32 %v1483, 7
      %v1485 = vsub.s32 %v1482, %v1484
      %v1486 = vrot.slane %v1472, %v1485
      %v1487 = vcombine.low %v1479, %v1486
      %v1488 = vcombine.low %v1006, %v1008
      %v1489 = vcombine.low %v1022, %v1046
      %v1490 = vcombine.low %v1060, %v1068
      %v1491 = vcombine.low %v1070, %v1053
      %v1493 = vunpack.c.l.s4 1966171168
      %v1494 = vunpack.c.0.s8 %v1493
      %v1495 = vlaneseq
      %v1496 = vshrl.u32 %v1495, 7
      %v1497 = vsub.s32 %v1494, %v1496
      %v1498 = vrot.slane %v1488, %v1497
      %v1500 = vunpack.c.l.s4 1966171168
      %v1501 = vunpack.c.0.s8 %v1500
      %v1502 = vlaneseq
      %v1503 = vshrl.u32 %v1502, 7
      %v1504 = vsub.s32 %v1501, %v1503
      %v1505 = vrot.slane %v1489, %v1504
      %v1507 = vunpack.c.l.s4 1966171168
      %v1508 = vunpack.c.0.s8 %v1507
      %v1509 = vlaneseq
      %v1510 = vshrl.u32 %v1509, 7
      %v1511 = vsub.s32 %v1508, %v1510
      %v1512 = vrot.slane %v1490, %v1511
      %v1514 = vunpack.c.l.s4 1966171168
      %v1515 = vunpack.c.0.s8 %v1514
      %v1516 = vlaneseq
      %v1517 = vshrl.u32 %v1516, 7
      %v1518 = vsub.s32 %v1515, %v1517
      %v1519 = vrot.slane %v1491, %v1518
      %v1520 = vcombine.low %v1498, %v1505
      %v1521 = vcombine.low %v1512, %v1519
      %v1523 = vunpack.c.l.s4 1966171168
      %v1524 = vunpack.c.0.s8 %v1523
      %v1525 = vlaneseq
      %v1526 = vshrl.u32 %v1525, 7
      %v1527 = vsub.s32 %v1524, %v1526
      %v1528 = vrot.slane %v1520, %v1527
      %v1530 = vunpack.c.l.s4 1966171168
      %v1531 = vunpack.c.0.s8 %v1530
      %v1532 = vlaneseq
      %v1533 = vshrl.u32 %v1532, 7
      %v1534 = vsub.s32 %v1531, %v1533
      %v1535 = vrot.slane %v1521, %v1534
      %v1536 = vcombine.low %v1528, %v1535
      %v1537 = vcombine.low %v1067, %v1069
      %v1538 = vcombine.low %v1071, %v1085
      %v1539 = vcombine.low %v1109, %v1123
      %v1540 = vcombine.low %v1131, %v1133
      %v1542 = vunpack.c.l.s4 1966171168
      %v1543 = vunpack.c.0.s8 %v1542
      %v1544 = vlaneseq
      %v1545 = vshrl.u32 %v1544, 7
      %v1546 = vsub.s32 %v1543, %v1545
      %v1547 = vrot.slane %v1537, %v1546
      %v1549 = vunpack.c.l.s4 1966171168
      %v1550 = vunpack.c.0.s8 %v1549
      %v1551 = vlaneseq
      %v1552 = vshrl.u32 %v1551, 7
      %v1553 = vsub.s32 %v1550, %v1552
      %v1554 = vrot.slane %v1538, %v1553
      %v1556 = vunpack.c.l.s4 1966171168
      %v1557 = vunpack.c.0.s8 %v1556
      %v1558 = vlaneseq
      %v1559 = vshrl.u32 %v1558, 7
      %v1560 = vsub.s32 %v1557, %v1559
      %v1561 = vrot.slane %v1539, %v1560
      %v1563 = vunpack.c.l.s4 1966171168
      %v1564 = vunpack.c.0.s8 %v1563
      %v1565 = vlaneseq
      %v1566 = vshrl.u32 %v1565, 7
      %v1567 = vsub.s32 %v1564, %v1566
      %v1568 = vrot.slane %v1540, %v1567
      %v1569 = vcombine.low %v1547, %v1554
      %v1570 = vcombine.low %v1561, %v1568
      %v1572 = vunpack.c.l.s4 1966171168
      %v1573 = vunpack.c.0.s8 %v1572
      %v1574 = vlaneseq
      %v1575 = vshrl.u32 %v1574, 7
      %v1576 = vsub.s32 %v1573, %v1575
      %v1577 = vrot.slane %v1569, %v1576
      %v1579 = vunpack.c.l.s4 1966171168
      %v1580 = vunpack.c.0.s8 %v1579
      %v1581 = vlaneseq
      %v1582 = vshrl.u32 %v1581, 7
      %v1583 = vsub.s32 %v1580, %v1582
      %v1584 = vrot.slane %v1570, %v1583
      %v1585 = vcombine.low %v1577, %v1584
      %v1586 = vcombine.low %v1116, %v1130
      %v1587 = vcombine.low %v1132, %v1134
      %v1588 = vcombine.low %v1148, %v1172
      %v1589 = vcombine.low %v1186, %v1194
      %v1591 = vunpack.c.l.s4 1966171168
      %v1592 = vunpack.c.0.s8 %v1591
      %v1593 = vlaneseq
      %v1594 = vshrl.u32 %v1593, 7
      %v1595 = vsub.s32 %v1592, %v1594
      %v1596 = vrot.slane %v1586, %v1595
      %v1598 = vunpack.c.l.s4 1966171168
      %v1599 = vunpack.c.0.s8 %v1598
      %v1600 = vlaneseq
      %v1601 = vshrl.u32 %v1600, 7
      %v1602 = vsub.s32 %v1599, %v1601
      %v1603 = vrot.slane %v1587, %v1602
      %v1605 = vunpack.c.l.s4 1966171168
      %v1606 = vunpack.c.0.s8 %v1605
      %v1607 = vlaneseq
      %v1608 = vshrl.u32 %v1607, 7
      %v1609 = vsub.s32 %v1606, %v1608
      %v1610 = vrot.slane %v1588, %v1609
      %v1612 = vunpack.c.l.s4 1966171168
      %v1613 = vunpack.c.0.s8 %v1612
      %v1614 = vlaneseq
      %v1615 = vshrl.u32 %v1614, 7
      %v1616 = vsub.s32 %v1613, %v1615
      %v1617 = vrot.slane %v1589, %v1616
      %v1618 = vcombine.low %v1596, %v1603
      %v1619 = vcombine.low %v1610, %v1617
      %v1621 = vunpack.c.l.s4 1966171168
      %v1622 = vunpack.c.0.s8 %v1621
      %v1623 = vlaneseq
      %v1624 = vshrl.u32 %v1623, 7
      %v1625 = vsub.s32 %v1622, %v1624
      %v1626 = vrot.slane %v1618, %v1625
      %v1628 = vunpack.c.l.s4 1966171168
      %v1629 = vunpack.c.0.s8 %v1628
      %v1630 = vlaneseq
      %v1631 = vshrl.u32 %v1630, 7
      %v1632 = vsub.s32 %v1629, %v1631
      %v1633 = vrot.slane %v1619, %v1632
      %v1634 = vcombine.low %v1626, %v1633
      %v1635 = vcombine.low %v1196, %v1179
      %v1636 = vcombine.low %v1193, %v1195
      %v1637 = vcombine.low %v1197, %v1211
      %v1638 = vcombine.low %v1235, %v1249
      %v1640 = vunpack.c.l.s4 1966171168
      %v1641 = vunpack.c.0.s8 %v1640
      %v1642 = vlaneseq
      %v1643 = vshrl.u32 %v1642, 7
      %v1644 = vsub.s32 %v1641, %v1643
      %v1645 = vrot.slane %v1635, %v1644
      %v1647 = vunpack.c.l.s4 1966171168
      %v1648 = vunpack.c.0.s8 %v1647
      %v1649 = vlaneseq
      %v1650 = vshrl.u32 %v1649, 7
      %v1651 = vsub.s32 %v1648, %v1650
      %v1652 = vrot.slane %v1636, %v1651
      %v1654 = vunpack.c.l.s4 1966171168
      %v1655 = vunpack.c.0.s8 %v1654
      %v1656 = vlaneseq
      %v1657 = vshrl.u32 %v1656, 7
      %v1658 = vsub.s32 %v1655, %v1657
      %v1659 = vrot.slane %v1637, %v1658
      %v1661 = vunpack.c.l.s4 1966171168
      %v1662 = vunpack.c.0.s8 %v1661
      %v1663 = vlaneseq
      %v1664 = vshrl.u32 %v1663, 7
      %v1665 = vsub.s32 %v1662, %v1664
      %v1666 = vrot.slane %v1638, %v1665
      %v1667 = vcombine.low %v1645, %v1652
      %v1668 = vcombine.low %v1659, %v1666
      %v1670 = vunpack.c.l.s4 1966171168
      %v1671 = vunpack.c.0.s8 %v1670
      %v1672 = vlaneseq
      %v1673 = vshrl.u32 %v1672, 7
      %v1674 = vsub.s32 %v1671, %v1673
      %v1675 = vrot.slane %v1667, %v1674
      %v1677 = vunpack.c.l.s4 1966171168
      %v1678 = vunpack.c.0.s8 %v1677
      %v1679 = vlaneseq
      %v1680 = vshrl.u32 %v1679, 7
      %v1681 = vsub.s32 %v1678, %v1680
      %v1682 = vrot.slane %v1668, %v1681
      %v1683 = vcombine.low %v1675, %v1682
      %v1684 = vcombine.low %v1257, %v1259
      %v1685 = vcombine.low %v1242, %v1256
      %v1686 = vcombine.low %v1258, %v1260
      %v1687 = vcombine.low %v1274, %v1298
      %v1689 = vunpack.c.l.s4 1966171168
      %v1690 = vunpack.c.0.s8 %v1689
      %v1691 = vlaneseq
      %v1692 = vshrl.u32 %v1691, 7
      %v1693 = vsub.s32 %v1690, %v1692
      %v1694 = vrot.slane %v1684, %v1693
      %v1696 = vunpack.c.l.s4 1966171168
      %v1697 = vunpack.c.0.s8 %v1696
      %v1698 = vlaneseq
      %v1699 = vshrl.u32 %v1698, 7
      %v1700 = vsub.s32 %v1697, %v1699
      %v1701 = vrot.slane %v1685, %v1700
      %v1703 = vunpack.c.l.s4 1966171168
      %v1704 = vunpack.c.0.s8 %v1703
      %v1705 = vlaneseq
      %v1706 = vshrl.u32 %v1705, 7
      %v1707 = vsub.s32 %v1704, %v1706
      %v1708 = vrot.slane %v1686, %v1707
      %v1710 = vunpack.c.l.s4 1966171168
      %v1711 = vunpack.c.0.s8 %v1710
      %v1712 = vlaneseq
      %v1713 = vshrl.u32 %v1712, 7
      %v1714 = vsub.s32 %v1711, %v1713
      %v1715 = vrot.slane %v1687, %v1714
      %v1716 = vcombine.low %v1694, %v1701
      %v1717 = vcombine.low %v1708, %v1715
      %v1719 = vunpack.c.l.s4 1966171168
      %v1720 = vunpack.c.0.s8 %v1719
      %v1721 = vlaneseq
      %v1722 = vshrl.u32 %v1721, 7
      %v1723 = vsub.s32 %v1720, %v1722
      %v1724 = vrot.slane %v1716, %v1723
      %v1726 = vunpack.c.l.s4 1966171168
      %v1727 = vunpack.c.0.s8 %v1726
      %v1728 = vlaneseq
      %v1729 = vshrl.u32 %v1728, 7
      %v1730 = vsub.s32 %v1727, %v1729
      %v1731 = vrot.slane %v1717, %v1730
      %v1732 = vcombine.low %v1724, %v1731
      %v1733 = vcombine.low %v1312, %v1320
      %v1734 = vcombine.low %v1322, %v1305
      %v1735 = vcombine.low %v1319, %v1321
      %v1736 = vcombine.low %v1323, %v1337
      %v1738 = vunpack.c.l.s4 1966171168
      %v1739 = vunpack.c.0.s8 %v1738
      %v1740 = vlaneseq
      %v1741 = vshrl.u32 %v1740, 7
      %v1742 = vsub.s32 %v1739, %v1741
      %v1743 = vrot.slane %v1733, %v1742
      %v1745 = vunpack.c.l.s4 1966171168
      %v1746 = vunpack.c.0.s8 %v1745
      %v1747 = vlaneseq
      %v1748 = vshrl.u32 %v1747, 7
      %v1749 = vsub.s32 %v1746, %v1748
      %v1750 = vrot.slane %v1734, %v1749
      %v1752 = vunpack.c.l.s4 1966171168
      %v1753 = vunpack.c.0.s8 %v1752
      %v1754 = vlaneseq
      %v1755 = vshrl.u32 %v1754, 7
      %v1756 = vsub.s32 %v1753, %v1755
      %v1757 = vrot.slane %v1735, %v1756
      %v1759 = vunpack.c.l.s4 1966171168
      %v1760 = vunpack.c.0.s8 %v1759
      %v1761 = vlaneseq
      %v1762 = vshrl.u32 %v1761, 7
      %v1763 = vsub.s32 %v1760, %v1762
      %v1764 = vrot.slane %v1736, %v1763
      %v1765 = vcombine.low %v1743, %v1750
      %v1766 = vcombine.low %v1757, %v1764
      %v1768 = vunpack.c.l.s4 1966171168
      %v1769 = vunpack.c.0.s8 %v1768
      %v1770 = vlaneseq
      %v1771 = vshrl.u32 %v1770, 7
      %v1772 = vsub.s32 %v1769, %v1771
      %v1773 = vrot.slane %v1765, %v1772
      %v1775 = vunpack.c.l.s4 1966171168
      %v1776 = vunpack.c.0.s8 %v1775
      %v1777 = vlaneseq
      %v1778 = vshrl.u32 %v1777, 7
      %v1779 = vsub.s32 %v1776, %v1778
      %v1780 = vrot.slane %v1766, %v1779
      %v1781 = vcombine.low %v1773, %v1780
      %v1785 = vunpack.c.l.b16 %v1338
      %v1786 = vunpack.c.l.b16 %v1339
      %v1787 = vunpack.c.l.b16 %v1340
      %v1788 = vpack.c.b16 %v1786, %v1785
      %v1789 = vpack.c.b16 %v1787, %v1787
      %vm1791 = vcmask 195584
      %v1793 = vsel %vm1791, %v1389, 0
      %v1796 = vsel %vm1791, %v1438, 0
      %v1799 = vsel %vm1791, %v1487, 0
      %v1802 = vsel %vm1791, %v1536, 0
      %v1805 = vsel %vm1791, %v1585, 0
      %v1808 = vsel %vm1791, %v1634, 0
      %v1811 = vsel %vm1791, %v1683, 0
      %v1814 = vsel %vm1791, %v1732, 0
      %v1817 = vsel %vm1791, %v1781, 0
      %vm1819 = vcmask 1043456
      %v1821 = vsel %vm1819, %v1789, 0
      %1823 = vmatprep.subr.bf16.mxu0 0
      %1824 = vmatpush1.bf16.msra.mxu0 0
      %1825 = vmatprep.subr.bf16.mxu0 0
      %1826 = vmatpush1.bf16.msra.mxu0 0
      %1827 = vmatprep.subr.bf16.mxu0 0
      %1828 = vmatpush1.bf16.msra.mxu0 0
      %1829 = vmatprep.subr.bf16.mxu0 0
      %1830 = vmatpush1.bf16.msra.mxu0 0
      %1831 = vmatprep.subr.bf16.mxu0 0
      %1832 = vmatpush1.bf16.msra.mxu0 0
      %1833 = vmatprep.subr.bf16.mxu0 0
      %1834 = vmatpush1.bf16.msra.mxu0 0
      %1835 = vmatprep.subr.bf16.mxu0 0
      %1836 = vmatpush1.bf16.msra.mxu0 %v1821
      %1837 = vmatprep.subr.bf16.mxu0 0
      %1838 = vmatpush1.bf16.msra.mxu0 %v1788
      %1839 = vmatprep.subr.bf16.mxu0 0
      %1840 = vmatpush2.bf16.msra.mxu0 0
      %1841 = vmatprep.subr.bf16.mxu0 0
      %1842 = vmatpush2.bf16.msra.mxu0 0
      %1843 = vmatprep.subr.bf16.mxu0 0
      %1844 = vmatpush2.bf16.msra.mxu0 0
      %1845 = vmatprep.subr.bf16.mxu0 0
      %1846 = vmatpush2.bf16.msra.mxu0 0
      %1847 = vmatprep.subr.bf16.mxu0 0
      %1848 = vmatpush2.bf16.msra.mxu0 0
      %1849 = vmatprep.subr.bf16.mxu0 0
      %1850 = vmatpush2.bf16.msra.mxu0 0
      %1851 = vmatprep.subr.bf16.mxu0 0
      %1852 = vmatpush2.bf16.msra.mxu0 0
      %1853 = vmatprep.subr.bf16.mxu0 0
      %1854 = vmatpush2.bf16.msra.mxu0 0
      %1855 = vmatprep.mubr.bf16.mxu0 0
      %1856 = vmatmul.mubr.bf16.gmra.mxu0 %v1793
      %v1857 = vpop.f32.mrf.mxu0
      %v1858 = vadd.f32 0.0, %v1857
      %v1859 = vpop.f32.mrf.mxu0
      %v1860 = vpop.f32.mrf.mxu0
      %v1861 = vadd.f32 0.0, %v1860
      %v1862 = vpop.f32.mrf.mxu0
      %1863 = vmatprep.mubr.bf16.mxu0 0
      %1864 = vmatmul.mubr.bf16.gmra.mxu0 %v1796
      %v1865 = vpop.f32.mrf.mxu0
      %v1866 = vadd.f32 0.0, %v1865
      %v1867 = vpop.f32.mrf.mxu0
      %v1868 = vpop.f32.mrf.mxu0
      %v1869 = vadd.f32 0.0, %v1868
      %v1870 = vpop.f32.mrf.mxu0
      %1871 = vmatprep.mubr.bf16.mxu0 0
      %1872 = vmatmul.mubr.bf16.gmra.mxu0 %v1799
      %v1873 = vpop.f32.mrf.mxu0
      %v1874 = vadd.f32 0.0, %v1873
      %v1875 = vpop.f32.mrf.mxu0
      %v1876 = vpop.f32.mrf.mxu0
      %v1877 = vadd.f32 0.0, %v1876
      %v1878 = vpop.f32.mrf.mxu0
      %1879 = vmatprep.mubr.bf16.mxu0 0
      %1880 = vmatmul.mubr.bf16.gmra.mxu0 %v1802
      %v1881 = vpop.f32.mrf.mxu0
      %v1882 = vadd.f32 0.0, %v1881
      %v1883 = vpop.f32.mrf.mxu0
      %v1884 = vpop.f32.mrf.mxu0
      %v1885 = vadd.f32 0.0, %v1884
      %v1886 = vpop.f32.mrf.mxu0
      %1887 = vmatprep.mubr.bf16.mxu0 0
      %1888 = vmatmul.mubr.bf16.gmra.mxu0 %v1805
      %v1889 = vpop.f32.mrf.mxu0
      %v1890 = vadd.f32 0.0, %v1889
      %v1891 = vpop.f32.mrf.mxu0
      %v1892 = vpop.f32.mrf.mxu0
      %v1893 = vadd.f32 0.0, %v1892
      %v1894 = vpop.f32.mrf.mxu0
      %1895 = vmatprep.mubr.bf16.mxu0 0
      %1896 = vmatmul.mubr.bf16.gmra.mxu0 %v1808
      %v1897 = vpop.f32.mrf.mxu0
      %v1898 = vadd.f32 0.0, %v1897
      %v1899 = vpop.f32.mrf.mxu0
      %v1900 = vpop.f32.mrf.mxu0
      %v1901 = vadd.f32 0.0, %v1900
      %v1902 = vpop.f32.mrf.mxu0
      %1903 = vmatprep.mubr.bf16.mxu0 0
      %1904 = vmatmul.mubr.bf16.gmra.mxu0 %v1811
      %v1905 = vpop.f32.mrf.mxu0
      %v1906 = vadd.f32 0.0, %v1905
      %v1907 = vpop.f32.mrf.mxu0
      %v1908 = vpop.f32.mrf.mxu0
      %v1909 = vadd.f32 0.0, %v1908
      %v1910 = vpop.f32.mrf.mxu0
      %1911 = vmatprep.mubr.bf16.mxu0 0
      %1912 = vmatmul.mubr.bf16.gmra.mxu0 %v1814
      %v1913 = vpop.f32.mrf.mxu0
      %v1914 = vadd.f32 0.0, %v1913
      %v1915 = vpop.f32.mrf.mxu0
      %v1916 = vpop.f32.mrf.mxu0
      %v1917 = vadd.f32 0.0, %v1916
      %v1918 = vpop.f32.mrf.mxu0
      %1919 = vmatprep.mubr.bf16.mxu0 0
      %1920 = vmatmul.mubr.bf16.gmra.mxu0 %v1817
      %v1921 = vpop.f32.mrf.mxu0
      %v1922 = vadd.f32 0.0, %v1921
      %v1923 = vpop.f32.mrf.mxu0
      %v1924 = vpop.f32.mrf.mxu0
      %v1925 = vadd.f32 0.0, %v1924
      %v1926 = vpop.f32.mrf.mxu0
      %1927 = vdwg.mxu0
      %v1946 = vcombine.high %v1858, %v1858
      %v1948 = vunpack.c.l.s4 1983009808
      %v1949 = vunpack.c.0.s8 %v1948
      %v1950 = vlaneseq
      %v1951 = vshrl.u32 %v1950, 7
      %v1952 = vsub.s32 %v1949, %v1951
      %v1953 = vrot.slane %v1858, %v1952
      %v1955 = vunpack.c.l.s4 1983009808
      %v1956 = vunpack.c.0.s8 %v1955
      %v1957 = vlaneseq
      %v1958 = vshrl.u32 %v1957, 7
      %v1959 = vsub.s32 %v1956, %v1958
      %v1960 = vrot.slane %v1946, %v1959
      %v1961 = vcombine.high %v1953, %v1953
      %v1962 = vcombine.high %v1960, %v1960
      %v1963 = vcombine.high %v1861, %v1861
      %v1965 = vunpack.c.l.s4 1983009808
      %v1966 = vunpack.c.0.s8 %v1965
      %v1967 = vlaneseq
      %v1968 = vshrl.u32 %v1967, 7
      %v1969 = vsub.s32 %v1966, %v1968
      %v1970 = vrot.slane %v1861, %v1969
      %v1972 = vunpack.c.l.s4 1983009808
      %v1973 = vunpack.c.0.s8 %v1972
      %v1974 = vlaneseq
      %v1975 = vshrl.u32 %v1974, 7
      %v1976 = vsub.s32 %v1973, %v1975
      %v1977 = vrot.slane %v1963, %v1976
      %v1978 = vcombine.high %v1970, %v1970
      %v1979 = vcombine.high %v1977, %v1977
      %v1980 = vcombine.high %v1866, %v1866
      %v1982 = vunpack.c.l.s4 1983009808
      %v1983 = vunpack.c.0.s8 %v1982
      %v1984 = vlaneseq
      %v1985 = vshrl.u32 %v1984, 7
      %v1986 = vsub.s32 %v1983, %v1985
      %v1987 = vrot.slane %v1866, %v1986
      %v1989 = vunpack.c.l.s4 1983009808
      %v1990 = vunpack.c.0.s8 %v1989
      %v1991 = vlaneseq
      %v1992 = vshrl.u32 %v1991, 7
      %v1993 = vsub.s32 %v1990, %v1992
      %v1994 = vrot.slane %v1980, %v1993
      %v1995 = vcombine.high %v1987, %v1987
      %v1996 = vcombine.high %v1994, %v1994
      %v1997 = vcombine.high %v1869, %v1869
      %v1999 = vunpack.c.l.s4 1983009808
      %v2000 = vunpack.c.0.s8 %v1999
      %v2001 = vlaneseq
      %v2002 = vshrl.u32 %v2001, 7
      %v2003 = vsub.s32 %v2000, %v2002
      %v2004 = vrot.slane %v1869, %v2003
      %v2006 = vunpack.c.l.s4 1983009808
      %v2007 = vunpack.c.0.s8 %v2006
      %v2008 = vlaneseq
      %v2009 = vshrl.u32 %v2008, 7
      %v2010 = vsub.s32 %v2007, %v2009
      %v2011 = vrot.slane %v1997, %v2010
      %v2012 = vcombine.high %v2004, %v2004
      %v2013 = vcombine.high %v2011, %v2011
      %v2014 = vcombine.high %v1874, %v1874
      %v2016 = vunpack.c.l.s4 1983009808
      %v2017 = vunpack.c.0.s8 %v2016
      %v2018 = vlaneseq
      %v2019 = vshrl.u32 %v2018, 7
      %v2020 = vsub.s32 %v2017, %v2019
      %v2021 = vrot.slane %v1874, %v2020
      %v2023 = vunpack.c.l.s4 1983009808
      %v2024 = vunpack.c.0.s8 %v2023
      %v2025 = vlaneseq
      %v2026 = vshrl.u32 %v2025, 7
      %v2027 = vsub.s32 %v2024, %v2026
      %v2028 = vrot.slane %v2014, %v2027
      %v2029 = vcombine.high %v2028, %v2028
      %v2030 = vcombine.high %v1877, %v1877
      %v2032 = vunpack.c.l.s4 1983009808
      %v2033 = vunpack.c.0.s8 %v2032
      %v2034 = vlaneseq
      %v2035 = vshrl.u32 %v2034, 7
      %v2036 = vsub.s32 %v2033, %v2035
      %v2037 = vrot.slane %v1877, %v2036
      %v2039 = vunpack.c.l.s4 1983009808
      %v2040 = vunpack.c.0.s8 %v2039
      %v2041 = vlaneseq
      %v2042 = vshrl.u32 %v2041, 7
      %v2043 = vsub.s32 %v2040, %v2042
      %v2044 = vrot.slane %v2030, %v2043
      %v2045 = vcombine.high %v2037, %v2037
      %v2046 = vcombine.high %v2044, %v2044
      %v2047 = vcombine.high %v1882, %v1882
      %v2049 = vunpack.c.l.s4 1983009808
      %v2050 = vunpack.c.0.s8 %v2049
      %v2051 = vlaneseq
      %v2052 = vshrl.u32 %v2051, 7
      %v2053 = vsub.s32 %v2050, %v2052
      %v2054 = vrot.slane %v1882, %v2053
      %v2056 = vunpack.c.l.s4 1983009808
      %v2057 = vunpack.c.0.s8 %v2056
      %v2058 = vlaneseq
      %v2059 = vshrl.u32 %v2058, 7
      %v2060 = vsub.s32 %v2057, %v2059
      %v2061 = vrot.slane %v2047, %v2060
      %v2062 = vcombine.high %v2054, %v2054
      %v2063 = vcombine.high %v2061, %v2061
      %v2064 = vcombine.high %v1885, %v1885
      %v2066 = vunpack.c.l.s4 1983009808
      %v2067 = vunpack.c.0.s8 %v2066
      %v2068 = vlaneseq
      %v2069 = vshrl.u32 %v2068, 7
      %v2070 = vsub.s32 %v2067, %v2069
      %v2071 = vrot.slane %v1885, %v2070
      %v2073 = vunpack.c.l.s4 1983009808
      %v2074 = vunpack.c.0.s8 %v2073
      %v2075 = vlaneseq
      %v2076 = vshrl.u32 %v2075, 7
      %v2077 = vsub.s32 %v2074, %v2076
      %v2078 = vrot.slane %v2064, %v2077
      %v2079 = vcombine.high %v2071, %v2071
      %v2080 = vcombine.high %v2078, %v2078
      %v2081 = vcombine.high %v1890, %v1890
      %v2083 = vunpack.c.l.s4 1983009808
      %v2084 = vunpack.c.0.s8 %v2083
      %v2085 = vlaneseq
      %v2086 = vshrl.u32 %v2085, 7
      %v2087 = vsub.s32 %v2084, %v2086
      %v2088 = vrot.slane %v1890, %v2087
      %v2090 = vunpack.c.l.s4 1983009808
      %v2091 = vunpack.c.0.s8 %v2090
      %v2092 = vlaneseq
      %v2093 = vshrl.u32 %v2092, 7
      %v2094 = vsub.s32 %v2091, %v2093
      %v2095 = vrot.slane %v2081, %v2094
      %v2096 = vcombine.high %v2088, %v2088
      %v2097 = vcombine.high %v1893, %v1893
      %v2099 = vunpack.c.l.s4 1983009808
      %v2100 = vunpack.c.0.s8 %v2099
      %v2101 = vlaneseq
      %v2102 = vshrl.u32 %v2101, 7
      %v2103 = vsub.s32 %v2100, %v2102
      %v2104 = vrot.slane %v1893, %v2103
      %v2106 = vunpack.c.l.s4 1983009808
      %v2107 = vunpack.c.0.s8 %v2106
      %v2108 = vlaneseq
      %v2109 = vshrl.u32 %v2108, 7
      %v2110 = vsub.s32 %v2107, %v2109
      %v2111 = vrot.slane %v2097, %v2110
      %v2112 = vcombine.high %v2104, %v2104
      %v2113 = vcombine.high %v2111, %v2111
      %v2114 = vcombine.high %v1898, %v1898
      %v2116 = vunpack.c.l.s4 1983009808
      %v2117 = vunpack.c.0.s8 %v2116
      %v2118 = vlaneseq
      %v2119 = vshrl.u32 %v2118, 7
      %v2120 = vsub.s32 %v2117, %v2119
      %v2121 = vrot.slane %v1898, %v2120
      %v2123 = vunpack.c.l.s4 1983009808
      %v2124 = vunpack.c.0.s8 %v2123
      %v2125 = vlaneseq
      %v2126 = vshrl.u32 %v2125, 7
      %v2127 = vsub.s32 %v2124, %v2126
      %v2128 = vrot.slane %v2114, %v2127
      %v2129 = vcombine.high %v2121, %v2121
      %v2130 = vcombine.high %v2128, %v2128
      %v2131 = vcombine.high %v1901, %v1901
      %v2133 = vunpack.c.l.s4 1983009808
      %v2134 = vunpack.c.0.s8 %v2133
      %v2135 = vlaneseq
      %v2136 = vshrl.u32 %v2135, 7
      %v2137 = vsub.s32 %v2134, %v2136
      %v2138 = vrot.slane %v1901, %v2137
      %v2140 = vunpack.c.l.s4 1983009808
      %v2141 = vunpack.c.0.s8 %v2140
      %v2142 = vlaneseq
      %v2143 = vshrl.u32 %v2142, 7
      %v2144 = vsub.s32 %v2141, %v2143
      %v2145 = vrot.slane %v2131, %v2144
      %v2146 = vcombine.high %v2138, %v2138
      %v2147 = vcombine.high %v2145, %v2145
      %v2148 = vcombine.high %v1906, %v1906
      %v2150 = vunpack.c.l.s4 1983009808
      %v2151 = vunpack.c.0.s8 %v2150
      %v2152 = vlaneseq
      %v2153 = vshrl.u32 %v2152, 7
      %v2154 = vsub.s32 %v2151, %v2153
      %v2155 = vrot.slane %v1906, %v2154
      %v2157 = vunpack.c.l.s4 1983009808
      %v2158 = vunpack.c.0.s8 %v2157
      %v2159 = vlaneseq
      %v2160 = vshrl.u32 %v2159, 7
      %v2161 = vsub.s32 %v2158, %v2160
      %v2162 = vrot.slane %v2148, %v2161
      %v2163 = vcombine.high %v2155, %v2155
      %v2164 = vcombine.high %v2162, %v2162
      %v2165 = vcombine.high %v1909, %v1909
      %v2167 = vunpack.c.l.s4 1983009808
      %v2168 = vunpack.c.0.s8 %v2167
      %v2169 = vlaneseq
      %v2170 = vshrl.u32 %v2169, 7
      %v2171 = vsub.s32 %v2168, %v2170
      %v2172 = vrot.slane %v1909, %v2171
      %v2174 = vunpack.c.l.s4 1983009808
      %v2175 = vunpack.c.0.s8 %v2174
      %v2176 = vlaneseq
      %v2177 = vshrl.u32 %v2176, 7
      %v2178 = vsub.s32 %v2175, %v2177
      %v2179 = vrot.slane %v2165, %v2178
      %v2180 = vcombine.high %v2179, %v2179
      %v2181 = vcombine.high %v1914, %v1914
      %v2183 = vunpack.c.l.s4 1983009808
      %v2184 = vunpack.c.0.s8 %v2183
      %v2185 = vlaneseq
      %v2186 = vshrl.u32 %v2185, 7
      %v2187 = vsub.s32 %v2184, %v2186
      %v2188 = vrot.slane %v1914, %v2187
      %v2190 = vunpack.c.l.s4 1983009808
      %v2191 = vunpack.c.0.s8 %v2190
      %v2192 = vlaneseq
      %v2193 = vshrl.u32 %v2192, 7
      %v2194 = vsub.s32 %v2191, %v2193
      %v2195 = vrot.slane %v2181, %v2194
      %v2196 = vcombine.high %v2188, %v2188
      %v2197 = vcombine.high %v2195, %v2195
      %v2198 = vcombine.high %v1917, %v1917
      %v2200 = vunpack.c.l.s4 1983009808
      %v2201 = vunpack.c.0.s8 %v2200
      %v2202 = vlaneseq
      %v2203 = vshrl.u32 %v2202, 7
      %v2204 = vsub.s32 %v2201, %v2203
      %v2205 = vrot.slane %v1917, %v2204
      %v2207 = vunpack.c.l.s4 1983009808
      %v2208 = vunpack.c.0.s8 %v2207
      %v2209 = vlaneseq
      %v2210 = vshrl.u32 %v2209, 7
      %v2211 = vsub.s32 %v2208, %v2210
      %v2212 = vrot.slane %v2198, %v2211
      %v2213 = vcombine.high %v2205, %v2205
      %v2214 = vcombine.high %v2212, %v2212
      %v2215 = vcombine.high %v1922, %v1922
      %v2217 = vunpack.c.l.s4 1983009808
      %v2218 = vunpack.c.0.s8 %v2217
      %v2219 = vlaneseq
      %v2220 = vshrl.u32 %v2219, 7
      %v2221 = vsub.s32 %v2218, %v2220
      %v2222 = vrot.slane %v1922, %v2221
      %v2224 = vunpack.c.l.s4 1983009808
      %v2225 = vunpack.c.0.s8 %v2224
      %v2226 = vlaneseq
      %v2227 = vshrl.u32 %v2226, 7
      %v2228 = vsub.s32 %v2225, %v2227
      %v2229 = vrot.slane %v2215, %v2228
      %v2230 = vcombine.high %v2222, %v2222
      %v2231 = vcombine.high %v2229, %v2229
      %v2232 = vcombine.high %v1925, %v1925
      %v2234 = vunpack.c.l.s4 1983009808
      %v2235 = vunpack.c.0.s8 %v2234
      %v2236 = vlaneseq
      %v2237 = vshrl.u32 %v2236, 7
      %v2238 = vsub.s32 %v2235, %v2237
      %v2239 = vrot.slane %v1925, %v2238
      %v2241 = vunpack.c.l.s4 1983009808
      %v2242 = vunpack.c.0.s8 %v2241
      %v2243 = vlaneseq
      %v2244 = vshrl.u32 %v2243, 7
      %v2245 = vsub.s32 %v2242, %v2244
      %v2246 = vrot.slane %v2232, %v2245
      %v2247 = vcombine.high %v2239, %v2239
      %s2312 = scalar_lea.vmem %s5, 12
      %v2313 = vld [vmem:[%s2312] sm:$0xf]
      %v2314 = vld [vmem:[%s2312 + $0x4] sm:$0xf]
      %v2315 = vld [vmem:[%s2312 + $0x8] sm:$0xf]
      %v2319 = vunpack.c.l.b16 %v2313
      %v2320 = vunpack.c.l.b16 %v2314
      %v2321 = vunpack.c.l.b16 %v2315
      %v2322 = vpack.c.b16 %v2320, %v2319
      %v2323 = vpack.c.b16 %v2321, %v2321
      %v2326 = vsel %vm1819, %v2323, 0
      %2328 = vmatprep.subr.bf16.mxu0 0
      %2329 = vmatpush1.bf16.msra.mxu0 0
      %2330 = vmatprep.subr.bf16.mxu0 0
      %2331 = vmatpush1.bf16.msra.mxu0 0
      %2332 = vmatprep.subr.bf16.mxu0 0
      %2333 = vmatpush1.bf16.msra.mxu0 0
      %2334 = vmatprep.subr.bf16.mxu0 0
      %2335 = vmatpush1.bf16.msra.mxu0 0
      %2336 = vmatprep.subr.bf16.mxu0 0
      %2337 = vmatpush1.bf16.msra.mxu0 0
      %2338 = vmatprep.subr.bf16.mxu0 0
      %2339 = vmatpush1.bf16.msra.mxu0 0
      %2340 = vmatprep.subr.bf16.mxu0 0
      %2341 = vmatpush1.bf16.msra.mxu0 %v2326
      %2342 = vmatprep.subr.bf16.mxu0 0
      %2343 = vmatpush1.bf16.msra.mxu0 %v2322
      %2344 = vmatprep.subr.bf16.mxu0 0
      %2345 = vmatpush2.bf16.msra.mxu0 0
      %2346 = vmatprep.subr.bf16.mxu0 0
      %2347 = vmatpush2.bf16.msra.mxu0 0
      %2348 = vmatprep.subr.bf16.mxu0 0
      %2349 = vmatpush2.bf16.msra.mxu0 0
      %2350 = vmatprep.subr.bf16.mxu0 0
      %2351 = vmatpush2.bf16.msra.mxu0 0
      %2352 = vmatprep.subr.bf16.mxu0 0
      %2353 = vmatpush2.bf16.msra.mxu0 0
      %2354 = vmatprep.subr.bf16.mxu0 0
      %2355 = vmatpush2.bf16.msra.mxu0 0
      %2356 = vmatprep.subr.bf16.mxu0 0
      %2357 = vmatpush2.bf16.msra.mxu0 0
      %2358 = vmatprep.subr.bf16.mxu0 0
      %2359 = vmatpush2.bf16.msra.mxu0 0
      %2360 = vmatprep.mubr.bf16.mxu0 0
      %2361 = vmatmul.mubr.bf16.gmra.mxu0 %v1793
      %v2362 = vpop.f32.mrf.mxu0
      %v2363 = vadd.f32 0.0, %v2362
      %v2364 = vpop.f32.mrf.mxu0
      %v2365 = vpop.f32.mrf.mxu0
      %v2366 = vadd.f32 0.0, %v2365
      %v2367 = vpop.f32.mrf.mxu0
      %2368 = vmatprep.mubr.bf16.mxu0 0
      %2369 = vmatmul.mubr.bf16.gmra.mxu0 %v1796
      %v2370 = vpop.f32.mrf.mxu0
      %v2371 = vadd.f32 0.0, %v2370
      %v2372 = vpop.f32.mrf.mxu0
      %v2373 = vpop.f32.mrf.mxu0
      %v2374 = vadd.f32 0.0, %v2373
      %v2375 = vpop.f32.mrf.mxu0
      %2376 = vmatprep.mubr.bf16.mxu0 0
      %2377 = vmatmul.mubr.bf16.gmra.mxu0 %v1799
      %v2378 = vpop.f32.mrf.mxu0
      %v2379 = vadd.f32 0.0, %v2378
      %v2380 = vpop.f32.mrf.mxu0
      %v2381 = vpop.f32.mrf.mxu0
      %v2382 = vadd.f32 0.0, %v2381
      %v2383 = vpop.f32.mrf.mxu0
      %2384 = vmatprep.mubr.bf16.mxu0 0
      %2385 = vmatmul.mubr.bf16.gmra.mxu0 %v1802
      %v2386 = vpop.f32.mrf.mxu0
      %v2387 = vadd.f32 0.0, %v2386
      %v2388 = vpop.f32.mrf.mxu0
      %v2389 = vpop.f32.mrf.mxu0
      %v2390 = vadd.f32 0.0, %v2389
      %v2391 = vpop.f32.mrf.mxu0
      %2392 = vmatprep.mubr.bf16.mxu0 0
      %2393 = vmatmul.mubr.bf16.gmra.mxu0 %v1805
      %v2394 = vpop.f32.mrf.mxu0
      %v2395 = vadd.f32 0.0, %v2394
      %v2396 = vpop.f32.mrf.mxu0
      %v2397 = vpop.f32.mrf.mxu0
      %v2398 = vadd.f32 0.0, %v2397
      %v2399 = vpop.f32.mrf.mxu0
      %2400 = vmatprep.mubr.bf16.mxu0 0
      %2401 = vmatmul.mubr.bf16.gmra.mxu0 %v1808
      %v2402 = vpop.f32.mrf.mxu0
      %v2403 = vadd.f32 0.0, %v2402
      %v2404 = vpop.f32.mrf.mxu0
      %v2405 = vpop.f32.mrf.mxu0
      %v2406 = vadd.f32 0.0, %v2405
      %v2407 = vpop.f32.mrf.mxu0
      %2408 = vmatprep.mubr.bf16.mxu0 0
      %2409 = vmatmul.mubr.bf16.gmra.mxu0 %v1811
      %v2410 = vpop.f32.mrf.mxu0
      %v2411 = vadd.f32 0.0, %v2410
      %v2412 = vpop.f32.mrf.mxu0
      %v2413 = vpop.f32.mrf.mxu0
      %v2414 = vadd.f32 0.0, %v2413
      %v2415 = vpop.f32.mrf.mxu0
      %2416 = vmatprep.mubr.bf16.mxu0 0
      %2417 = vmatmul.mubr.bf16.gmra.mxu0 %v1814
      %v2418 = vpop.f32.mrf.mxu0
      %v2419 = vadd.f32 0.0, %v2418
      %v2420 = vpop.f32.mrf.mxu0
      %v2421 = vpop.f32.mrf.mxu0
      %v2422 = vadd.f32 0.0, %v2421
      %v2423 = vpop.f32.mrf.mxu0
      %2424 = vmatprep.mubr.bf16.mxu0 0
      %2425 = vmatmul.mubr.bf16.gmra.mxu0 %v1817
      %v2426 = vpop.f32.mrf.mxu0
      %v2427 = vadd.f32 0.0, %v2426
      %v2428 = vpop.f32.mrf.mxu0
      %v2429 = vpop.f32.mrf.mxu0
      %v2430 = vadd.f32 0.0, %v2429
      %v2431 = vpop.f32.mrf.mxu0
      %2432 = vdwg.mxu0
      %v2451 = vcombine.high %v2363, %v2363
      %v2453 = vunpack.c.l.s4 1983009808
      %v2454 = vunpack.c.0.s8 %v2453
      %v2455 = vlaneseq
      %v2456 = vshrl.u32 %v2455, 7
      %v2457 = vsub.s32 %v2454, %v2456
      %v2458 = vrot.slane %v2363, %v2457
      %v2460 = vunpack.c.l.s4 1983009808
      %v2461 = vunpack.c.0.s8 %v2460
      %v2462 = vlaneseq
      %v2463 = vshrl.u32 %v2462, 7
      %v2464 = vsub.s32 %v2461, %v2463
      %v2465 = vrot.slane %v2451, %v2464
      %v2466 = vcombine.high %v2458, %v2458
      %v2467 = vcombine.high %v2465, %v2465
      %v2468 = vcombine.high %v2366, %v2366
      %v2470 = vunpack.c.l.s4 1983009808
      %v2471 = vunpack.c.0.s8 %v2470
      %v2472 = vlaneseq
      %v2473 = vshrl.u32 %v2472, 7
      %v2474 = vsub.s32 %v2471, %v2473
      %v2475 = vrot.slane %v2366, %v2474
      %v2477 = vunpack.c.l.s4 1983009808
      %v2478 = vunpack.c.0.s8 %v2477
      %v2479 = vlaneseq
      %v2480 = vshrl.u32 %v2479, 7
      %v2481 = vsub.s32 %v2478, %v2480
      %v2482 = vrot.slane %v2468, %v2481
      %v2483 = vcombine.high %v2475, %v2475
      %v2484 = vcombine.high %v2482, %v2482
      %v2485 = vcombine.high %v2371, %v2371
      %v2487 = vunpack.c.l.s4 1983009808
      %v2488 = vunpack.c.0.s8 %v2487
      %v2489 = vlaneseq
      %v2490 = vshrl.u32 %v2489, 7
      %v2491 = vsub.s32 %v2488, %v2490
      %v2492 = vrot.slane %v2371, %v2491
      %v2494 = vunpack.c.l.s4 1983009808
      %v2495 = vunpack.c.0.s8 %v2494
      %v2496 = vlaneseq
      %v2497 = vshrl.u32 %v2496, 7
      %v2498 = vsub.s32 %v2495, %v2497
      %v2499 = vrot.slane %v2485, %v2498
      %v2500 = vcombine.high %v2492, %v2492
      %v2501 = vcombine.high %v2499, %v2499
      %v2502 = vcombine.high %v2374, %v2374
      %v2504 = vunpack.c.l.s4 1983009808
      %v2505 = vunpack.c.0.s8 %v2504
      %v2506 = vlaneseq
      %v2507 = vshrl.u32 %v2506, 7
      %v2508 = vsub.s32 %v2505, %v2507
      %v2509 = vrot.slane %v2374, %v2508
      %v2511 = vunpack.c.l.s4 1983009808
      %v2512 = vunpack.c.0.s8 %v2511
      %v2513 = vlaneseq
      %v2514 = vshrl.u32 %v2513, 7
      %v2515 = vsub.s32 %v2512, %v2514
      %v2516 = vrot.slane %v2502, %v2515
      %v2517 = vcombine.high %v2509, %v2509
      %v2518 = vcombine.high %v2516, %v2516
      %v2519 = vcombine.high %v2379, %v2379
      %v2521 = vunpack.c.l.s4 1983009808
      %v2522 = vunpack.c.0.s8 %v2521
      %v2523 = vlaneseq
      %v2524 = vshrl.u32 %v2523, 7
      %v2525 = vsub.s32 %v2522, %v2524
      %v2526 = vrot.slane %v2379, %v2525
      %v2528 = vunpack.c.l.s4 1983009808
      %v2529 = vunpack.c.0.s8 %v2528
      %v2530 = vlaneseq
      %v2531 = vshrl.u32 %v2530, 7
      %v2532 = vsub.s32 %v2529, %v2531
      %v2533 = vrot.slane %v2519, %v2532
      %v2534 = vcombine.high %v2526, %v2526
      %v2535 = vcombine.high %v2533, %v2533
      %v2536 = vcombine.high %v2382, %v2382
      %v2538 = vunpack.c.l.s4 1983009808
      %v2539 = vunpack.c.0.s8 %v2538
      %v2540 = vlaneseq
      %v2541 = vshrl.u32 %v2540, 7
      %v2542 = vsub.s32 %v2539, %v2541
      %v2543 = vrot.slane %v2382, %v2542
      %v2545 = vunpack.c.l.s4 1983009808
      %v2546 = vunpack.c.0.s8 %v2545
      %v2547 = vlaneseq
      %v2548 = vshrl.u32 %v2547, 7
      %v2549 = vsub.s32 %v2546, %v2548
      %v2550 = vrot.slane %v2536, %v2549
      %v2551 = vcombine.high %v2543, %v2543
      %v2552 = vcombine.high %v2550, %v2550
      %v2553 = vcombine.high %v2387, %v2387
      %v2555 = vunpack.c.l.s4 1983009808
      %v2556 = vunpack.c.0.s8 %v2555
      %v2557 = vlaneseq
      %v2558 = vshrl.u32 %v2557, 7
      %v2559 = vsub.s32 %v2556, %v2558
      %v2560 = vrot.slane %v2387, %v2559
      %v2562 = vunpack.c.l.s4 1983009808
      %v2563 = vunpack.c.0.s8 %v2562
      %v2564 = vlaneseq
      %v2565 = vshrl.u32 %v2564, 7
      %v2566 = vsub.s32 %v2563, %v2565
      %v2567 = vrot.slane %v2553, %v2566
      %v2568 = vcombine.high %v2560, %v2560
      %v2569 = vcombine.high %v2567, %v2567
      %v2570 = vcombine.high %v2390, %v2390
      %v2572 = vunpack.c.l.s4 1983009808
      %v2573 = vunpack.c.0.s8 %v2572
      %v2574 = vlaneseq
      %v2575 = vshrl.u32 %v2574, 7
      %v2576 = vsub.s32 %v2573, %v2575
      %v2577 = vrot.slane %v2390, %v2576
      %v2579 = vunpack.c.l.s4 1983009808
      %v2580 = vunpack.c.0.s8 %v2579
      %v2581 = vlaneseq
      %v2582 = vshrl.u32 %v2581, 7
      %v2583 = vsub.s32 %v2580, %v2582
      %v2584 = vrot.slane %v2570, %v2583
      %v2585 = vcombine.high %v2577, %v2577
      %v2586 = vcombine.high %v2584, %v2584
      %v2587 = vcombine.high %v2395, %v2395
      %v2589 = vunpack.c.l.s4 1983009808
      %v2590 = vunpack.c.0.s8 %v2589
      %v2591 = vlaneseq
      %v2592 = vshrl.u32 %v2591, 7
      %v2593 = vsub.s32 %v2590, %v2592
      %v2594 = vrot.slane %v2395, %v2593
      %v2596 = vunpack.c.l.s4 1983009808
      %v2597 = vunpack.c.0.s8 %v2596
      %v2598 = vlaneseq
      %v2599 = vshrl.u32 %v2598, 7
      %v2600 = vsub.s32 %v2597, %v2599
      %v2601 = vrot.slane %v2587, %v2600
      %v2602 = vcombine.high %v2594, %v2594
      %v2603 = vcombine.high %v2601, %v2601
      %v2604 = vcombine.high %v2398, %v2398
      %v2606 = vunpack.c.l.s4 1983009808
      %v2607 = vunpack.c.0.s8 %v2606
      %v2608 = vlaneseq
      %v2609 = vshrl.u32 %v2608, 7
      %v2610 = vsub.s32 %v2607, %v2609
      %v2611 = vrot.slane %v2398, %v2610
      %v2613 = vunpack.c.l.s4 1983009808
      %v2614 = vunpack.c.0.s8 %v2613
      %v2615 = vlaneseq
      %v2616 = vshrl.u32 %v2615, 7
      %v2617 = vsub.s32 %v2614, %v2616
      %v2618 = vrot.slane %v2604, %v2617
      %v2619 = vcombine.high %v2611, %v2611
      %v2620 = vcombine.high %v2618, %v2618
      %v2621 = vcombine.high %v2403, %v2403
      %v2623 = vunpack.c.l.s4 1983009808
      %v2624 = vunpack.c.0.s8 %v2623
      %v2625 = vlaneseq
      %v2626 = vshrl.u32 %v2625, 7
      %v2627 = vsub.s32 %v2624, %v2626
      %v2628 = vrot.slane %v2403, %v2627
      %v2630 = vunpack.c.l.s4 1983009808
      %v2631 = vunpack.c.0.s8 %v2630
      %v2632 = vlaneseq
      %v2633 = vshrl.u32 %v2632, 7
      %v2634 = vsub.s32 %v2631, %v2633
      %v2635 = vrot.slane %v2621, %v2634
      %v2636 = vcombine.high %v2628, %v2628
      %v2637 = vcombine.high %v2635, %v2635
      %v2638 = vcombine.high %v2406, %v2406
      %v2640 = vunpack.c.l.s4 1983009808
      %v2641 = vunpack.c.0.s8 %v2640
      %v2642 = vlaneseq
      %v2643 = vshrl.u32 %v2642, 7
      %v2644 = vsub.s32 %v2641, %v2643
      %v2645 = vrot.slane %v2406, %v2644
      %v2647 = vunpack.c.l.s4 1983009808
      %v2648 = vunpack.c.0.s8 %v2647
      %v2649 = vlaneseq
      %v2650 = vshrl.u32 %v2649, 7
      %v2651 = vsub.s32 %v2648, %v2650
      %v2652 = vrot.slane %v2638, %v2651
      %v2653 = vcombine.high %v2645, %v2645
      %v2654 = vcombine.high %v2652, %v2652
      %v2655 = vcombine.high %v2411, %v2411
      %v2657 = vunpack.c.l.s4 1983009808
      %v2658 = vunpack.c.0.s8 %v2657
      %v2659 = vlaneseq
      %v2660 = vshrl.u32 %v2659, 7
      %v2661 = vsub.s32 %v2658, %v2660
      %v2662 = vrot.slane %v2411, %v2661
      %v2664 = vunpack.c.l.s4 1983009808
      %v2665 = vunpack.c.0.s8 %v2664
      %v2666 = vlaneseq
      %v2667 = vshrl.u32 %v2666, 7
      %v2668 = vsub.s32 %v2665, %v2667
      %v2669 = vrot.slane %v2655, %v2668
      %v2670 = vcombine.high %v2662, %v2662
      %v2671 = vcombine.high %v2669, %v2669
      %v2672 = vcombine.high %v2414, %v2414
      %v2674 = vunpack.c.l.s4 1983009808
      %v2675 = vunpack.c.0.s8 %v2674
      %v2676 = vlaneseq
      %v2677 = vshrl.u32 %v2676, 7
      %v2678 = vsub.s32 %v2675, %v2677
      %v2679 = vrot.slane %v2414, %v2678
      %v2681 = vunpack.c.l.s4 1983009808
      %v2682 = vunpack.c.0.s8 %v2681
      %v2683 = vlaneseq
      %v2684 = vshrl.u32 %v2683, 7
      %v2685 = vsub.s32 %v2682, %v2684
      %v2686 = vrot.slane %v2672, %v2685
      %v2687 = vcombine.high %v2679, %v2679
      %v2688 = vcombine.high %v2686, %v2686
      %v2689 = vcombine.high %v2419, %v2419
      %v2691 = vunpack.c.l.s4 1983009808
      %v2692 = vunpack.c.0.s8 %v2691
      %v2693 = vlaneseq
      %v2694 = vshrl.u32 %v2693, 7
      %v2695 = vsub.s32 %v2692, %v2694
      %v2696 = vrot.slane %v2419, %v2695
      %v2698 = vunpack.c.l.s4 1983009808
      %v2699 = vunpack.c.0.s8 %v2698
      %v2700 = vlaneseq
      %v2701 = vshrl.u32 %v2700, 7
      %v2702 = vsub.s32 %v2699, %v2701
      %v2703 = vrot.slane %v2689, %v2702
      %v2704 = vcombine.high %v2696, %v2696
      %v2705 = vcombine.high %v2703, %v2703
      %v2706 = vcombine.high %v2422, %v2422
      %v2708 = vunpack.c.l.s4 1983009808
      %v2709 = vunpack.c.0.s8 %v2708
      %v2710 = vlaneseq
      %v2711 = vshrl.u32 %v2710, 7
      %v2712 = vsub.s32 %v2709, %v2711
      %v2713 = vrot.slane %v2422, %v2712
      %v2715 = vunpack.c.l.s4 1983009808
      %v2716 = vunpack.c.0.s8 %v2715
      %v2717 = vlaneseq
      %v2718 = vshrl.u32 %v2717, 7
      %v2719 = vsub.s32 %v2716, %v2718
      %v2720 = vrot.slane %v2706, %v2719
      %v2721 = vcombine.high %v2713, %v2713
      %v2722 = vcombine.high %v2720, %v2720
      %v2723 = vcombine.high %v2427, %v2427
      %v2725 = vunpack.c.l.s4 1983009808
      %v2726 = vunpack.c.0.s8 %v2725
      %v2727 = vlaneseq
      %v2728 = vshrl.u32 %v2727, 7
      %v2729 = vsub.s32 %v2726, %v2728
      %v2730 = vrot.slane %v2427, %v2729
      %v2732 = vunpack.c.l.s4 1983009808
      %v2733 = vunpack.c.0.s8 %v2732
      %v2734 = vlaneseq
      %v2735 = vshrl.u32 %v2734, 7
      %v2736 = vsub.s32 %v2733, %v2735
      %v2737 = vrot.slane %v2723, %v2736
      %v2738 = vcombine.high %v2730, %v2730
      %v2739 = vcombine.high %v2737, %v2737
      %v2740 = vcombine.high %v2430, %v2430
      %v2742 = vunpack.c.l.s4 1983009808
      %v2743 = vunpack.c.0.s8 %v2742
      %v2744 = vlaneseq
      %v2745 = vshrl.u32 %v2744, 7
      %v2746 = vsub.s32 %v2743, %v2745
      %v2747 = vrot.slane %v2430, %v2746
      %v2749 = vunpack.c.l.s4 1983009808
      %v2750 = vunpack.c.0.s8 %v2749
      %v2751 = vlaneseq
      %v2752 = vshrl.u32 %v2751, 7
      %v2753 = vsub.s32 %v2750, %v2752
      %v2754 = vrot.slane %v2740, %v2753
      %v2755 = vcombine.high %v2747, %v2747
      %v2756 = vcombine.high %v2754, %v2754
      %vm2757 = vcmask 1040384
      %vm2758 = vcmask 1042434
      %vm2759 = vmor %vm2757, %vm2758
      %vm2760 = vcmask 1044484
      %vm2761 = vmor %vm2759, %vm2760
      %vm2762 = vcmask 1046534
      %vm2763 = vmor %vm2761, %vm2762
      %v2764 = vrot.slane %v2458, 7
      %v2765 = vrot.slane %v2764, 2
      %v2766 = vrot.slane %v2466, 7
      %v2767 = vsel %vm2763, %v2765, %v2766
      %v2768 = vrot.slane %v2766, 2
      %v2769 = vrot.slane %v2465, 7
      %v2770 = vsel %vm2763, %v2768, %v2769
      %v2771 = vrot.slane %v2769, 2
      %v2772 = vrot.slane %v2467, 7
      %v2773 = vsel %vm2763, %v2771, %v2772
      %v2774 = vrot.slane %v2772, 2
      %v2775 = vrot.slane %v2475, 7
      %v2776 = vsel %vm2763, %v2774, %v2775
      %v2777 = vrot.slane %v2775, 2
      %v2778 = vrot.slane %v2483, 7
      %v2779 = vsel %vm2763, %v2777, %v2778
      %v2780 = vrot.slane %v2778, 2
      %v2781 = vrot.slane %v2482, 7
      %v2782 = vsel %vm2763, %v2780, %v2781
      %v2783 = vrot.slane %v2781, 2
      %v2784 = vrot.slane %v2484, 7
      %v2785 = vsel %vm2763, %v2783, %v2784
      %v2786 = vrot.slane %v2784, 2
      %v2787 = vrot.slane %v2492, 7
      %v2788 = vsel %vm2763, %v2786, %v2787
      %v2789 = vrot.slane %v2500, 7
      %v2790 = vrot.slane %v2789, 2
      %v2791 = vrot.slane %v2499, 7
      %v2792 = vsel %vm2763, %v2790, %v2791
      %v2793 = vrot.slane %v2791, 2
      %v2794 = vrot.slane %v2501, 7
      %v2795 = vsel %vm2763, %v2793, %v2794
      %v2796 = vrot.slane %v2794, 2
      %v2797 = vrot.slane %v2509, 7
      %v2798 = vsel %vm2763, %v2796, %v2797
      %v2799 = vrot.slane %v2797, 2
      %v2800 = vrot.slane %v2517, 7
      %v2801 = vsel %vm2763, %v2799, %v2800
      %v2802 = vrot.slane %v2800, 2
      %v2803 = vrot.slane %v2516, 7
      %v2804 = vsel %vm2763, %v2802, %v2803
      %v2805 = vrot.slane %v2803, 2
      %v2806 = vrot.slane %v2518, 7
      %v2807 = vsel %vm2763, %v2805, %v2806
      %v2808 = vrot.slane %v2806, 2
      %v2809 = vrot.slane %v2526, 7
      %v2810 = vsel %vm2763, %v2808, %v2809
      %v2811 = vrot.slane %v2809, 2
      %v2812 = vrot.slane %v2534, 7
      %v2813 = vsel %vm2763, %v2811, %v2812
      %v2814 = vrot.slane %v2533, 7
      %v2815 = vrot.slane %v2814, 2
      %v2816 = vrot.slane %v2535, 7
      %v2817 = vsel %vm2763, %v2815, %v2816
      %v2818 = vrot.slane %v2816, 2
      %v2819 = vrot.slane %v2543, 7
      %v2820 = vsel %vm2763, %v2818, %v2819
      %v2821 = vrot.slane %v2819, 2
      %v2822 = vrot.slane %v2551, 7
      %v2823 = vsel %vm2763, %v2821, %v2822
      %v2824 = vrot.slane %v2822, 2
      %v2825 = vrot.slane %v2550, 7
      %v2826 = vsel %vm2763, %v2824, %v2825
      %v2827 = vrot.slane %v2825, 2
      %v2828 = vrot.slane %v2552, 7
      %v2829 = vsel %vm2763, %v2827, %v2828
      %v2830 = vrot.slane %v2828, 2
      %v2831 = vrot.slane %v2560, 7
      %v2832 = vsel %vm2763, %v2830, %v2831
      %v2833 = vrot.slane %v2831, 2
      %v2834 = vrot.slane %v2568, 7
      %v2835 = vsel %vm2763, %v2833, %v2834
      %v2836 = vrot.slane %v2834, 2
      %v2837 = vrot.slane %v2567, 7
      %v2838 = vsel %vm2763, %v2836, %v2837
      %v2839 = vrot.slane %v2569, 7
      %v2840 = vrot.slane %v2839, 2
      %v2841 = vrot.slane %v2577, 7
      %v2842 = vsel %vm2763, %v2840, %v2841
      %v2843 = vrot.slane %v2841, 2
      %v2844 = vrot.slane %v2585, 7
      %v2845 = vsel %vm2763, %v2843, %v2844
      %v2846 = vrot.slane %v2844, 2
      %v2847 = vrot.slane %v2584, 7
      %v2848 = vsel %vm2763, %v2846, %v2847
      %v2849 = vrot.slane %v2847, 2
      %v2850 = vrot.slane %v2586, 7
      %v2851 = vsel %vm2763, %v2849, %v2850
      %v2852 = vrot.slane %v2850, 2
      %v2853 = vrot.slane %v2594, 7
      %v2854 = vsel %vm2763, %v2852, %v2853
      %v2855 = vrot.slane %v2853, 2
      %v2856 = vrot.slane %v2602, 7
      %v2857 = vsel %vm2763, %v2855, %v2856
      %v2858 = vrot.slane %v2856, 2
      %v2859 = vrot.slane %v2601, 7
      %v2860 = vsel %vm2763, %v2858, %v2859
      %v2861 = vrot.slane %v2859, 2
      %v2862 = vrot.slane %v2603, 7
      %v2863 = vsel %vm2763, %v2861, %v2862
      %v2864 = vrot.slane %v2611, 7
      %v2865 = vrot.slane %v2864, 2
      %v2866 = vrot.slane %v2619, 7
      %v2867 = vsel %vm2763, %v2865, %v2866
      %v2868 = vrot.slane %v2866, 2
      %v2869 = vrot.slane %v2618, 7
      %v2870 = vsel %vm2763, %v2868, %v2869
      %v2871 = vrot.slane %v2869, 2
      %v2872 = vrot.slane %v2620, 7
      %v2873 = vsel %vm2763, %v2871, %v2872
      %v2874 = vrot.slane %v2872, 2
      %v2875 = vrot.slane %v2628, 7
      %v2876 = vsel %vm2763, %v2874, %v2875
      %v2877 = vrot.slane %v2875, 2
      %v2878 = vrot.slane %v2636, 7
      %v2879 = vsel %vm2763, %v2877, %v2878
      %v2880 = vrot.slane %v2878, 2
      %v2881 = vrot.slane %v2635, 7
      %v2882 = vsel %vm2763, %v2880, %v2881
      %v2883 = vrot.slane %v2881, 2
      %v2884 = vrot.slane %v2637, 7
      %v2885 = vsel %vm2763, %v2883, %v2884
      %v2886 = vrot.slane %v2884, 2
      %v2887 = vrot.slane %v2645, 7
      %v2888 = vsel %vm2763, %v2886, %v2887
      %v2889 = vrot.slane %v2653, 7
      %v2890 = vrot.slane %v2889, 2
      %v2891 = vrot.slane %v2652, 7
      %v2892 = vsel %vm2763, %v2890, %v2891
      %v2893 = vrot.slane %v2891, 2
      %v2894 = vrot.slane %v2654, 7
      %v2895 = vsel %vm2763, %v2893, %v2894
      %v2896 = vrot.slane %v2894, 2
      %v2897 = vrot.slane %v2662, 7
      %v2898 = vsel %vm2763, %v2896, %v2897
      %v2899 = vrot.slane %v2897, 2
      %v2900 = vrot.slane %v2670, 7
      %v2901 = vsel %vm2763, %v2899, %v2900
      %v2902 = vrot.slane %v2900, 2
      %v2903 = vrot.slane %v2669, 7
      %v2904 = vsel %vm2763, %v2902, %v2903
      %v2905 = vrot.slane %v2903, 2
      %v2906 = vrot.slane %v2671, 7
      %v2907 = vsel %vm2763, %v2905, %v2906
      %v2908 = vrot.slane %v2906, 2
      %v2909 = vrot.slane %v2679, 7
      %v2910 = vsel %vm2763, %v2908, %v2909
      %v2911 = vrot.slane %v2909, 2
      %v2912 = vrot.slane %v2687, 7
      %v2913 = vsel %vm2763, %v2911, %v2912
      %v2914 = vrot.slane %v2686, 7
      %v2915 = vrot.slane %v2914, 2
      %v2916 = vrot.slane %v2688, 7
      %v2917 = vsel %vm2763, %v2915, %v2916
      %v2918 = vrot.slane %v2916, 2
      %v2919 = vrot.slane %v2696, 7
      %v2920 = vsel %vm2763, %v2918, %v2919
      %v2921 = vrot.slane %v2919, 2
      %v2922 = vrot.slane %v2704, 7
      %v2923 = vsel %vm2763, %v2921, %v2922
      %v2924 = vrot.slane %v2922, 2
      %v2925 = vrot.slane %v2703, 7
      %v2926 = vsel %vm2763, %v2924, %v2925
      %v2927 = vrot.slane %v2925, 2
      %v2928 = vrot.slane %v2705, 7
      %v2929 = vsel %vm2763, %v2927, %v2928
      %v2930 = vrot.slane %v2928, 2
      %v2931 = vrot.slane %v2713, 7
      %v2932 = vsel %vm2763, %v2930, %v2931
      %v2933 = vrot.slane %v2931, 2
      %v2934 = vrot.slane %v2721, 7
      %v2935 = vsel %vm2763, %v2933, %v2934
      %v2936 = vrot.slane %v2934, 2
      %v2937 = vrot.slane %v2720, 7
      %v2938 = vsel %vm2763, %v2936, %v2937
      %v2939 = vrot.slane %v2722, 7
      %v2940 = vrot.slane %v2939, 2
      %v2941 = vrot.slane %v2730, 7
      %v2942 = vsel %vm2763, %v2940, %v2941
      %v2943 = vrot.slane %v2941, 2
      %v2944 = vrot.slane %v2738, 7
      %v2945 = vsel %vm2763, %v2943, %v2944
      %v2946 = vrot.slane %v2944, 2
      %v2947 = vrot.slane %v2737, 7
      %v2948 = vsel %vm2763, %v2946, %v2947
      %v2949 = vrot.slane %v2947, 2
      %v2950 = vrot.slane %v2739, 7
      %v2951 = vsel %vm2763, %v2949, %v2950
      %v2952 = vrot.slane %v2950, 2
      %v2953 = vrot.slane %v2747, 7
      %v2954 = vsel %vm2763, %v2952, %v2953
      %v2955 = vrot.slane %v2953, 2
      %v2956 = vrot.slane %v2755, 7
      %v2957 = vsel %vm2763, %v2955, %v2956
      %v2958 = vrot.slane %v2956, 2
      %v2959 = vrot.slane %v2754, 7
      %v2960 = vsel %vm2763, %v2958, %v2959
      %v2961 = vrot.slane %v2959, 2
      %v2962 = vrot.slane %v2756, 7
      %v2963 = vsel %vm2763, %v2961, %v2962
      %v3028 = vadd.f32 %v1953, %v2767
      %v3029 = vadd.f32 %v1961, %v2770
      %v3030 = vadd.f32 %v1960, %v2773
      %v3031 = vadd.f32 %v1962, %v2776
      %v3032 = vadd.f32 %v1970, %v2779
      %v3033 = vadd.f32 %v1978, %v2782
      %v3034 = vadd.f32 %v1977, %v2785
      %v3035 = vadd.f32 %v1979, %v2788
      %v3036 = vadd.f32 %v1995, %v2792
      %v3037 = vadd.f32 %v1994, %v2795
      %v3038 = vadd.f32 %v1996, %v2798
      %v3039 = vadd.f32 %v2004, %v2801
      %v3040 = vadd.f32 %v2012, %v2804
      %v3041 = vadd.f32 %v2011, %v2807
      %v3042 = vadd.f32 %v2013, %v2810
      %v3043 = vadd.f32 %v2021, %v2813
      %v3044 = vadd.f32 %v2028, %v2817
      %v3045 = vadd.f32 %v2029, %v2820
      %v3046 = vadd.f32 %v2037, %v2823
      %v3047 = vadd.f32 %v2045, %v2826
      %v3048 = vadd.f32 %v2044, %v2829
      %v3049 = vadd.f32 %v2046, %v2832
      %v3050 = vadd.f32 %v2054, %v2835
      %v3051 = vadd.f32 %v2062, %v2838
      %v3052 = vadd.f32 %v2063, %v2842
      %v3053 = vadd.f32 %v2071, %v2845
      %v3054 = vadd.f32 %v2079, %v2848
      %v3055 = vadd.f32 %v2078, %v2851
      %v3056 = vadd.f32 %v2080, %v2854
      %v3057 = vadd.f32 %v2088, %v2857
      %v3058 = vadd.f32 %v2096, %v2860
      %v3059 = vadd.f32 %v2095, %v2863
      %v3060 = vadd.f32 %v2104, %v2867
      %v3061 = vadd.f32 %v2112, %v2870
      %v3062 = vadd.f32 %v2111, %v2873
      %v3063 = vadd.f32 %v2113, %v2876
      %v3064 = vadd.f32 %v2121, %v2879
      %v3065 = vadd.f32 %v2129, %v2882
      %v3066 = vadd.f32 %v2128, %v2885
      %v3067 = vadd.f32 %v2130, %v2888
      %v3068 = vadd.f32 %v2146, %v2892
      %v3069 = vadd.f32 %v2145, %v2895
      %v3070 = vadd.f32 %v2147, %v2898
      %v3071 = vadd.f32 %v2155, %v2901
      %v3072 = vadd.f32 %v2163, %v2904
      %v3073 = vadd.f32 %v2162, %v2907
      %v3074 = vadd.f32 %v2164, %v2910
      %v3075 = vadd.f32 %v2172, %v2913
      %v3076 = vadd.f32 %v2179, %v2917
      %v3077 = vadd.f32 %v2180, %v2920
      %v3078 = vadd.f32 %v2188, %v2923
      %v3079 = vadd.f32 %v2196, %v2926
      %v3080 = vadd.f32 %v2195, %v2929
      %v3081 = vadd.f32 %v2197, %v2932
      %v3082 = vadd.f32 %v2205, %v2935
      %v3083 = vadd.f32 %v2213, %v2938
      %v3084 = vadd.f32 %v2214, %v2942
      %v3085 = vadd.f32 %v2222, %v2945
      %v3086 = vadd.f32 %v2230, %v2948
      %v3087 = vadd.f32 %v2229, %v2951
      %v3088 = vadd.f32 %v2231, %v2954
      %v3089 = vadd.f32 %v2239, %v2957
      %v3090 = vadd.f32 %v2247, %v2960
      %v3091 = vadd.f32 %v2246, %v2963
      %s3092 = scalar_lea.vmem %s5, 24
      %v3093 = vld [vmem:[%s3092] sm:$0xf]
      %v3094 = vld [vmem:[%s3092 + $0x4] sm:$0xf]
      %v3095 = vld [vmem:[%s3092 + $0x8] sm:$0xf]
      %v3099 = vunpack.c.l.b16 %v3093
      %v3100 = vunpack.c.l.b16 %v3094
      %v3101 = vunpack.c.l.b16 %v3095
      %v3102 = vpack.c.b16 %v3100, %v3099
      %v3103 = vpack.c.b16 %v3101, %v3101
      %v3106 = vsel %vm1819, %v3103, 0
      %3108 = vmatprep.subr.bf16.mxu0 0
      %3109 = vmatpush1.bf16.msra.mxu0 0
      %3110 = vmatprep.subr.bf16.mxu0 0
      %3111 = vmatpush1.bf16.msra.mxu0 0
      %3112 = vmatprep.subr.bf16.mxu0 0
      %3113 = vmatpush1.bf16.msra.mxu0 0
      %3114 = vmatprep.subr.bf16.mxu0 0
      %3115 = vmatpush1.bf16.msra.mxu0 0
      %3116 = vmatprep.subr.bf16.mxu0 0
      %3117 = vmatpush1.bf16.msra.mxu0 0
      %3118 = vmatprep.subr.bf16.mxu0 0
      %3119 = vmatpush1.bf16.msra.mxu0 0
      %3120 = vmatprep.subr.bf16.mxu0 0
      %3121 = vmatpush1.bf16.msra.mxu0 %v3106
      %3122 = vmatprep.subr.bf16.mxu0 0
      %3123 = vmatpush1.bf16.msra.mxu0 %v3102
      %3124 = vmatprep.subr.bf16.mxu0 0
      %3125 = vmatpush2.bf16.msra.mxu0 0
      %3126 = vmatprep.subr.bf16.mxu0 0
      %3127 = vmatpush2.bf16.msra.mxu0 0
      %3128 = vmatprep.subr.bf16.mxu0 0
      %3129 = vmatpush2.bf16.msra.mxu0 0
      %3130 = vmatprep.subr.bf16.mxu0 0
      %3131 = vmatpush2.bf16.msra.mxu0 0
      %3132 = vmatprep.subr.bf16.mxu0 0
      %3133 = vmatpush2.bf16.msra.mxu0 0
      %3134 = vmatprep.subr.bf16.mxu0 0
      %3135 = vmatpush2.bf16.msra.mxu0 0
      %3136 = vmatprep.subr.bf16.mxu0 0
      %3137 = vmatpush2.bf16.msra.mxu0 0
      %3138 = vmatprep.subr.bf16.mxu0 0
      %3139 = vmatpush2.bf16.msra.mxu0 0
      %3140 = vmatprep.mubr.bf16.mxu0 0
      %3141 = vmatmul.mubr.bf16.gmra.mxu0 %v1793
      %v3142 = vpop.f32.mrf.mxu0
      %v3143 = vadd.f32 0.0, %v3142
      %v3144 = vpop.f32.mrf.mxu0
      %v3145 = vpop.f32.mrf.mxu0
      %v3146 = vadd.f32 0.0, %v3145
      %v3147 = vpop.f32.mrf.mxu0
      %3148 = vmatprep.mubr.bf16.mxu0 0
      %3149 = vmatmul.mubr.bf16.gmra.mxu0 %v1796
      %v3150 = vpop.f32.mrf.mxu0
      %v3151 = vadd.f32 0.0, %v3150
      %v3152 = vpop.f32.mrf.mxu0
      %v3153 = vpop.f32.mrf.mxu0
      %v3154 = vadd.f32 0.0, %v3153
      %v3155 = vpop.f32.mrf.mxu0
      %3156 = vmatprep.mubr.bf16.mxu0 0
      %3157 = vmatmul.mubr.bf16.gmra.mxu0 %v1799
      %v3158 = vpop.f32.mrf.mxu0
      %v3159 = vadd.f32 0.0, %v3158
      %v3160 = vpop.f32.mrf.mxu0
      %v3161 = vpop.f32.mrf.mxu0
      %v3162 = vadd.f32 0.0, %v3161
      %v3163 = vpop.f32.mrf.mxu0
      %3164 = vmatprep.mubr.bf16.mxu0 0
      %3165 = vmatmul.mubr.bf16.gmra.mxu0 %v1802
      %v3166 = vpop.f32.mrf.mxu0
      %v3167 = vadd.f32 0.0, %v3166
      %v3168 = vpop.f32.mrf.mxu0
      %v3169 = vpop.f32.mrf.mxu0
      %v3170 = vadd.f32 0.0, %v3169
      %v3171 = vpop.f32.mrf.mxu0
      %3172 = vmatprep.mubr.bf16.mxu0 0
      %3173 = vmatmul.mubr.bf16.gmra.mxu0 %v1805
      %v3174 = vpop.f32.mrf.mxu0
      %v3175 = vadd.f32 0.0, %v3174
      %v3176 = vpop.f32.mrf.mxu0
      %v3177 = vpop.f32.mrf.mxu0
      %v3178 = vadd.f32 0.0, %v3177
      %v3179 = vpop.f32.mrf.mxu0
      %3180 = vmatprep.mubr.bf16.mxu0 0
      %3181 = vmatmul.mubr.bf16.gmra.mxu0 %v1808
      %v3182 = vpop.f32.mrf.mxu0
      %v3183 = vadd.f32 0.0, %v3182
      %v3184 = vpop.f32.mrf.mxu0
      %v3185 = vpop.f32.mrf.mxu0
      %v3186 = vadd.f32 0.0, %v3185
      %v3187 = vpop.f32.mrf.mxu0
      %3188 = vmatprep.mubr.bf16.mxu0 0
      %3189 = vmatmul.mubr.bf16.gmra.mxu0 %v1811
      %v3190 = vpop.f32.mrf.mxu0
      %v3191 = vadd.f32 0.0, %v3190
      %v3192 = vpop.f32.mrf.mxu0
      %v3193 = vpop.f32.mrf.mxu0
      %v3194 = vadd.f32 0.0, %v3193
      %v3195 = vpop.f32.mrf.mxu0
      %3196 = vmatprep.mubr.bf16.mxu0 0
      %3197 = vmatmul.mubr.bf16.gmra.mxu0 %v1814
      %v3198 = vpop.f32.mrf.mxu0
      %v3199 = vadd.f32 0.0, %v3198
      %v3200 = vpop.f32.mrf.mxu0
      %v3201 = vpop.f32.mrf.mxu0
      %v3202 = vadd.f32 0.0, %v3201
      %v3203 = vpop.f32.mrf.mxu0
      %3204 = vmatprep.mubr.bf16.mxu0 0
      %3205 = vmatmul.mubr.bf16.gmra.mxu0 %v1817
      %v3206 = vpop.f32.mrf.mxu0
      %v3207 = vadd.f32 0.0, %v3206
      %v3208 = vpop.f32.mrf.mxu0
      %v3209 = vpop.f32.mrf.mxu0
      %v3210 = vadd.f32 0.0, %v3209
      %v3211 = vpop.f32.mrf.mxu0
      %3212 = vdwg.mxu0
      %v3231 = vcombine.high %v3143, %v3143
      %v3233 = vunpack.c.l.s4 1983009808
      %v3234 = vunpack.c.0.s8 %v3233
      %v3235 = vlaneseq
      %v3236 = vshrl.u32 %v3235, 7
      %v3237 = vsub.s32 %v3234, %v3236
      %v3238 = vrot.slane %v3143, %v3237
      %v3240 = vunpack.c.l.s4 1983009808
      %v3241 = vunpack.c.0.s8 %v3240
      %v3242 = vlaneseq
      %v3243 = vshrl.u32 %v3242, 7
      %v3244 = vsub.s32 %v3241, %v3243
      %v3245 = vrot.slane %v3231, %v3244
      %v3246 = vcombine.high %v3238, %v3238
      %v3247 = vcombine.high %v3245, %v3245
      %v3248 = vcombine.high %v3146, %v3146
      %v3250 = vunpack.c.l.s4 1983009808
      %v3251 = vunpack.c.0.s8 %v3250
      %v3252 = vlaneseq
      %v3253 = vshrl.u32 %v3252, 7
      %v3254 = vsub.s32 %v3251, %v3253
      %v3255 = vrot.slane %v3146, %v3254
      %v3257 = vunpack.c.l.s4 1983009808
      %v3258 = vunpack.c.0.s8 %v3257
      %v3259 = vlaneseq
      %v3260 = vshrl.u32 %v3259, 7
      %v3261 = vsub.s32 %v3258, %v3260
      %v3262 = vrot.slane %v3248, %v3261
      %v3263 = vcombine.high %v3255, %v3255
      %v3264 = vcombine.high %v3262, %v3262
      %v3265 = vcombine.high %v3151, %v3151
      %v3267 = vunpack.c.l.s4 1983009808
      %v3268 = vunpack.c.0.s8 %v3267
      %v3269 = vlaneseq
      %v3270 = vshrl.u32 %v3269, 7
      %v3271 = vsub.s32 %v3268, %v3270
      %v3272 = vrot.slane %v3151, %v3271
      %v3274 = vunpack.c.l.s4 1983009808
      %v3275 = vunpack.c.0.s8 %v3274
      %v3276 = vlaneseq
      %v3277 = vshrl.u32 %v3276, 7
      %v3278 = vsub.s32 %v3275, %v3277
      %v3279 = vrot.slane %v3265, %v3278
      %v3280 = vcombine.high %v3279, %v3279
      %v3281 = vcombine.high %v3154, %v3154
      %v3283 = vunpack.c.l.s4 1983009808
      %v3284 = vunpack.c.0.s8 %v3283
      %v3285 = vlaneseq
      %v3286 = vshrl.u32 %v3285, 7
      %v3287 = vsub.s32 %v3284, %v3286
      %v3288 = vrot.slane %v3154, %v3287
      %v3290 = vunpack.c.l.s4 1983009808
      %v3291 = vunpack.c.0.s8 %v3290
      %v3292 = vlaneseq
      %v3293 = vshrl.u32 %v3292, 7
      %v3294 = vsub.s32 %v3291, %v3293
      %v3295 = vrot.slane %v3281, %v3294
      %v3296 = vcombine.high %v3288, %v3288
      %v3297 = vcombine.high %v3295, %v3295
      %v3298 = vcombine.high %v3159, %v3159
      %v3300 = vunpack.c.l.s4 1983009808
      %v3301 = vunpack.c.0.s8 %v3300
      %v3302 = vlaneseq
      %v3303 = vshrl.u32 %v3302, 7
      %v3304 = vsub.s32 %v3301, %v3303
      %v3305 = vrot.slane %v3159, %v3304
      %v3307 = vunpack.c.l.s4 1983009808
      %v3308 = vunpack.c.0.s8 %v3307
      %v3309 = vlaneseq
      %v3310 = vshrl.u32 %v3309, 7
      %v3311 = vsub.s32 %v3308, %v3310
      %v3312 = vrot.slane %v3298, %v3311
      %v3313 = vcombine.high %v3305, %v3305
      %v3314 = vcombine.high %v3312, %v3312
      %v3315 = vcombine.high %v3162, %v3162
      %v3317 = vunpack.c.l.s4 1983009808
      %v3318 = vunpack.c.0.s8 %v3317
      %v3319 = vlaneseq
      %v3320 = vshrl.u32 %v3319, 7
      %v3321 = vsub.s32 %v3318, %v3320
      %v3322 = vrot.slane %v3162, %v3321
      %v3324 = vunpack.c.l.s4 1983009808
      %v3325 = vunpack.c.0.s8 %v3324
      %v3326 = vlaneseq
      %v3327 = vshrl.u32 %v3326, 7
      %v3328 = vsub.s32 %v3325, %v3327
      %v3329 = vrot.slane %v3315, %v3328
      %v3330 = vcombine.high %v3322, %v3322
      %v3331 = vcombine.high %v3329, %v3329
      %v3332 = vcombine.high %v3167, %v3167
      %v3334 = vunpack.c.l.s4 1983009808
      %v3335 = vunpack.c.0.s8 %v3334
      %v3336 = vlaneseq
      %v3337 = vshrl.u32 %v3336, 7
      %v3338 = vsub.s32 %v3335, %v3337
      %v3339 = vrot.slane %v3167, %v3338
      %v3341 = vunpack.c.l.s4 1983009808
      %v3342 = vunpack.c.0.s8 %v3341
      %v3343 = vlaneseq
      %v3344 = vshrl.u32 %v3343, 7
      %v3345 = vsub.s32 %v3342, %v3344
      %v3346 = vrot.slane %v3332, %v3345
      %v3347 = vcombine.high %v3339, %v3339
      %v3348 = vcombine.high %v3170, %v3170
      %v3350 = vunpack.c.l.s4 1983009808
      %v3351 = vunpack.c.0.s8 %v3350
      %v3352 = vlaneseq
      %v3353 = vshrl.u32 %v3352, 7
      %v3354 = vsub.s32 %v3351, %v3353
      %v3355 = vrot.slane %v3170, %v3354
      %v3357 = vunpack.c.l.s4 1983009808
      %v3358 = vunpack.c.0.s8 %v3357
      %v3359 = vlaneseq
      %v3360 = vshrl.u32 %v3359, 7
      %v3361 = vsub.s32 %v3358, %v3360
      %v3362 = vrot.slane %v3348, %v3361
      %v3363 = vcombine.high %v3355, %v3355
      %v3364 = vcombine.high %v3362, %v3362
      %v3365 = vcombine.high %v3175, %v3175
      %v3367 = vunpack.c.l.s4 1983009808
      %v3368 = vunpack.c.0.s8 %v3367
      %v3369 = vlaneseq
      %v3370 = vshrl.u32 %v3369, 7
      %v3371 = vsub.s32 %v3368, %v3370
      %v3372 = vrot.slane %v3175, %v3371
      %v3374 = vunpack.c.l.s4 1983009808
      %v3375 = vunpack.c.0.s8 %v3374
      %v3376 = vlaneseq
      %v3377 = vshrl.u32 %v3376, 7
      %v3378 = vsub.s32 %v3375, %v3377
      %v3379 = vrot.slane %v3365, %v3378
      %v3380 = vcombine.high %v3372, %v3372
      %v3381 = vcombine.high %v3379, %v3379
      %v3382 = vcombine.high %v3178, %v3178
      %v3384 = vunpack.c.l.s4 1983009808
      %v3385 = vunpack.c.0.s8 %v3384
      %v3386 = vlaneseq
      %v3387 = vshrl.u32 %v3386, 7
      %v3388 = vsub.s32 %v3385, %v3387
      %v3389 = vrot.slane %v3178, %v3388
      %v3391 = vunpack.c.l.s4 1983009808
      %v3392 = vunpack.c.0.s8 %v3391
      %v3393 = vlaneseq
      %v3394 = vshrl.u32 %v3393, 7
      %v3395 = vsub.s32 %v3392, %v3394
      %v3396 = vrot.slane %v3382, %v3395
      %v3397 = vcombine.high %v3389, %v3389
      %v3398 = vcombine.high %v3396, %v3396
      %v3399 = vcombine.high %v3183, %v3183
      %v3401 = vunpack.c.l.s4 1983009808
      %v3402 = vunpack.c.0.s8 %v3401
      %v3403 = vlaneseq
      %v3404 = vshrl.u32 %v3403, 7
      %v3405 = vsub.s32 %v3402, %v3404
      %v3406 = vrot.slane %v3183, %v3405
      %v3408 = vunpack.c.l.s4 1983009808
      %v3409 = vunpack.c.0.s8 %v3408
      %v3410 = vlaneseq
      %v3411 = vshrl.u32 %v3410, 7
      %v3412 = vsub.s32 %v3409, %v3411
      %v3413 = vrot.slane %v3399, %v3412
      %v3414 = vcombine.high %v3406, %v3406
      %v3415 = vcombine.high %v3413, %v3413
      %v3416 = vcombine.high %v3186, %v3186
      %v3418 = vunpack.c.l.s4 1983009808
      %v3419 = vunpack.c.0.s8 %v3418
      %v3420 = vlaneseq
      %v3421 = vshrl.u32 %v3420, 7
      %v3422 = vsub.s32 %v3419, %v3421
      %v3423 = vrot.slane %v3186, %v3422
      %v3425 = vunpack.c.l.s4 1983009808
      %v3426 = vunpack.c.0.s8 %v3425
      %v3427 = vlaneseq
      %v3428 = vshrl.u32 %v3427, 7
      %v3429 = vsub.s32 %v3426, %v3428
      %v3430 = vrot.slane %v3416, %v3429
      %v3431 = vcombine.high %v3430, %v3430
      %v3432 = vcombine.high %v3191, %v3191
      %v3434 = vunpack.c.l.s4 1983009808
      %v3435 = vunpack.c.0.s8 %v3434
      %v3436 = vlaneseq
      %v3437 = vshrl.u32 %v3436, 7
      %v3438 = vsub.s32 %v3435, %v3437
      %v3439 = vrot.slane %v3191, %v3438
      %v3441 = vunpack.c.l.s4 1983009808
      %v3442 = vunpack.c.0.s8 %v3441
      %v3443 = vlaneseq
      %v3444 = vshrl.u32 %v3443, 7
      %v3445 = vsub.s32 %v3442, %v3444
      %v3446 = vrot.slane %v3432, %v3445
      %v3447 = vcombine.high %v3439, %v3439
      %v3448 = vcombine.high %v3446, %v3446
      %v3449 = vcombine.high %v3194, %v3194
      %v3451 = vunpack.c.l.s4 1983009808
      %v3452 = vunpack.c.0.s8 %v3451
      %v3453 = vlaneseq
      %v3454 = vshrl.u32 %v3453, 7
      %v3455 = vsub.s32 %v3452, %v3454
      %v3456 = vrot.slane %v3194, %v3455
      %v3458 = vunpack.c.l.s4 1983009808
      %v3459 = vunpack.c.0.s8 %v3458
      %v3460 = vlaneseq
      %v3461 = vshrl.u32 %v3460, 7
      %v3462 = vsub.s32 %v3459, %v3461
      %v3463 = vrot.slane %v3449, %v3462
      %v3464 = vcombine.high %v3456, %v3456
      %v3465 = vcombine.high %v3463, %v3463
      %v3466 = vcombine.high %v3199, %v3199
      %v3468 = vunpack.c.l.s4 1983009808
      %v3469 = vunpack.c.0.s8 %v3468
      %v3470 = vlaneseq
      %v3471 = vshrl.u32 %v3470, 7
      %v3472 = vsub.s32 %v3469, %v3471
      %v3473 = vrot.slane %v3199, %v3472
      %v3475 = vunpack.c.l.s4 1983009808
      %v3476 = vunpack.c.0.s8 %v3475
      %v3477 = vlaneseq
      %v3478 = vshrl.u32 %v3477, 7
      %v3479 = vsub.s32 %v3476, %v3478
      %v3480 = vrot.slane %v3466, %v3479
      %v3481 = vcombine.high %v3473, %v3473
      %v3482 = vcombine.high %v3480, %v3480
      %v3483 = vcombine.high %v3202, %v3202
      %v3485 = vunpack.c.l.s4 1983009808
      %v3486 = vunpack.c.0.s8 %v3485
      %v3487 = vlaneseq
      %v3488 = vshrl.u32 %v3487, 7
      %v3489 = vsub.s32 %v3486, %v3488
      %v3490 = vrot.slane %v3202, %v3489
      %v3492 = vunpack.c.l.s4 1983009808
      %v3493 = vunpack.c.0.s8 %v3492
      %v3494 = vlaneseq
      %v3495 = vshrl.u32 %v3494, 7
      %v3496 = vsub.s32 %v3493, %v3495
      %v3497 = vrot.slane %v3483, %v3496
      %v3498 = vcombine.high %v3490, %v3490
      %v3499 = vcombine.high %v3207, %v3207
      %v3501 = vunpack.c.l.s4 1983009808
      %v3502 = vunpack.c.0.s8 %v3501
      %v3503 = vlaneseq
      %v3504 = vshrl.u32 %v3503, 7
      %v3505 = vsub.s32 %v3502, %v3504
      %v3506 = vrot.slane %v3207, %v3505
      %v3508 = vunpack.c.l.s4 1983009808
      %v3509 = vunpack.c.0.s8 %v3508
      %v3510 = vlaneseq
      %v3511 = vshrl.u32 %v3510, 7
      %v3512 = vsub.s32 %v3509, %v3511
      %v3513 = vrot.slane %v3499, %v3512
      %v3514 = vcombine.high %v3506, %v3506
      %v3515 = vcombine.high %v3513, %v3513
      %v3516 = vcombine.high %v3210, %v3210
      %v3518 = vunpack.c.l.s4 1983009808
      %v3519 = vunpack.c.0.s8 %v3518
      %v3520 = vlaneseq
      %v3521 = vshrl.u32 %v3520, 7
      %v3522 = vsub.s32 %v3519, %v3521
      %v3523 = vrot.slane %v3210, %v3522
      %v3525 = vunpack.c.l.s4 1983009808
      %v3526 = vunpack.c.0.s8 %v3525
      %v3527 = vlaneseq
      %v3528 = vshrl.u32 %v3527, 7
      %v3529 = vsub.s32 %v3526, %v3528
      %v3530 = vrot.slane %v3516, %v3529
      %v3531 = vcombine.high %v3523, %v3523
      %v3532 = vcombine.high %v3530, %v3530
      %v3597 = vadd.f32 %v3028, %v3246
      %v3598 = vadd.f32 %v3029, %v3245
      %v3599 = vadd.f32 %v3030, %v3247
      %v3600 = vadd.f32 %v3031, %v3255
      %v3601 = vadd.f32 %v3032, %v3263
      %v3602 = vadd.f32 %v3033, %v3262
      %v3603 = vadd.f32 %v3034, %v3264
      %v3604 = vadd.f32 %v3035, %v3272
      %v3605 = vadd.f32 %v3036, %v3279
      %v3606 = vadd.f32 %v3037, %v3280
      %v3607 = vadd.f32 %v3038, %v3288
      %v3608 = vadd.f32 %v3039, %v3296
      %v3609 = vadd.f32 %v3040, %v3295
      %v3610 = vadd.f32 %v3041, %v3297
      %v3611 = vadd.f32 %v3042, %v3305
      %v3612 = vadd.f32 %v3043, %v3313
      %v3613 = vadd.f32 %v3044, %v3314
      %v3614 = vadd.f32 %v3045, %v3322
      %v3615 = vadd.f32 %v3046, %v3330
      %v3616 = vadd.f32 %v3047, %v3329
      %v3617 = vadd.f32 %v3048, %v3331
      %v3618 = vadd.f32 %v3049, %v3339
      %v3619 = vadd.f32 %v3050, %v3347
      %v3620 = vadd.f32 %v3051, %v3346
      %v3621 = vadd.f32 %v3052, %v3355
      %v3622 = vadd.f32 %v3053, %v3363
      %v3623 = vadd.f32 %v3054, %v3362
      %v3624 = vadd.f32 %v3055, %v3364
      %v3625 = vadd.f32 %v3056, %v3372
      %v3626 = vadd.f32 %v3057, %v3380
      %v3627 = vadd.f32 %v3058, %v3379
      %v3628 = vadd.f32 %v3059, %v3381
      %v3629 = vadd.f32 %v3060, %v3397
      %v3630 = vadd.f32 %v3061, %v3396
      %v3631 = vadd.f32 %v3062, %v3398
      %v3632 = vadd.f32 %v3063, %v3406
      %v3633 = vadd.f32 %v3064, %v3414
      %v3634 = vadd.f32 %v3065, %v3413
      %v3635 = vadd.f32 %v3066, %v3415
      %v3636 = vadd.f32 %v3067, %v3423
      %v3637 = vadd.f32 %v3068, %v3430
      %v3638 = vadd.f32 %v3069, %v3431
      %v3639 = vadd.f32 %v3070, %v3439
      %v3640 = vadd.f32 %v3071, %v3447
      %v3641 = vadd.f32 %v3072, %v3446
      %v3642 = vadd.f32 %v3073, %v3448
      %v3643 = vadd.f32 %v3074, %v3456
      %v3644 = vadd.f32 %v3075, %v3464
      %v3645 = vadd.f32 %v3076, %v3465
      %v3646 = vadd.f32 %v3077, %v3473
      %v3647 = vadd.f32 %v3078, %v3481
      %v3648 = vadd.f32 %v3079, %v3480
      %v3649 = vadd.f32 %v3080, %v3482
      %v3650 = vadd.f32 %v3081, %v3490
      %v3651 = vadd.f32 %v3082, %v3498
      %v3652 = vadd.f32 %v3083, %v3497
      %v3653 = vadd.f32 %v3084, %v3506
      %v3654 = vadd.f32 %v3085, %v3514
      %v3655 = vadd.f32 %v3086, %v3513
      %v3656 = vadd.f32 %v3087, %v3515
      %v3657 = vadd.f32 %v3088, %v3523
      %v3658 = vadd.f32 %v3089, %v3531
      %v3659 = vadd.f32 %v3090, %v3530
      %v3660 = vadd.f32 %v3091, %v3532
      %v3725 = vcombine.low %v3597, %v3598
      %v3726 = vcombine.low %v3599, %v3600
      %v3728 = vunpack.c.l.s4 1983009808
      %v3729 = vunpack.c.0.s8 %v3728
      %v3730 = vlaneseq
      %v3731 = vshrl.u32 %v3730, 7
      %v3732 = vsub.s32 %v3729, %v3731
      %v3733 = vrot.slane %v3725, %v3732
      %v3735 = vunpack.c.l.s4 1983009808
      %v3736 = vunpack.c.0.s8 %v3735
      %v3737 = vlaneseq
      %v3738 = vshrl.u32 %v3737, 7
      %v3739 = vsub.s32 %v3736, %v3738
      %v3740 = vrot.slane %v3726, %v3739
      %v3741 = vcombine.low %v3733, %v3740
      %v3742 = vcombine.low %v3601, %v3602
      %v3743 = vcombine.low %v3603, %v3604
      %v3745 = vunpack.c.l.s4 1983009808
      %v3746 = vunpack.c.0.s8 %v3745
      %v3747 = vlaneseq
      %v3748 = vshrl.u32 %v3747, 7
      %v3749 = vsub.s32 %v3746, %v3748
      %v3750 = vrot.slane %v3742, %v3749
      %v3752 = vunpack.c.l.s4 1983009808
      %v3753 = vunpack.c.0.s8 %v3752
      %v3754 = vlaneseq
      %v3755 = vshrl.u32 %v3754, 7
      %v3756 = vsub.s32 %v3753, %v3755
      %v3757 = vrot.slane %v3743, %v3756
      %v3758 = vcombine.low %v3750, %v3757
      %v3759 = vcombine.low %v3605, %v3606
      %v3760 = vcombine.low %v3607, %v3608
      %v3762 = vunpack.c.l.s4 1983009808
      %v3763 = vunpack.c.0.s8 %v3762
      %v3764 = vlaneseq
      %v3765 = vshrl.u32 %v3764, 7
      %v3766 = vsub.s32 %v3763, %v3765
      %v3767 = vrot.slane %v3759, %v3766
      %v3769 = vunpack.c.l.s4 1983009808
      %v3770 = vunpack.c.0.s8 %v3769
      %v3771 = vlaneseq
      %v3772 = vshrl.u32 %v3771, 7
      %v3773 = vsub.s32 %v3770, %v3772
      %v3774 = vrot.slane %v3760, %v3773
      %v3775 = vcombine.low %v3767, %v3774
      %v3776 = vcombine.low %v3609, %v3610
      %v3777 = vcombine.low %v3611, %v3612
      %v3779 = vunpack.c.l.s4 1983009808
      %v3780 = vunpack.c.0.s8 %v3779
      %v3781 = vlaneseq
      %v3782 = vshrl.u32 %v3781, 7
      %v3783 = vsub.s32 %v3780, %v3782
      %v3784 = vrot.slane %v3776, %v3783
      %v3786 = vunpack.c.l.s4 1983009808
      %v3787 = vunpack.c.0.s8 %v3786
      %v3788 = vlaneseq
      %v3789 = vshrl.u32 %v3788, 7
      %v3790 = vsub.s32 %v3787, %v3789
      %v3791 = vrot.slane %v3777, %v3790
      %v3792 = vcombine.low %v3784, %v3791
      %v3793 = vcombine.low %v3613, %v3614
      %v3794 = vcombine.low %v3615, %v3616
      %v3796 = vunpack.c.l.s4 1983009808
      %v3797 = vunpack.c.0.s8 %v3796
      %v3798 = vlaneseq
      %v3799 = vshrl.u32 %v3798, 7
      %v3800 = vsub.s32 %v3797, %v3799
      %v3801 = vrot.slane %v3793, %v3800
      %v3803 = vunpack.c.l.s4 1983009808
      %v3804 = vunpack.c.0.s8 %v3803
      %v3805 = vlaneseq
      %v3806 = vshrl.u32 %v3805, 7
      %v3807 = vsub.s32 %v3804, %v3806
      %v3808 = vrot.slane %v3794, %v3807
      %v3809 = vcombine.low %v3801, %v3808
      %v3810 = vcombine.low %v3617, %v3618
      %v3811 = vcombine.low %v3619, %v3620
      %v3813 = vunpack.c.l.s4 1983009808
      %v3814 = vunpack.c.0.s8 %v3813
      %v3815 = vlaneseq
      %v3816 = vshrl.u32 %v3815, 7
      %v3817 = vsub.s32 %v3814, %v3816
      %v3818 = vrot.slane %v3810, %v3817
      %v3820 = vunpack.c.l.s4 1983009808
      %v3821 = vunpack.c.0.s8 %v3820
      %v3822 = vlaneseq
      %v3823 = vshrl.u32 %v3822, 7
      %v3824 = vsub.s32 %v3821, %v3823
      %v3825 = vrot.slane %v3811, %v3824
      %v3826 = vcombine.low %v3818, %v3825
      %v3827 = vcombine.low %v3621, %v3622
      %v3828 = vcombine.low %v3623, %v3624
      %v3830 = vunpack.c.l.s4 1983009808
      %v3831 = vunpack.c.0.s8 %v3830
      %v3832 = vlaneseq
      %v3833 = vshrl.u32 %v3832, 7
      %v3834 = vsub.s32 %v3831, %v3833
      %v3835 = vrot.slane %v3827, %v3834
      %v3837 = vunpack.c.l.s4 1983009808
      %v3838 = vunpack.c.0.s8 %v3837
      %v3839 = vlaneseq
      %v3840 = vshrl.u32 %v3839, 7
      %v3841 = vsub.s32 %v3838, %v3840
      %v3842 = vrot.slane %v3828, %v3841
      %v3843 = vcombine.low %v3835, %v3842
      %v3844 = vcombine.low %v3625, %v3626
      %v3845 = vcombine.low %v3627, %v3628
      %v3847 = vunpack.c.l.s4 1983009808
      %v3848 = vunpack.c.0.s8 %v3847
      %v3849 = vlaneseq
      %v3850 = vshrl.u32 %v3849, 7
      %v3851 = vsub.s32 %v3848, %v3850
      %v3852 = vrot.slane %v3844, %v3851
      %v3854 = vunpack.c.l.s4 1983009808
      %v3855 = vunpack.c.0.s8 %v3854
      %v3856 = vlaneseq
      %v3857 = vshrl.u32 %v3856, 7
      %v3858 = vsub.s32 %v3855, %v3857
      %v3859 = vrot.slane %v3845, %v3858
      %v3860 = vcombine.low %v3852, %v3859
      %v3861 = vcombine.low %v3629, %v3630
      %v3862 = vcombine.low %v3631, %v3632
      %v3864 = vunpack.c.l.s4 1983009808
      %v3865 = vunpack.c.0.s8 %v3864
      %v3866 = vlaneseq
      %v3867 = vshrl.u32 %v3866, 7
      %v3868 = vsub.s32 %v3865, %v3867
      %v3869 = vrot.slane %v3861, %v3868
      %v3871 = vunpack.c.l.s4 1983009808
      %v3872 = vunpack.c.0.s8 %v3871
      %v3873 = vlaneseq
      %v3874 = vshrl.u32 %v3873, 7
      %v3875 = vsub.s32 %v3872, %v3874
      %v3876 = vrot.slane %v3862, %v3875
      %v3877 = vcombine.low %v3869, %v3876
      %v3878 = vcombine.low %v3633, %v3634
      %v3879 = vcombine.low %v3635, %v3636
      %v3881 = vunpack.c.l.s4 1983009808
      %v3882 = vunpack.c.0.s8 %v3881
      %v3883 = vlaneseq
      %v3884 = vshrl.u32 %v3883, 7
      %v3885 = vsub.s32 %v3882, %v3884
      %v3886 = vrot.slane %v3878, %v3885
      %v3888 = vunpack.c.l.s4 1983009808
      %v3889 = vunpack.c.0.s8 %v3888
      %v3890 = vlaneseq
      %v3891 = vshrl.u32 %v3890, 7
      %v3892 = vsub.s32 %v3889, %v3891
      %v3893 = vrot.slane %v3879, %v3892
      %v3894 = vcombine.low %v3886, %v3893
      %v3895 = vcombine.low %v3637, %v3638
      %v3896 = vcombine.low %v3639, %v3640
      %v3898 = vunpack.c.l.s4 1983009808
      %v3899 = vunpack.c.0.s8 %v3898
      %v3900 = vlaneseq
      %v3901 = vshrl.u32 %v3900, 7
      %v3902 = vsub.s32 %v3899, %v3901
      %v3903 = vrot.slane %v3895, %v3902
      %v3905 = vunpack.c.l.s4 1983009808
      %v3906 = vunpack.c.0.s8 %v3905
      %v3907 = vlaneseq
      %v3908 = vshrl.u32 %v3907, 7
      %v3909 = vsub.s32 %v3906, %v3908
      %v3910 = vrot.slane %v3896, %v3909
      %v3911 = vcombine.low %v3903, %v3910
      %v3912 = vcombine.low %v3641, %v3642
      %v3913 = vcombine.low %v3643, %v3644
      %v3915 = vunpack.c.l.s4 1983009808
      %v3916 = vunpack.c.0.s8 %v3915
      %v3917 = vlaneseq
      %v3918 = vshrl.u32 %v3917, 7
      %v3919 = vsub.s32 %v3916, %v3918
      %v3920 = vrot.slane %v3912, %v3919
      %v3922 = vunpack.c.l.s4 1983009808
      %v3923 = vunpack.c.0.s8 %v3922
      %v3924 = vlaneseq
      %v3925 = vshrl.u32 %v3924, 7
      %v3926 = vsub.s32 %v3923, %v3925
      %v3927 = vrot.slane %v3913, %v3926
      %v3928 = vcombine.low %v3920, %v3927
      %v3929 = vcombine.low %v3645, %v3646
      %v3930 = vcombine.low %v3647, %v3648
      %v3932 = vunpack.c.l.s4 1983009808
      %v3933 = vunpack.c.0.s8 %v3932
      %v3934 = vlaneseq
      %v3935 = vshrl.u32 %v3934, 7
      %v3936 = vsub.s32 %v3933, %v3935
      %v3937 = vrot.slane %v3929, %v3936
      %v3939 = vunpack.c.l.s4 1983009808
      %v3940 = vunpack.c.0.s8 %v3939
      %v3941 = vlaneseq
      %v3942 = vshrl.u32 %v3941, 7
      %v3943 = vsub.s32 %v3940, %v3942
      %v3944 = vrot.slane %v3930, %v3943
      %v3945 = vcombine.low %v3937, %v3944
      %v3946 = vcombine.low %v3649, %v3650
      %v3947 = vcombine.low %v3651, %v3652
      %v3949 = vunpack.c.l.s4 1983009808
      %v3950 = vunpack.c.0.s8 %v3949
      %v3951 = vlaneseq
      %v3952 = vshrl.u32 %v3951, 7
      %v3953 = vsub.s32 %v3950, %v3952
      %v3954 = vrot.slane %v3946, %v3953
      %v3956 = vunpack.c.l.s4 1983009808
      %v3957 = vunpack.c.0.s8 %v3956
      %v3958 = vlaneseq
      %v3959 = vshrl.u32 %v3958, 7
      %v3960 = vsub.s32 %v3957, %v3959
      %v3961 = vrot.slane %v3947, %v3960
      %v3962 = vcombine.low %v3954, %v3961
      %v3963 = vcombine.low %v3653, %v3654
      %v3964 = vcombine.low %v3655, %v3656
      %v3966 = vunpack.c.l.s4 1983009808
      %v3967 = vunpack.c.0.s8 %v3966
      %v3968 = vlaneseq
      %v3969 = vshrl.u32 %v3968, 7
      %v3970 = vsub.s32 %v3967, %v3969
      %v3971 = vrot.slane %v3963, %v3970
      %v3973 = vunpack.c.l.s4 1983009808
      %v3974 = vunpack.c.0.s8 %v3973
      %v3975 = vlaneseq
      %v3976 = vshrl.u32 %v3975, 7
      %v3977 = vsub.s32 %v3974, %v3976
      %v3978 = vrot.slane %v3964, %v3977
      %v3979 = vcombine.low %v3971, %v3978
      %v3980 = vcombine.low %v3657, %v3658
      %v3981 = vcombine.low %v3659, %v3660
      %v3983 = vunpack.c.l.s4 1983009808
      %v3984 = vunpack.c.0.s8 %v3983
      %v3985 = vlaneseq
      %v3986 = vshrl.u32 %v3985, 7
      %v3987 = vsub.s32 %v3984, %v3986
      %v3988 = vrot.slane %v3980, %v3987
      %v3990 = vunpack.c.l.s4 1983009808
      %v3991 = vunpack.c.0.s8 %v3990
      %v3992 = vlaneseq
      %v3993 = vshrl.u32 %v3992, 7
      %v3994 = vsub.s32 %v3991, %v3993
      %v3995 = vrot.slane %v3981, %v3994
      %v3996 = vcombine.low %v3988, %v3995
      %vm4013 = vcmask 31744
      %v4014 = vsel %vm4013, %v3741, 0.0
      %v4015 = vsel %vm4013, %v3758, 0.0
      %v4016 = vadd.f32 %v4014, %v4015
      %v4017 = vsel %vm4013, %v3775, 0.0
      %v4018 = vadd.f32 %v4016, %v4017
      %v4019 = vsel %vm4013, %v3792, 0.0
      %v4020 = vadd.f32 %v4018, %v4019
      %v4021 = vsel %vm4013, %v3809, 0.0
      %v4022 = vadd.f32 %v4020, %v4021
      %v4023 = vsel %vm4013, %v3826, 0.0
      %v4024 = vadd.f32 %v4022, %v4023
      %v4025 = vsel %vm4013, %v3843, 0.0
      %v4026 = vadd.f32 %v4024, %v4025
      %v4027 = vsel %vm4013, %v3860, 0.0
      %v4028 = vadd.f32 %v4026, %v4027
      %v4029 = vsel %vm4013, %v3877, 0.0
      %v4030 = vadd.f32 %v4028, %v4029
      %v4031 = vsel %vm4013, %v3894, 0.0
      %v4032 = vadd.f32 %v4030, %v4031
      %v4033 = vsel %vm4013, %v3911, 0.0
      %v4034 = vadd.f32 %v4032, %v4033
      %v4035 = vsel %vm4013, %v3928, 0.0
      %v4036 = vadd.f32 %v4034, %v4035
      %v4037 = vsel %vm4013, %v3945, 0.0
      %v4038 = vadd.f32 %v4036, %v4037
      %v4039 = vsel %vm4013, %v3962, 0.0
      %v4040 = vadd.f32 %v4038, %v4039
      %v4041 = vsel %vm4013, %v3979, 0.0
      %v4042 = vadd.f32 %v4040, %v4041
      %v4043 = vsel %vm4013, %v3996, 0.0
      %v4044 = vadd.f32 %v4042, %v4043
      %v4045 = vrot.slane %v4044, 4
      %v4046 = vadd.f32 %v4044, %v4045
      %v4047 = vrot.slane %v4046, 2
      %v4048 = vadd.f32 %v4046, %v4047
      %v4049 = vrot.slane %v4048, 1
      %v4050 = vadd.f32 %v4048, %v4049
      %v4051 = vmul.f32 %v4050, 0.0078125
      %v4053 = vcombine.high %v4051, %v4051
      %v4055 = vunpack.c.l.s4 1983009808
      %v4056 = vunpack.c.0.s8 %v4055
      %v4057 = vlaneseq
      %v4058 = vshrl.u32 %v4057, 7
      %v4059 = vsub.s32 %v4056, %v4058
      %v4060 = vrot.slane %v4051, %v4059
      %v4062 = vunpack.c.l.s4 1983009808
      %v4063 = vunpack.c.0.s8 %v4062
      %v4064 = vlaneseq
      %v4065 = vshrl.u32 %v4064, 7
      %v4066 = vsub.s32 %v4063, %v4065
      %v4067 = vrot.slane %v4053, %v4066
      %v4068 = vcombine.high %v4060, %v4060
      %v4069 = vcombine.high %v4067, %v4067
      %v4074 = vsub.f32 %v3597, %v4060
      %v4075 = vsub.f32 %v3598, %v4068
      %v4076 = vsub.f32 %v3599, %v4067
      %v4077 = vsub.f32 %v3600, %v4069
      %v4078 = vsub.f32 %v3601, %v4060
      %v4079 = vsub.f32 %v3602, %v4068
      %v4080 = vsub.f32 %v3603, %v4067
      %v4081 = vsub.f32 %v3604, %v4069
      %v4082 = vsub.f32 %v3605, %v4060
      %v4083 = vsub.f32 %v3606, %v4068
      %v4084 = vsub.f32 %v3607, %v4067
      %v4085 = vsub.f32 %v3608, %v4069
      %v4086 = vsub.f32 %v3609, %v4060
      %v4087 = vsub.f32 %v3610, %v4068
      %v4088 = vsub.f32 %v3611, %v4067
      %v4089 = vsub.f32 %v3612, %v4069
      %v4090 = vsub.f32 %v3613, %v4060
      %v4091 = vsub.f32 %v3614, %v4068
      %v4092 = vsub.f32 %v3615, %v4067
      %v4093 = vsub.f32 %v3616, %v4069
      %v4094 = vsub.f32 %v3617, %v4060
      %v4095 = vsub.f32 %v3618, %v4068
      %v4096 = vsub.f32 %v3619, %v4067
      %v4097 = vsub.f32 %v3620, %v4069
      %v4098 = vsub.f32 %v3621, %v4060
      %v4099 = vsub.f32 %v3622, %v4068
      %v4100 = vsub.f32 %v3623, %v4067
      %v4101 = vsub.f32 %v3624, %v4069
      %v4102 = vsub.f32 %v3625, %v4060
      %v4103 = vsub.f32 %v3626, %v4068
      %v4104 = vsub.f32 %v3627, %v4067
      %v4105 = vsub.f32 %v3628, %v4069
      %v4106 = vsub.f32 %v3629, %v4060
      %v4107 = vsub.f32 %v3630, %v4068
      %v4108 = vsub.f32 %v3631, %v4067
      %v4109 = vsub.f32 %v3632, %v4069
      %v4110 = vsub.f32 %v3633, %v4060
      %v4111 = vsub.f32 %v3634, %v4068
      %v4112 = vsub.f32 %v3635, %v4067
      %v4113 = vsub.f32 %v3636, %v4069
      %v4114 = vsub.f32 %v3637, %v4060
      %v4115 = vsub.f32 %v3638, %v4068
      %v4116 = vsub.f32 %v3639, %v4067
      %v4117 = vsub.f32 %v3640, %v4069
      %v4118 = vsub.f32 %v3641, %v4060
      %v4119 = vsub.f32 %v3642, %v4068
      %v4120 = vsub.f32 %v3643, %v4067
      %v4121 = vsub.f32 %v3644, %v4069
      %v4122 = vsub.f32 %v3645, %v4060
      %v4123 = vsub.f32 %v3646, %v4068
      %v4124 = vsub.f32 %v3647, %v4067
      %v4125 = vsub.f32 %v3648, %v4069
      %v4126 = vsub.f32 %v3649, %v4060
      %v4127 = vsub.f32 %v3650, %v4068
      %v4128 = vsub.f32 %v3651, %v4067
      %v4129 = vsub.f32 %v3652, %v4069
      %v4130 = vsub.f32 %v3653, %v4060
      %v4131 = vsub.f32 %v3654, %v4068
      %v4132 = vsub.f32 %v3655, %v4067
      %v4133 = vsub.f32 %v3656, %v4069
      %v4134 = vsub.f32 %v3657, %v4060
      %v4135 = vsub.f32 %v3658, %v4068
      %v4136 = vsub.f32 %v3659, %v4067
      %v4137 = vsub.f32 %v3660, %v4069
      %v4138 = vmul.f32 %v4074, %v4074
      %v4139 = vmul.f32 %v4075, %v4075
      %v4140 = vmul.f32 %v4076, %v4076
      %v4141 = vmul.f32 %v4077, %v4077
      %v4142 = vmul.f32 %v4078, %v4078
      %v4143 = vmul.f32 %v4079, %v4079
      %v4144 = vmul.f32 %v4080, %v4080
      %v4145 = vmul.f32 %v4081, %v4081
      %v4146 = vmul.f32 %v4082, %v4082
      %v4147 = vmul.f32 %v4083, %v4083
      %v4148 = vmul.f32 %v4084, %v4084
      %v4149 = vmul.f32 %v4085, %v4085
      %v4150 = vmul.f32 %v4086, %v4086
      %v4151 = vmul.f32 %v4087, %v4087
      %v4152 = vmul.f32 %v4088, %v4088
      %v4153 = vmul.f32 %v4089, %v4089
      %v4154 = vmul.f32 %v4090, %v4090
      %v4155 = vmul.f32 %v4091, %v4091
      %v4156 = vmul.f32 %v4092, %v4092
      %v4157 = vmul.f32 %v4093, %v4093
      %v4158 = vmul.f32 %v4094, %v4094
      %v4159 = vmul.f32 %v4095, %v4095
      %v4160 = vmul.f32 %v4096, %v4096
      %v4161 = vmul.f32 %v4097, %v4097
      %v4162 = vmul.f32 %v4098, %v4098
      %v4163 = vmul.f32 %v4099, %v4099
      %v4164 = vmul.f32 %v4100, %v4100
      %v4165 = vmul.f32 %v4101, %v4101
      %v4166 = vmul.f32 %v4102, %v4102
      %v4167 = vmul.f32 %v4103, %v4103
      %v4168 = vmul.f32 %v4104, %v4104
      %v4169 = vmul.f32 %v4105, %v4105
      %v4170 = vmul.f32 %v4106, %v4106
      %v4171 = vmul.f32 %v4107, %v4107
      %v4172 = vmul.f32 %v4108, %v4108
      %v4173 = vmul.f32 %v4109, %v4109
      %v4174 = vmul.f32 %v4110, %v4110
      %v4175 = vmul.f32 %v4111, %v4111
      %v4176 = vmul.f32 %v4112, %v4112
      %v4177 = vmul.f32 %v4113, %v4113
      %v4178 = vmul.f32 %v4114, %v4114
      %v4179 = vmul.f32 %v4115, %v4115
      %v4180 = vmul.f32 %v4116, %v4116
      %v4181 = vmul.f32 %v4117, %v4117
      %v4182 = vmul.f32 %v4118, %v4118
      %v4183 = vmul.f32 %v4119, %v4119
      %v4184 = vmul.f32 %v4120, %v4120
      %v4185 = vmul.f32 %v4121, %v4121
      %v4186 = vmul.f32 %v4122, %v4122
      %v4187 = vmul.f32 %v4123, %v4123
      %v4188 = vmul.f32 %v4124, %v4124
      %v4189 = vmul.f32 %v4125, %v4125
      %v4190 = vmul.f32 %v4126, %v4126
      %v4191 = vmul.f32 %v4127, %v4127
      %v4192 = vmul.f32 %v4128, %v4128
      %v4193 = vmul.f32 %v4129, %v4129
      %v4194 = vmul.f32 %v4130, %v4130
      %v4195 = vmul.f32 %v4131, %v4131
      %v4196 = vmul.f32 %v4132, %v4132
      %v4197 = vmul.f32 %v4133, %v4133
      %v4198 = vmul.f32 %v4134, %v4134
      %v4199 = vmul.f32 %v4135, %v4135
      %v4200 = vmul.f32 %v4136, %v4136
      %v4201 = vmul.f32 %v4137, %v4137
      %v4266 = vcombine.low %v4138, %v4139
      %v4267 = vcombine.low %v4140, %v4141
      %v4269 = vunpack.c.l.s4 1983009808
      %v4270 = vunpack.c.0.s8 %v4269
      %v4271 = vlaneseq
      %v4272 = vshrl.u32 %v4271, 7
      %v4273 = vsub.s32 %v4270, %v4272
      %v4274 = vrot.slane %v4266, %v4273
      %v4276 = vunpack.c.l.s4 1983009808
      %v4277 = vunpack.c.0.s8 %v4276
      %v4278 = vlaneseq
      %v4279 = vshrl.u32 %v4278, 7
      %v4280 = vsub.s32 %v4277, %v4279
      %v4281 = vrot.slane %v4267, %v4280
      %v4282 = vcombine.low %v4274, %v4281
      %v4283 = vcombine.low %v4142, %v4143
      %v4284 = vcombine.low %v4144, %v4145
      %v4286 = vunpack.c.l.s4 1983009808
      %v4287 = vunpack.c.0.s8 %v4286
      %v4288 = vlaneseq
      %v4289 = vshrl.u32 %v4288, 7
      %v4290 = vsub.s32 %v4287, %v4289
      %v4291 = vrot.slane %v4283, %v4290
      %v4293 = vunpack.c.l.s4 1983009808
      %v4294 = vunpack.c.0.s8 %v4293
      %v4295 = vlaneseq
      %v4296 = vshrl.u32 %v4295, 7
      %v4297 = vsub.s32 %v4294, %v4296
      %v4298 = vrot.slane %v4284, %v4297
      %v4299 = vcombine.low %v4291, %v4298
      %v4300 = vcombine.low %v4146, %v4147
      %v4301 = vcombine.low %v4148, %v4149
      %v4303 = vunpack.c.l.s4 1983009808
      %v4304 = vunpack.c.0.s8 %v4303
      %v4305 = vlaneseq
      %v4306 = vshrl.u32 %v4305, 7
      %v4307 = vsub.s32 %v4304, %v4306
      %v4308 = vrot.slane %v4300, %v4307
      %v4310 = vunpack.c.l.s4 1983009808
      %v4311 = vunpack.c.0.s8 %v4310
      %v4312 = vlaneseq
      %v4313 = vshrl.u32 %v4312, 7
      %v4314 = vsub.s32 %v4311, %v4313
      %v4315 = vrot.slane %v4301, %v4314
      %v4316 = vcombine.low %v4308, %v4315
      %v4317 = vcombine.low %v4150, %v4151
      %v4318 = vcombine.low %v4152, %v4153
      %v4320 = vunpack.c.l.s4 1983009808
      %v4321 = vunpack.c.0.s8 %v4320
      %v4322 = vlaneseq
      %v4323 = vshrl.u32 %v4322, 7
      %v4324 = vsub.s32 %v4321, %v4323
      %v4325 = vrot.slane %v4317, %v4324
      %v4327 = vunpack.c.l.s4 1983009808
      %v4328 = vunpack.c.0.s8 %v4327
      %v4329 = vlaneseq
      %v4330 = vshrl.u32 %v4329, 7
      %v4331 = vsub.s32 %v4328, %v4330
      %v4332 = vrot.slane %v4318, %v4331
      %v4333 = vcombine.low %v4325, %v4332
      %v4334 = vcombine.low %v4154, %v4155
      %v4335 = vcombine.low %v4156, %v4157
      %v4337 = vunpack.c.l.s4 1983009808
      %v4338 = vunpack.c.0.s8 %v4337
      %v4339 = vlaneseq
      %v4340 = vshrl.u32 %v4339, 7
      %v4341 = vsub.s32 %v4338, %v4340
      %v4342 = vrot.slane %v4334, %v4341
      %v4344 = vunpack.c.l.s4 1983009808
      %v4345 = vunpack.c.0.s8 %v4344
      %v4346 = vlaneseq
      %v4347 = vshrl.u32 %v4346, 7
      %v4348 = vsub.s32 %v4345, %v4347
      %v4349 = vrot.slane %v4335, %v4348
      %v4350 = vcombine.low %v4342, %v4349
      %v4351 = vcombine.low %v4158, %v4159
      %v4352 = vcombine.low %v4160, %v4161
      %v4354 = vunpack.c.l.s4 1983009808
      %v4355 = vunpack.c.0.s8 %v4354
      %v4356 = vlaneseq
      %v4357 = vshrl.u32 %v4356, 7
      %v4358 = vsub.s32 %v4355, %v4357
      %v4359 = vrot.slane %v4351, %v4358
      %v4361 = vunpack.c.l.s4 1983009808
      %v4362 = vunpack.c.0.s8 %v4361
      %v4363 = vlaneseq
      %v4364 = vshrl.u32 %v4363, 7
      %v4365 = vsub.s32 %v4362, %v4364
      %v4366 = vrot.slane %v4352, %v4365
      %v4367 = vcombine.low %v4359, %v4366
      %v4368 = vcombine.low %v4162, %v4163
      %v4369 = vcombine.low %v4164, %v4165
      %v4371 = vunpack.c.l.s4 1983009808
      %v4372 = vunpack.c.0.s8 %v4371
      %v4373 = vlaneseq
      %v4374 = vshrl.u32 %v4373, 7
      %v4375 = vsub.s32 %v4372, %v4374
      %v4376 = vrot.slane %v4368, %v4375
      %v4378 = vunpack.c.l.s4 1983009808
      %v4379 = vunpack.c.0.s8 %v4378
      %v4380 = vlaneseq
      %v4381 = vshrl.u32 %v4380, 7
      %v4382 = vsub.s32 %v4379, %v4381
      %v4383 = vrot.slane %v4369, %v4382
      %v4384 = vcombine.low %v4376, %v4383
      %v4385 = vcombine.low %v4166, %v4167
      %v4386 = vcombine.low %v4168, %v4169
      %v4388 = vunpack.c.l.s4 1983009808
      %v4389 = vunpack.c.0.s8 %v4388
      %v4390 = vlaneseq
      %v4391 = vshrl.u32 %v4390, 7
      %v4392 = vsub.s32 %v4389, %v4391
      %v4393 = vrot.slane %v4385, %v4392
      %v4395 = vunpack.c.l.s4 1983009808
      %v4396 = vunpack.c.0.s8 %v4395
      %v4397 = vlaneseq
      %v4398 = vshrl.u32 %v4397, 7
      %v4399 = vsub.s32 %v4396, %v4398
      %v4400 = vrot.slane %v4386, %v4399
      %v4401 = vcombine.low %v4393, %v4400
      %v4402 = vcombine.low %v4170, %v4171
      %v4403 = vcombine.low %v4172, %v4173
      %v4405 = vunpack.c.l.s4 1983009808
      %v4406 = vunpack.c.0.s8 %v4405
      %v4407 = vlaneseq
      %v4408 = vshrl.u32 %v4407, 7
      %v4409 = vsub.s32 %v4406, %v4408
      %v4410 = vrot.slane %v4402, %v4409
      %v4412 = vunpack.c.l.s4 1983009808
      %v4413 = vunpack.c.0.s8 %v4412
      %v4414 = vlaneseq
      %v4415 = vshrl.u32 %v4414, 7
      %v4416 = vsub.s32 %v4413, %v4415
      %v4417 = vrot.slane %v4403, %v4416
      %v4418 = vcombine.low %v4410, %v4417
      %v4419 = vcombine.low %v4174, %v4175
      %v4420 = vcombine.low %v4176, %v4177
      %v4422 = vunpack.c.l.s4 1983009808
      %v4423 = vunpack.c.0.s8 %v4422
      %v4424 = vlaneseq
      %v4425 = vshrl.u32 %v4424, 7
      %v4426 = vsub.s32 %v4423, %v4425
      %v4427 = vrot.slane %v4419, %v4426
      %v4429 = vunpack.c.l.s4 1983009808
      %v4430 = vunpack.c.0.s8 %v4429
      %v4431 = vlaneseq
      %v4432 = vshrl.u32 %v4431, 7
      %v4433 = vsub.s32 %v4430, %v4432
      %v4434 = vrot.slane %v4420, %v4433
      %v4435 = vcombine.low %v4427, %v4434
      %v4436 = vcombine.low %v4178, %v4179
      %v4437 = vcombine.low %v4180, %v4181
      %v4439 = vunpack.c.l.s4 1983009808
      %v4440 = vunpack.c.0.s8 %v4439
      %v4441 = vlaneseq
      %v4442 = vshrl.u32 %v4441, 7
      %v4443 = vsub.s32 %v4440, %v4442
      %v4444 = vrot.slane %v4436, %v4443
      %v4446 = vunpack.c.l.s4 1983009808
      %v4447 = vunpack.c.0.s8 %v4446
      %v4448 = vlaneseq
      %v4449 = vshrl.u32 %v4448, 7
      %v4450 = vsub.s32 %v4447, %v4449
      %v4451 = vrot.slane %v4437, %v4450
      %v4452 = vcombine.low %v4444, %v4451
      %v4453 = vcombine.low %v4182, %v4183
      %v4454 = vcombine.low %v4184, %v4185
      %v4456 = vunpack.c.l.s4 1983009808
      %v4457 = vunpack.c.0.s8 %v4456
      %v4458 = vlaneseq
      %v4459 = vshrl.u32 %v4458, 7
      %v4460 = vsub.s32 %v4457, %v4459
      %v4461 = vrot.slane %v4453, %v4460
      %v4463 = vunpack.c.l.s4 1983009808
      %v4464 = vunpack.c.0.s8 %v4463
      %v4465 = vlaneseq
      %v4466 = vshrl.u32 %v4465, 7
      %v4467 = vsub.s32 %v4464, %v4466
      %v4468 = vrot.slane %v4454, %v4467
      %v4469 = vcombine.low %v4461, %v4468
      %v4470 = vcombine.low %v4186, %v4187
      %v4471 = vcombine.low %v4188, %v4189
      %v4473 = vunpack.c.l.s4 1983009808
      %v4474 = vunpack.c.0.s8 %v4473
      %v4475 = vlaneseq
      %v4476 = vshrl.u32 %v4475, 7
      %v4477 = vsub.s32 %v4474, %v4476
      %v4478 = vrot.slane %v4470, %v4477
      %v4480 = vunpack.c.l.s4 1983009808
      %v4481 = vunpack.c.0.s8 %v4480
      %v4482 = vlaneseq
      %v4483 = vshrl.u32 %v4482, 7
      %v4484 = vsub.s32 %v4481, %v4483
      %v4485 = vrot.slane %v4471, %v4484
      %v4486 = vcombine.low %v4478, %v4485
      %v4487 = vcombine.low %v4190, %v4191
      %v4488 = vcombine.low %v4192, %v4193
      %v4490 = vunpack.c.l.s4 1983009808
      %v4491 = vunpack.c.0.s8 %v4490
      %v4492 = vlaneseq
      %v4493 = vshrl.u32 %v4492, 7
      %v4494 = vsub.s32 %v4491, %v4493
      %v4495 = vrot.slane %v4487, %v4494
      %v4497 = vunpack.c.l.s4 1983009808
      %v4498 = vunpack.c.0.s8 %v4497
      %v4499 = vlaneseq
      %v4500 = vshrl.u32 %v4499, 7
      %v4501 = vsub.s32 %v4498, %v4500
      %v4502 = vrot.slane %v4488, %v4501
      %v4503 = vcombine.low %v4495, %v4502
      %v4504 = vcombine.low %v4194, %v4195
      %v4505 = vcombine.low %v4196, %v4197
      %v4507 = vunpack.c.l.s4 1983009808
      %v4508 = vunpack.c.0.s8 %v4507
      %v4509 = vlaneseq
      %v4510 = vshrl.u32 %v4509, 7
      %v4511 = vsub.s32 %v4508, %v4510
      %v4512 = vrot.slane %v4504, %v4511
      %v4514 = vunpack.c.l.s4 1983009808
      %v4515 = vunpack.c.0.s8 %v4514
      %v4516 = vlaneseq
      %v4517 = vshrl.u32 %v4516, 7
      %v4518 = vsub.s32 %v4515, %v4517
      %v4519 = vrot.slane %v4505, %v4518
      %v4520 = vcombine.low %v4512, %v4519
      %v4521 = vcombine.low %v4198, %v4199
      %v4522 = vcombine.low %v4200, %v4201
      %v4524 = vunpack.c.l.s4 1983009808
      %v4525 = vunpack.c.0.s8 %v4524
      %v4526 = vlaneseq
      %v4527 = vshrl.u32 %v4526, 7
      %v4528 = vsub.s32 %v4525, %v4527
      %v4529 = vrot.slane %v4521, %v4528
      %v4531 = vunpack.c.l.s4 1983009808
      %v4532 = vunpack.c.0.s8 %v4531
      %v4533 = vlaneseq
      %v4534 = vshrl.u32 %v4533, 7
      %v4535 = vsub.s32 %v4532, %v4534
      %v4536 = vrot.slane %v4522, %v4535
      %v4537 = vcombine.low %v4529, %v4536
      %v4554 = vsel %vm4013, %v4282, 0.0
      %v4555 = vsel %vm4013, %v4299, 0.0
      %v4556 = vadd.f32 %v4554, %v4555
      %v4557 = vsel %vm4013, %v4316, 0.0
      %v4558 = vadd.f32 %v4556, %v4557
      %v4559 = vsel %vm4013, %v4333, 0.0
      %v4560 = vadd.f32 %v4558, %v4559
      %v4561 = vsel %vm4013, %v4350, 0.0
      %v4562 = vadd.f32 %v4560, %v4561
      %v4563 = vsel %vm4013, %v4367, 0.0
      %v4564 = vadd.f32 %v4562, %v4563
      %v4565 = vsel %vm4013, %v4384, 0.0
      %v4566 = vadd.f32 %v4564, %v4565
      %v4567 = vsel %vm4013, %v4401, 0.0
      %v4568 = vadd.f32 %v4566, %v4567
      %v4569 = vsel %vm4013, %v4418, 0.0
      %v4570 = vadd.f32 %v4568, %v4569
      %v4571 = vsel %vm4013, %v4435, 0.0
      %v4572 = vadd.f32 %v4570, %v4571
      %v4573 = vsel %vm4013, %v4452, 0.0
      %v4574 = vadd.f32 %v4572, %v4573
      %v4575 = vsel %vm4013, %v4469, 0.0
      %v4576 = vadd.f32 %v4574, %v4575
      %v4577 = vsel %vm4013, %v4486, 0.0
      %v4578 = vadd.f32 %v4576, %v4577
      %v4579 = vsel %vm4013, %v4503, 0.0
      %v4580 = vadd.f32 %v4578, %v4579
      %v4581 = vsel %vm4013, %v4520, 0.0
      %v4582 = vadd.f32 %v4580, %v4581
      %v4583 = vsel %vm4013, %v4537, 0.0
      %v4584 = vadd.f32 %v4582, %v4583
      %v4585 = vrot.slane %v4584, 4
      %v4586 = vadd.f32 %v4584, %v4585
      %v4587 = vrot.slane %v4586, 2
      %v4588 = vadd.f32 %v4586, %v4587
      %v4589 = vrot.slane %v4588, 1
      %v4590 = vadd.f32 %v4588, %v4589
      %v4591 = vsel %vm2757, %v4050, %v4590
      %vm4592 = vcmask 25600
      %4593 = vst.msk [vmem:[%s462] sm:$0x3] %vm4592, %v4591
      %v4594 = vcombine.low %v3597, %v3605
      %v4596 = vunpack.c.l.s4 1934713408
      %v4597 = vunpack.c.0.s8 %v4596
      %v4598 = vlaneseq
      %v4599 = vshrl.u32 %v4598, 7
      %v4600 = vsub.s32 %v4597, %v4599
      %v4601 = vrot.slane %v4594, %v4600
      %v4602 = vcombine.high %v4601, 0.0
      %v4603 = vcombine.low %v3613, %v3621
      %v4605 = vunpack.c.l.s4 1934713408
      %v4606 = vunpack.c.0.s8 %v4605
      %v4607 = vlaneseq
      %v4608 = vshrl.u32 %v4607, 7
      %v4609 = vsub.s32 %v4606, %v4608
      %v4610 = vrot.slane %v4603, %v4609
      %v4611 = vcombine.high %v4610, 0.0
      %v4612 = vcombine.low %v3629, %v3637
      %v4614 = vunpack.c.l.s4 1934713408
      %v4615 = vunpack.c.0.s8 %v4614
      %v4616 = vlaneseq
      %v4617 = vshrl.u32 %v4616, 7
      %v4618 = vsub.s32 %v4615, %v4617
      %v4619 = vrot.slane %v4612, %v4618
      %v4620 = vcombine.high %v4619, 0.0
      %v4621 = vcombine.low %v3645, %v3653
      %v4623 = vunpack.c.l.s4 1934713408
      %v4624 = vunpack.c.0.s8 %v4623
      %v4625 = vlaneseq
      %v4626 = vshrl.u32 %v4625, 7
      %v4627 = vsub.s32 %v4624, %v4626
      %v4628 = vrot.slane %v4621, %v4627
      %v4629 = vcombine.high %v4628, 0.0
      %v4630 = vcombine.low %v3598, %v3606
      %v4632 = vunpack.c.l.s4 1934713408
      %v4633 = vunpack.c.0.s8 %v4632
      %v4634 = vlaneseq
      %v4635 = vshrl.u32 %v4634, 7
      %v4636 = vsub.s32 %v4633, %v4635
      %v4637 = vrot.slane %v4630, %v4636
      %v4638 = vcombine.high %v4637, 0.0
      %v4639 = vcombine.low %v3614, %v3622
      %v4641 = vunpack.c.l.s4 1934713408
      %v4642 = vunpack.c.0.s8 %v4641
      %v4643 = vlaneseq
      %v4644 = vshrl.u32 %v4643, 7
      %v4645 = vsub.s32 %v4642, %v4644
      %v4646 = vrot.slane %v4639, %v4645
      %v4647 = vcombine.high %v4646, 0.0
      %v4648 = vcombine.low %v3630, %v3638
      %v4650 = vunpack.c.l.s4 1934713408
      %v4651 = vunpack.c.0.s8 %v4650
      %v4652 = vlaneseq
      %v4653 = vshrl.u32 %v4652, 7
      %v4654 = vsub.s32 %v4651, %v4653
      %v4655 = vrot.slane %v4648, %v4654
      %v4656 = vcombine.high %v4655, 0.0
      %v4657 = vcombine.low %v3646, %v3654
      %v4659 = vunpack.c.l.s4 1934713408
      %v4660 = vunpack.c.0.s8 %v4659
      %v4661 = vlaneseq
      %v4662 = vshrl.u32 %v4661, 7
      %v4663 = vsub.s32 %v4660, %v4662
      %v4664 = vrot.slane %v4657, %v4663
      %v4665 = vcombine.high %v4664, 0.0
      %v4666 = vcombine.low %v3599, %v3607
      %v4668 = vunpack.c.l.s4 1934713408
      %v4669 = vunpack.c.0.s8 %v4668
      %v4670 = vlaneseq
      %v4671 = vshrl.u32 %v4670, 7
      %v4672 = vsub.s32 %v4669, %v4671
      %v4673 = vrot.slane %v4666, %v4672
      %v4674 = vcombine.high %v4673, 0.0
      %v4675 = vcombine.low %v3615, %v3623
      %v4677 = vunpack.c.l.s4 1934713408
      %v4678 = vunpack.c.0.s8 %v4677
      %v4679 = vlaneseq
      %v4680 = vshrl.u32 %v4679, 7
      %v4681 = vsub.s32 %v4678, %v4680
      %v4682 = vrot.slane %v4675, %v4681
      %v4683 = vcombine.high %v4682, 0.0
      %v4684 = vcombine.low %v3631, %v3639
      %v4686 = vunpack.c.l.s4 1934713408
      %v4687 = vunpack.c.0.s8 %v4686
      %v4688 = vlaneseq
      %v4689 = vshrl.u32 %v4688, 7
      %v4690 = vsub.s32 %v4687, %v4689
      %v4691 = vrot.slane %v4684, %v4690
      %v4692 = vcombine.high %v4691, 0.0
      %v4693 = vcombine.low %v3647, %v3655
      %v4695 = vunpack.c.l.s4 1934713408
      %v4696 = vunpack.c.0.s8 %v4695
      %v4697 = vlaneseq
      %v4698 = vshrl.u32 %v4697, 7
      %v4699 = vsub.s32 %v4696, %v4698
      %v4700 = vrot.slane %v4693, %v4699
      %v4701 = vcombine.high %v4700, 0.0
      %v4702 = vcombine.low %v3600, %v3608
      %v4704 = vunpack.c.l.s4 1934713408
      %v4705 = vunpack.c.0.s8 %v4704
      %v4706 = vlaneseq
      %v4707 = vshrl.u32 %v4706, 7
      %v4708 = vsub.s32 %v4705, %v4707
      %v4709 = vrot.slane %v4702, %v4708
      %v4710 = vcombine.high %v4709, 0.0
      %v4711 = vcombine.low %v3616, %v3624
      %v4713 = vunpack.c.l.s4 1934713408
      %v4714 = vunpack.c.0.s8 %v4713
      %v4715 = vlaneseq
      %v4716 = vshrl.u32 %v4715, 7
      %v4717 = vsub.s32 %v4714, %v4716
      %v4718 = vrot.slane %v4711, %v4717
      %v4719 = vcombine.high %v4718, 0.0
      %v4720 = vcombine.low %v3632, %v3640
      %v4722 = vunpack.c.l.s4 1934713408
      %v4723 = vunpack.c.0.s8 %v4722
      %v4724 = vlaneseq
      %v4725 = vshrl.u32 %v4724, 7
      %v4726 = vsub.s32 %v4723, %v4725
      %v4727 = vrot.slane %v4720, %v4726
      %v4728 = vcombine.high %v4727, 0.0
      %v4729 = vcombine.low %v3648, %v3656
      %v4731 = vunpack.c.l.s4 1934713408
      %v4732 = vunpack.c.0.s8 %v4731
      %v4733 = vlaneseq
      %v4734 = vshrl.u32 %v4733, 7
      %v4735 = vsub.s32 %v4732, %v4734
      %v4736 = vrot.slane %v4729, %v4735
      %v4737 = vcombine.high %v4736, 0.0
      %v4738 = vcombine.low %v3601, %v3609
      %v4740 = vunpack.c.l.s4 1934713408
      %v4741 = vunpack.c.0.s8 %v4740
      %v4742 = vlaneseq
      %v4743 = vshrl.u32 %v4742, 7
      %v4744 = vsub.s32 %v4741, %v4743
      %v4745 = vrot.slane %v4738, %v4744
      %v4746 = vcombine.high %v4745, 0.0
      %v4747 = vcombine.low %v3617, %v3625
      %v4749 = vunpack.c.l.s4 1934713408
      %v4750 = vunpack.c.0.s8 %v4749
      %v4751 = vlaneseq
      %v4752 = vshrl.u32 %v4751, 7
      %v4753 = vsub.s32 %v4750, %v4752
      %v4754 = vrot.slane %v4747, %v4753
      %v4755 = vcombine.high %v4754, 0.0
      %v4756 = vcombine.low %v3633, %v3641
      %v4758 = vunpack.c.l.s4 1934713408
      %v4759 = vunpack.c.0.s8 %v4758
      %v4760 = vlaneseq
      %v4761 = vshrl.u32 %v4760, 7
      %v4762 = vsub.s32 %v4759, %v4761
      %v4763 = vrot.slane %v4756, %v4762
      %v4764 = vcombine.high %v4763, 0.0
      %v4765 = vcombine.low %v3649, %v3657
      %v4767 = vunpack.c.l.s4 1934713408
      %v4768 = vunpack.c.0.s8 %v4767
      %v4769 = vlaneseq
      %v4770 = vshrl.u32 %v4769, 7
      %v4771 = vsub.s32 %v4768, %v4770
      %v4772 = vrot.slane %v4765, %v4771
      %v4773 = vcombine.high %v4772, 0.0
      %v4774 = vcombine.low %v3602, %v3610
      %v4776 = vunpack.c.l.s4 1934713408
      %v4777 = vunpack.c.0.s8 %v4776
      %v4778 = vlaneseq
      %v4779 = vshrl.u32 %v4778, 7
      %v4780 = vsub.s32 %v4777, %v4779
      %v4781 = vrot.slane %v4774, %v4780
      %v4782 = vcombine.high %v4781, 0.0
      %v4783 = vcombine.low %v3618, %v3626
      %v4785 = vunpack.c.l.s4 1934713408
      %v4786 = vunpack.c.0.s8 %v4785
      %v4787 = vlaneseq
      %v4788 = vshrl.u32 %v4787, 7
      %v4789 = vsub.s32 %v4786, %v4788
      %v4790 = vrot.slane %v4783, %v4789
      %v4791 = vcombine.high %v4790, 0.0
      %v4792 = vcombine.low %v3634, %v3642
      %v4794 = vunpack.c.l.s4 1934713408
      %v4795 = vunpack.c.0.s8 %v4794
      %v4796 = vlaneseq
      %v4797 = vshrl.u32 %v4796, 7
      %v4798 = vsub.s32 %v4795, %v4797
      %v4799 = vrot.slane %v4792, %v4798
      %v4800 = vcombine.high %v4799, 0.0
      %v4801 = vcombine.low %v3650, %v3658
      %v4803 = vunpack.c.l.s4 1934713408
      %v4804 = vunpack.c.0.s8 %v4803
      %v4805 = vlaneseq
      %v4806 = vshrl.u32 %v4805, 7
      %v4807 = vsub.s32 %v4804, %v4806
      %v4808 = vrot.slane %v4801, %v4807
      %v4809 = vcombine.high %v4808, 0.0
      %v4810 = vcombine.low %v3603, %v3611
      %v4812 = vunpack.c.l.s4 1934713408
      %v4813 = vunpack.c.0.s8 %v4812
      %v4814 = vlaneseq
      %v4815 = vshrl.u32 %v4814, 7
      %v4816 = vsub.s32 %v4813, %v4815
      %v4817 = vrot.slane %v4810, %v4816
      %v4818 = vcombine.high %v4817, 0.0
      %v4819 = vcombine.low %v3619, %v3627
      %v4821 = vunpack.c.l.s4 1934713408
      %v4822 = vunpack.c.0.s8 %v4821
      %v4823 = vlaneseq
      %v4824 = vshrl.u32 %v4823, 7
      %v4825 = vsub.s32 %v4822, %v4824
      %v4826 = vrot.slane %v4819, %v4825
      %v4827 = vcombine.high %v4826, 0.0
      %v4828 = vcombine.low %v3635, %v3643
      %v4830 = vunpack.c.l.s4 1934713408
      %v4831 = vunpack.c.0.s8 %v4830
      %v4832 = vlaneseq
      %v4833 = vshrl.u32 %v4832, 7
      %v4834 = vsub.s32 %v4831, %v4833
      %v4835 = vrot.slane %v4828, %v4834
      %v4836 = vcombine.high %v4835, 0.0
      %v4837 = vcombine.low %v3651, %v3659
      %v4839 = vunpack.c.l.s4 1934713408
      %v4840 = vunpack.c.0.s8 %v4839
      %v4841 = vlaneseq
      %v4842 = vshrl.u32 %v4841, 7
      %v4843 = vsub.s32 %v4840, %v4842
      %v4844 = vrot.slane %v4837, %v4843
      %v4845 = vcombine.high %v4844, 0.0
      %v4846 = vcombine.low %v3604, %v3612
      %v4848 = vunpack.c.l.s4 1934713408
      %v4849 = vunpack.c.0.s8 %v4848
      %v4850 = vlaneseq
      %v4851 = vshrl.u32 %v4850, 7
      %v4852 = vsub.s32 %v4849, %v4851
      %v4853 = vrot.slane %v4846, %v4852
      %v4854 = vcombine.high %v4853, 0.0
      %v4855 = vcombine.low %v3620, %v3628
      %v4857 = vunpack.c.l.s4 1934713408
      %v4858 = vunpack.c.0.s8 %v4857
      %v4859 = vlaneseq
      %v4860 = vshrl.u32 %v4859, 7
      %v4861 = vsub.s32 %v4858, %v4860
      %v4862 = vrot.slane %v4855, %v4861
      %v4863 = vcombine.high %v4862, 0.0
      %v4864 = vcombine.low %v3636, %v3644
      %v4866 = vunpack.c.l.s4 1934713408
      %v4867 = vunpack.c.0.s8 %v4866
      %v4868 = vlaneseq
      %v4869 = vshrl.u32 %v4868, 7
      %v4870 = vsub.s32 %v4867, %v4869
      %v4871 = vrot.slane %v4864, %v4870
      %v4872 = vcombine.high %v4871, 0.0
      %v4873 = vcombine.low %v3652, %v3660
      %v4875 = vunpack.c.l.s4 1934713408
      %v4876 = vunpack.c.0.s8 %v4875
      %v4877 = vlaneseq
      %v4878 = vshrl.u32 %v4877, 7
      %v4879 = vsub.s32 %v4876, %v4878
      %v4880 = vrot.slane %v4873, %v4879
      %v4881 = vcombine.high %v4880, 0.0
      %v4886 = vcombine.low %v4601, %v4610
      %v4887 = vcombine.low %v4619, %v4628
      %v4889 = vunpack.c.l.s4 1983009808
      %v4890 = vunpack.c.0.s8 %v4889
      %v4891 = vlaneseq
      %v4892 = vshrl.u32 %v4891, 7
      %v4893 = vsub.s32 %v4890, %v4892
      %v4894 = vrot.slane %v4886, %v4893
      %v4896 = vunpack.c.l.s4 1983009808
      %v4897 = vunpack.c.0.s8 %v4896
      %v4898 = vlaneseq
      %v4899 = vshrl.u32 %v4898, 7
      %v4900 = vsub.s32 %v4897, %v4899
      %v4901 = vrot.slane %v4887, %v4900
      %v4902 = vcombine.low %v4894, %v4901
      %v4908 = vcombine.low %v4602, %v4611
      %v4909 = vcombine.low %v4620, %v4629
      %v4911 = vunpack.c.l.s4 1983009808
      %v4912 = vunpack.c.0.s8 %v4911
      %v4913 = vlaneseq
      %v4914 = vshrl.u32 %v4913, 7
      %v4915 = vsub.s32 %v4912, %v4914
      %v4916 = vrot.slane %v4908, %v4915
      %v4918 = vunpack.c.l.s4 1983009808
      %v4919 = vunpack.c.0.s8 %v4918
      %v4920 = vlaneseq
      %v4921 = vshrl.u32 %v4920, 7
      %v4922 = vsub.s32 %v4919, %v4921
      %v4923 = vrot.slane %v4909, %v4922
      %v4924 = vcombine.low %v4916, %v4923
      %4925 = vrot.lane.b32.xlu0 %v4924, 4
      %v4926 = vpop.permute.xlu0 %4925
      %v4932 = vcombine.low %v4637, %v4646
      %v4933 = vcombine.low %v4655, %v4664
      %v4935 = vunpack.c.l.s4 1983009808
      %v4936 = vunpack.c.0.s8 %v4935
      %v4937 = vlaneseq
      %v4938 = vshrl.u32 %v4937, 7
      %v4939 = vsub.s32 %v4936, %v4938
      %v4940 = vrot.slane %v4932, %v4939
      %v4942 = vunpack.c.l.s4 1983009808
      %v4943 = vunpack.c.0.s8 %v4942
      %v4944 = vlaneseq
      %v4945 = vshrl.u32 %v4944, 7
      %v4946 = vsub.s32 %v4943, %v4945
      %v4947 = vrot.slane %v4933, %v4946
      %v4948 = vcombine.low %v4940, %v4947
      %4949 = vrot.lane.b32.xlu0 %v4948, 8
      %v4950 = vpop.permute.xlu0 %4949
      %v4956 = vcombine.low %v4638, %v4647
      %v4957 = vcombine.low %v4656, %v4665
      %v4959 = vunpack.c.l.s4 1983009808
      %v4960 = vunpack.c.0.s8 %v4959
      %v4961 = vlaneseq
      %v4962 = vshrl.u32 %v4961, 7
      %v4963 = vsub.s32 %v4960, %v4962
      %v4964 = vrot.slane %v4956, %v4963
      %v4966 = vunpack.c.l.s4 1983009808
      %v4967 = vunpack.c.0.s8 %v4966
      %v4968 = vlaneseq
      %v4969 = vshrl.u32 %v4968, 7
      %v4970 = vsub.s32 %v4967, %v4969
      %v4971 = vrot.slane %v4957, %v4970
      %v4972 = vcombine.low %v4964, %v4971
      %4973 = vrot.lane.b32.xlu0 %v4972, 12
      %v4974 = vpop.permute.xlu0 %4973
      %v4980 = vcombine.low %v4673, %v4682
      %v4981 = vcombine.low %v4691, %v4700
      %v4983 = vunpack.c.l.s4 1983009808
      %v4984 = vunpack.c.0.s8 %v4983
      %v4985 = vlaneseq
      %v4986 = vshrl.u32 %v4985, 7
      %v4987 = vsub.s32 %v4984, %v4986
      %v4988 = vrot.slane %v4980, %v4987
      %v4990 = vunpack.c.l.s4 1983009808
      %v4991 = vunpack.c.0.s8 %v4990
      %v4992 = vlaneseq
      %v4993 = vshrl.u32 %v4992, 7
      %v4994 = vsub.s32 %v4991, %v4993
      %v4995 = vrot.slane %v4981, %v4994
      %v4996 = vcombine.low %v4988, %v4995
      %4997 = vrot.lane.b32.xlu0 %v4996, 16
      %v4998 = vpop.permute.xlu0 %4997
      %v5004 = vcombine.low %v4674, %v4683
      %v5005 = vcombine.low %v4692, %v4701
      %v5007 = vunpack.c.l.s4 1983009808
      %v5008 = vunpack.c.0.s8 %v5007
      %v5009 = vlaneseq
      %v5010 = vshrl.u32 %v5009, 7
      %v5011 = vsub.s32 %v5008, %v5010
      %v5012 = vrot.slane %v5004, %v5011
      %v5014 = vunpack.c.l.s4 1983009808
      %v5015 = vunpack.c.0.s8 %v5014
      %v5016 = vlaneseq
      %v5017 = vshrl.u32 %v5016, 7
      %v5018 = vsub.s32 %v5015, %v5017
      %v5019 = vrot.slane %v5005, %v5018
      %v5020 = vcombine.low %v5012, %v5019
      %5021 = vrot.lane.b32.xlu0 %v5020, 20
      %v5022 = vpop.permute.xlu0 %5021
      %v5028 = vcombine.low %v4709, %v4718
      %v5029 = vcombine.low %v4727, %v4736
      %v5031 = vunpack.c.l.s4 1983009808
      %v5032 = vunpack.c.0.s8 %v5031
      %v5033 = vlaneseq
      %v5034 = vshrl.u32 %v5033, 7
      %v5035 = vsub.s32 %v5032, %v5034
      %v5036 = vrot.slane %v5028, %v5035
      %v5038 = vunpack.c.l.s4 1983009808
      %v5039 = vunpack.c.0.s8 %v5038
      %v5040 = vlaneseq
      %v5041 = vshrl.u32 %v5040, 7
      %v5042 = vsub.s32 %v5039, %v5041
      %v5043 = vrot.slane %v5029, %v5042
      %v5044 = vcombine.low %v5036, %v5043
      %5045 = vrot.lane.b32.xlu0 %v5044, 24
      %v5046 = vpop.permute.xlu0 %5045
      %v5052 = vcombine.low %v4710, %v4719
      %v5053 = vcombine.low %v4728, %v4737
      %v5055 = vunpack.c.l.s4 1983009808
      %v5056 = vunpack.c.0.s8 %v5055
      %v5057 = vlaneseq
      %v5058 = vshrl.u32 %v5057, 7
      %v5059 = vsub.s32 %v5056, %v5058
      %v5060 = vrot.slane %v5052, %v5059
      %v5062 = vunpack.c.l.s4 1983009808
      %v5063 = vunpack.c.0.s8 %v5062
      %v5064 = vlaneseq
      %v5065 = vshrl.u32 %v5064, 7
      %v5066 = vsub.s32 %v5063, %v5065
      %v5067 = vrot.slane %v5053, %v5066
      %v5068 = vcombine.low %v5060, %v5067
      %5069 = vrot.lane.b32.xlu0 %v5068, 28
      %v5070 = vpop.permute.xlu0 %5069
      %v5076 = vcombine.low %v4745, %v4754
      %v5077 = vcombine.low %v4763, %v4772
      %v5079 = vunpack.c.l.s4 1983009808
      %v5080 = vunpack.c.0.s8 %v5079
      %v5081 = vlaneseq
      %v5082 = vshrl.u32 %v5081, 7
      %v5083 = vsub.s32 %v5080, %v5082
      %v5084 = vrot.slane %v5076, %v5083
      %v5086 = vunpack.c.l.s4 1983009808
      %v5087 = vunpack.c.0.s8 %v5086
      %v5088 = vlaneseq
      %v5089 = vshrl.u32 %v5088, 7
      %v5090 = vsub.s32 %v5087, %v5089
      %v5091 = vrot.slane %v5077, %v5090
      %v5092 = vcombine.low %v5084, %v5091
      %5093 = vrot.lane.b32.xlu0 %v5092, 32
      %v5094 = vpop.permute.xlu0 %5093
      %v5100 = vcombine.low %v4746, %v4755
      %v5101 = vcombine.low %v4764, %v4773
      %v5103 = vunpack.c.l.s4 1983009808
      %v5104 = vunpack.c.0.s8 %v5103
      %v5105 = vlaneseq
      %v5106 = vshrl.u32 %v5105, 7
      %v5107 = vsub.s32 %v5104, %v5106
      %v5108 = vrot.slane %v5100, %v5107
      %v5110 = vunpack.c.l.s4 1983009808
      %v5111 = vunpack.c.0.s8 %v5110
      %v5112 = vlaneseq
      %v5113 = vshrl.u32 %v5112, 7
      %v5114 = vsub.s32 %v5111, %v5113
      %v5115 = vrot.slane %v5101, %v5114
      %v5116 = vcombine.low %v5108, %v5115
      %5117 = vrot.lane.b32.xlu0 %v5116, 36
      %v5118 = vpop.permute.xlu0 %5117
      %v5124 = vcombine.low %v4781, %v4790
      %v5125 = vcombine.low %v4799, %v4808
      %v5127 = vunpack.c.l.s4 1983009808
      %v5128 = vunpack.c.0.s8 %v5127
      %v5129 = vlaneseq
      %v5130 = vshrl.u32 %v5129, 7
      %v5131 = vsub.s32 %v5128, %v5130
      %v5132 = vrot.slane %v5124, %v5131
      %v5134 = vunpack.c.l.s4 1983009808
      %v5135 = vunpack.c.0.s8 %v5134
      %v5136 = vlaneseq
      %v5137 = vshrl.u32 %v5136, 7
      %v5138 = vsub.s32 %v5135, %v5137
      %v5139 = vrot.slane %v5125, %v5138
      %v5140 = vcombine.low %v5132, %v5139
      %5141 = vrot.lane.b32.xlu0 %v5140, 40
      %v5142 = vpop.permute.xlu0 %5141
      %v5148 = vcombine.low %v4782, %v4791
      %v5149 = vcombine.low %v4800, %v4809
      %v5151 = vunpack.c.l.s4 1983009808
      %v5152 = vunpack.c.0.s8 %v5151
      %v5153 = vlaneseq
      %v5154 = vshrl.u32 %v5153, 7
      %v5155 = vsub.s32 %v5152, %v5154
      %v5156 = vrot.slane %v5148, %v5155
      %v5158 = vunpack.c.l.s4 1983009808
      %v5159 = vunpack.c.0.s8 %v5158
      %v5160 = vlaneseq
      %v5161 = vshrl.u32 %v5160, 7
      %v5162 = vsub.s32 %v5159, %v5161
      %v5163 = vrot.slane %v5149, %v5162
      %v5164 = vcombine.low %v5156, %v5163
      %5165 = vrot.lane.b32.xlu0 %v5164, 44
      %v5166 = vpop.permute.xlu0 %5165
      %v5172 = vcombine.low %v4817, %v4826
      %v5173 = vcombine.low %v4835, %v4844
      %v5175 = vunpack.c.l.s4 1983009808
      %v5176 = vunpack.c.0.s8 %v5175
      %v5177 = vlaneseq
      %v5178 = vshrl.u32 %v5177, 7
      %v5179 = vsub.s32 %v5176, %v5178
      %v5180 = vrot.slane %v5172, %v5179
      %v5182 = vunpack.c.l.s4 1983009808
      %v5183 = vunpack.c.0.s8 %v5182
      %v5184 = vlaneseq
      %v5185 = vshrl.u32 %v5184, 7
      %v5186 = vsub.s32 %v5183, %v5185
      %v5187 = vrot.slane %v5173, %v5186
      %v5188 = vcombine.low %v5180, %v5187
      %5189 = vrot.lane.b32.xlu0 %v5188, 48
      %v5190 = vpop.permute.xlu0 %5189
      %v5196 = vcombine.low %v4818, %v4827
      %v5197 = vcombine.low %v4836, %v4845
      %v5199 = vunpack.c.l.s4 1983009808
      %v5200 = vunpack.c.0.s8 %v5199
      %v5201 = vlaneseq
      %v5202 = vshrl.u32 %v5201, 7
      %v5203 = vsub.s32 %v5200, %v5202
      %v5204 = vrot.slane %v5196, %v5203
      %v5206 = vunpack.c.l.s4 1983009808
      %v5207 = vunpack.c.0.s8 %v5206
      %v5208 = vlaneseq
      %v5209 = vshrl.u32 %v5208, 7
      %v5210 = vsub.s32 %v5207, %v5209
      %v5211 = vrot.slane %v5197, %v5210
      %v5212 = vcombine.low %v5204, %v5211
      %5213 = vrot.lane.b32.xlu0 %v5212, 52
      %v5214 = vpop.permute.xlu0 %5213
      %v5220 = vcombine.low %v4853, %v4862
      %v5221 = vcombine.low %v4871, %v4880
      %v5223 = vunpack.c.l.s4 1983009808
      %v5224 = vunpack.c.0.s8 %v5223
      %v5225 = vlaneseq
      %v5226 = vshrl.u32 %v5225, 7
      %v5227 = vsub.s32 %v5224, %v5226
      %v5228 = vrot.slane %v5220, %v5227
      %v5230 = vunpack.c.l.s4 1983009808
      %v5231 = vunpack.c.0.s8 %v5230
      %v5232 = vlaneseq
      %v5233 = vshrl.u32 %v5232, 7
      %v5234 = vsub.s32 %v5231, %v5233
      %v5235 = vrot.slane %v5221, %v5234
      %v5236 = vcombine.low %v5228, %v5235
      %5237 = vrot.lane.b32.xlu0 %v5236, 56
      %v5238 = vpop.permute.xlu0 %5237
      %v5244 = vcombine.low %v4854, %v4863
      %v5245 = vcombine.low %v4872, %v4881
      %v5247 = vunpack.c.l.s4 1983009808
      %v5248 = vunpack.c.0.s8 %v5247
      %v5249 = vlaneseq
      %v5250 = vshrl.u32 %v5249, 7
      %v5251 = vsub.s32 %v5248, %v5250
      %v5252 = vrot.slane %v5244, %v5251
      %v5254 = vunpack.c.l.s4 1983009808
      %v5255 = vunpack.c.0.s8 %v5254
      %v5256 = vlaneseq
      %v5257 = vshrl.u32 %v5256, 7
      %v5258 = vsub.s32 %v5255, %v5257
      %v5259 = vrot.slane %v5245, %v5258
      %v5260 = vcombine.low %v5252, %v5259
      %5261 = vrot.lane.b32.xlu0 %v5260, 60
      %v5262 = vpop.permute.xlu0 %5261
      %v5264 = vsel %vm4013, %v4902, %v4926
      %v5265 = vsel %vm736, %v5264, %v4950
      %vm5266 = vcmask 97280
      %v5267 = vsel %vm5266, %v5265, %v4974
      %v5268 = vsel %vm785, %v5267, %v4998
      %vm5269 = vcmask 162816
      %v5270 = vsel %vm5269, %v5268, %v5022
      %v5271 = vsel %vm1791, %v5270, %v5046
      %vm5272 = vcmask 228352
      %v5273 = vsel %vm5272, %v5271, %v5070
      %vm5274 = vcmask 261120
      %v5275 = vsel %vm5274, %v5273, %v5094
      %vm5276 = vcmask 293888
      %v5277 = vsel %vm5276, %v5275, %v5118
      %vm5278 = vcmask 326656
      %v5279 = vsel %vm5278, %v5277, %v5142
      %vm5280 = vcmask 359424
      %v5281 = vsel %vm5280, %v5279, %v5166
      %vm5282 = vcmask 392192
      %v5283 = vsel %vm5282, %v5281, %v5190
      %vm5284 = vcmask 424960
      %v5285 = vsel %vm5284, %v5283, %v5214
      %vm5286 = vcmask 457728
      %v5287 = vsel %vm5286, %v5285, %v5238
      %vm5288 = vcmask 490496
      %v5289 = vsel %vm5288, %v5287, %v5262
      %v5290 = vpack.c.bf16 %v5289, %v5289
      %vm5291 = vcmask 519168
      %5292 = vst.msk [vmem:[%s454] sm:$0xf] %vm5291, %v5290
      %p5293 = scmp.lt.s32.totalorder %s23, 1
      %s5294 = scalar_select %p5293, %s23, 1
      %p5295 = scmp.lt.s32.totalorder %s24, 1
      %s5296 = scalar_select %p5295, %s24, 1
      %s5297 = smul.addr %s5294, 2
      %s5298 = sadd.s32 %s5296, %s5297
      %s5299 = smul.addr %s5298, 4
      %s5300 = scalar_lea.vmem %s6, %s5299
      %p5301 = scmp.lt.s32.totalorder %s23, 1
      %s5302 = scalar_select %p5301, %s23, 1
      %p5303 = scmp.lt.s32.totalorder %s24, 1
      %s5304 = scalar_select %p5303, %s24, 1
      %s5305 = smul.addr %s5302, 2
      %s5306 = sadd.s32 %s5304, %s5305
      %s5307 = smul.addr %s5306, 2
      %s5308 = scalar_lea.vmem %s7, %s5307
      // Predicated region
      $region45: #{vgg_block.4} parent=43 // pred_check
        %p5309 = pneg %p214
      $region46: #{vgg_block.4} parent=43 // pred_check_branch
        %5311 = sbr.rel (%p5309) target = $region48
      $region47: #{vgg_block.4} parent=43 // pred_region
        _
      $region48: #{vgg_block.4} parent=43 // pred_fallthru
        _
      // Predicated region
      $region49: #{vgg_block.4} parent=43 // pred_check
        %p5312 = pneg %p242
      $region50: #{vgg_block.4} parent=43 // pred_check_branch
        %5314 = sbr.rel (%p5312) target = $region52
      $region51: #{vgg_block.4} parent=43 // pred_region
        _
      $region52: #{vgg_block.4} parent=43 // pred_fallthru
        _
    $region44: #{vgg_block.4} parent=5 // pred_fallthru
      _
    %p5315 = scmp.le.s32.totalorder 2, %s14
    // Predicated region
    $region53: #{vgg_block.4} parent=5 // pred_check
      %p5316 = pneg %p5315
    $region54: #{vgg_block.4} parent=5 // pred_check_branch
      %5318 = sbr.rel (%p5316) target = $region56
    $region55: #{vgg_block.4} parent=5 // pred_region
      %s5319 = ssub.s32 %s14, 2
      // Predicated region
      $region57: #{vgg_block.4} parent=55 // pred_check
        %p5320 = pneg %p220
      $region58: #{vgg_block.4} parent=55 // pred_check_branch
        %5322 = sbr.rel (%p5320) target = $region60
      $region59: #{vgg_block.4} parent=55 // pred_region
        %p5323 = scmp.lt.s32.totalorder %s25, 1
        %s5324 = scalar_select %p5323, %s25, 1
        %p5325 = scmp.lt.s32.totalorder %s26, 1
        %s5326 = scalar_select %p5325, %s26, 1
        %s5327 = smul.addr %s5324, 2
        %s5328 = sadd.s32 %s5326, %s5327
        %s5329 = smul.addr %s5328, 4
        %s5330 = scalar_lea.vmem %s6, %s5329
      $region60: #{vgg_block.4} parent=55 // pred_fallthru
        _
      // Predicated region
      $region61: #{vgg_block.4} parent=55 // pred_check
        %p5331 = pneg %p248
      $region62: #{vgg_block.4} parent=55 // pred_check_branch
        %5333 = sbr.rel (%p5331) target = $region64
      $region63: #{vgg_block.4} parent=55 // pred_region
        %p5334 = scmp.lt.s32.totalorder %s25, 1
        %s5335 = scalar_select %p5334, %s25, 1
        %p5336 = scmp.lt.s32.totalorder %s26, 1
        %s5337 = scalar_select %p5336, %s26, 1
        %s5338 = smul.addr %s5335, 2
        %s5339 = sadd.s32 %s5337, %s5338
        %s5340 = smul.addr %s5339, 2
        %s5341 = scalar_lea.vmem %s7, %s5340
      $region64: #{vgg_block.4} parent=55 // pred_fallthru
        _
    $region56: #{vgg_block.4} parent=5 // pred_fallthru
      _
  $region6: #{vgg_block.4} parent=0 // loop_footer
    %s18 = sadd.s32 1, %s14
  $region7: #{vgg_block.4} parent=0 // loop_footer_branch
    %13 = sbr.rel target = $region3
  $region8: #{vgg_block.4} parent=0 // loop_exit
    _

</llo_original>
